<compile_context>
chip_gen: v5e
topology: v5e:2x2
jax: 0.10.0
libtpu: 0.0.40
codegen_flags: <defaults>
</compile_context>

<pallas_src>
import functools

import jax
import jax.numpy as jnp
from jax.experimental import pallas as pl
from jax.experimental.pallas import tpu as pltpu


# ---------------------------------------------------------------------------
# Helpers
# ---------------------------------------------------------------------------
def _resident_spec(block_shape, index_map):
    """BlockSpec for grid-invariant operands: single-buffered when supported."""
    try:
        return pl.BlockSpec(block_shape, index_map, pipeline_mode=pl.Buffered(1))
    except (AttributeError, TypeError):
        return pl.BlockSpec(block_shape, index_map)


def _row_tile(m, tm_max):
    """Pick a row-tile size: full extent if it fits, else an 8-aligned tile
    that divides m when possible (avoids a ragged masked last block)."""
    if m <= tm_max:
        return m
    for t in range(tm_max, tm_max // 2, -8):
        if m % t == 0:
            return t
    return tm_max


# ---------------------------------------------------------------------------
# Pallas kernels
# ---------------------------------------------------------------------------
def _mm_bias_act_kernel(x_ref, w_ref, b_ref, o_ref, *, act):
    """out = act(x @ w + b).  x:(tm,K) w:(K,N) b:(1,N) o:(tm,N); f32 accumulate."""
    y = jnp.dot(x_ref[...], w_ref[...], preferred_element_type=jnp.float32)
    y = y + b_ref[...]
    if act == "relu":
        y = jnp.maximum(y, 0.0)
    elif act == "lrelu":
        y = jnp.where(y > 0.0, y, 0.01 * y)
    elif act != "none":
        raise ValueError(act)
    o_ref[...] = y.astype(o_ref.dtype)


def _dueling_tail_kernel(flat_ref, wfc_ref, bfc_ref, whd_ref, bhd_ref, q_ref,
                         *, num_actions):
    """Fused dueling tail.

    f  = lrelu(flat @ [Wfc | Wfc_du] + b)        (tb, 1024)
    d  = f @ Whead_blockdiag + bhead_cat         (tb, A + 1)
    q  = d2 + d1 - mean(d1, axis=1, keepdims)    (tb, A)
    """
    f = jnp.dot(flat_ref[...], wfc_ref[...], preferred_element_type=jnp.float32)
    f = f + bfc_ref[...]
    f = jnp.where(f > 0.0, f, 0.01 * f)                      # leaky-ReLU in f32
    d = jnp.dot(f.astype(whd_ref.dtype), whd_ref[...],
                preferred_element_type=jnp.float32)
    d = d + bhd_ref[...]
    d1 = d[:, :num_actions]                                  # advantage head
    d2 = d[:, num_actions:num_actions + 1]                   # value head
    q_ref[...] = (d2 + d1 - jnp.mean(d1, axis=1, keepdims=True)).astype(q_ref.dtype)


# ---------------------------------------------------------------------------
# Pallas wrappers
# ---------------------------------------------------------------------------
def matmul_bias_act(x, w, b, act, *, tm_max=1024):
    """act(x @ w + b): x:(M,K), w:(K,N), b:(1,N) -> (M,N) in x.dtype, f32 accum."""
    M, K = x.shape
    K2, N = w.shape
    assert K == K2 and b.shape == (1, N)
    tm = _row_tile(M, tm_max)
    cost = pl.CostEstimate(
        flops=int(2 * M * K * N),
        transcendentals=0,
        bytes_accessed=int((M * K + M * N) * x.dtype.itemsize
                           + K * N * w.dtype.itemsize + N * 4))
    kernel = functools.partial(_mm_bias_act_kernel, act=act)
    return pl.pallas_call(
        kernel,
        out_shape=jax.ShapeDtypeStruct((M, N), x.dtype),
        grid=(pl.cdiv(M, tm),),
        in_specs=[
            pl.BlockSpec((tm, K), lambda i: (i, 0)),        # streamed row tiles
            _resident_spec((K, N), lambda i: (0, 0)),       # weights stay resident
            _resident_spec((1, N), lambda i: (0, 0)),
        ],
        out_specs=pl.BlockSpec((tm, N), lambda i: (i, 0)),
        compiler_params=pltpu.CompilerParams(
            dimension_semantics=("parallel",),              # v7x: 2 TCs split M
            vmem_limit_bytes=32 * 1024 * 1024),             # covers v5e's 16 MiB default
        cost_estimate=cost,
    )(x, w, b)


def dueling_tail(flat, w_fc, b_fc, w_head, b_head, num_actions, *, tb_max=256):
    B, K = flat.shape
    H2 = w_fc.shape[1]
    A1 = w_head.shape[1]
    assert A1 == num_actions + 1
    tb = _row_tile(B, tb_max)
    cost = pl.CostEstimate(
        flops=int(2 * B * K * H2 + 2 * B * H2 * A1),
        transcendentals=0,
        bytes_accessed=int(B * K * flat.dtype.itemsize
                           + (K * H2 + H2 * A1) * w_fc.dtype.itemsize
                           + B * num_actions * 4))
    kernel = functools.partial(_dueling_tail_kernel, num_actions=num_actions)
    return pl.pallas_call(
        kernel,
        out_shape=jax.ShapeDtypeStruct((B, num_actions), jnp.float32),
        grid=(pl.cdiv(B, tb),),
        in_specs=[
            pl.BlockSpec((tb, K), lambda i: (i, 0)),
            _resident_spec((K, H2), lambda i: (0, 0)),      # big fc weight, single-buffered
            _resident_spec((1, H2), lambda i: (0, 0)),
            _resident_spec((H2, A1), lambda i: (0, 0)),
            _resident_spec((1, A1), lambda i: (0, 0)),
        ],
        out_specs=pl.BlockSpec((tb, num_actions), lambda i: (i, 0)),
        compiler_params=pltpu.CompilerParams(
            dimension_semantics=("parallel",),
            vmem_limit_bytes=40 * 1024 * 1024),             # headroom on v7x's 64 MiB
        cost_estimate=cost,
    )(flat, w_fc, b_fc, w_head, b_head)


# ---------------------------------------------------------------------------
# im2col glue (plain JAX, NHWC, strided slices only)
# ---------------------------------------------------------------------------
def im2col_nhwc(x, k, s):
    """x:(B,H,W,C) NHWC -> ((B*O*O, k*k*C), O), feature order (kh, kw, c)."""
    # TODO(synk): fuse patch extraction into the conv kernel (DMA input rows and
    # assemble the k*k slices in VMEM) to remove this HBM round trip per layer.
    B, Hh, Ww, C = x.shape
    O = (Hh - k) // s + 1
    span = (O - 1) * s + 1
    cols = [x[:, i:i + span:s, j:j + span:s, :]
            for i in range(k) for j in range(k)]
    patches = jnp.concatenate(cols, axis=-1)                 # (B, O, O, k*k*C)
    return patches.reshape(B * O * O, k * k * C), O


# ---------------------------------------------------------------------------
# Dueling DQN forward
# ---------------------------------------------------------------------------
def dueling_dqn_forward(params, x):
    """x: (B, C, 84, 84) float32 NCHW (PyTorch convention) -> (B, A) float32."""
    B = x.shape[0]
    cd = params["w1"].dtype                                  # compute dtype (f32/bf16)
    num_actions = params["w_head"].shape[1] - 1

    x = jnp.transpose(x, (0, 2, 3, 1)).astype(cd)            # single NCHW->NHWC

    # conv1 (8x8 / 4) + ReLU
    p, o = im2col_nhwc(x, 8, 4)
    x = matmul_bias_act(p, params["w1"], params["b1"], "relu").reshape(B, o, o, 32)

    # conv2 (4x4 / 2) + ReLU
    p, o = im2col_nhwc(x, 4, 2)
    x = matmul_bias_act(p, params["w2"], params["b2"], "relu").reshape(B, o, o, 64)

    # conv3 (3x3 / 1) + ReLU
    p, o = im2col_nhwc(x, 3, 1)
    x = matmul_bias_act(p, params["w3"], params["b3"], "relu").reshape(B, o, o, 64)

    # NHWC flatten; w_fc rows were permuted at init so this matches PyTorch's
    # NCHW x.view(B, -1) @ fc.weight.T exactly.
    flat = x.reshape(B, 64 * o * o)                          # (B, 3136)

    # TODO(synk): at small B, fuse conv2 + conv3 + tail into one pallas_call
    # (all remaining weights fit VMEM) to cut launches / HBM round trips further.
    return dueling_tail(flat, params["w_fc"], params["b_fc"],
                        params["w_head"], params["b_head"], num_actions)


# ---------------------------------------------------------------------------
# Parameters: raw (PyTorch shapes) -> kernel layout (one-time conversion)
# ---------------------------------------------------------------------------
def init_raw_params(channels, num_actions, key):
    """Deterministic synthetic parameters in PyTorch's native shapes."""
    ks = jax.random.split(key, 14)
    s = 0.05
    n = lambda k, shape: s * jax.random.normal(k, shape, jnp.float32)
    return {
        "conv1_w": n(ks[0], (32, channels, 8, 8)),  "conv1_b": n(ks[1], (32,)),
        "conv2_w": n(ks[2], (64, 32, 4, 4)),        "conv2_b": n(ks[3], (64,)),
        "conv3_w": n(ks[4], (64, 64, 3, 3)),        "conv3_b": n(ks[5], (64,)),
        "fc_w":    n(ks[6], (512, 3136)),           "fc_b":    n(ks[7], (512,)),
        "fc_du_w": n(ks[8], (512, 3136)),           "fc_du_b": n(ks[9], (512,)),
        "head_w":  n(ks[10], (num_actions, 512)),   "head_b":  n(ks[11], (num_actions,)),
        "head_du_w": n(ks[12], (1, 512)),           "head_du_b": n(ks[13], (1,)),
    }


def prepare_params(raw, num_actions, compute_dtype=jnp.float32):
    """Reshape/permute the PyTorch params once into the kernel layout."""
    def conv_mat(w, b):
        oc, ic, kh, kw = w.shape
        m = jnp.transpose(w, (2, 3, 1, 0)).reshape(kh * kw * ic, oc)  # (kh,kw,c)-major
        return m.astype(compute_dtype), b.reshape(1, oc).astype(jnp.float32)

    w1, b1 = conv_mat(raw["conv1_w"], raw["conv1_b"])
    w2, b2 = conv_mat(raw["conv2_w"], raw["conv2_b"])
    w3, b3 = conv_mat(raw["conv3_w"], raw["conv3_b"])

    # fc rows: NCHW flatten index (c*49 + h*7 + w) -> NHWC flatten ((h*7+w)*64 + c).
    hw = jnp.arange(49)
    c = jnp.arange(64)
    perm = (c[None, :] * 49 + hw[:, None]).reshape(-1)                # (3136,)
    w_fc = raw["fc_w"].T[perm]                                        # (3136, 512)
    w_fc_du = raw["fc_du_w"].T[perm]
    w_fc_cat = jnp.concatenate([w_fc, w_fc_du], axis=1).astype(compute_dtype)
    b_fc_cat = jnp.concatenate([raw["fc_b"], raw["fc_du_b"]]).reshape(1, 1024)

    # Block-diagonal head: cols [0:A] read the fc half, col A reads the fc_du half.
    A = num_actions
    w_head_cat = jnp.zeros((1024, A + 1), jnp.float32)
    w_head_cat = w_head_cat.at[:512, :A].set(raw["head_w"].T)
    w_head_cat = w_head_cat.at[512:, A:].set(raw["head_du_w"].T)
    w_head_cat = w_head_cat.astype(compute_dtype)                     # no f32xf32 on bf16 path
    b_head_cat = jnp.concatenate([raw["head_b"], raw["head_du_b"]]).reshape(1, A + 1)

    return {
        "w1": w1, "b1": b1, "w2": w2, "b2": b2, "w3": w3, "b3": b3,
        "w_fc": w_fc_cat, "b_fc": b_fc_cat.astype(jnp.float32),
        "w_head": w_head_cat, "b_head": b_head_cat.astype(jnp.float32),
    }


# ---------------------------------------------------------------------------
# Pure-JAX reference (mirrors the PyTorch module exactly) for validation
# ---------------------------------------------------------------------------
def reference_forward(raw, x):
    dn = ("NCHW", "OIHW", "NCHW")

    def conv(x, w, b, s):
        y = jax.lax.conv_general_dilated(x, w, (s, s), "VALID", dimension_numbers=dn)
        return jax.nn.relu(y + b.reshape(1, -1, 1, 1))

    x = conv(x, raw["conv1_w"], raw["conv1_b"], 4)
    x = conv(x, raw["conv2_w"], raw["conv2_b"], 2)
    x = conv(x, raw["conv3_w"], raw["conv3_b"], 1)
    flat = x.reshape(x.shape[0], -1)
    lrelu = lambda v: jnp.where(v > 0, v, 0.01 * v)
    d1 = lrelu(flat @ raw["fc_w"].T + raw["fc_b"]) @ raw["head_w"].T + raw["head_b"]
    d2 = lrelu(flat @ raw["fc_du_w"].T + raw["fc_du_b"]) @ raw["head_du_w"].T + raw["head_du_b"]
    return d2 + d1 - jnp.mean(d1, axis=1, keepdims=True)


if __name__ == "__main__":
    B, C, H, W = 2, 4, 84, 84          # 84x84 required: fc expects 64*7*7 = 3136 features
    NUM_ACTIONS = 4

    key = jax.random.PRNGKey(0)
    pkey, xkey = jax.random.split(key)
    raw = init_raw_params(C, NUM_ACTIONS, pkey)
    x = jax.random.normal(xkey, (B, C, H, W), jnp.float32)

    q_ref = jax.block_until_ready(reference_forward(raw, x))
    fwd = jax.jit(dueling_dqn_forward)

    # f32 path: tight correctness check vs the pure-JAX / PyTorch-equivalent reference.
    params_f32 = prepare_params(raw, NUM_ACTIONS, jnp.float32)
    q = jax.block_until_ready(fwd(params_f32, x))
    assert q.shape == (B, NUM_ACTIONS)
    assert jnp.allclose(q, q_ref, atol=1e-3, rtol=1e-3), "f32 mismatch vs reference"

    # bf16-operand path (v6e/v7x MXU; f32 accumulation/epilogue) — loose sanity check.
    params_bf16 = prepare_params(raw, NUM_ACTIONS, jnp.bfloat16)
    q_bf16 = jax.block_until_ready(fwd(params_bf16, x))
    err = float(jnp.max(jnp.abs(q_bf16 - q_ref)))
    assert err < 0.3, f"bf16 path deviates too much: {err}"

    print("KERNEL_OK")
</pallas_src>

<mosaic_0001>
module attributes {stable_mosaic.version = 11 : i64} {
  func.func @_mm_bias_act_kernel(%arg0: i32, %arg1: memref<800x256xf32, #tpu.memory_space<vmem>>, %arg2: memref<256x32xf32, #tpu.memory_space<vmem>>, %arg3: memref<1x32xf32, #tpu.memory_space<vmem>>, %arg4: memref<800x32xf32, #tpu.memory_space<vmem>>) attributes {dimension_semantics = [#tpu.dimension_semantics<parallel>], iteration_bounds = array<i64: 1>, scalar_prefetch = 0 : i64, scratch_operands = 0 : i64, tpu.core_type = #tpu.core_type<tc>, window_params = [{transform_indices = @transform_0, window_bounds = array<i64: 800, 256>}, {pipeline_mode = #tpu.pipeline_mode<synchronous>, transform_indices = @transform_1, window_bounds = array<i64: 256, 32>}, {pipeline_mode = #tpu.pipeline_mode<synchronous>, transform_indices = @transform_2, window_bounds = array<i64: 1, 32>}, {transform_indices = @transform_3, window_bounds = array<i64: 800, 32>}]} {
    %c0 = arith.constant 0 : index
    %c0_0 = arith.constant 0 : index
    %0 = vector.load %arg1[%c0, %c0_0] : memref<800x256xf32, #tpu.memory_space<vmem>>, vector<800x256xf32>
    %c0_1 = arith.constant 0 : index
    %c0_2 = arith.constant 0 : index
    %1 = vector.load %arg2[%c0_1, %c0_2] : memref<256x32xf32, #tpu.memory_space<vmem>>, vector<256x32xf32>
    %cst = arith.constant dense<0.000000e+00> : vector<800x32xf32>
    %2 = tpu.matmul %0, %1, %cst {dimension_numbers = #tpu.dot_dimension_numbers<[1], [0], [0], [1], [0, 0, 1, 1], [], []>} : vector<800x256xf32>, vector<256x32xf32>, vector<800x32xf32> -> vector<800x32xf32>
    %c0_3 = arith.constant 0 : index
    %c0_4 = arith.constant 0 : index
    %3 = vector.load %arg3[%c0_3, %c0_4] : memref<1x32xf32, #tpu.memory_space<vmem>>, vector<1x32xf32>
    %4 = vector.broadcast %3 : vector<1x32xf32> to vector<800x32xf32>
    %5 = arith.addf %2, %4 : vector<800x32xf32>
    %cst_5 = arith.constant 0.000000e+00 : f32
    %6 = vector.broadcast %cst_5 : f32 to vector<800x32xf32>
    %7 = arith.maximumf %5, %6 : vector<800x32xf32>
    %c0_6 = arith.constant 0 : index
    %c0_7 = arith.constant 0 : index
    %8 = vector.load %arg4[%c0_6, %c0_7] : memref<800x32xf32, #tpu.memory_space<vmem>>, vector<800x32xf32>
    tpu.vector_store %arg4[%c0_6, %c0_7], %7 {strides = array<i32>} : memref<800x32xf32, #tpu.memory_space<vmem>>, vector<800x32xf32>,
    return
  }
  func.func @transform_0(%arg0: i32) -> (i32, i32) {
    %c0_i32 = arith.constant 0 : i32
    %c0_i32_0 = arith.constant 0 : i32
    return %arg0, %c0_i32 : i32, i32
  }
  func.func @transform_1(%arg0: i32) -> (i32, i32) {
    %c0_i32 = arith.constant 0 : i32
    %c0_i32_0 = arith.constant 0 : i32
    %c0_i32_1 = arith.constant 0 : i32
    return %c0_i32, %c0_i32_0 : i32, i32
  }
  func.func @transform_2(%arg0: i32) -> (i32, i32) {
    %c0_i32 = arith.constant 0 : i32
    %c0_i32_0 = arith.constant 0 : i32
    %c0_i32_1 = arith.constant 0 : i32
    return %c0_i32, %c0_i32_0 : i32, i32
  }
  func.func @transform_3(%arg0: i32) -> (i32, i32) {
    %c0_i32 = arith.constant 0 : i32
    %c0_i32_0 = arith.constant 0 : i32
    return %arg0, %c0_i32 : i32, i32
  }
}

module attributes {stable_mosaic.version = 11 : i64} {
  func.func @_mm_bias_act_kernel(%arg0: i32, %arg1: memref<162x512xf32, #tpu.memory_space<vmem>>, %arg2: memref<512x64xf32, #tpu.memory_space<vmem>>, %arg3: memref<1x64xf32, #tpu.memory_space<vmem>>, %arg4: memref<162x64xf32, #tpu.memory_space<vmem>>) attributes {dimension_semantics = [#tpu.dimension_semantics<parallel>], iteration_bounds = array<i64: 1>, scalar_prefetch = 0 : i64, scratch_operands = 0 : i64, tpu.core_type = #tpu.core_type<tc>, window_params = [{transform_indices = @transform_0, window_bounds = array<i64: 162, 512>}, {pipeline_mode = #tpu.pipeline_mode<synchronous>, transform_indices = @transform_1, window_bounds = array<i64: 512, 64>}, {pipeline_mode = #tpu.pipeline_mode<synchronous>, transform_indices = @transform_2, window_bounds = array<i64: 1, 64>}, {transform_indices = @transform_3, window_bounds = array<i64: 162, 64>}]} {
    %c0 = arith.constant 0 : index
    %c0_0 = arith.constant 0 : index
    %0 = vector.load %arg1[%c0, %c0_0] : memref<162x512xf32, #tpu.memory_space<vmem>>, vector<162x512xf32>
    %c0_1 = arith.constant 0 : index
    %c0_2 = arith.constant 0 : index
    %1 = vector.load %arg2[%c0_1, %c0_2] : memref<512x64xf32, #tpu.memory_space<vmem>>, vector<512x64xf32>
    %cst = arith.constant dense<0.000000e+00> : vector<162x64xf32>
    %2 = tpu.matmul %0, %1, %cst {dimension_numbers = #tpu.dot_dimension_numbers<[1], [0], [0], [1], [0, 0, 1, 1], [], []>} : vector<162x512xf32>, vector<512x64xf32>, vector<162x64xf32> -> vector<162x64xf32>
    %c0_3 = arith.constant 0 : index
    %c0_4 = arith.constant 0 : index
    %3 = vector.load %arg3[%c0_3, %c0_4] : memref<1x64xf32, #tpu.memory_space<vmem>>, vector<1x64xf32>
    %4 = vector.broadcast %3 : vector<1x64xf32> to vector<162x64xf32>
    %5 = arith.addf %2, %4 : vector<162x64xf32>
    %cst_5 = arith.constant 0.000000e+00 : f32
    %6 = vector.broadcast %cst_5 : f32 to vector<162x64xf32>
    %7 = arith.maximumf %5, %6 : vector<162x64xf32>
    %c0_6 = arith.constant 0 : index
    %c0_7 = arith.constant 0 : index
    %8 = vector.load %arg4[%c0_6, %c0_7] : memref<162x64xf32, #tpu.memory_space<vmem>>, vector<162x64xf32>
    tpu.vector_store %arg4[%c0_6, %c0_7], %7 {strides = array<i32>} : memref<162x64xf32, #tpu.memory_space<vmem>>, vector<162x64xf32>,
    return
  }
  func.func @transform_0(%arg0: i32) -> (i32, i32) {
    %c0_i32 = arith.constant 0 : i32
    %c0_i32_0 = arith.constant 0 : i32
    return %arg0, %c0_i32 : i32, i32
  }
  func.func @transform_1(%arg0: i32) -> (i32, i32) {
    %c0_i32 = arith.constant 0 : i32
    %c0_i32_0 = arith.constant 0 : i32
    %c0_i32_1 = arith.constant 0 : i32
    return %c0_i32, %c0_i32_0 : i32, i32
  }
  func.func @transform_2(%arg0: i32) -> (i32, i32) {
    %c0_i32 = arith.constant 0 : i32
    %c0_i32_0 = arith.constant 0 : i32
    %c0_i32_1 = arith.constant 0 : i32
    return %c0_i32, %c0_i32_0 : i32, i32
  }
  func.func @transform_3(%arg0: i32) -> (i32, i32) {
    %c0_i32 = arith.constant 0 : i32
    %c0_i32_0 = arith.constant 0 : i32
    return %arg0, %c0_i32 : i32, i32
  }
}

module attributes {stable_mosaic.version = 11 : i64} {
  func.func @_mm_bias_act_kernel(%arg0: i32, %arg1: memref<98x576xf32, #tpu.memory_space<vmem>>, %arg2: memref<576x64xf32, #tpu.memory_space<vmem>>, %arg3: memref<1x64xf32, #tpu.memory_space<vmem>>, %arg4: memref<98x64xf32, #tpu.memory_space<vmem>>) attributes {dimension_semantics = [#tpu.dimension_semantics<parallel>], iteration_bounds = array<i64: 1>, scalar_prefetch = 0 : i64, scratch_operands = 0 : i64, tpu.core_type = #tpu.core_type<tc>, window_params = [{transform_indices = @transform_0, window_bounds = array<i64: 98, 576>}, {pipeline_mode = #tpu.pipeline_mode<synchronous>, transform_indices = @transform_1, window_bounds = array<i64: 576, 64>}, {pipeline_mode = #tpu.pipeline_mode<synchronous>, transform_indices = @transform_2, window_bounds = array<i64: 1, 64>}, {transform_indices = @transform_3, window_bounds = array<i64: 98, 64>}]} {
    %c0 = arith.constant 0 : index
    %c0_0 = arith.constant 0 : index
    %0 = vector.load %arg1[%c0, %c0_0] : memref<98x576xf32, #tpu.memory_space<vmem>>, vector<98x576xf32>
    %c0_1 = arith.constant 0 : index
    %c0_2 = arith.constant 0 : index
    %1 = vector.load %arg2[%c0_1, %c0_2] : memref<576x64xf32, #tpu.memory_space<vmem>>, vector<576x64xf32>
    %cst = arith.constant dense<0.000000e+00> : vector<98x64xf32>
    %2 = tpu.matmul %0, %1, %cst {dimension_numbers = #tpu.dot_dimension_numbers<[1], [0], [0], [1], [0, 0, 1, 1], [], []>} : vector<98x576xf32>, vector<576x64xf32>, vector<98x64xf32> -> vector<98x64xf32>
    %c0_3 = arith.constant 0 : index
    %c0_4 = arith.constant 0 : index
    %3 = vector.load %arg3[%c0_3, %c0_4] : memref<1x64xf32, #tpu.memory_space<vmem>>, vector<1x64xf32>
    %4 = vector.broadcast %3 : vector<1x64xf32> to vector<98x64xf32>
    %5 = arith.addf %2, %4 : vector<98x64xf32>
    %cst_5 = arith.constant 0.000000e+00 : f32
    %6 = vector.broadcast %cst_5 : f32 to vector<98x64xf32>
    %7 = arith.maximumf %5, %6 : vector<98x64xf32>
    %c0_6 = arith.constant 0 : index
    %c0_7 = arith.constant 0 : index
    %8 = vector.load %arg4[%c0_6, %c0_7] : memref<98x64xf32, #tpu.memory_space<vmem>>, vector<98x64xf32>
    tpu.vector_store %arg4[%c0_6, %c0_7], %7 {strides = array<i32>} : memref<98x64xf32, #tpu.memory_space<vmem>>, vector<98x64xf32>,
    return
  }
  func.func @transform_0(%arg0: i32) -> (i32, i32) {
    %c0_i32 = arith.constant 0 : i32
    %c0_i32_0 = arith.constant 0 : i32
    return %arg0, %c0_i32 : i32, i32
  }
  func.func @transform_1(%arg0: i32) -> (i32, i32) {
    %c0_i32 = arith.constant 0 : i32
    %c0_i32_0 = arith.constant 0 : i32
    %c0_i32_1 = arith.constant 0 : i32
    return %c0_i32, %c0_i32_0 : i32, i32
  }
  func.func @transform_2(%arg0: i32) -> (i32, i32) {
    %c0_i32 = arith.constant 0 : i32
    %c0_i32_0 = arith.constant 0 : i32
    %c0_i32_1 = arith.constant 0 : i32
    return %c0_i32, %c0_i32_0 : i32, i32
  }
  func.func @transform_3(%arg0: i32) -> (i32, i32) {
    %c0_i32 = arith.constant 0 : i32
    %c0_i32_0 = arith.constant 0 : i32
    return %arg0, %c0_i32 : i32, i32
  }
}

module attributes {stable_mosaic.version = 11 : i64} {
  func.func @_dueling_tail_kernel(%arg0: i32, %arg1: memref<2x3136xf32, #tpu.memory_space<vmem>>, %arg2: memref<3136x1024xf32, #tpu.memory_space<vmem>>, %arg3: memref<1x1024xf32, #tpu.memory_space<vmem>>, %arg4: memref<1024x5xf32, #tpu.memory_space<vmem>>, %arg5: memref<1x5xf32, #tpu.memory_space<vmem>>, %arg6: memref<2x4xf32, #tpu.memory_space<vmem>>) attributes {dimension_semantics = [#tpu.dimension_semantics<parallel>], iteration_bounds = array<i64: 1>, scalar_prefetch = 0 : i64, scratch_operands = 0 : i64, tpu.core_type = #tpu.core_type<tc>, window_params = [{transform_indices = @transform_0, window_bounds = array<i64: 2, 3136>}, {pipeline_mode = #tpu.pipeline_mode<synchronous>, transform_indices = @transform_1, window_bounds = array<i64: 3136, 1024>}, {pipeline_mode = #tpu.pipeline_mode<synchronous>, transform_indices = @transform_2, window_bounds = array<i64: 1, 1024>}, {pipeline_mode = #tpu.pipeline_mode<synchronous>, transform_indices = @transform_3, window_bounds = array<i64: 1024, 5>}, {pipeline_mode = #tpu.pipeline_mode<synchronous>, transform_indices = @transform_4, window_bounds = array<i64: 1, 5>}, {transform_indices = @transform_5, window_bounds = array<i64: 2, 4>}]} {
    %c0 = arith.constant 0 : index
    %c0_0 = arith.constant 0 : index
    %0 = vector.load %arg1[%c0, %c0_0] : memref<2x3136xf32, #tpu.memory_space<vmem>>, vector<2x3136xf32>
    %c0_1 = arith.constant 0 : index
    %c0_2 = arith.constant 0 : index
    %1 = vector.load %arg2[%c0_1, %c0_2] : memref<3136x1024xf32, #tpu.memory_space<vmem>>, vector<3136x1024xf32>
    %cst = arith.constant dense<0.000000e+00> : vector<2x1024xf32>
    %2 = tpu.matmul %0, %1, %cst {dimension_numbers = #tpu.dot_dimension_numbers<[1], [0], [0], [1], [0, 0, 1, 1], [], []>} : vector<2x3136xf32>, vector<3136x1024xf32>, vector<2x1024xf32> -> vector<2x1024xf32>
    %c0_3 = arith.constant 0 : index
    %c0_4 = arith.constant 0 : index
    %3 = vector.load %arg3[%c0_3, %c0_4] : memref<1x1024xf32, #tpu.memory_space<vmem>>, vector<1x1024xf32>
    %4 = vector.broadcast %3 : vector<1x1024xf32> to vector<2x1024xf32>
    %5 = arith.addf %2, %4 : vector<2x1024xf32>
    %cst_5 = arith.constant 0.000000e+00 : f32
    %6 = vector.broadcast %cst_5 : f32 to vector<2x1024xf32>
    %7 = arith.cmpf ogt, %5, %6 : vector<2x1024xf32>
    %cst_6 = arith.constant 0.00999999977 : f32
    %8 = vector.broadcast %cst_6 : f32 to vector<2x1024xf32>
    %9 = arith.mulf %8, %5 : vector<2x1024xf32>
    %10 = arith.select %7, %5, %9 : vector<2x1024xi1>, vector<2x1024xf32>
    %c0_7 = arith.constant 0 : index
    %c0_8 = arith.constant 0 : index
    %11 = vector.load %arg4[%c0_7, %c0_8] : memref<1024x5xf32, #tpu.memory_space<vmem>>, vector<1024x5xf32>
    %cst_9 = arith.constant dense<0.000000e+00> : vector<2x5xf32>
    %12 = tpu.matmul %10, %11, %cst_9 {dimension_numbers = #tpu.dot_dimension_numbers<[1], [0], [0], [1], [0, 0, 1, 1], [], []>} : vector<2x1024xf32>, vector<1024x5xf32>, vector<2x5xf32> -> vector<2x5xf32>
    %c0_10 = arith.constant 0 : index
    %c0_11 = arith.constant 0 : index
    %13 = vector.load %arg5[%c0_10, %c0_11] : memref<1x5xf32, #tpu.memory_space<vmem>>, vector<1x5xf32>
    %14 = vector.broadcast %13 : vector<1x5xf32> to vector<2x5xf32>
    %15 = arith.addf %12, %14 : vector<2x5xf32>
    %16 = vector.extract_strided_slice %15 {offsets = [0, 0], sizes = [2, 4], strides = [1, 1]} : vector<2x5xf32> to vector<2x4xf32>
    %17 = vector.extract_strided_slice %15 {offsets = [0, 4], sizes = [2, 1], strides = [1, 1]} : vector<2x5xf32> to vector<2x1xf32>
    %18 = vector.broadcast %17 : vector<2x1xf32> to vector<2x4xf32>
    %19 = arith.addf %18, %16 : vector<2x4xf32>
    %cst_12 = arith.constant dense<0.000000e+00> : vector<2xf32>
    %20 = vector.multi_reduction <add>, %16, %cst_12 [1] : vector<2x4xf32> to vector<2xf32>
    %21 = vector.shape_cast %20 : vector<2xf32> to vector<2x1xf32>
    %cst_13 = arith.constant 4.000000e+00 : f32
    %22 = vector.broadcast %cst_13 : f32 to vector<2x1xf32>
    %23 = arith.divf %21, %22 : vector<2x1xf32>
    %24 = vector.broadcast %23 : vector<2x1xf32> to vector<2x4xf32>
    %25 = arith.subf %19, %24 : vector<2x4xf32>
    %c0_14 = arith.constant 0 : index
    %c0_15 = arith.constant 0 : index
    %26 = vector.load %arg6[%c0_14, %c0_15] : memref<2x4xf32, #tpu.memory_space<vmem>>, vector<2x4xf32>
    tpu.vector_store %arg6[%c0_14, %c0_15], %25 {strides = array<i32>} : memref<2x4xf32, #tpu.memory_space<vmem>>, vector<2x4xf32>,
    return
  }
  func.func @transform_0(%arg0: i32) -> (i32, i32) {
    %c0_i32 = arith.constant 0 : i32
    %c0_i32_0 = arith.constant 0 : i32
    return %arg0, %c0_i32 : i32, i32
  }
  func.func @transform_1(%arg0: i32) -> (i32, i32) {
    %c0_i32 = arith.constant 0 : i32
    %c0_i32_0 = arith.constant 0 : i32
    %c0_i32_1 = arith.constant 0 : i32
    return %c0_i32, %c0_i32_0 : i32, i32
  }
  func.func @transform_2(%arg0: i32) -> (i32, i32) {
    %c0_i32 = arith.constant 0 : i32
    %c0_i32_0 = arith.constant 0 : i32
    %c0_i32_1 = arith.constant 0 : i32
    return %c0_i32, %c0_i32_0 : i32, i32
  }
  func.func @transform_3(%arg0: i32) -> (i32, i32) {
    %c0_i32 = arith.constant 0 : i32
    %c0_i32_0 = arith.constant 0 : i32
    %c0_i32_1 = arith.constant 0 : i32
    return %c0_i32, %c0_i32_0 : i32, i32
  }
  func.func @transform_4(%arg0: i32) -> (i32, i32) {
    %c0_i32 = arith.constant 0 : i32
    %c0_i32_0 = arith.constant 0 : i32
    %c0_i32_1 = arith.constant 0 : i32
    return %c0_i32, %c0_i32_0 : i32, i32
  }
  func.func @transform_5(%arg0: i32) -> (i32, i32) {
    %c0_i32 = arith.constant 0 : i32
    %c0_i32_0 = arith.constant 0 : i32
    return %arg0, %c0_i32 : i32, i32
  }
}

</mosaic_0001>

<llo_original>
// kernel: dueling_dqn_forward.4
$region0: #{dueling_dqn_forward.4}
  #allocation0 [shape = 'u32[]', space=smem, size = 0x4, offset = 0x4, fixed_abs, tag = 'smem constant byte address 0x4 - core index']
  #allocation1 [shape = 'u32[72,128]{1,0:T(1,128)}', space=vmem, size = 0x9000, scoped, tag = 'internal scratch']
  %s0 = inlined_call_operand.vmem [shape: f32[800,256], index: 0, kind: input, shape index: {}]
  %s1 = inlined_call_operand.vmem [shape: f32[256,32], index: 1, kind: input, shape index: {}]
  %s2 = inlined_call_operand.vmem [shape: f32[1,32], index: 2, kind: input, shape index: {}]
  %s3 = inlined_call_operand.vmem [shape: f32[800,32], index: 3, kind: output, shape index: {}]
  %s4 = sld [smem:[#allocation0]]
  $region22: #{dueling_dqn_forward.4} parent=0
    _
  %s6 = ssub.s32 1, %s4
  %s7 = scalar_select 0, %s6, %s4
  // Predicated region
  $region2: #{dueling_dqn_forward.4} parent=0 // pred_check
    _
  $region3: #{dueling_dqn_forward.4} parent=0 // pred_check_branch
    %9 = sbr.rel (0) target = $region5
  $region4: #{dueling_dqn_forward.4} parent=0 // pred_region
    _
  $region5: #{dueling_dqn_forward.4} parent=0 // pred_fallthru
    _
  // Predicated region
  $region6: #{dueling_dqn_forward.4} parent=0 // pred_check
    _
  $region7: #{dueling_dqn_forward.4} parent=0 // pred_check_branch
    %11 = sbr.rel (0) target = $region9
  $region8: #{dueling_dqn_forward.4} parent=0 // pred_region
    _
  $region9: #{dueling_dqn_forward.4} parent=0 // pred_fallthru
    _
  // Predicated region
  $region10: #{dueling_dqn_forward.4} parent=0 // pred_check
    _
  $region11: #{dueling_dqn_forward.4} parent=0 // pred_check_branch
    %13 = sbr.rel (0) target = $region13
  $region12: #{dueling_dqn_forward.4} parent=0 // pred_region
    _
  $region13: #{dueling_dqn_forward.4} parent=0 // pred_fallthru
    _
  %v14 = vld [vmem:[%s0] sm:$0xff]
  %v15 = vld [vmem:[%s0 + $0x8] sm:$0xff]
  %v16 = vld [vmem:[%s0 + $0x10] sm:$0xff]
  %v17 = vld [vmem:[%s0 + $0x18] sm:$0xff]
  %v18 = vld [vmem:[%s0 + $0x20] sm:$0xff]
  %v19 = vld [vmem:[%s0 + $0x28] sm:$0xff]
  %v20 = vld [vmem:[%s0 + $0x30] sm:$0xff]
  %v21 = vld [vmem:[%s0 + $0x38] sm:$0xff]
  %v22 = vld [vmem:[%s0 + $0x40] sm:$0xff]
  %v23 = vld [vmem:[%s0 + $0x48] sm:$0xff]
  %v24 = vld [vmem:[%s0 + $0x50] sm:$0xff]
  %v25 = vld [vmem:[%s0 + $0x58] sm:$0xff]
  %v26 = vld [vmem:[%s0 + $0x60] sm:$0xff]
  %v27 = vld [vmem:[%s0 + $0x68] sm:$0xff]
  %v28 = vld [vmem:[%s0 + $0x70] sm:$0xff]
  %v29 = vld [vmem:[%s0 + $0x78] sm:$0xff]
  %v30 = vld [vmem:[%s0 + $0x80] sm:$0xff]
  %v31 = vld [vmem:[%s0 + $0x88] sm:$0xff]
  %v32 = vld [vmem:[%s0 + $0x90] sm:$0xff]
  %v33 = vld [vmem:[%s0 + $0x98] sm:$0xff]
  %v34 = vld [vmem:[%s0 + $0xa0] sm:$0xff]
  %v35 = vld [vmem:[%s0 + $0xa8] sm:$0xff]
  %v36 = vld [vmem:[%s0 + $0xb0] sm:$0xff]
  %v37 = vld [vmem:[%s0 + $0xb8] sm:$0xff]
  %v38 = vld [vmem:[%s0 + $0xc0] sm:$0xff]
  %v39 = vld [vmem:[%s0 + $0xc8] sm:$0xff]
  %v40 = vld [vmem:[%s0 + $0xd0] sm:$0xff]
  %v41 = vld [vmem:[%s0 + $0xd8] sm:$0xff]
  %v42 = vld [vmem:[%s0 + $0xe0] sm:$0xff]
  %v43 = vld [vmem:[%s0 + $0xe8] sm:$0xff]
  %v44 = vld [vmem:[%s0 + $0xf0] sm:$0xff]
  %v45 = vld [vmem:[%s0 + $0xf8] sm:$0xff]
  %v46 = vld [vmem:[%s0 + $0x100] sm:$0xff]
  %v47 = vld [vmem:[%s0 + $0x108] sm:$0xff]
  %v48 = vld [vmem:[%s0 + $0x110] sm:$0xff]
  %v49 = vld [vmem:[%s0 + $0x118] sm:$0xff]
  %v50 = vld [vmem:[%s0 + $0x120] sm:$0xff]
  %v51 = vld [vmem:[%s0 + $0x128] sm:$0xff]
  %v52 = vld [vmem:[%s0 + $0x130] sm:$0xff]
  %v53 = vld [vmem:[%s0 + $0x138] sm:$0xff]
  %v54 = vld [vmem:[%s0 + $0x140] sm:$0xff]
  %v55 = vld [vmem:[%s0 + $0x148] sm:$0xff]
  %v56 = vld [vmem:[%s0 + $0x150] sm:$0xff]
  %v57 = vld [vmem:[%s0 + $0x158] sm:$0xff]
  %v58 = vld [vmem:[%s0 + $0x160] sm:$0xff]
  %v59 = vld [vmem:[%s0 + $0x168] sm:$0xff]
  %v60 = vld [vmem:[%s0 + $0x170] sm:$0xff]
  %v61 = vld [vmem:[%s0 + $0x178] sm:$0xff]
  %v62 = vld [vmem:[%s0 + $0x180] sm:$0xff]
  %v63 = vld [vmem:[%s0 + $0x188] sm:$0xff]
  %v64 = vld [vmem:[%s0 + $0x190] sm:$0xff]
  %v65 = vld [vmem:[%s0 + $0x198] sm:$0xff]
  %v66 = vld [vmem:[%s0 + $0x1a0] sm:$0xff]
  %v67 = vld [vmem:[%s0 + $0x1a8] sm:$0xff]
  %v68 = vld [vmem:[%s0 + $0x1b0] sm:$0xff]
  %v69 = vld [vmem:[%s0 + $0x1b8] sm:$0xff]
  %v70 = vld [vmem:[%s0 + $0x1c0] sm:$0xff]
  %v71 = vld [vmem:[%s0 + $0x1c8] sm:$0xff]
  %v72 = vld [vmem:[%s0 + $0x1d0] sm:$0xff]
  %v73 = vld [vmem:[%s0 + $0x1d8] sm:$0xff]
  %v74 = vld [vmem:[%s0 + $0x1e0] sm:$0xff]
  %v75 = vld [vmem:[%s0 + $0x1e8] sm:$0xff]
  %v76 = vld [vmem:[%s0 + $0x1f0] sm:$0xff]
  %v77 = vld [vmem:[%s0 + $0x1f8] sm:$0xff]
  %v78 = vld [vmem:[%s0 + $0x200] sm:$0xff]
  %v79 = vld [vmem:[%s0 + $0x208] sm:$0xff]
  %v80 = vld [vmem:[%s0 + $0x210] sm:$0xff]
  %v81 = vld [vmem:[%s0 + $0x218] sm:$0xff]
  %v82 = vld [vmem:[%s0 + $0x220] sm:$0xff]
  %v83 = vld [vmem:[%s0 + $0x228] sm:$0xff]
  %v84 = vld [vmem:[%s0 + $0x230] sm:$0xff]
  %v85 = vld [vmem:[%s0 + $0x238] sm:$0xff]
  %v86 = vld [vmem:[%s0 + $0x240] sm:$0xff]
  %v87 = vld [vmem:[%s0 + $0x248] sm:$0xff]
  %v88 = vld [vmem:[%s0 + $0x250] sm:$0xff]
  %v89 = vld [vmem:[%s0 + $0x258] sm:$0xff]
  %v90 = vld [vmem:[%s0 + $0x260] sm:$0xff]
  %v91 = vld [vmem:[%s0 + $0x268] sm:$0xff]
  %v92 = vld [vmem:[%s0 + $0x270] sm:$0xff]
  %v93 = vld [vmem:[%s0 + $0x278] sm:$0xff]
  %v94 = vld [vmem:[%s0 + $0x280] sm:$0xff]
  %v95 = vld [vmem:[%s0 + $0x288] sm:$0xff]
  %v96 = vld [vmem:[%s0 + $0x290] sm:$0xff]
  %v97 = vld [vmem:[%s0 + $0x298] sm:$0xff]
  %v98 = vld [vmem:[%s0 + $0x2a0] sm:$0xff]
  %v99 = vld [vmem:[%s0 + $0x2a8] sm:$0xff]
  %v100 = vld [vmem:[%s0 + $0x2b0] sm:$0xff]
  %v101 = vld [vmem:[%s0 + $0x2b8] sm:$0xff]
  %v102 = vld [vmem:[%s0 + $0x2c0] sm:$0xff]
  %v103 = vld [vmem:[%s0 + $0x2c8] sm:$0xff]
  %v104 = vld [vmem:[%s0 + $0x2d0] sm:$0xff]
  %v105 = vld [vmem:[%s0 + $0x2d8] sm:$0xff]
  %v106 = vld [vmem:[%s0 + $0x2e0] sm:$0xff]
  %v107 = vld [vmem:[%s0 + $0x2e8] sm:$0xff]
  %v108 = vld [vmem:[%s0 + $0x2f0] sm:$0xff]
  %v109 = vld [vmem:[%s0 + $0x2f8] sm:$0xff]
  %v110 = vld [vmem:[%s0 + $0x300] sm:$0xff]
  %v111 = vld [vmem:[%s0 + $0x308] sm:$0xff]
  %v112 = vld [vmem:[%s0 + $0x310] sm:$0xff]
  %v113 = vld [vmem:[%s0 + $0x318] sm:$0xff]
  %v114 = vld [vmem:[%s0 + $0x320] sm:$0xff]
  %v115 = vld [vmem:[%s0 + $0x328] sm:$0xff]
  %v116 = vld [vmem:[%s0 + $0x330] sm:$0xff]
  %v117 = vld [vmem:[%s0 + $0x338] sm:$0xff]
  %v118 = vld [vmem:[%s0 + $0x340] sm:$0xff]
  %v119 = vld [vmem:[%s0 + $0x348] sm:$0xff]
  %v120 = vld [vmem:[%s0 + $0x350] sm:$0xff]
  %v121 = vld [vmem:[%s0 + $0x358] sm:$0xff]
  %v122 = vld [vmem:[%s0 + $0x360] sm:$0xff]
  %v123 = vld [vmem:[%s0 + $0x368] sm:$0xff]
  %v124 = vld [vmem:[%s0 + $0x370] sm:$0xff]
  %v125 = vld [vmem:[%s0 + $0x378] sm:$0xff]
  %v126 = vld [vmem:[%s0 + $0x380] sm:$0xff]
  %v127 = vld [vmem:[%s0 + $0x388] sm:$0xff]
  %v128 = vld [vmem:[%s0 + $0x390] sm:$0xff]
  %v129 = vld [vmem:[%s0 + $0x398] sm:$0xff]
  %v130 = vld [vmem:[%s0 + $0x3a0] sm:$0xff]
  %v131 = vld [vmem:[%s0 + $0x3a8] sm:$0xff]
  %v132 = vld [vmem:[%s0 + $0x3b0] sm:$0xff]
  %v133 = vld [vmem:[%s0 + $0x3b8] sm:$0xff]
  %v134 = vld [vmem:[%s0 + $0x3c0] sm:$0xff]
  %v135 = vld [vmem:[%s0 + $0x3c8] sm:$0xff]
  %v136 = vld [vmem:[%s0 + $0x3d0] sm:$0xff]
  %v137 = vld [vmem:[%s0 + $0x3d8] sm:$0xff]
  %v138 = vld [vmem:[%s0 + $0x3e0] sm:$0xff]
  %v139 = vld [vmem:[%s0 + $0x3e8] sm:$0xff]
  %v140 = vld [vmem:[%s0 + $0x3f0] sm:$0xff]
  %v141 = vld [vmem:[%s0 + $0x3f8] sm:$0xff]
  %v142 = vld [vmem:[%s0 + $0x400] sm:$0xff]
  %v143 = vld [vmem:[%s0 + $0x408] sm:$0xff]
  %v144 = vld [vmem:[%s0 + $0x410] sm:$0xff]
  %v145 = vld [vmem:[%s0 + $0x418] sm:$0xff]
  %v146 = vld [vmem:[%s0 + $0x420] sm:$0xff]
  %v147 = vld [vmem:[%s0 + $0x428] sm:$0xff]
  %v148 = vld [vmem:[%s0 + $0x430] sm:$0xff]
  %v149 = vld [vmem:[%s0 + $0x438] sm:$0xff]
  %v150 = vld [vmem:[%s0 + $0x440] sm:$0xff]
  %v151 = vld [vmem:[%s0 + $0x448] sm:$0xff]
  %v152 = vld [vmem:[%s0 + $0x450] sm:$0xff]
  %v153 = vld [vmem:[%s0 + $0x458] sm:$0xff]
  %v154 = vld [vmem:[%s0 + $0x460] sm:$0xff]
  %v155 = vld [vmem:[%s0 + $0x468] sm:$0xff]
  %v156 = vld [vmem:[%s0 + $0x470] sm:$0xff]
  %v157 = vld [vmem:[%s0 + $0x478] sm:$0xff]
  %v158 = vld [vmem:[%s0 + $0x480] sm:$0xff]
  %v159 = vld [vmem:[%s0 + $0x488] sm:$0xff]
  %v160 = vld [vmem:[%s0 + $0x490] sm:$0xff]
  %v161 = vld [vmem:[%s0 + $0x498] sm:$0xff]
  %v162 = vld [vmem:[%s0 + $0x4a0] sm:$0xff]
  %v163 = vld [vmem:[%s0 + $0x4a8] sm:$0xff]
  %v164 = vld [vmem:[%s0 + $0x4b0] sm:$0xff]
  %v165 = vld [vmem:[%s0 + $0x4b8] sm:$0xff]
  %v166 = vld [vmem:[%s0 + $0x4c0] sm:$0xff]
  %v167 = vld [vmem:[%s0 + $0x4c8] sm:$0xff]
  %v168 = vld [vmem:[%s0 + $0x4d0] sm:$0xff]
  %v169 = vld [vmem:[%s0 + $0x4d8] sm:$0xff]
  %v170 = vld [vmem:[%s0 + $0x4e0] sm:$0xff]
  %v171 = vld [vmem:[%s0 + $0x4e8] sm:$0xff]
  %v172 = vld [vmem:[%s0 + $0x4f0] sm:$0xff]
  %v173 = vld [vmem:[%s0 + $0x4f8] sm:$0xff]
  %v174 = vld [vmem:[%s0 + $0x500] sm:$0xff]
  %v175 = vld [vmem:[%s0 + $0x508] sm:$0xff]
  %v176 = vld [vmem:[%s0 + $0x510] sm:$0xff]
  %v177 = vld [vmem:[%s0 + $0x518] sm:$0xff]
  %v178 = vld [vmem:[%s0 + $0x520] sm:$0xff]
  %v179 = vld [vmem:[%s0 + $0x528] sm:$0xff]
  %v180 = vld [vmem:[%s0 + $0x530] sm:$0xff]
  %v181 = vld [vmem:[%s0 + $0x538] sm:$0xff]
  %v182 = vld [vmem:[%s0 + $0x540] sm:$0xff]
  %v183 = vld [vmem:[%s0 + $0x548] sm:$0xff]
  %v184 = vld [vmem:[%s0 + $0x550] sm:$0xff]
  %v185 = vld [vmem:[%s0 + $0x558] sm:$0xff]
  %v186 = vld [vmem:[%s0 + $0x560] sm:$0xff]
  %v187 = vld [vmem:[%s0 + $0x568] sm:$0xff]
  %v188 = vld [vmem:[%s0 + $0x570] sm:$0xff]
  %v189 = vld [vmem:[%s0 + $0x578] sm:$0xff]
  %v190 = vld [vmem:[%s0 + $0x580] sm:$0xff]
  %v191 = vld [vmem:[%s0 + $0x588] sm:$0xff]
  %v192 = vld [vmem:[%s0 + $0x590] sm:$0xff]
  %v193 = vld [vmem:[%s0 + $0x598] sm:$0xff]
  %v194 = vld [vmem:[%s0 + $0x5a0] sm:$0xff]
  %v195 = vld [vmem:[%s0 + $0x5a8] sm:$0xff]
  %v196 = vld [vmem:[%s0 + $0x5b0] sm:$0xff]
  %v197 = vld [vmem:[%s0 + $0x5b8] sm:$0xff]
  %v198 = vld [vmem:[%s0 + $0x5c0] sm:$0xff]
  %v199 = vld [vmem:[%s0 + $0x5c8] sm:$0xff]
  %v200 = vld [vmem:[%s0 + $0x5d0] sm:$0xff]
  %v201 = vld [vmem:[%s0 + $0x5d8] sm:$0xff]
  %v202 = vld [vmem:[%s0 + $0x5e0] sm:$0xff]
  %v203 = vld [vmem:[%s0 + $0x5e8] sm:$0xff]
  %v204 = vld [vmem:[%s0 + $0x5f0] sm:$0xff]
  %v205 = vld [vmem:[%s0 + $0x5f8] sm:$0xff]
  %v206 = vld [vmem:[%s0 + $0x600] sm:$0xff]
  %v207 = vld [vmem:[%s0 + $0x608] sm:$0xff]
  %v208 = vld [vmem:[%s0 + $0x610] sm:$0xff]
  %v209 = vld [vmem:[%s0 + $0x618] sm:$0xff]
  %v210 = vld [vmem:[%s0 + $0x620] sm:$0xff]
  %v211 = vld [vmem:[%s0 + $0x628] sm:$0xff]
  %v212 = vld [vmem:[%s0 + $0x630] sm:$0xff]
  %v213 = vld [vmem:[%s0 + $0x638] sm:$0xff]
  %v214 = vld [vmem:[%s1] sm:$0xff]
  %v215 = vld [vmem:[%s1 + $0x8] sm:$0xff]
  %v216 = vld [vmem:[%s1 + $0x10] sm:$0xff]
  %v217 = vld [vmem:[%s1 + $0x18] sm:$0xff]
  %v218 = vld [vmem:[%s1 + $0x20] sm:$0xff]
  %v219 = vld [vmem:[%s1 + $0x28] sm:$0xff]
  %v220 = vld [vmem:[%s1 + $0x30] sm:$0xff]
  %v221 = vld [vmem:[%s1 + $0x38] sm:$0xff]
  %v222 = vld [vmem:[%s1 + $0x40] sm:$0xff]
  %v223 = vld [vmem:[%s1 + $0x48] sm:$0xff]
  %v224 = vld [vmem:[%s1 + $0x50] sm:$0xff]
  %v225 = vld [vmem:[%s1 + $0x58] sm:$0xff]
  %v226 = vld [vmem:[%s1 + $0x60] sm:$0xff]
  %v227 = vld [vmem:[%s1 + $0x68] sm:$0xff]
  %v228 = vld [vmem:[%s1 + $0x70] sm:$0xff]
  %v229 = vld [vmem:[%s1 + $0x78] sm:$0xff]
  %v230 = vld [vmem:[%s1 + $0x80] sm:$0xff]
  %v231 = vld [vmem:[%s1 + $0x88] sm:$0xff]
  %v232 = vld [vmem:[%s1 + $0x90] sm:$0xff]
  %v233 = vld [vmem:[%s1 + $0x98] sm:$0xff]
  %v234 = vld [vmem:[%s1 + $0xa0] sm:$0xff]
  %v235 = vld [vmem:[%s1 + $0xa8] sm:$0xff]
  %v236 = vld [vmem:[%s1 + $0xb0] sm:$0xff]
  %v237 = vld [vmem:[%s1 + $0xb8] sm:$0xff]
  %v238 = vld [vmem:[%s1 + $0xc0] sm:$0xff]
  %v239 = vld [vmem:[%s1 + $0xc8] sm:$0xff]
  %v240 = vld [vmem:[%s1 + $0xd0] sm:$0xff]
  %v241 = vld [vmem:[%s1 + $0xd8] sm:$0xff]
  %v242 = vld [vmem:[%s1 + $0xe0] sm:$0xff]
  %v243 = vld [vmem:[%s1 + $0xe8] sm:$0xff]
  %v244 = vld [vmem:[%s1 + $0xf0] sm:$0xff]
  %v245 = vld [vmem:[%s1 + $0xf8] sm:$0xff]
  %v246 = vld [vmem:[%s2] sm:$0x1]
  %v248 = vperm.slane %v246, 0
  %250 = vmatpush.msra.mxu0 %v229
  %251 = vmatpush.msra.mxu0 %v228
  %252 = vmatpush.msra.mxu0 %v227
  %253 = vmatpush.msra.mxu0 %v226
  %254 = vmatpush.msra.mxu0 %v225
  %255 = vmatpush.msra.mxu0 %v224
  %256 = vmatpush.msra.mxu0 %v223
  %257 = vmatpush.msra.mxu0 %v222
  %258 = vmatpush.msra.mxu0 %v221
  %259 = vmatpush.msra.mxu0 %v220
  %260 = vmatpush.msra.mxu0 %v219
  %261 = vmatpush.msra.mxu0 %v218
  %262 = vmatpush.msra.mxu0 %v217
  %263 = vmatpush.msra.mxu0 %v216
  %264 = vmatpush.msra.mxu0 %v215
  %265 = vmatpush.msra.mxu0 %v214
  %266 = vmatmul.f32.gmra.mxu0 %v14
  %v267 = vpop.f32.mrf.mxu0
  %v268 = vadd.f32 %v248, %v267
  %269 = vmatmul.f32.gmra.mxu0 %v16
  %v270 = vpop.f32.mrf.mxu0
  %v271 = vadd.f32 %v248, %v270
  %272 = vmatmul.f32.gmra.mxu0 %v18
  %v273 = vpop.f32.mrf.mxu0
  %v274 = vadd.f32 %v248, %v273
  %275 = vmatmul.f32.gmra.mxu0 %v20
  %v276 = vpop.f32.mrf.mxu0
  %v277 = vadd.f32 %v248, %v276
  %278 = vmatmul.f32.gmra.mxu0 %v22
  %v279 = vpop.f32.mrf.mxu0
  %v280 = vadd.f32 %v248, %v279
  %281 = vmatmul.f32.gmra.mxu0 %v24
  %v282 = vpop.f32.mrf.mxu0
  %v283 = vadd.f32 %v248, %v282
  %284 = vmatmul.f32.gmra.mxu0 %v26
  %v285 = vpop.f32.mrf.mxu0
  %v286 = vadd.f32 %v248, %v285
  %287 = vmatmul.f32.gmra.mxu0 %v28
  %v288 = vpop.f32.mrf.mxu0
  %v289 = vadd.f32 %v248, %v288
  %290 = vmatmul.f32.gmra.mxu0 %v30
  %v291 = vpop.f32.mrf.mxu0
  %v292 = vadd.f32 %v248, %v291
  %293 = vmatmul.f32.gmra.mxu0 %v32
  %v294 = vpop.f32.mrf.mxu0
  %v295 = vadd.f32 %v248, %v294
  %296 = vmatmul.f32.gmra.mxu0 %v34
  %v297 = vpop.f32.mrf.mxu0
  %v298 = vadd.f32 %v248, %v297
  %299 = vmatmul.f32.gmra.mxu0 %v36
  %v300 = vpop.f32.mrf.mxu0
  %v301 = vadd.f32 %v248, %v300
  %302 = vmatmul.f32.gmra.mxu0 %v38
  %v303 = vpop.f32.mrf.mxu0
  %v304 = vadd.f32 %v248, %v303
  %305 = vmatmul.f32.gmra.mxu0 %v40
  %v306 = vpop.f32.mrf.mxu0
  %v307 = vadd.f32 %v248, %v306
  %308 = vmatmul.f32.gmra.mxu0 %v42
  %v309 = vpop.f32.mrf.mxu0
  %v310 = vadd.f32 %v248, %v309
  %311 = vmatmul.f32.gmra.mxu0 %v44
  %v312 = vpop.f32.mrf.mxu0
  %v313 = vadd.f32 %v248, %v312
  %314 = vmatmul.f32.gmra.mxu0 %v46
  %v315 = vpop.f32.mrf.mxu0
  %v316 = vadd.f32 %v248, %v315
  %317 = vmatmul.f32.gmra.mxu0 %v48
  %v318 = vpop.f32.mrf.mxu0
  %v319 = vadd.f32 %v248, %v318
  %320 = vmatmul.f32.gmra.mxu0 %v50
  %v321 = vpop.f32.mrf.mxu0
  %v322 = vadd.f32 %v248, %v321
  %323 = vmatmul.f32.gmra.mxu0 %v52
  %v324 = vpop.f32.mrf.mxu0
  %v325 = vadd.f32 %v248, %v324
  %326 = vmatmul.f32.gmra.mxu0 %v54
  %v327 = vpop.f32.mrf.mxu0
  %v328 = vadd.f32 %v248, %v327
  %329 = vmatmul.f32.gmra.mxu0 %v56
  %v330 = vpop.f32.mrf.mxu0
  %v331 = vadd.f32 %v248, %v330
  %332 = vmatmul.f32.gmra.mxu0 %v58
  %v333 = vpop.f32.mrf.mxu0
  %v334 = vadd.f32 %v248, %v333
  %335 = vmatmul.f32.gmra.mxu0 %v60
  %v336 = vpop.f32.mrf.mxu0
  %v337 = vadd.f32 %v248, %v336
  %338 = vmatmul.f32.gmra.mxu0 %v62
  %v339 = vpop.f32.mrf.mxu0
  %v340 = vadd.f32 %v248, %v339
  %341 = vmatmul.f32.gmra.mxu0 %v64
  %v342 = vpop.f32.mrf.mxu0
  %v343 = vadd.f32 %v248, %v342
  %344 = vmatmul.f32.gmra.mxu0 %v66
  %v345 = vpop.f32.mrf.mxu0
  %v346 = vadd.f32 %v248, %v345
  %347 = vmatmul.f32.gmra.mxu0 %v68
  %v348 = vpop.f32.mrf.mxu0
  %v349 = vadd.f32 %v248, %v348
  %350 = vmatmul.f32.gmra.mxu0 %v70
  %v351 = vpop.f32.mrf.mxu0
  %v352 = vadd.f32 %v248, %v351
  %353 = vmatmul.f32.gmra.mxu0 %v72
  %v354 = vpop.f32.mrf.mxu0
  %v355 = vadd.f32 %v248, %v354
  %356 = vmatmul.f32.gmra.mxu0 %v74
  %v357 = vpop.f32.mrf.mxu0
  %v358 = vadd.f32 %v248, %v357
  %359 = vmatmul.f32.gmra.mxu0 %v76
  %v360 = vpop.f32.mrf.mxu0
  %v361 = vadd.f32 %v248, %v360
  %362 = vmatmul.f32.gmra.mxu0 %v78
  %v363 = vpop.f32.mrf.mxu0
  %v364 = vadd.f32 %v248, %v363
  %365 = vmatmul.f32.gmra.mxu0 %v80
  %v366 = vpop.f32.mrf.mxu0
  %v367 = vadd.f32 %v248, %v366
  %368 = vmatmul.f32.gmra.mxu0 %v82
  %v369 = vpop.f32.mrf.mxu0
  %v370 = vadd.f32 %v248, %v369
  %371 = vmatmul.f32.gmra.mxu0 %v84
  %v372 = vpop.f32.mrf.mxu0
  %v373 = vadd.f32 %v248, %v372
  %374 = vmatmul.f32.gmra.mxu0 %v86
  %v375 = vpop.f32.mrf.mxu0
  %v376 = vadd.f32 %v248, %v375
  %377 = vmatmul.f32.gmra.mxu0 %v88
  %v378 = vpop.f32.mrf.mxu0
  %v379 = vadd.f32 %v248, %v378
  %380 = vmatmul.f32.gmra.mxu0 %v90
  %v381 = vpop.f32.mrf.mxu0
  %v382 = vadd.f32 %v248, %v381
  %383 = vmatmul.f32.gmra.mxu0 %v92
  %v384 = vpop.f32.mrf.mxu0
  %v385 = vadd.f32 %v248, %v384
  %386 = vmatmul.f32.gmra.mxu0 %v94
  %v387 = vpop.f32.mrf.mxu0
  %v388 = vadd.f32 %v248, %v387
  %389 = vmatmul.f32.gmra.mxu0 %v96
  %v390 = vpop.f32.mrf.mxu0
  %v391 = vadd.f32 %v248, %v390
  %392 = vmatmul.f32.gmra.mxu0 %v98
  %v393 = vpop.f32.mrf.mxu0
  %v394 = vadd.f32 %v248, %v393
  %395 = vmatmul.f32.gmra.mxu0 %v100
  %v396 = vpop.f32.mrf.mxu0
  %v397 = vadd.f32 %v248, %v396
  %398 = vmatmul.f32.gmra.mxu0 %v102
  %v399 = vpop.f32.mrf.mxu0
  %v400 = vadd.f32 %v248, %v399
  %401 = vmatmul.f32.gmra.mxu0 %v104
  %v402 = vpop.f32.mrf.mxu0
  %v403 = vadd.f32 %v248, %v402
  %404 = vmatmul.f32.gmra.mxu0 %v106
  %v405 = vpop.f32.mrf.mxu0
  %v406 = vadd.f32 %v248, %v405
  %407 = vmatmul.f32.gmra.mxu0 %v108
  %v408 = vpop.f32.mrf.mxu0
  %v409 = vadd.f32 %v248, %v408
  %410 = vmatmul.f32.gmra.mxu0 %v110
  %v411 = vpop.f32.mrf.mxu0
  %v412 = vadd.f32 %v248, %v411
  %413 = vmatmul.f32.gmra.mxu0 %v112
  %v414 = vpop.f32.mrf.mxu0
  %v415 = vadd.f32 %v248, %v414
  %416 = vmatmul.f32.gmra.mxu0 %v114
  %v417 = vpop.f32.mrf.mxu0
  %v418 = vadd.f32 %v248, %v417
  %419 = vmatmul.f32.gmra.mxu0 %v116
  %v420 = vpop.f32.mrf.mxu0
  %v421 = vadd.f32 %v248, %v420
  %422 = vmatmul.f32.gmra.mxu0 %v118
  %v423 = vpop.f32.mrf.mxu0
  %v424 = vadd.f32 %v248, %v423
  %425 = vmatmul.f32.gmra.mxu0 %v120
  %v426 = vpop.f32.mrf.mxu0
  %v427 = vadd.f32 %v248, %v426
  %428 = vmatmul.f32.gmra.mxu0 %v122
  %v429 = vpop.f32.mrf.mxu0
  %v430 = vadd.f32 %v248, %v429
  %431 = vmatmul.f32.gmra.mxu0 %v124
  %v432 = vpop.f32.mrf.mxu0
  %v433 = vadd.f32 %v248, %v432
  %434 = vmatmul.f32.gmra.mxu0 %v126
  %v435 = vpop.f32.mrf.mxu0
  %v436 = vadd.f32 %v248, %v435
  %437 = vmatmul.f32.gmra.mxu0 %v128
  %v438 = vpop.f32.mrf.mxu0
  %v439 = vadd.f32 %v248, %v438
  %440 = vmatmul.f32.gmra.mxu0 %v130
  %v441 = vpop.f32.mrf.mxu0
  %v442 = vadd.f32 %v248, %v441
  %443 = vmatmul.f32.gmra.mxu0 %v132
  %v444 = vpop.f32.mrf.mxu0
  %v445 = vadd.f32 %v248, %v444
  %446 = vmatmul.f32.gmra.mxu0 %v134
  %v447 = vpop.f32.mrf.mxu0
  %v448 = vadd.f32 %v248, %v447
  %449 = vmatmul.f32.gmra.mxu0 %v136
  %v450 = vpop.f32.mrf.mxu0
  %v451 = vadd.f32 %v248, %v450
  %452 = vmatmul.f32.gmra.mxu0 %v138
  %v453 = vpop.f32.mrf.mxu0
  %v454 = vadd.f32 %v248, %v453
  %455 = vmatmul.f32.gmra.mxu0 %v140
  %v456 = vpop.f32.mrf.mxu0
  %v457 = vadd.f32 %v248, %v456
  %458 = vmatmul.f32.gmra.mxu0 %v142
  %v459 = vpop.f32.mrf.mxu0
  %v460 = vadd.f32 %v248, %v459
  %461 = vmatmul.f32.gmra.mxu0 %v144
  %v462 = vpop.f32.mrf.mxu0
  %v463 = vadd.f32 %v248, %v462
  %464 = vmatmul.f32.gmra.mxu0 %v146
  %v465 = vpop.f32.mrf.mxu0
  %v466 = vadd.f32 %v248, %v465
  %467 = vmatmul.f32.gmra.mxu0 %v148
  %v468 = vpop.f32.mrf.mxu0
  %v469 = vadd.f32 %v248, %v468
  %470 = vmatmul.f32.gmra.mxu0 %v150
  %v471 = vpop.f32.mrf.mxu0
  %v472 = vadd.f32 %v248, %v471
  %473 = vmatmul.f32.gmra.mxu0 %v152
  %v474 = vpop.f32.mrf.mxu0
  %v475 = vadd.f32 %v248, %v474
  %476 = vmatmul.f32.gmra.mxu0 %v154
  %v477 = vpop.f32.mrf.mxu0
  %v478 = vadd.f32 %v248, %v477
  %479 = vmatmul.f32.gmra.mxu0 %v156
  %v480 = vpop.f32.mrf.mxu0
  %v481 = vadd.f32 %v248, %v480
  %482 = vmatmul.f32.gmra.mxu0 %v158
  %v483 = vpop.f32.mrf.mxu0
  %v484 = vadd.f32 %v248, %v483
  %485 = vmatmul.f32.gmra.mxu0 %v160
  %v486 = vpop.f32.mrf.mxu0
  %v487 = vadd.f32 %v248, %v486
  %488 = vmatmul.f32.gmra.mxu0 %v162
  %v489 = vpop.f32.mrf.mxu0
  %v490 = vadd.f32 %v248, %v489
  %491 = vmatmul.f32.gmra.mxu0 %v164
  %v492 = vpop.f32.mrf.mxu0
  %v493 = vadd.f32 %v248, %v492
  %494 = vmatmul.f32.gmra.mxu0 %v166
  %v495 = vpop.f32.mrf.mxu0
  %v496 = vadd.f32 %v248, %v495
  %497 = vmatmul.f32.gmra.mxu0 %v168
  %v498 = vpop.f32.mrf.mxu0
  %v499 = vadd.f32 %v248, %v498
  %500 = vmatmul.f32.gmra.mxu0 %v170
  %v501 = vpop.f32.mrf.mxu0
  %v502 = vadd.f32 %v248, %v501
  %503 = vmatmul.f32.gmra.mxu0 %v172
  %v504 = vpop.f32.mrf.mxu0
  %v505 = vadd.f32 %v248, %v504
  %506 = vmatmul.f32.gmra.mxu0 %v174
  %v507 = vpop.f32.mrf.mxu0
  %v508 = vadd.f32 %v248, %v507
  %509 = vmatmul.f32.gmra.mxu0 %v176
  %v510 = vpop.f32.mrf.mxu0
  %v511 = vadd.f32 %v248, %v510
  %512 = vmatmul.f32.gmra.mxu0 %v178
  %v513 = vpop.f32.mrf.mxu0
  %v514 = vadd.f32 %v248, %v513
  %515 = vmatmul.f32.gmra.mxu0 %v180
  %v516 = vpop.f32.mrf.mxu0
  %v517 = vadd.f32 %v248, %v516
  %518 = vmatmul.f32.gmra.mxu0 %v182
  %v519 = vpop.f32.mrf.mxu0
  %v520 = vadd.f32 %v248, %v519
  %521 = vmatmul.f32.gmra.mxu0 %v184
  %v522 = vpop.f32.mrf.mxu0
  %v523 = vadd.f32 %v248, %v522
  %524 = vmatmul.f32.gmra.mxu0 %v186
  %v525 = vpop.f32.mrf.mxu0
  %v526 = vadd.f32 %v248, %v525
  %527 = vmatmul.f32.gmra.mxu0 %v188
  %v528 = vpop.f32.mrf.mxu0
  %v529 = vadd.f32 %v248, %v528
  %530 = vmatmul.f32.gmra.mxu0 %v190
  %v531 = vpop.f32.mrf.mxu0
  %v532 = vadd.f32 %v248, %v531
  %533 = vmatmul.f32.gmra.mxu0 %v192
  %v534 = vpop.f32.mrf.mxu0
  %v535 = vadd.f32 %v248, %v534
  %536 = vmatmul.f32.gmra.mxu0 %v194
  %v537 = vpop.f32.mrf.mxu0
  %v538 = vadd.f32 %v248, %v537
  %539 = vmatmul.f32.gmra.mxu0 %v196
  %v540 = vpop.f32.mrf.mxu0
  %v541 = vadd.f32 %v248, %v540
  %542 = vmatmul.f32.gmra.mxu0 %v198
  %v543 = vpop.f32.mrf.mxu0
  %v544 = vadd.f32 %v248, %v543
  %545 = vmatmul.f32.gmra.mxu0 %v200
  %v546 = vpop.f32.mrf.mxu0
  %v547 = vadd.f32 %v248, %v546
  %548 = vmatmul.f32.gmra.mxu0 %v202
  %v549 = vpop.f32.mrf.mxu0
  %v550 = vadd.f32 %v248, %v549
  %551 = vmatmul.f32.gmra.mxu0 %v204
  %v552 = vpop.f32.mrf.mxu0
  %v553 = vadd.f32 %v248, %v552
  %554 = vmatmul.f32.gmra.mxu0 %v206
  %v555 = vpop.f32.mrf.mxu0
  %v556 = vadd.f32 %v248, %v555
  %557 = vmatmul.f32.gmra.mxu0 %v208
  %v558 = vpop.f32.mrf.mxu0
  %v559 = vadd.f32 %v248, %v558
  %560 = vmatmul.f32.gmra.mxu0 %v210
  %v561 = vpop.f32.mrf.mxu0
  %v562 = vadd.f32 %v248, %v561
  %563 = vmatmul.f32.gmra.mxu0 %v212
  %v564 = vpop.f32.mrf.mxu0
  %v565 = vadd.f32 %v248, %v564
  %566 = vdwg.mxu0
  %567 = vmatpush.msra.mxu0 %v245
  %568 = vmatpush.msra.mxu0 %v244
  %569 = vmatpush.msra.mxu0 %v243
  %570 = vmatpush.msra.mxu0 %v242
  %571 = vmatpush.msra.mxu0 %v241
  %572 = vmatpush.msra.mxu0 %v240
  %573 = vmatpush.msra.mxu0 %v239
  %574 = vmatpush.msra.mxu0 %v238
  %575 = vmatpush.msra.mxu0 %v237
  %576 = vmatpush.msra.mxu0 %v236
  %577 = vmatpush.msra.mxu0 %v235
  %578 = vmatpush.msra.mxu0 %v234
  %579 = vmatpush.msra.mxu0 %v233
  %580 = vmatpush.msra.mxu0 %v232
  %581 = vmatpush.msra.mxu0 %v231
  %582 = vmatpush.msra.mxu0 %v230
  %583 = vmatmul.f32.gmra.mxu0 %v15
  %v584 = vpop.f32.mrf.mxu0
  %v585 = vadd.f32 %v268, %v584
  %586 = vmatmul.f32.gmra.mxu0 %v17
  %v587 = vpop.f32.mrf.mxu0
  %v588 = vadd.f32 %v271, %v587
  %589 = vmatmul.f32.gmra.mxu0 %v19
  %v590 = vpop.f32.mrf.mxu0
  %v591 = vadd.f32 %v274, %v590
  %592 = vmatmul.f32.gmra.mxu0 %v21
  %v593 = vpop.f32.mrf.mxu0
  %v594 = vadd.f32 %v277, %v593
  %595 = vmatmul.f32.gmra.mxu0 %v23
  %v596 = vpop.f32.mrf.mxu0
  %v597 = vadd.f32 %v280, %v596
  %598 = vmatmul.f32.gmra.mxu0 %v25
  %v599 = vpop.f32.mrf.mxu0
  %v600 = vadd.f32 %v283, %v599
  %601 = vmatmul.f32.gmra.mxu0 %v27
  %v602 = vpop.f32.mrf.mxu0
  %v603 = vadd.f32 %v286, %v602
  %604 = vmatmul.f32.gmra.mxu0 %v29
  %v605 = vpop.f32.mrf.mxu0
  %v606 = vadd.f32 %v289, %v605
  %607 = vmatmul.f32.gmra.mxu0 %v31
  %v608 = vpop.f32.mrf.mxu0
  %v609 = vadd.f32 %v292, %v608
  %610 = vmatmul.f32.gmra.mxu0 %v33
  %v611 = vpop.f32.mrf.mxu0
  %v612 = vadd.f32 %v295, %v611
  %613 = vmatmul.f32.gmra.mxu0 %v35
  %v614 = vpop.f32.mrf.mxu0
  %v615 = vadd.f32 %v298, %v614
  %616 = vmatmul.f32.gmra.mxu0 %v37
  %v617 = vpop.f32.mrf.mxu0
  %v618 = vadd.f32 %v301, %v617
  %619 = vmatmul.f32.gmra.mxu0 %v39
  %v620 = vpop.f32.mrf.mxu0
  %v621 = vadd.f32 %v304, %v620
  %622 = vmatmul.f32.gmra.mxu0 %v41
  %v623 = vpop.f32.mrf.mxu0
  %v624 = vadd.f32 %v307, %v623
  %625 = vmatmul.f32.gmra.mxu0 %v43
  %v626 = vpop.f32.mrf.mxu0
  %v627 = vadd.f32 %v310, %v626
  %628 = vmatmul.f32.gmra.mxu0 %v45
  %v629 = vpop.f32.mrf.mxu0
  %v630 = vadd.f32 %v313, %v629
  %631 = vmatmul.f32.gmra.mxu0 %v47
  %v632 = vpop.f32.mrf.mxu0
  %v633 = vadd.f32 %v316, %v632
  %634 = vmatmul.f32.gmra.mxu0 %v49
  %v635 = vpop.f32.mrf.mxu0
  %v636 = vadd.f32 %v319, %v635
  %637 = vmatmul.f32.gmra.mxu0 %v51
  %v638 = vpop.f32.mrf.mxu0
  %v639 = vadd.f32 %v322, %v638
  %640 = vmatmul.f32.gmra.mxu0 %v53
  %v641 = vpop.f32.mrf.mxu0
  %v642 = vadd.f32 %v325, %v641
  %643 = vmatmul.f32.gmra.mxu0 %v55
  %v644 = vpop.f32.mrf.mxu0
  %v645 = vadd.f32 %v328, %v644
  %646 = vmatmul.f32.gmra.mxu0 %v57
  %v647 = vpop.f32.mrf.mxu0
  %v648 = vadd.f32 %v331, %v647
  %649 = vmatmul.f32.gmra.mxu0 %v59
  %v650 = vpop.f32.mrf.mxu0
  %v651 = vadd.f32 %v334, %v650
  %652 = vmatmul.f32.gmra.mxu0 %v61
  %v653 = vpop.f32.mrf.mxu0
  %v654 = vadd.f32 %v337, %v653
  %655 = vmatmul.f32.gmra.mxu0 %v63
  %v656 = vpop.f32.mrf.mxu0
  %v657 = vadd.f32 %v340, %v656
  %658 = vmatmul.f32.gmra.mxu0 %v65
  %v659 = vpop.f32.mrf.mxu0
  %v660 = vadd.f32 %v343, %v659
  %661 = vmatmul.f32.gmra.mxu0 %v67
  %v662 = vpop.f32.mrf.mxu0
  %v663 = vadd.f32 %v346, %v662
  %664 = vmatmul.f32.gmra.mxu0 %v69
  %v665 = vpop.f32.mrf.mxu0
  %v666 = vadd.f32 %v349, %v665
  %667 = vmatmul.f32.gmra.mxu0 %v71
  %v668 = vpop.f32.mrf.mxu0
  %v669 = vadd.f32 %v352, %v668
  %670 = vmatmul.f32.gmra.mxu0 %v73
  %v671 = vpop.f32.mrf.mxu0
  %v672 = vadd.f32 %v355, %v671
  %673 = vmatmul.f32.gmra.mxu0 %v75
  %v674 = vpop.f32.mrf.mxu0
  %v675 = vadd.f32 %v358, %v674
  %676 = vmatmul.f32.gmra.mxu0 %v77
  %v677 = vpop.f32.mrf.mxu0
  %v678 = vadd.f32 %v361, %v677
  %679 = vmatmul.f32.gmra.mxu0 %v79
  %v680 = vpop.f32.mrf.mxu0
  %v681 = vadd.f32 %v364, %v680
  %682 = vmatmul.f32.gmra.mxu0 %v81
  %v683 = vpop.f32.mrf.mxu0
  %v684 = vadd.f32 %v367, %v683
  %685 = vmatmul.f32.gmra.mxu0 %v83
  %v686 = vpop.f32.mrf.mxu0
  %v687 = vadd.f32 %v370, %v686
  %688 = vmatmul.f32.gmra.mxu0 %v85
  %v689 = vpop.f32.mrf.mxu0
  %v690 = vadd.f32 %v373, %v689
  %691 = vmatmul.f32.gmra.mxu0 %v87
  %v692 = vpop.f32.mrf.mxu0
  %v693 = vadd.f32 %v376, %v692
  %694 = vmatmul.f32.gmra.mxu0 %v89
  %v695 = vpop.f32.mrf.mxu0
  %v696 = vadd.f32 %v379, %v695
  %697 = vmatmul.f32.gmra.mxu0 %v91
  %v698 = vpop.f32.mrf.mxu0
  %v699 = vadd.f32 %v382, %v698
  %700 = vmatmul.f32.gmra.mxu0 %v93
  %v701 = vpop.f32.mrf.mxu0
  %v702 = vadd.f32 %v385, %v701
  %703 = vmatmul.f32.gmra.mxu0 %v95
  %v704 = vpop.f32.mrf.mxu0
  %v705 = vadd.f32 %v388, %v704
  %706 = vmatmul.f32.gmra.mxu0 %v97
  %v707 = vpop.f32.mrf.mxu0
  %v708 = vadd.f32 %v391, %v707
  %709 = vmatmul.f32.gmra.mxu0 %v99
  %v710 = vpop.f32.mrf.mxu0
  %v711 = vadd.f32 %v394, %v710
  %712 = vmatmul.f32.gmra.mxu0 %v101
  %v713 = vpop.f32.mrf.mxu0
  %v714 = vadd.f32 %v397, %v713
  %715 = vmatmul.f32.gmra.mxu0 %v103
  %v716 = vpop.f32.mrf.mxu0
  %v717 = vadd.f32 %v400, %v716
  %718 = vmatmul.f32.gmra.mxu0 %v105
  %v719 = vpop.f32.mrf.mxu0
  %v720 = vadd.f32 %v403, %v719
  %721 = vmatmul.f32.gmra.mxu0 %v107
  %v722 = vpop.f32.mrf.mxu0
  %v723 = vadd.f32 %v406, %v722
  %724 = vmatmul.f32.gmra.mxu0 %v109
  %v725 = vpop.f32.mrf.mxu0
  %v726 = vadd.f32 %v409, %v725
  %727 = vmatmul.f32.gmra.mxu0 %v111
  %v728 = vpop.f32.mrf.mxu0
  %v729 = vadd.f32 %v412, %v728
  %730 = vmatmul.f32.gmra.mxu0 %v113
  %v731 = vpop.f32.mrf.mxu0
  %v732 = vadd.f32 %v415, %v731
  %733 = vmatmul.f32.gmra.mxu0 %v115
  %v734 = vpop.f32.mrf.mxu0
  %v735 = vadd.f32 %v418, %v734
  %736 = vmatmul.f32.gmra.mxu0 %v117
  %v737 = vpop.f32.mrf.mxu0
  %v738 = vadd.f32 %v421, %v737
  %739 = vmatmul.f32.gmra.mxu0 %v119
  %v740 = vpop.f32.mrf.mxu0
  %v741 = vadd.f32 %v424, %v740
  %742 = vmatmul.f32.gmra.mxu0 %v121
  %v743 = vpop.f32.mrf.mxu0
  %v744 = vadd.f32 %v427, %v743
  %745 = vmatmul.f32.gmra.mxu0 %v123
  %v746 = vpop.f32.mrf.mxu0
  %v747 = vadd.f32 %v430, %v746
  %748 = vmatmul.f32.gmra.mxu0 %v125
  %v749 = vpop.f32.mrf.mxu0
  %v750 = vadd.f32 %v433, %v749
  %751 = vmatmul.f32.gmra.mxu0 %v127
  %v752 = vpop.f32.mrf.mxu0
  %v753 = vadd.f32 %v436, %v752
  %754 = vmatmul.f32.gmra.mxu0 %v129
  %v755 = vpop.f32.mrf.mxu0
  %v756 = vadd.f32 %v439, %v755
  %757 = vmatmul.f32.gmra.mxu0 %v131
  %v758 = vpop.f32.mrf.mxu0
  %v759 = vadd.f32 %v442, %v758
  %760 = vmatmul.f32.gmra.mxu0 %v133
  %v761 = vpop.f32.mrf.mxu0
  %v762 = vadd.f32 %v445, %v761
  %763 = vmatmul.f32.gmra.mxu0 %v135
  %v764 = vpop.f32.mrf.mxu0
  %v765 = vadd.f32 %v448, %v764
  %766 = vmatmul.f32.gmra.mxu0 %v137
  %v767 = vpop.f32.mrf.mxu0
  %v768 = vadd.f32 %v451, %v767
  %769 = vmatmul.f32.gmra.mxu0 %v139
  %v770 = vpop.f32.mrf.mxu0
  %v771 = vadd.f32 %v454, %v770
  %772 = vmatmul.f32.gmra.mxu0 %v141
  %v773 = vpop.f32.mrf.mxu0
  %v774 = vadd.f32 %v457, %v773
  %775 = vmatmul.f32.gmra.mxu0 %v143
  %v776 = vpop.f32.mrf.mxu0
  %v777 = vadd.f32 %v460, %v776
  %778 = vmatmul.f32.gmra.mxu0 %v145
  %v779 = vpop.f32.mrf.mxu0
  %v780 = vadd.f32 %v463, %v779
  %781 = vmatmul.f32.gmra.mxu0 %v147
  %v782 = vpop.f32.mrf.mxu0
  %v783 = vadd.f32 %v466, %v782
  %784 = vmatmul.f32.gmra.mxu0 %v149
  %v785 = vpop.f32.mrf.mxu0
  %v786 = vadd.f32 %v469, %v785
  %787 = vmatmul.f32.gmra.mxu0 %v151
  %v788 = vpop.f32.mrf.mxu0
  %v789 = vadd.f32 %v472, %v788
  %790 = vmatmul.f32.gmra.mxu0 %v153
  %v791 = vpop.f32.mrf.mxu0
  %v792 = vadd.f32 %v475, %v791
  %793 = vmatmul.f32.gmra.mxu0 %v155
  %v794 = vpop.f32.mrf.mxu0
  %v795 = vadd.f32 %v478, %v794
  %796 = vmatmul.f32.gmra.mxu0 %v157
  %v797 = vpop.f32.mrf.mxu0
  %v798 = vadd.f32 %v481, %v797
  %799 = vmatmul.f32.gmra.mxu0 %v159
  %v800 = vpop.f32.mrf.mxu0
  %v801 = vadd.f32 %v484, %v800
  %802 = vmatmul.f32.gmra.mxu0 %v161
  %v803 = vpop.f32.mrf.mxu0
  %v804 = vadd.f32 %v487, %v803
  %805 = vmatmul.f32.gmra.mxu0 %v163
  %v806 = vpop.f32.mrf.mxu0
  %v807 = vadd.f32 %v490, %v806
  %808 = vmatmul.f32.gmra.mxu0 %v165
  %v809 = vpop.f32.mrf.mxu0
  %v810 = vadd.f32 %v493, %v809
  %811 = vmatmul.f32.gmra.mxu0 %v167
  %v812 = vpop.f32.mrf.mxu0
  %v813 = vadd.f32 %v496, %v812
  %814 = vmatmul.f32.gmra.mxu0 %v169
  %v815 = vpop.f32.mrf.mxu0
  %v816 = vadd.f32 %v499, %v815
  %817 = vmatmul.f32.gmra.mxu0 %v171
  %v818 = vpop.f32.mrf.mxu0
  %v819 = vadd.f32 %v502, %v818
  %820 = vmatmul.f32.gmra.mxu0 %v173
  %v821 = vpop.f32.mrf.mxu0
  %v822 = vadd.f32 %v505, %v821
  %823 = vmatmul.f32.gmra.mxu0 %v175
  %v824 = vpop.f32.mrf.mxu0
  %v825 = vadd.f32 %v508, %v824
  %826 = vmatmul.f32.gmra.mxu0 %v177
  %v827 = vpop.f32.mrf.mxu0
  %v828 = vadd.f32 %v511, %v827
  %829 = vmatmul.f32.gmra.mxu0 %v179
  %v830 = vpop.f32.mrf.mxu0
  %v831 = vadd.f32 %v514, %v830
  %832 = vmatmul.f32.gmra.mxu0 %v181
  %v833 = vpop.f32.mrf.mxu0
  %v834 = vadd.f32 %v517, %v833
  %835 = vmatmul.f32.gmra.mxu0 %v183
  %v836 = vpop.f32.mrf.mxu0
  %v837 = vadd.f32 %v520, %v836
  %838 = vmatmul.f32.gmra.mxu0 %v185
  %v839 = vpop.f32.mrf.mxu0
  %v840 = vadd.f32 %v523, %v839
  %841 = vmatmul.f32.gmra.mxu0 %v187
  %v842 = vpop.f32.mrf.mxu0
  %v843 = vadd.f32 %v526, %v842
  %844 = vmatmul.f32.gmra.mxu0 %v189
  %v845 = vpop.f32.mrf.mxu0
  %v846 = vadd.f32 %v529, %v845
  %847 = vmatmul.f32.gmra.mxu0 %v191
  %v848 = vpop.f32.mrf.mxu0
  %v849 = vadd.f32 %v532, %v848
  %850 = vmatmul.f32.gmra.mxu0 %v193
  %v851 = vpop.f32.mrf.mxu0
  %v852 = vadd.f32 %v535, %v851
  %853 = vmatmul.f32.gmra.mxu0 %v195
  %v854 = vpop.f32.mrf.mxu0
  %v855 = vadd.f32 %v538, %v854
  %856 = vmatmul.f32.gmra.mxu0 %v197
  %v857 = vpop.f32.mrf.mxu0
  %v858 = vadd.f32 %v541, %v857
  %859 = vmatmul.f32.gmra.mxu0 %v199
  %v860 = vpop.f32.mrf.mxu0
  %v861 = vadd.f32 %v544, %v860
  %862 = vmatmul.f32.gmra.mxu0 %v201
  %v863 = vpop.f32.mrf.mxu0
  %v864 = vadd.f32 %v547, %v863
  %865 = vmatmul.f32.gmra.mxu0 %v203
  %v866 = vpop.f32.mrf.mxu0
  %v867 = vadd.f32 %v550, %v866
  %868 = vmatmul.f32.gmra.mxu0 %v205
  %v869 = vpop.f32.mrf.mxu0
  %v870 = vadd.f32 %v553, %v869
  %871 = vmatmul.f32.gmra.mxu0 %v207
  %v872 = vpop.f32.mrf.mxu0
  %v873 = vadd.f32 %v556, %v872
  %874 = vmatmul.f32.gmra.mxu0 %v209
  %v875 = vpop.f32.mrf.mxu0
  %v876 = vadd.f32 %v559, %v875
  %877 = vmatmul.f32.gmra.mxu0 %v211
  %v878 = vpop.f32.mrf.mxu0
  %v879 = vadd.f32 %v562, %v878
  %880 = vmatmul.f32.gmra.mxu0 %v213
  %v881 = vpop.f32.mrf.mxu0
  %v882 = vadd.f32 %v565, %v881
  %883 = vdwg.mxu0
  %v884 = vmax.f32 %v585, 0.0
  %v885 = vmax.f32 %v588, 0.0
  %v886 = vmax.f32 %v591, 0.0
  %v887 = vmax.f32 %v594, 0.0
  %v888 = vmax.f32 %v597, 0.0
  %v889 = vmax.f32 %v600, 0.0
  %v890 = vmax.f32 %v603, 0.0
  %v891 = vmax.f32 %v606, 0.0
  %v892 = vmax.f32 %v609, 0.0
  %v893 = vmax.f32 %v612, 0.0
  %v894 = vmax.f32 %v615, 0.0
  %v895 = vmax.f32 %v618, 0.0
  %v896 = vmax.f32 %v621, 0.0
  %v897 = vmax.f32 %v624, 0.0
  %v898 = vmax.f32 %v627, 0.0
  %v899 = vmax.f32 %v630, 0.0
  %v900 = vmax.f32 %v633, 0.0
  %v901 = vmax.f32 %v636, 0.0
  %v902 = vmax.f32 %v639, 0.0
  %v903 = vmax.f32 %v642, 0.0
  %v904 = vmax.f32 %v645, 0.0
  %v905 = vmax.f32 %v648, 0.0
  %v906 = vmax.f32 %v651, 0.0
  %v907 = vmax.f32 %v654, 0.0
  %v908 = vmax.f32 %v657, 0.0
  %v909 = vmax.f32 %v660, 0.0
  %v910 = vmax.f32 %v663, 0.0
  %v911 = vmax.f32 %v666, 0.0
  %v912 = vmax.f32 %v669, 0.0
  %v913 = vmax.f32 %v672, 0.0
  %v914 = vmax.f32 %v675, 0.0
  %v915 = vmax.f32 %v678, 0.0
  %v916 = vmax.f32 %v681, 0.0
  %v917 = vmax.f32 %v684, 0.0
  %v918 = vmax.f32 %v687, 0.0
  %v919 = vmax.f32 %v690, 0.0
  %v920 = vmax.f32 %v693, 0.0
  %v921 = vmax.f32 %v696, 0.0
  %v922 = vmax.f32 %v699, 0.0
  %v923 = vmax.f32 %v702, 0.0
  %v924 = vmax.f32 %v705, 0.0
  %v925 = vmax.f32 %v708, 0.0
  %v926 = vmax.f32 %v711, 0.0
  %v927 = vmax.f32 %v714, 0.0
  %v928 = vmax.f32 %v717, 0.0
  %v929 = vmax.f32 %v720, 0.0
  %v930 = vmax.f32 %v723, 0.0
  %v931 = vmax.f32 %v726, 0.0
  %v932 = vmax.f32 %v729, 0.0
  %v933 = vmax.f32 %v732, 0.0
  %v934 = vmax.f32 %v735, 0.0
  %v935 = vmax.f32 %v738, 0.0
  %v936 = vmax.f32 %v741, 0.0
  %v937 = vmax.f32 %v744, 0.0
  %v938 = vmax.f32 %v747, 0.0
  %v939 = vmax.f32 %v750, 0.0
  %v940 = vmax.f32 %v753, 0.0
  %v941 = vmax.f32 %v756, 0.0
  %v942 = vmax.f32 %v759, 0.0
  %v943 = vmax.f32 %v762, 0.0
  %v944 = vmax.f32 %v765, 0.0
  %v945 = vmax.f32 %v768, 0.0
  %v946 = vmax.f32 %v771, 0.0
  %v947 = vmax.f32 %v774, 0.0
  %v948 = vmax.f32 %v777, 0.0
  %v949 = vmax.f32 %v780, 0.0
  %v950 = vmax.f32 %v783, 0.0
  %v951 = vmax.f32 %v786, 0.0
  %v952 = vmax.f32 %v789, 0.0
  %v953 = vmax.f32 %v792, 0.0
  %v954 = vmax.f32 %v795, 0.0
  %v955 = vmax.f32 %v798, 0.0
  %v956 = vmax.f32 %v801, 0.0
  %v957 = vmax.f32 %v804, 0.0
  %v958 = vmax.f32 %v807, 0.0
  %v959 = vmax.f32 %v810, 0.0
  %v960 = vmax.f32 %v813, 0.0
  %v961 = vmax.f32 %v816, 0.0
  %v962 = vmax.f32 %v819, 0.0
  %v963 = vmax.f32 %v822, 0.0
  %v964 = vmax.f32 %v825, 0.0
  %v965 = vmax.f32 %v828, 0.0
  %v966 = vmax.f32 %v831, 0.0
  %v967 = vmax.f32 %v834, 0.0
  %v968 = vmax.f32 %v837, 0.0
  %v969 = vmax.f32 %v840, 0.0
  %v970 = vmax.f32 %v843, 0.0
  %v971 = vmax.f32 %v846, 0.0
  %v972 = vmax.f32 %v849, 0.0
  %v973 = vmax.f32 %v852, 0.0
  %v974 = vmax.f32 %v855, 0.0
  %v975 = vmax.f32 %v858, 0.0
  %v976 = vmax.f32 %v861, 0.0
  %v977 = vmax.f32 %v864, 0.0
  %v978 = vmax.f32 %v867, 0.0
  %v979 = vmax.f32 %v870, 0.0
  %v980 = vmax.f32 %v873, 0.0
  %v981 = vmax.f32 %v876, 0.0
  %v982 = vmax.f32 %v879, 0.0
  %v983 = vmax.f32 %v882, 0.0
  %vm984 = vcmask 261120
  %985 = vst.msk [vmem:[%s3] sm:$0xff] %vm984, %v884
  %986 = vst.msk [vmem:[%s3 + $0x8] sm:$0xff] %vm984, %v885
  %987 = vst.msk [vmem:[%s3 + $0x10] sm:$0xff] %vm984, %v886
  %988 = vst.msk [vmem:[%s3 + $0x18] sm:$0xff] %vm984, %v887
  %989 = vst.msk [vmem:[%s3 + $0x20] sm:$0xff] %vm984, %v888
  %990 = vst.msk [vmem:[%s3 + $0x28] sm:$0xff] %vm984, %v889
  %991 = vst.msk [vmem:[%s3 + $0x30] sm:$0xff] %vm984, %v890
  %992 = vst.msk [vmem:[%s3 + $0x38] sm:$0xff] %vm984, %v891
  %993 = vst.msk [vmem:[%s3 + $0x40] sm:$0xff] %vm984, %v892
  %994 = vst.msk [vmem:[%s3 + $0x48] sm:$0xff] %vm984, %v893
  %995 = vst.msk [vmem:[%s3 + $0x50] sm:$0xff] %vm984, %v894
  %996 = vst.msk [vmem:[%s3 + $0x58] sm:$0xff] %vm984, %v895
  %997 = vst.msk [vmem:[%s3 + $0x60] sm:$0xff] %vm984, %v896
  %998 = vst.msk [vmem:[%s3 + $0x68] sm:$0xff] %vm984, %v897
  %999 = vst.msk [vmem:[%s3 + $0x70] sm:$0xff] %vm984, %v898
  %1000 = vst.msk [vmem:[%s3 + $0x78] sm:$0xff] %vm984, %v899
  %1001 = vst.msk [vmem:[%s3 + $0x80] sm:$0xff] %vm984, %v900
  %1002 = vst.msk [vmem:[%s3 + $0x88] sm:$0xff] %vm984, %v901
  %1003 = vst.msk [vmem:[%s3 + $0x90] sm:$0xff] %vm984, %v902
  %1004 = vst.msk [vmem:[%s3 + $0x98] sm:$0xff] %vm984, %v903
  %1005 = vst.msk [vmem:[%s3 + $0xa0] sm:$0xff] %vm984, %v904
  %1006 = vst.msk [vmem:[%s3 + $0xa8] sm:$0xff] %vm984, %v905
  %1007 = vst.msk [vmem:[%s3 + $0xb0] sm:$0xff] %vm984, %v906
  %1008 = vst.msk [vmem:[%s3 + $0xb8] sm:$0xff] %vm984, %v907
  %1009 = vst.msk [vmem:[%s3 + $0xc0] sm:$0xff] %vm984, %v908
  %1010 = vst.msk [vmem:[%s3 + $0xc8] sm:$0xff] %vm984, %v909
  %1011 = vst.msk [vmem:[%s3 + $0xd0] sm:$0xff] %vm984, %v910
  %1012 = vst.msk [vmem:[%s3 + $0xd8] sm:$0xff] %vm984, %v911
  %1013 = vst.msk [vmem:[%s3 + $0xe0] sm:$0xff] %vm984, %v912
  %1014 = vst.msk [vmem:[%s3 + $0xe8] sm:$0xff] %vm984, %v913
  %1015 = vst.msk [vmem:[%s3 + $0xf0] sm:$0xff] %vm984, %v914
  %1016 = vst.msk [vmem:[%s3 + $0xf8] sm:$0xff] %vm984, %v915
  %1017 = vst.msk [vmem:[%s3 + $0x100] sm:$0xff] %vm984, %v916
  %1018 = vst.msk [vmem:[%s3 + $0x108] sm:$0xff] %vm984, %v917
  %1019 = vst.msk [vmem:[%s3 + $0x110] sm:$0xff] %vm984, %v918
  %1020 = vst.msk [vmem:[%s3 + $0x118] sm:$0xff] %vm984, %v919
  %1021 = vst.msk [vmem:[%s3 + $0x120] sm:$0xff] %vm984, %v920
  %1022 = vst.msk [vmem:[%s3 + $0x128] sm:$0xff] %vm984, %v921
  %1023 = vst.msk [vmem:[%s3 + $0x130] sm:$0xff] %vm984, %v922
  %1024 = vst.msk [vmem:[%s3 + $0x138] sm:$0xff] %vm984, %v923
  %1025 = vst.msk [vmem:[%s3 + $0x140] sm:$0xff] %vm984, %v924
  %1026 = vst.msk [vmem:[%s3 + $0x148] sm:$0xff] %vm984, %v925
  %1027 = vst.msk [vmem:[%s3 + $0x150] sm:$0xff] %vm984, %v926
  %1028 = vst.msk [vmem:[%s3 + $0x158] sm:$0xff] %vm984, %v927
  %1029 = vst.msk [vmem:[%s3 + $0x160] sm:$0xff] %vm984, %v928
  %1030 = vst.msk [vmem:[%s3 + $0x168] sm:$0xff] %vm984, %v929
  %1031 = vst.msk [vmem:[%s3 + $0x170] sm:$0xff] %vm984, %v930
  %1032 = vst.msk [vmem:[%s3 + $0x178] sm:$0xff] %vm984, %v931
  %1033 = vst.msk [vmem:[%s3 + $0x180] sm:$0xff] %vm984, %v932
  %1034 = vst.msk [vmem:[%s3 + $0x188] sm:$0xff] %vm984, %v933
  %1035 = vst.msk [vmem:[%s3 + $0x190] sm:$0xff] %vm984, %v934
  %1036 = vst.msk [vmem:[%s3 + $0x198] sm:$0xff] %vm984, %v935
  %1037 = vst.msk [vmem:[%s3 + $0x1a0] sm:$0xff] %vm984, %v936
  %1038 = vst.msk [vmem:[%s3 + $0x1a8] sm:$0xff] %vm984, %v937
  %1039 = vst.msk [vmem:[%s3 + $0x1b0] sm:$0xff] %vm984, %v938
  %1040 = vst.msk [vmem:[%s3 + $0x1b8] sm:$0xff] %vm984, %v939
  %1041 = vst.msk [vmem:[%s3 + $0x1c0] sm:$0xff] %vm984, %v940
  %1042 = vst.msk [vmem:[%s3 + $0x1c8] sm:$0xff] %vm984, %v941
  %1043 = vst.msk [vmem:[%s3 + $0x1d0] sm:$0xff] %vm984, %v942
  %1044 = vst.msk [vmem:[%s3 + $0x1d8] sm:$0xff] %vm984, %v943
  %1045 = vst.msk [vmem:[%s3 + $0x1e0] sm:$0xff] %vm984, %v944
  %1046 = vst.msk [vmem:[%s3 + $0x1e8] sm:$0xff] %vm984, %v945
  %1047 = vst.msk [vmem:[%s3 + $0x1f0] sm:$0xff] %vm984, %v946
  %1048 = vst.msk [vmem:[%s3 + $0x1f8] sm:$0xff] %vm984, %v947
  %1049 = vst.msk [vmem:[%s3 + $0x200] sm:$0xff] %vm984, %v948
  %1050 = vst.msk [vmem:[%s3 + $0x208] sm:$0xff] %vm984, %v949
  %1051 = vst.msk [vmem:[%s3 + $0x210] sm:$0xff] %vm984, %v950
  %1052 = vst.msk [vmem:[%s3 + $0x218] sm:$0xff] %vm984, %v951
  %1053 = vst.msk [vmem:[%s3 + $0x220] sm:$0xff] %vm984, %v952
  %1054 = vst.msk [vmem:[%s3 + $0x228] sm:$0xff] %vm984, %v953
  %1055 = vst.msk [vmem:[%s3 + $0x230] sm:$0xff] %vm984, %v954
  %1056 = vst.msk [vmem:[%s3 + $0x238] sm:$0xff] %vm984, %v955
  %1057 = vst.msk [vmem:[%s3 + $0x240] sm:$0xff] %vm984, %v956
  %1058 = vst.msk [vmem:[%s3 + $0x248] sm:$0xff] %vm984, %v957
  %1059 = vst.msk [vmem:[%s3 + $0x250] sm:$0xff] %vm984, %v958
  %1060 = vst.msk [vmem:[%s3 + $0x258] sm:$0xff] %vm984, %v959
  %1061 = vst.msk [vmem:[%s3 + $0x260] sm:$0xff] %vm984, %v960
  %1062 = vst.msk [vmem:[%s3 + $0x268] sm:$0xff] %vm984, %v961
  %1063 = vst.msk [vmem:[%s3 + $0x270] sm:$0xff] %vm984, %v962
  %1064 = vst.msk [vmem:[%s3 + $0x278] sm:$0xff] %vm984, %v963
  %1065 = vst.msk [vmem:[%s3 + $0x280] sm:$0xff] %vm984, %v964
  %1066 = vst.msk [vmem:[%s3 + $0x288] sm:$0xff] %vm984, %v965
  %1067 = vst.msk [vmem:[%s3 + $0x290] sm:$0xff] %vm984, %v966
  %1068 = vst.msk [vmem:[%s3 + $0x298] sm:$0xff] %vm984, %v967
  %1069 = vst.msk [vmem:[%s3 + $0x2a0] sm:$0xff] %vm984, %v968
  %1070 = vst.msk [vmem:[%s3 + $0x2a8] sm:$0xff] %vm984, %v969
  %1071 = vst.msk [vmem:[%s3 + $0x2b0] sm:$0xff] %vm984, %v970
  %1072 = vst.msk [vmem:[%s3 + $0x2b8] sm:$0xff] %vm984, %v971
  %1073 = vst.msk [vmem:[%s3 + $0x2c0] sm:$0xff] %vm984, %v972
  %1074 = vst.msk [vmem:[%s3 + $0x2c8] sm:$0xff] %vm984, %v973
  %1075 = vst.msk [vmem:[%s3 + $0x2d0] sm:$0xff] %vm984, %v974
  %1076 = vst.msk [vmem:[%s3 + $0x2d8] sm:$0xff] %vm984, %v975
  %1077 = vst.msk [vmem:[%s3 + $0x2e0] sm:$0xff] %vm984, %v976
  %1078 = vst.msk [vmem:[%s3 + $0x2e8] sm:$0xff] %vm984, %v977
  %1079 = vst.msk [vmem:[%s3 + $0x2f0] sm:$0xff] %vm984, %v978
  %1080 = vst.msk [vmem:[%s3 + $0x2f8] sm:$0xff] %vm984, %v979
  %1081 = vst.msk [vmem:[%s3 + $0x300] sm:$0xff] %vm984, %v980
  %1082 = vst.msk [vmem:[%s3 + $0x308] sm:$0xff] %vm984, %v981
  %1083 = vst.msk [vmem:[%s3 + $0x310] sm:$0xff] %vm984, %v982
  %1084 = vst.msk [vmem:[%s3 + $0x318] sm:$0xff] %vm984, %v983
  // Predicated region
  $region14: #{dueling_dqn_forward.4} parent=0 // pred_check
    _
  $region15: #{dueling_dqn_forward.4} parent=0 // pred_check_branch
    %1086 = sbr.rel (0) target = $region17
  $region16: #{dueling_dqn_forward.4} parent=0 // pred_region
    _
  $region17: #{dueling_dqn_forward.4} parent=0 // pred_fallthru
    _
  // Predicated region
  $region18: #{dueling_dqn_forward.4} parent=0 // pred_check
    _
  $region19: #{dueling_dqn_forward.4} parent=0 // pred_check_branch
    %1088 = sbr.rel (0) target = $region21
  $region20: #{dueling_dqn_forward.4} parent=0 // pred_region
    _
  $region21: #{dueling_dqn_forward.4} parent=0 // pred_fallthru
    _

// kernel: dueling_dqn_forward.5
$region0: #{dueling_dqn_forward.5}
  #allocation0 [shape = 'u32[]', space=smem, size = 0x4, offset = 0x4, fixed_abs, tag = 'smem constant byte address 0x4 - core index']
  #allocation1 [shape = 'u32[72,128]{1,0:T(1,128)}', space=vmem, size = 0x9000, scoped, tag = 'internal scratch']
  %s0 = inlined_call_operand.vmem [shape: f32[162,512], index: 0, kind: input, shape index: {}]
  %s1 = inlined_call_operand.vmem [shape: f32[512,64], index: 1, kind: input, shape index: {}]
  %s2 = inlined_call_operand.vmem [shape: f32[1,64], index: 2, kind: input, shape index: {}]
  %s3 = inlined_call_operand.vmem [shape: f32[162,64], index: 3, kind: output, shape index: {}]
  %s4 = sld [smem:[#allocation0]]
  $region22: #{dueling_dqn_forward.5} parent=0
    _
  %s6 = ssub.s32 1, %s4
  %s7 = scalar_select 0, %s6, %s4
  // Predicated region
  $region2: #{dueling_dqn_forward.5} parent=0 // pred_check
    _
  $region3: #{dueling_dqn_forward.5} parent=0 // pred_check_branch
    %9 = sbr.rel (0) target = $region5
  $region4: #{dueling_dqn_forward.5} parent=0 // pred_region
    _
  $region5: #{dueling_dqn_forward.5} parent=0 // pred_fallthru
    _
  // Predicated region
  $region6: #{dueling_dqn_forward.5} parent=0 // pred_check
    _
  $region7: #{dueling_dqn_forward.5} parent=0 // pred_check_branch
    %11 = sbr.rel (0) target = $region9
  $region8: #{dueling_dqn_forward.5} parent=0 // pred_region
    _
  $region9: #{dueling_dqn_forward.5} parent=0 // pred_fallthru
    _
  // Predicated region
  $region10: #{dueling_dqn_forward.5} parent=0 // pred_check
    _
  $region11: #{dueling_dqn_forward.5} parent=0 // pred_check_branch
    %13 = sbr.rel (0) target = $region13
  $region12: #{dueling_dqn_forward.5} parent=0 // pred_region
    _
  $region13: #{dueling_dqn_forward.5} parent=0 // pred_fallthru
    _
  %v14 = vld [vmem:[%s0] sm:$0xff]
  %v15 = vld [vmem:[%s0 + $0x8] sm:$0xff]
  %v16 = vld [vmem:[%s0 + $0x10] sm:$0xff]
  %v17 = vld [vmem:[%s0 + $0x18] sm:$0xff]
  %v18 = vld [vmem:[%s0 + $0x20] sm:$0xff]
  %v19 = vld [vmem:[%s0 + $0x28] sm:$0xff]
  %v20 = vld [vmem:[%s0 + $0x30] sm:$0xff]
  %v21 = vld [vmem:[%s0 + $0x38] sm:$0xff]
  %v22 = vld [vmem:[%s0 + $0x40] sm:$0xff]
  %v23 = vld [vmem:[%s0 + $0x48] sm:$0xff]
  %v24 = vld [vmem:[%s0 + $0x50] sm:$0xff]
  %v25 = vld [vmem:[%s0 + $0x58] sm:$0xff]
  %v26 = vld [vmem:[%s0 + $0x60] sm:$0xff]
  %v27 = vld [vmem:[%s0 + $0x68] sm:$0xff]
  %v28 = vld [vmem:[%s0 + $0x70] sm:$0xff]
  %v29 = vld [vmem:[%s0 + $0x78] sm:$0xff]
  %v30 = vld [vmem:[%s0 + $0x80] sm:$0xff]
  %v31 = vld [vmem:[%s0 + $0x88] sm:$0xff]
  %v32 = vld [vmem:[%s0 + $0x90] sm:$0xff]
  %v33 = vld [vmem:[%s0 + $0x98] sm:$0xff]
  %v34 = vld [vmem:[%s0 + $0xa0] sm:$0xff]
  %v35 = vld [vmem:[%s0 + $0xa8] sm:$0xff]
  %v36 = vld [vmem:[%s0 + $0xb0] sm:$0xff]
  %v37 = vld [vmem:[%s0 + $0xb8] sm:$0xff]
  %v38 = vld [vmem:[%s0 + $0xc0] sm:$0xff]
  %v39 = vld [vmem:[%s0 + $0xc8] sm:$0xff]
  %v40 = vld [vmem:[%s0 + $0xd0] sm:$0xff]
  %v41 = vld [vmem:[%s0 + $0xd8] sm:$0xff]
  %v42 = vld [vmem:[%s0 + $0xe0] sm:$0xff]
  %v43 = vld [vmem:[%s0 + $0xe8] sm:$0xff]
  %v44 = vld [vmem:[%s0 + $0xf0] sm:$0xff]
  %v45 = vld [vmem:[%s0 + $0xf8] sm:$0xff]
  %v46 = vld [vmem:[%s0 + $0x100] sm:$0xff]
  %v47 = vld [vmem:[%s0 + $0x108] sm:$0xff]
  %v48 = vld [vmem:[%s0 + $0x110] sm:$0xff]
  %v49 = vld [vmem:[%s0 + $0x118] sm:$0xff]
  %v50 = vld [vmem:[%s0 + $0x120] sm:$0xff]
  %v51 = vld [vmem:[%s0 + $0x128] sm:$0xff]
  %v52 = vld [vmem:[%s0 + $0x130] sm:$0xff]
  %v53 = vld [vmem:[%s0 + $0x138] sm:$0xff]
  %v54 = vld [vmem:[%s0 + $0x140] sm:$0xff]
  %v55 = vld [vmem:[%s0 + $0x148] sm:$0xff]
  %v56 = vld [vmem:[%s0 + $0x150] sm:$0xff]
  %v57 = vld [vmem:[%s0 + $0x158] sm:$0xff]
  %v58 = vld [vmem:[%s0 + $0x160] sm:$0xff]
  %v59 = vld [vmem:[%s0 + $0x168] sm:$0xff]
  %v60 = vld [vmem:[%s0 + $0x170] sm:$0xff]
  %v61 = vld [vmem:[%s0 + $0x178] sm:$0xff]
  %v62 = vld [vmem:[%s0 + $0x180] sm:$0xff]
  %v63 = vld [vmem:[%s0 + $0x188] sm:$0xff]
  %v64 = vld [vmem:[%s0 + $0x190] sm:$0xff]
  %v65 = vld [vmem:[%s0 + $0x198] sm:$0xff]
  %v66 = vld [vmem:[%s0 + $0x1a0] sm:$0xff]
  %v67 = vld [vmem:[%s0 + $0x1a8] sm:$0xff]
  %v68 = vld [vmem:[%s0 + $0x1b0] sm:$0xff]
  %v69 = vld [vmem:[%s0 + $0x1b8] sm:$0xff]
  %v70 = vld [vmem:[%s0 + $0x1c0] sm:$0xff]
  %v71 = vld [vmem:[%s0 + $0x1c8] sm:$0xff]
  %v72 = vld [vmem:[%s0 + $0x1d0] sm:$0xff]
  %v73 = vld [vmem:[%s0 + $0x1d8] sm:$0xff]
  %v74 = vld [vmem:[%s0 + $0x1e0] sm:$0xff]
  %v75 = vld [vmem:[%s0 + $0x1e8] sm:$0xff]
  %v76 = vld [vmem:[%s0 + $0x1f0] sm:$0xff]
  %v77 = vld [vmem:[%s0 + $0x1f8] sm:$0xff]
  %v78 = vld [vmem:[%s0 + $0x200] sm:$0xff]
  %v79 = vld [vmem:[%s0 + $0x208] sm:$0xff]
  %v80 = vld [vmem:[%s0 + $0x210] sm:$0xff]
  %v81 = vld [vmem:[%s0 + $0x218] sm:$0xff]
  %v82 = vld [vmem:[%s0 + $0x220] sm:$0xff]
  %v83 = vld [vmem:[%s0 + $0x228] sm:$0xff]
  %v84 = vld [vmem:[%s0 + $0x230] sm:$0xff]
  %v85 = vld [vmem:[%s0 + $0x238] sm:$0xff]
  %v86 = vld [vmem:[%s0 + $0x240] sm:$0xff]
  %v87 = vld [vmem:[%s0 + $0x248] sm:$0xff]
  %v88 = vld [vmem:[%s0 + $0x250] sm:$0xff]
  %v89 = vld [vmem:[%s0 + $0x258] sm:$0xff]
  %v90 = vld [vmem:[%s0 + $0x260] sm:$0xff]
  %v91 = vld [vmem:[%s0 + $0x268] sm:$0xff]
  %v92 = vld [vmem:[%s0 + $0x270] sm:$0xff]
  %v93 = vld [vmem:[%s0 + $0x278] sm:$0xff]
  %v94 = vld [vmem:[%s0 + $0x280] sm:$0x3]
  %v95 = vld [vmem:[%s0 + $0x288] sm:$0x3]
  %v96 = vld [vmem:[%s0 + $0x290] sm:$0x3]
  %v97 = vld [vmem:[%s0 + $0x298] sm:$0x3]
  %v98 = vld [vmem:[%s1] sm:$0xff]
  %v99 = vld [vmem:[%s1 + $0x8] sm:$0xff]
  %v100 = vld [vmem:[%s1 + $0x10] sm:$0xff]
  %v101 = vld [vmem:[%s1 + $0x18] sm:$0xff]
  %v102 = vld [vmem:[%s1 + $0x20] sm:$0xff]
  %v103 = vld [vmem:[%s1 + $0x28] sm:$0xff]
  %v104 = vld [vmem:[%s1 + $0x30] sm:$0xff]
  %v105 = vld [vmem:[%s1 + $0x38] sm:$0xff]
  %v106 = vld [vmem:[%s1 + $0x40] sm:$0xff]
  %v107 = vld [vmem:[%s1 + $0x48] sm:$0xff]
  %v108 = vld [vmem:[%s1 + $0x50] sm:$0xff]
  %v109 = vld [vmem:[%s1 + $0x58] sm:$0xff]
  %v110 = vld [vmem:[%s1 + $0x60] sm:$0xff]
  %v111 = vld [vmem:[%s1 + $0x68] sm:$0xff]
  %v112 = vld [vmem:[%s1 + $0x70] sm:$0xff]
  %v113 = vld [vmem:[%s1 + $0x78] sm:$0xff]
  %v114 = vld [vmem:[%s1 + $0x80] sm:$0xff]
  %v115 = vld [vmem:[%s1 + $0x88] sm:$0xff]
  %v116 = vld [vmem:[%s1 + $0x90] sm:$0xff]
  %v117 = vld [vmem:[%s1 + $0x98] sm:$0xff]
  %v118 = vld [vmem:[%s1 + $0xa0] sm:$0xff]
  %v119 = vld [vmem:[%s1 + $0xa8] sm:$0xff]
  %v120 = vld [vmem:[%s1 + $0xb0] sm:$0xff]
  %v121 = vld [vmem:[%s1 + $0xb8] sm:$0xff]
  %v122 = vld [vmem:[%s1 + $0xc0] sm:$0xff]
  %v123 = vld [vmem:[%s1 + $0xc8] sm:$0xff]
  %v124 = vld [vmem:[%s1 + $0xd0] sm:$0xff]
  %v125 = vld [vmem:[%s1 + $0xd8] sm:$0xff]
  %v126 = vld [vmem:[%s1 + $0xe0] sm:$0xff]
  %v127 = vld [vmem:[%s1 + $0xe8] sm:$0xff]
  %v128 = vld [vmem:[%s1 + $0xf0] sm:$0xff]
  %v129 = vld [vmem:[%s1 + $0xf8] sm:$0xff]
  %v130 = vld [vmem:[%s1 + $0x100] sm:$0xff]
  %v131 = vld [vmem:[%s1 + $0x108] sm:$0xff]
  %v132 = vld [vmem:[%s1 + $0x110] sm:$0xff]
  %v133 = vld [vmem:[%s1 + $0x118] sm:$0xff]
  %v134 = vld [vmem:[%s1 + $0x120] sm:$0xff]
  %v135 = vld [vmem:[%s1 + $0x128] sm:$0xff]
  %v136 = vld [vmem:[%s1 + $0x130] sm:$0xff]
  %v137 = vld [vmem:[%s1 + $0x138] sm:$0xff]
  %v138 = vld [vmem:[%s1 + $0x140] sm:$0xff]
  %v139 = vld [vmem:[%s1 + $0x148] sm:$0xff]
  %v140 = vld [vmem:[%s1 + $0x150] sm:$0xff]
  %v141 = vld [vmem:[%s1 + $0x158] sm:$0xff]
  %v142 = vld [vmem:[%s1 + $0x160] sm:$0xff]
  %v143 = vld [vmem:[%s1 + $0x168] sm:$0xff]
  %v144 = vld [vmem:[%s1 + $0x170] sm:$0xff]
  %v145 = vld [vmem:[%s1 + $0x178] sm:$0xff]
  %v146 = vld [vmem:[%s1 + $0x180] sm:$0xff]
  %v147 = vld [vmem:[%s1 + $0x188] sm:$0xff]
  %v148 = vld [vmem:[%s1 + $0x190] sm:$0xff]
  %v149 = vld [vmem:[%s1 + $0x198] sm:$0xff]
  %v150 = vld [vmem:[%s1 + $0x1a0] sm:$0xff]
  %v151 = vld [vmem:[%s1 + $0x1a8] sm:$0xff]
  %v152 = vld [vmem:[%s1 + $0x1b0] sm:$0xff]
  %v153 = vld [vmem:[%s1 + $0x1b8] sm:$0xff]
  %v154 = vld [vmem:[%s1 + $0x1c0] sm:$0xff]
  %v155 = vld [vmem:[%s1 + $0x1c8] sm:$0xff]
  %v156 = vld [vmem:[%s1 + $0x1d0] sm:$0xff]
  %v157 = vld [vmem:[%s1 + $0x1d8] sm:$0xff]
  %v158 = vld [vmem:[%s1 + $0x1e0] sm:$0xff]
  %v159 = vld [vmem:[%s1 + $0x1e8] sm:$0xff]
  %v160 = vld [vmem:[%s1 + $0x1f0] sm:$0xff]
  %v161 = vld [vmem:[%s1 + $0x1f8] sm:$0xff]
  %v162 = vld [vmem:[%s2] sm:$0x1]
  %v164 = vperm.slane %v162, 0
  %166 = vmatpush.msra.mxu0 %v113
  %167 = vmatpush.msra.mxu0 %v112
  %168 = vmatpush.msra.mxu0 %v111
  %169 = vmatpush.msra.mxu0 %v110
  %170 = vmatpush.msra.mxu0 %v109
  %171 = vmatpush.msra.mxu0 %v108
  %172 = vmatpush.msra.mxu0 %v107
  %173 = vmatpush.msra.mxu0 %v106
  %174 = vmatpush.msra.mxu0 %v105
  %175 = vmatpush.msra.mxu0 %v104
  %176 = vmatpush.msra.mxu0 %v103
  %177 = vmatpush.msra.mxu0 %v102
  %178 = vmatpush.msra.mxu0 %v101
  %179 = vmatpush.msra.mxu0 %v100
  %180 = vmatpush.msra.mxu0 %v99
  %181 = vmatpush.msra.mxu0 %v98
  %182 = vmatmul.f32.gmra.mxu0 %v14
  %v183 = vpop.f32.mrf.mxu0
  %v184 = vadd.f32 %v164, %v183
  %185 = vmatmul.f32.gmra.mxu0 %v18
  %v186 = vpop.f32.mrf.mxu0
  %v187 = vadd.f32 %v164, %v186
  %188 = vmatmul.f32.gmra.mxu0 %v22
  %v189 = vpop.f32.mrf.mxu0
  %v190 = vadd.f32 %v164, %v189
  %191 = vmatmul.f32.gmra.mxu0 %v26
  %v192 = vpop.f32.mrf.mxu0
  %v193 = vadd.f32 %v164, %v192
  %194 = vmatmul.f32.gmra.mxu0 %v30
  %v195 = vpop.f32.mrf.mxu0
  %v196 = vadd.f32 %v164, %v195
  %197 = vmatmul.f32.gmra.mxu0 %v34
  %v198 = vpop.f32.mrf.mxu0
  %v199 = vadd.f32 %v164, %v198
  %200 = vmatmul.f32.gmra.mxu0 %v38
  %v201 = vpop.f32.mrf.mxu0
  %v202 = vadd.f32 %v164, %v201
  %203 = vmatmul.f32.gmra.mxu0 %v42
  %v204 = vpop.f32.mrf.mxu0
  %v205 = vadd.f32 %v164, %v204
  %206 = vmatmul.f32.gmra.mxu0 %v46
  %v207 = vpop.f32.mrf.mxu0
  %v208 = vadd.f32 %v164, %v207
  %209 = vmatmul.f32.gmra.mxu0 %v50
  %v210 = vpop.f32.mrf.mxu0
  %v211 = vadd.f32 %v164, %v210
  %212 = vmatmul.f32.gmra.mxu0 %v54
  %v213 = vpop.f32.mrf.mxu0
  %v214 = vadd.f32 %v164, %v213
  %215 = vmatmul.f32.gmra.mxu0 %v58
  %v216 = vpop.f32.mrf.mxu0
  %v217 = vadd.f32 %v164, %v216
  %218 = vmatmul.f32.gmra.mxu0 %v62
  %v219 = vpop.f32.mrf.mxu0
  %v220 = vadd.f32 %v164, %v219
  %221 = vmatmul.f32.gmra.mxu0 %v66
  %v222 = vpop.f32.mrf.mxu0
  %v223 = vadd.f32 %v164, %v222
  %224 = vmatmul.f32.gmra.mxu0 %v70
  %v225 = vpop.f32.mrf.mxu0
  %v226 = vadd.f32 %v164, %v225
  %227 = vmatmul.f32.gmra.mxu0 %v74
  %v228 = vpop.f32.mrf.mxu0
  %v229 = vadd.f32 %v164, %v228
  %230 = vmatmul.f32.gmra.mxu0 %v78
  %v231 = vpop.f32.mrf.mxu0
  %v232 = vadd.f32 %v164, %v231
  %233 = vmatmul.f32.gmra.mxu0 %v82
  %v234 = vpop.f32.mrf.mxu0
  %v235 = vadd.f32 %v164, %v234
  %236 = vmatmul.f32.gmra.mxu0 %v86
  %v237 = vpop.f32.mrf.mxu0
  %v238 = vadd.f32 %v164, %v237
  %239 = vmatmul.f32.gmra.mxu0 %v90
  %v240 = vpop.f32.mrf.mxu0
  %v241 = vadd.f32 %v164, %v240
  %242 = vmatmul.f32.gmra.mxu0 %v94
  %v243 = vpop.f32.mrf.mxu0
  %v244 = vadd.f32 %v164, %v243
  %245 = vdwg.mxu0
  %246 = vmatpush.msra.mxu0 %v129
  %247 = vmatpush.msra.mxu0 %v128
  %248 = vmatpush.msra.mxu0 %v127
  %249 = vmatpush.msra.mxu0 %v126
  %250 = vmatpush.msra.mxu0 %v125
  %251 = vmatpush.msra.mxu0 %v124
  %252 = vmatpush.msra.mxu0 %v123
  %253 = vmatpush.msra.mxu0 %v122
  %254 = vmatpush.msra.mxu0 %v121
  %255 = vmatpush.msra.mxu0 %v120
  %256 = vmatpush.msra.mxu0 %v119
  %257 = vmatpush.msra.mxu0 %v118
  %258 = vmatpush.msra.mxu0 %v117
  %259 = vmatpush.msra.mxu0 %v116
  %260 = vmatpush.msra.mxu0 %v115
  %261 = vmatpush.msra.mxu0 %v114
  %262 = vmatmul.f32.gmra.mxu0 %v15
  %v263 = vpop.f32.mrf.mxu0
  %v264 = vadd.f32 %v184, %v263
  %265 = vmatmul.f32.gmra.mxu0 %v19
  %v266 = vpop.f32.mrf.mxu0
  %v267 = vadd.f32 %v187, %v266
  %268 = vmatmul.f32.gmra.mxu0 %v23
  %v269 = vpop.f32.mrf.mxu0
  %v270 = vadd.f32 %v190, %v269
  %271 = vmatmul.f32.gmra.mxu0 %v27
  %v272 = vpop.f32.mrf.mxu0
  %v273 = vadd.f32 %v193, %v272
  %274 = vmatmul.f32.gmra.mxu0 %v31
  %v275 = vpop.f32.mrf.mxu0
  %v276 = vadd.f32 %v196, %v275
  %277 = vmatmul.f32.gmra.mxu0 %v35
  %v278 = vpop.f32.mrf.mxu0
  %v279 = vadd.f32 %v199, %v278
  %280 = vmatmul.f32.gmra.mxu0 %v39
  %v281 = vpop.f32.mrf.mxu0
  %v282 = vadd.f32 %v202, %v281
  %283 = vmatmul.f32.gmra.mxu0 %v43
  %v284 = vpop.f32.mrf.mxu0
  %v285 = vadd.f32 %v205, %v284
  %286 = vmatmul.f32.gmra.mxu0 %v47
  %v287 = vpop.f32.mrf.mxu0
  %v288 = vadd.f32 %v208, %v287
  %289 = vmatmul.f32.gmra.mxu0 %v51
  %v290 = vpop.f32.mrf.mxu0
  %v291 = vadd.f32 %v211, %v290
  %292 = vmatmul.f32.gmra.mxu0 %v55
  %v293 = vpop.f32.mrf.mxu0
  %v294 = vadd.f32 %v214, %v293
  %295 = vmatmul.f32.gmra.mxu0 %v59
  %v296 = vpop.f32.mrf.mxu0
  %v297 = vadd.f32 %v217, %v296
  %298 = vmatmul.f32.gmra.mxu0 %v63
  %v299 = vpop.f32.mrf.mxu0
  %v300 = vadd.f32 %v220, %v299
  %301 = vmatmul.f32.gmra.mxu0 %v67
  %v302 = vpop.f32.mrf.mxu0
  %v303 = vadd.f32 %v223, %v302
  %304 = vmatmul.f32.gmra.mxu0 %v71
  %v305 = vpop.f32.mrf.mxu0
  %v306 = vadd.f32 %v226, %v305
  %307 = vmatmul.f32.gmra.mxu0 %v75
  %v308 = vpop.f32.mrf.mxu0
  %v309 = vadd.f32 %v229, %v308
  %310 = vmatmul.f32.gmra.mxu0 %v79
  %v311 = vpop.f32.mrf.mxu0
  %v312 = vadd.f32 %v232, %v311
  %313 = vmatmul.f32.gmra.mxu0 %v83
  %v314 = vpop.f32.mrf.mxu0
  %v315 = vadd.f32 %v235, %v314
  %316 = vmatmul.f32.gmra.mxu0 %v87
  %v317 = vpop.f32.mrf.mxu0
  %v318 = vadd.f32 %v238, %v317
  %319 = vmatmul.f32.gmra.mxu0 %v91
  %v320 = vpop.f32.mrf.mxu0
  %v321 = vadd.f32 %v241, %v320
  %322 = vmatmul.f32.gmra.mxu0 %v95
  %v323 = vpop.f32.mrf.mxu0
  %v324 = vadd.f32 %v244, %v323
  %325 = vdwg.mxu0
  %326 = vmatpush.msra.mxu0 %v145
  %327 = vmatpush.msra.mxu0 %v144
  %328 = vmatpush.msra.mxu0 %v143
  %329 = vmatpush.msra.mxu0 %v142
  %330 = vmatpush.msra.mxu0 %v141
  %331 = vmatpush.msra.mxu0 %v140
  %332 = vmatpush.msra.mxu0 %v139
  %333 = vmatpush.msra.mxu0 %v138
  %334 = vmatpush.msra.mxu0 %v137
  %335 = vmatpush.msra.mxu0 %v136
  %336 = vmatpush.msra.mxu0 %v135
  %337 = vmatpush.msra.mxu0 %v134
  %338 = vmatpush.msra.mxu0 %v133
  %339 = vmatpush.msra.mxu0 %v132
  %340 = vmatpush.msra.mxu0 %v131
  %341 = vmatpush.msra.mxu0 %v130
  %342 = vmatmul.f32.gmra.mxu0 %v16
  %v343 = vpop.f32.mrf.mxu0
  %v344 = vadd.f32 %v264, %v343
  %345 = vmatmul.f32.gmra.mxu0 %v20
  %v346 = vpop.f32.mrf.mxu0
  %v347 = vadd.f32 %v267, %v346
  %348 = vmatmul.f32.gmra.mxu0 %v24
  %v349 = vpop.f32.mrf.mxu0
  %v350 = vadd.f32 %v270, %v349
  %351 = vmatmul.f32.gmra.mxu0 %v28
  %v352 = vpop.f32.mrf.mxu0
  %v353 = vadd.f32 %v273, %v352
  %354 = vmatmul.f32.gmra.mxu0 %v32
  %v355 = vpop.f32.mrf.mxu0
  %v356 = vadd.f32 %v276, %v355
  %357 = vmatmul.f32.gmra.mxu0 %v36
  %v358 = vpop.f32.mrf.mxu0
  %v359 = vadd.f32 %v279, %v358
  %360 = vmatmul.f32.gmra.mxu0 %v40
  %v361 = vpop.f32.mrf.mxu0
  %v362 = vadd.f32 %v282, %v361
  %363 = vmatmul.f32.gmra.mxu0 %v44
  %v364 = vpop.f32.mrf.mxu0
  %v365 = vadd.f32 %v285, %v364
  %366 = vmatmul.f32.gmra.mxu0 %v48
  %v367 = vpop.f32.mrf.mxu0
  %v368 = vadd.f32 %v288, %v367
  %369 = vmatmul.f32.gmra.mxu0 %v52
  %v370 = vpop.f32.mrf.mxu0
  %v371 = vadd.f32 %v291, %v370
  %372 = vmatmul.f32.gmra.mxu0 %v56
  %v373 = vpop.f32.mrf.mxu0
  %v374 = vadd.f32 %v294, %v373
  %375 = vmatmul.f32.gmra.mxu0 %v60
  %v376 = vpop.f32.mrf.mxu0
  %v377 = vadd.f32 %v297, %v376
  %378 = vmatmul.f32.gmra.mxu0 %v64
  %v379 = vpop.f32.mrf.mxu0
  %v380 = vadd.f32 %v300, %v379
  %381 = vmatmul.f32.gmra.mxu0 %v68
  %v382 = vpop.f32.mrf.mxu0
  %v383 = vadd.f32 %v303, %v382
  %384 = vmatmul.f32.gmra.mxu0 %v72
  %v385 = vpop.f32.mrf.mxu0
  %v386 = vadd.f32 %v306, %v385
  %387 = vmatmul.f32.gmra.mxu0 %v76
  %v388 = vpop.f32.mrf.mxu0
  %v389 = vadd.f32 %v309, %v388
  %390 = vmatmul.f32.gmra.mxu0 %v80
  %v391 = vpop.f32.mrf.mxu0
  %v392 = vadd.f32 %v312, %v391
  %393 = vmatmul.f32.gmra.mxu0 %v84
  %v394 = vpop.f32.mrf.mxu0
  %v395 = vadd.f32 %v315, %v394
  %396 = vmatmul.f32.gmra.mxu0 %v88
  %v397 = vpop.f32.mrf.mxu0
  %v398 = vadd.f32 %v318, %v397
  %399 = vmatmul.f32.gmra.mxu0 %v92
  %v400 = vpop.f32.mrf.mxu0
  %v401 = vadd.f32 %v321, %v400
  %402 = vmatmul.f32.gmra.mxu0 %v96
  %v403 = vpop.f32.mrf.mxu0
  %v404 = vadd.f32 %v324, %v403
  %405 = vdwg.mxu0
  %406 = vmatpush.msra.mxu0 %v161
  %407 = vmatpush.msra.mxu0 %v160
  %408 = vmatpush.msra.mxu0 %v159
  %409 = vmatpush.msra.mxu0 %v158
  %410 = vmatpush.msra.mxu0 %v157
  %411 = vmatpush.msra.mxu0 %v156
  %412 = vmatpush.msra.mxu0 %v155
  %413 = vmatpush.msra.mxu0 %v154
  %414 = vmatpush.msra.mxu0 %v153
  %415 = vmatpush.msra.mxu0 %v152
  %416 = vmatpush.msra.mxu0 %v151
  %417 = vmatpush.msra.mxu0 %v150
  %418 = vmatpush.msra.mxu0 %v149
  %419 = vmatpush.msra.mxu0 %v148
  %420 = vmatpush.msra.mxu0 %v147
  %421 = vmatpush.msra.mxu0 %v146
  %422 = vmatmul.f32.gmra.mxu0 %v17
  %v423 = vpop.f32.mrf.mxu0
  %v424 = vadd.f32 %v344, %v423
  %425 = vmatmul.f32.gmra.mxu0 %v21
  %v426 = vpop.f32.mrf.mxu0
  %v427 = vadd.f32 %v347, %v426
  %428 = vmatmul.f32.gmra.mxu0 %v25
  %v429 = vpop.f32.mrf.mxu0
  %v430 = vadd.f32 %v350, %v429
  %431 = vmatmul.f32.gmra.mxu0 %v29
  %v432 = vpop.f32.mrf.mxu0
  %v433 = vadd.f32 %v353, %v432
  %434 = vmatmul.f32.gmra.mxu0 %v33
  %v435 = vpop.f32.mrf.mxu0
  %v436 = vadd.f32 %v356, %v435
  %437 = vmatmul.f32.gmra.mxu0 %v37
  %v438 = vpop.f32.mrf.mxu0
  %v439 = vadd.f32 %v359, %v438
  %440 = vmatmul.f32.gmra.mxu0 %v41
  %v441 = vpop.f32.mrf.mxu0
  %v442 = vadd.f32 %v362, %v441
  %443 = vmatmul.f32.gmra.mxu0 %v45
  %v444 = vpop.f32.mrf.mxu0
  %v445 = vadd.f32 %v365, %v444
  %446 = vmatmul.f32.gmra.mxu0 %v49
  %v447 = vpop.f32.mrf.mxu0
  %v448 = vadd.f32 %v368, %v447
  %449 = vmatmul.f32.gmra.mxu0 %v53
  %v450 = vpop.f32.mrf.mxu0
  %v451 = vadd.f32 %v371, %v450
  %452 = vmatmul.f32.gmra.mxu0 %v57
  %v453 = vpop.f32.mrf.mxu0
  %v454 = vadd.f32 %v374, %v453
  %455 = vmatmul.f32.gmra.mxu0 %v61
  %v456 = vpop.f32.mrf.mxu0
  %v457 = vadd.f32 %v377, %v456
  %458 = vmatmul.f32.gmra.mxu0 %v65
  %v459 = vpop.f32.mrf.mxu0
  %v460 = vadd.f32 %v380, %v459
  %461 = vmatmul.f32.gmra.mxu0 %v69
  %v462 = vpop.f32.mrf.mxu0
  %v463 = vadd.f32 %v383, %v462
  %464 = vmatmul.f32.gmra.mxu0 %v73
  %v465 = vpop.f32.mrf.mxu0
  %v466 = vadd.f32 %v386, %v465
  %467 = vmatmul.f32.gmra.mxu0 %v77
  %v468 = vpop.f32.mrf.mxu0
  %v469 = vadd.f32 %v389, %v468
  %470 = vmatmul.f32.gmra.mxu0 %v81
  %v471 = vpop.f32.mrf.mxu0
  %v472 = vadd.f32 %v392, %v471
  %473 = vmatmul.f32.gmra.mxu0 %v85
  %v474 = vpop.f32.mrf.mxu0
  %v475 = vadd.f32 %v395, %v474
  %476 = vmatmul.f32.gmra.mxu0 %v89
  %v477 = vpop.f32.mrf.mxu0
  %v478 = vadd.f32 %v398, %v477
  %479 = vmatmul.f32.gmra.mxu0 %v93
  %v480 = vpop.f32.mrf.mxu0
  %v481 = vadd.f32 %v401, %v480
  %482 = vmatmul.f32.gmra.mxu0 %v97
  %v483 = vpop.f32.mrf.mxu0
  %v484 = vadd.f32 %v404, %v483
  %485 = vdwg.mxu0
  %v486 = vmax.f32 %v424, 0.0
  %v487 = vmax.f32 %v427, 0.0
  %v488 = vmax.f32 %v430, 0.0
  %v489 = vmax.f32 %v433, 0.0
  %v490 = vmax.f32 %v436, 0.0
  %v491 = vmax.f32 %v439, 0.0
  %v492 = vmax.f32 %v442, 0.0
  %v493 = vmax.f32 %v445, 0.0
  %v494 = vmax.f32 %v448, 0.0
  %v495 = vmax.f32 %v451, 0.0
  %v496 = vmax.f32 %v454, 0.0
  %v497 = vmax.f32 %v457, 0.0
  %v498 = vmax.f32 %v460, 0.0
  %v499 = vmax.f32 %v463, 0.0
  %v500 = vmax.f32 %v466, 0.0
  %v501 = vmax.f32 %v469, 0.0
  %v502 = vmax.f32 %v472, 0.0
  %v503 = vmax.f32 %v475, 0.0
  %v504 = vmax.f32 %v478, 0.0
  %v505 = vmax.f32 %v481, 0.0
  %v506 = vmax.f32 %v484, 0.0
  %vm507 = vcmask 523264
  %508 = vst.msk [vmem:[%s3] sm:$0xff] %vm507, %v486
  %509 = vst.msk [vmem:[%s3 + $0x8] sm:$0xff] %vm507, %v487
  %510 = vst.msk [vmem:[%s3 + $0x10] sm:$0xff] %vm507, %v488
  %511 = vst.msk [vmem:[%s3 + $0x18] sm:$0xff] %vm507, %v489
  %512 = vst.msk [vmem:[%s3 + $0x20] sm:$0xff] %vm507, %v490
  %513 = vst.msk [vmem:[%s3 + $0x28] sm:$0xff] %vm507, %v491
  %514 = vst.msk [vmem:[%s3 + $0x30] sm:$0xff] %vm507, %v492
  %515 = vst.msk [vmem:[%s3 + $0x38] sm:$0xff] %vm507, %v493
  %516 = vst.msk [vmem:[%s3 + $0x40] sm:$0xff] %vm507, %v494
  %517 = vst.msk [vmem:[%s3 + $0x48] sm:$0xff] %vm507, %v495
  %518 = vst.msk [vmem:[%s3 + $0x50] sm:$0xff] %vm507, %v496
  %519 = vst.msk [vmem:[%s3 + $0x58] sm:$0xff] %vm507, %v497
  %520 = vst.msk [vmem:[%s3 + $0x60] sm:$0xff] %vm507, %v498
  %521 = vst.msk [vmem:[%s3 + $0x68] sm:$0xff] %vm507, %v499
  %522 = vst.msk [vmem:[%s3 + $0x70] sm:$0xff] %vm507, %v500
  %523 = vst.msk [vmem:[%s3 + $0x78] sm:$0xff] %vm507, %v501
  %524 = vst.msk [vmem:[%s3 + $0x80] sm:$0xff] %vm507, %v502
  %525 = vst.msk [vmem:[%s3 + $0x88] sm:$0xff] %vm507, %v503
  %526 = vst.msk [vmem:[%s3 + $0x90] sm:$0xff] %vm507, %v504
  %527 = vst.msk [vmem:[%s3 + $0x98] sm:$0xff] %vm507, %v505
  %vm528 = vcmask 517120
  %529 = vst.msk [vmem:[%s3 + $0xa0] sm:$0x3] %vm528, %v506
  // Predicated region
  $region14: #{dueling_dqn_forward.5} parent=0 // pred_check
    _
  $region15: #{dueling_dqn_forward.5} parent=0 // pred_check_branch
    %531 = sbr.rel (0) target = $region17
  $region16: #{dueling_dqn_forward.5} parent=0 // pred_region
    _
  $region17: #{dueling_dqn_forward.5} parent=0 // pred_fallthru
    _
  // Predicated region
  $region18: #{dueling_dqn_forward.5} parent=0 // pred_check
    _
  $region19: #{dueling_dqn_forward.5} parent=0 // pred_check_branch
    %533 = sbr.rel (0) target = $region21
  $region20: #{dueling_dqn_forward.5} parent=0 // pred_region
    _
  $region21: #{dueling_dqn_forward.5} parent=0 // pred_fallthru
    _

// kernel: dueling_dqn_forward.6
$region0: #{dueling_dqn_forward.6}
  #allocation0 [shape = 'u32[]', space=smem, size = 0x4, offset = 0x4, fixed_abs, tag = 'smem constant byte address 0x4 - core index']
  #allocation1 [shape = 'u32[72,128]{1,0:T(1,128)}', space=vmem, size = 0x9000, scoped, tag = 'internal scratch']
  %s0 = inlined_call_operand.vmem [shape: f32[98,576], index: 0, kind: input, shape index: {}]
  %s1 = inlined_call_operand.vmem [shape: f32[576,64], index: 1, kind: input, shape index: {}]
  %s2 = inlined_call_operand.vmem [shape: f32[1,64], index: 2, kind: input, shape index: {}]
  %s3 = inlined_call_operand.vmem [shape: f32[98,64], index: 3, kind: output, shape index: {}]
  %s4 = sld [smem:[#allocation0]]
  $region22: #{dueling_dqn_forward.6} parent=0
    _
  %s6 = ssub.s32 1, %s4
  %s7 = scalar_select 0, %s6, %s4
  // Predicated region
  $region2: #{dueling_dqn_forward.6} parent=0 // pred_check
    _
  $region3: #{dueling_dqn_forward.6} parent=0 // pred_check_branch
    %9 = sbr.rel (0) target = $region5
  $region4: #{dueling_dqn_forward.6} parent=0 // pred_region
    _
  $region5: #{dueling_dqn_forward.6} parent=0 // pred_fallthru
    _
  // Predicated region
  $region6: #{dueling_dqn_forward.6} parent=0 // pred_check
    _
  $region7: #{dueling_dqn_forward.6} parent=0 // pred_check_branch
    %11 = sbr.rel (0) target = $region9
  $region8: #{dueling_dqn_forward.6} parent=0 // pred_region
    _
  $region9: #{dueling_dqn_forward.6} parent=0 // pred_fallthru
    _
  // Predicated region
  $region10: #{dueling_dqn_forward.6} parent=0 // pred_check
    _
  $region11: #{dueling_dqn_forward.6} parent=0 // pred_check_branch
    %13 = sbr.rel (0) target = $region13
  $region12: #{dueling_dqn_forward.6} parent=0 // pred_region
    _
  $region13: #{dueling_dqn_forward.6} parent=0 // pred_fallthru
    _
  %v14 = vld [vmem:[%s0] sm:$0xff]
  %v15 = vld [vmem:[%s0 + $0x8] sm:$0xff]
  %v16 = vld [vmem:[%s0 + $0x10] sm:$0xff]
  %v17 = vld [vmem:[%s0 + $0x18] sm:$0xff]
  %v18 = vld [vmem:[%s0 + $0x20] sm:$0xff]
  %v19 = vld [vmem:[%s0 + $0x28] sm:$0xff]
  %v20 = vld [vmem:[%s0 + $0x30] sm:$0xff]
  %v21 = vld [vmem:[%s0 + $0x38] sm:$0xff]
  %v22 = vld [vmem:[%s0 + $0x40] sm:$0xff]
  %v23 = vld [vmem:[%s0 + $0x48] sm:$0xff]
  %v24 = vld [vmem:[%s0 + $0x50] sm:$0xff]
  %v25 = vld [vmem:[%s0 + $0x58] sm:$0xff]
  %v26 = vld [vmem:[%s0 + $0x60] sm:$0xff]
  %v27 = vld [vmem:[%s0 + $0x68] sm:$0xff]
  %v28 = vld [vmem:[%s0 + $0x70] sm:$0xff]
  %v29 = vld [vmem:[%s0 + $0x78] sm:$0xff]
  %v30 = vld [vmem:[%s0 + $0x80] sm:$0xff]
  %v31 = vld [vmem:[%s0 + $0x88] sm:$0xff]
  %v32 = vld [vmem:[%s0 + $0x90] sm:$0xff]
  %v33 = vld [vmem:[%s0 + $0x98] sm:$0xff]
  %v34 = vld [vmem:[%s0 + $0xa0] sm:$0xff]
  %v35 = vld [vmem:[%s0 + $0xa8] sm:$0xff]
  %v36 = vld [vmem:[%s0 + $0xb0] sm:$0xff]
  %v37 = vld [vmem:[%s0 + $0xb8] sm:$0xff]
  %v38 = vld [vmem:[%s0 + $0xc0] sm:$0xff]
  %v39 = vld [vmem:[%s0 + $0xc8] sm:$0xff]
  %v40 = vld [vmem:[%s0 + $0xd0] sm:$0xff]
  %v41 = vld [vmem:[%s0 + $0xd8] sm:$0xff]
  %v42 = vld [vmem:[%s0 + $0xe0] sm:$0xff]
  %v43 = vld [vmem:[%s0 + $0xe8] sm:$0xff]
  %v44 = vld [vmem:[%s0 + $0xf0] sm:$0xff]
  %v45 = vld [vmem:[%s0 + $0xf8] sm:$0xff]
  %v46 = vld [vmem:[%s0 + $0x100] sm:$0xff]
  %v47 = vld [vmem:[%s0 + $0x108] sm:$0xff]
  %v48 = vld [vmem:[%s0 + $0x110] sm:$0xff]
  %v49 = vld [vmem:[%s0 + $0x118] sm:$0xff]
  %v50 = vld [vmem:[%s0 + $0x120] sm:$0xff]
  %v51 = vld [vmem:[%s0 + $0x128] sm:$0xff]
  %v52 = vld [vmem:[%s0 + $0x130] sm:$0xff]
  %v53 = vld [vmem:[%s0 + $0x138] sm:$0xff]
  %v54 = vld [vmem:[%s0 + $0x140] sm:$0xff]
  %v55 = vld [vmem:[%s0 + $0x148] sm:$0xff]
  %v56 = vld [vmem:[%s0 + $0x150] sm:$0xff]
  %v57 = vld [vmem:[%s0 + $0x158] sm:$0xff]
  %v58 = vld [vmem:[%s0 + $0x160] sm:$0xff]
  %v59 = vld [vmem:[%s0 + $0x168] sm:$0xff]
  %v60 = vld [vmem:[%s0 + $0x170] sm:$0xff]
  %v61 = vld [vmem:[%s0 + $0x178] sm:$0xff]
  %v62 = vld [vmem:[%s0 + $0x180] sm:$0xff]
  %v63 = vld [vmem:[%s0 + $0x188] sm:$0xff]
  %v64 = vld [vmem:[%s0 + $0x190] sm:$0xff]
  %v65 = vld [vmem:[%s0 + $0x198] sm:$0xff]
  %v66 = vld [vmem:[%s0 + $0x1a0] sm:$0xff]
  %v67 = vld [vmem:[%s0 + $0x1a8] sm:$0xff]
  %v68 = vld [vmem:[%s0 + $0x1b0] sm:$0xff]
  %v69 = vld [vmem:[%s0 + $0x1b8] sm:$0xff]
  %v70 = vld [vmem:[%s0 + $0x1c0] sm:$0xff]
  %v71 = vld [vmem:[%s0 + $0x1c8] sm:$0xff]
  %v72 = vld [vmem:[%s0 + $0x1d0] sm:$0xff]
  %v73 = vld [vmem:[%s0 + $0x1d8] sm:$0xff]
  %v74 = vld [vmem:[%s0 + $0x1e0] sm:$0x3]
  %v75 = vld [vmem:[%s0 + $0x1e8] sm:$0x3]
  %v76 = vld [vmem:[%s0 + $0x1f0] sm:$0x3]
  %v77 = vld [vmem:[%s0 + $0x1f8] sm:$0x3]
  %v78 = vld [vmem:[%s0 + $0x200] sm:$0x3]
  %v79 = vld [vmem:[%s1] sm:$0xff]
  %v80 = vld [vmem:[%s1 + $0x8] sm:$0xff]
  %v81 = vld [vmem:[%s1 + $0x10] sm:$0xff]
  %v82 = vld [vmem:[%s1 + $0x18] sm:$0xff]
  %v83 = vld [vmem:[%s1 + $0x20] sm:$0xff]
  %v84 = vld [vmem:[%s1 + $0x28] sm:$0xff]
  %v85 = vld [vmem:[%s1 + $0x30] sm:$0xff]
  %v86 = vld [vmem:[%s1 + $0x38] sm:$0xff]
  %v87 = vld [vmem:[%s1 + $0x40] sm:$0xff]
  %v88 = vld [vmem:[%s1 + $0x48] sm:$0xff]
  %v89 = vld [vmem:[%s1 + $0x50] sm:$0xff]
  %v90 = vld [vmem:[%s1 + $0x58] sm:$0xff]
  %v91 = vld [vmem:[%s1 + $0x60] sm:$0xff]
  %v92 = vld [vmem:[%s1 + $0x68] sm:$0xff]
  %v93 = vld [vmem:[%s1 + $0x70] sm:$0xff]
  %v94 = vld [vmem:[%s1 + $0x78] sm:$0xff]
  %v95 = vld [vmem:[%s1 + $0x80] sm:$0xff]
  %v96 = vld [vmem:[%s1 + $0x88] sm:$0xff]
  %v97 = vld [vmem:[%s1 + $0x90] sm:$0xff]
  %v98 = vld [vmem:[%s1 + $0x98] sm:$0xff]
  %v99 = vld [vmem:[%s1 + $0xa0] sm:$0xff]
  %v100 = vld [vmem:[%s1 + $0xa8] sm:$0xff]
  %v101 = vld [vmem:[%s1 + $0xb0] sm:$0xff]
  %v102 = vld [vmem:[%s1 + $0xb8] sm:$0xff]
  %v103 = vld [vmem:[%s1 + $0xc0] sm:$0xff]
  %v104 = vld [vmem:[%s1 + $0xc8] sm:$0xff]
  %v105 = vld [vmem:[%s1 + $0xd0] sm:$0xff]
  %v106 = vld [vmem:[%s1 + $0xd8] sm:$0xff]
  %v107 = vld [vmem:[%s1 + $0xe0] sm:$0xff]
  %v108 = vld [vmem:[%s1 + $0xe8] sm:$0xff]
  %v109 = vld [vmem:[%s1 + $0xf0] sm:$0xff]
  %v110 = vld [vmem:[%s1 + $0xf8] sm:$0xff]
  %v111 = vld [vmem:[%s1 + $0x100] sm:$0xff]
  %v112 = vld [vmem:[%s1 + $0x108] sm:$0xff]
  %v113 = vld [vmem:[%s1 + $0x110] sm:$0xff]
  %v114 = vld [vmem:[%s1 + $0x118] sm:$0xff]
  %v115 = vld [vmem:[%s1 + $0x120] sm:$0xff]
  %v116 = vld [vmem:[%s1 + $0x128] sm:$0xff]
  %v117 = vld [vmem:[%s1 + $0x130] sm:$0xff]
  %v118 = vld [vmem:[%s1 + $0x138] sm:$0xff]
  %v119 = vld [vmem:[%s1 + $0x140] sm:$0xff]
  %v120 = vld [vmem:[%s1 + $0x148] sm:$0xff]
  %v121 = vld [vmem:[%s1 + $0x150] sm:$0xff]
  %v122 = vld [vmem:[%s1 + $0x158] sm:$0xff]
  %v123 = vld [vmem:[%s1 + $0x160] sm:$0xff]
  %v124 = vld [vmem:[%s1 + $0x168] sm:$0xff]
  %v125 = vld [vmem:[%s1 + $0x170] sm:$0xff]
  %v126 = vld [vmem:[%s1 + $0x178] sm:$0xff]
  %v127 = vld [vmem:[%s1 + $0x180] sm:$0xff]
  %v128 = vld [vmem:[%s1 + $0x188] sm:$0xff]
  %v129 = vld [vmem:[%s1 + $0x190] sm:$0xff]
  %v130 = vld [vmem:[%s1 + $0x198] sm:$0xff]
  %v131 = vld [vmem:[%s1 + $0x1a0] sm:$0xff]
  %v132 = vld [vmem:[%s1 + $0x1a8] sm:$0xff]
  %v133 = vld [vmem:[%s1 + $0x1b0] sm:$0xff]
  %v134 = vld [vmem:[%s1 + $0x1b8] sm:$0xff]
  %v135 = vld [vmem:[%s1 + $0x1c0] sm:$0xff]
  %v136 = vld [vmem:[%s1 + $0x1c8] sm:$0xff]
  %v137 = vld [vmem:[%s1 + $0x1d0] sm:$0xff]
  %v138 = vld [vmem:[%s1 + $0x1d8] sm:$0xff]
  %v139 = vld [vmem:[%s1 + $0x1e0] sm:$0xff]
  %v140 = vld [vmem:[%s1 + $0x1e8] sm:$0xff]
  %v141 = vld [vmem:[%s1 + $0x1f0] sm:$0xff]
  %v142 = vld [vmem:[%s1 + $0x1f8] sm:$0xff]
  %v143 = vld [vmem:[%s1 + $0x200] sm:$0xff]
  %v144 = vld [vmem:[%s1 + $0x208] sm:$0xff]
  %v145 = vld [vmem:[%s1 + $0x210] sm:$0xff]
  %v146 = vld [vmem:[%s1 + $0x218] sm:$0xff]
  %v147 = vld [vmem:[%s1 + $0x220] sm:$0xff]
  %v148 = vld [vmem:[%s1 + $0x228] sm:$0xff]
  %v149 = vld [vmem:[%s1 + $0x230] sm:$0xff]
  %v150 = vld [vmem:[%s1 + $0x238] sm:$0xff]
  %v151 = vld [vmem:[%s2] sm:$0x1]
  %v153 = vperm.slane %v151, 0
  %vm155 = vcmask 523264
  %v157 = vsel %vm155, %v18, 0
  %v160 = vsel %vm155, %v23, 0
  %v163 = vsel %vm155, %v28, 0
  %v166 = vsel %vm155, %v33, 0
  %v169 = vsel %vm155, %v38, 0
  %v172 = vsel %vm155, %v43, 0
  %v175 = vsel %vm155, %v48, 0
  %v178 = vsel %vm155, %v53, 0
  %v181 = vsel %vm155, %v58, 0
  %v184 = vsel %vm155, %v63, 0
  %v187 = vsel %vm155, %v68, 0
  %v190 = vsel %vm155, %v73, 0
  %v193 = vsel %vm155, %v78, 0
  %195 = vmatpush.msra.mxu0 %v94
  %196 = vmatpush.msra.mxu0 %v93
  %197 = vmatpush.msra.mxu0 %v92
  %198 = vmatpush.msra.mxu0 %v91
  %199 = vmatpush.msra.mxu0 %v90
  %200 = vmatpush.msra.mxu0 %v89
  %201 = vmatpush.msra.mxu0 %v88
  %202 = vmatpush.msra.mxu0 %v87
  %203 = vmatpush.msra.mxu0 %v86
  %204 = vmatpush.msra.mxu0 %v85
  %205 = vmatpush.msra.mxu0 %v84
  %206 = vmatpush.msra.mxu0 %v83
  %207 = vmatpush.msra.mxu0 %v82
  %208 = vmatpush.msra.mxu0 %v81
  %209 = vmatpush.msra.mxu0 %v80
  %210 = vmatpush.msra.mxu0 %v79
  %211 = vmatmul.f32.gmra.mxu0 %v14
  %v212 = vpop.f32.mrf.mxu0
  %v213 = vadd.f32 %v153, %v212
  %214 = vmatmul.f32.gmra.mxu0 %v19
  %v215 = vpop.f32.mrf.mxu0
  %v216 = vadd.f32 %v153, %v215
  %217 = vmatmul.f32.gmra.mxu0 %v24
  %v218 = vpop.f32.mrf.mxu0
  %v219 = vadd.f32 %v153, %v218
  %220 = vmatmul.f32.gmra.mxu0 %v29
  %v221 = vpop.f32.mrf.mxu0
  %v222 = vadd.f32 %v153, %v221
  %223 = vmatmul.f32.gmra.mxu0 %v34
  %v224 = vpop.f32.mrf.mxu0
  %v225 = vadd.f32 %v153, %v224
  %226 = vmatmul.f32.gmra.mxu0 %v39
  %v227 = vpop.f32.mrf.mxu0
  %v228 = vadd.f32 %v153, %v227
  %229 = vmatmul.f32.gmra.mxu0 %v44
  %v230 = vpop.f32.mrf.mxu0
  %v231 = vadd.f32 %v153, %v230
  %232 = vmatmul.f32.gmra.mxu0 %v49
  %v233 = vpop.f32.mrf.mxu0
  %v234 = vadd.f32 %v153, %v233
  %235 = vmatmul.f32.gmra.mxu0 %v54
  %v236 = vpop.f32.mrf.mxu0
  %v237 = vadd.f32 %v153, %v236
  %238 = vmatmul.f32.gmra.mxu0 %v59
  %v239 = vpop.f32.mrf.mxu0
  %v240 = vadd.f32 %v153, %v239
  %241 = vmatmul.f32.gmra.mxu0 %v64
  %v242 = vpop.f32.mrf.mxu0
  %v243 = vadd.f32 %v153, %v242
  %244 = vmatmul.f32.gmra.mxu0 %v69
  %v245 = vpop.f32.mrf.mxu0
  %v246 = vadd.f32 %v153, %v245
  %247 = vmatmul.f32.gmra.mxu0 %v74
  %v248 = vpop.f32.mrf.mxu0
  %v249 = vadd.f32 %v153, %v248
  %250 = vdwg.mxu0
  %251 = vmatpush.msra.mxu0 %v110
  %252 = vmatpush.msra.mxu0 %v109
  %253 = vmatpush.msra.mxu0 %v108
  %254 = vmatpush.msra.mxu0 %v107
  %255 = vmatpush.msra.mxu0 %v106
  %256 = vmatpush.msra.mxu0 %v105
  %257 = vmatpush.msra.mxu0 %v104
  %258 = vmatpush.msra.mxu0 %v103
  %259 = vmatpush.msra.mxu0 %v102
  %260 = vmatpush.msra.mxu0 %v101
  %261 = vmatpush.msra.mxu0 %v100
  %262 = vmatpush.msra.mxu0 %v99
  %263 = vmatpush.msra.mxu0 %v98
  %264 = vmatpush.msra.mxu0 %v97
  %265 = vmatpush.msra.mxu0 %v96
  %266 = vmatpush.msra.mxu0 %v95
  %267 = vmatmul.f32.gmra.mxu0 %v15
  %v268 = vpop.f32.mrf.mxu0
  %v269 = vadd.f32 %v213, %v268
  %270 = vmatmul.f32.gmra.mxu0 %v20
  %v271 = vpop.f32.mrf.mxu0
  %v272 = vadd.f32 %v216, %v271
  %273 = vmatmul.f32.gmra.mxu0 %v25
  %v274 = vpop.f32.mrf.mxu0
  %v275 = vadd.f32 %v219, %v274
  %276 = vmatmul.f32.gmra.mxu0 %v30
  %v277 = vpop.f32.mrf.mxu0
  %v278 = vadd.f32 %v222, %v277
  %279 = vmatmul.f32.gmra.mxu0 %v35
  %v280 = vpop.f32.mrf.mxu0
  %v281 = vadd.f32 %v225, %v280
  %282 = vmatmul.f32.gmra.mxu0 %v40
  %v283 = vpop.f32.mrf.mxu0
  %v284 = vadd.f32 %v228, %v283
  %285 = vmatmul.f32.gmra.mxu0 %v45
  %v286 = vpop.f32.mrf.mxu0
  %v287 = vadd.f32 %v231, %v286
  %288 = vmatmul.f32.gmra.mxu0 %v50
  %v289 = vpop.f32.mrf.mxu0
  %v290 = vadd.f32 %v234, %v289
  %291 = vmatmul.f32.gmra.mxu0 %v55
  %v292 = vpop.f32.mrf.mxu0
  %v293 = vadd.f32 %v237, %v292
  %294 = vmatmul.f32.gmra.mxu0 %v60
  %v295 = vpop.f32.mrf.mxu0
  %v296 = vadd.f32 %v240, %v295
  %297 = vmatmul.f32.gmra.mxu0 %v65
  %v298 = vpop.f32.mrf.mxu0
  %v299 = vadd.f32 %v243, %v298
  %300 = vmatmul.f32.gmra.mxu0 %v70
  %v301 = vpop.f32.mrf.mxu0
  %v302 = vadd.f32 %v246, %v301
  %303 = vmatmul.f32.gmra.mxu0 %v75
  %v304 = vpop.f32.mrf.mxu0
  %v305 = vadd.f32 %v249, %v304
  %306 = vdwg.mxu0
  %307 = vmatpush.msra.mxu0 %v126
  %308 = vmatpush.msra.mxu0 %v125
  %309 = vmatpush.msra.mxu0 %v124
  %310 = vmatpush.msra.mxu0 %v123
  %311 = vmatpush.msra.mxu0 %v122
  %312 = vmatpush.msra.mxu0 %v121
  %313 = vmatpush.msra.mxu0 %v120
  %314 = vmatpush.msra.mxu0 %v119
  %315 = vmatpush.msra.mxu0 %v118
  %316 = vmatpush.msra.mxu0 %v117
  %317 = vmatpush.msra.mxu0 %v116
  %318 = vmatpush.msra.mxu0 %v115
  %319 = vmatpush.msra.mxu0 %v114
  %320 = vmatpush.msra.mxu0 %v113
  %321 = vmatpush.msra.mxu0 %v112
  %322 = vmatpush.msra.mxu0 %v111
  %323 = vmatmul.f32.gmra.mxu0 %v16
  %v324 = vpop.f32.mrf.mxu0
  %v325 = vadd.f32 %v269, %v324
  %326 = vmatmul.f32.gmra.mxu0 %v21
  %v327 = vpop.f32.mrf.mxu0
  %v328 = vadd.f32 %v272, %v327
  %329 = vmatmul.f32.gmra.mxu0 %v26
  %v330 = vpop.f32.mrf.mxu0
  %v331 = vadd.f32 %v275, %v330
  %332 = vmatmul.f32.gmra.mxu0 %v31
  %v333 = vpop.f32.mrf.mxu0
  %v334 = vadd.f32 %v278, %v333
  %335 = vmatmul.f32.gmra.mxu0 %v36
  %v336 = vpop.f32.mrf.mxu0
  %v337 = vadd.f32 %v281, %v336
  %338 = vmatmul.f32.gmra.mxu0 %v41
  %v339 = vpop.f32.mrf.mxu0
  %v340 = vadd.f32 %v284, %v339
  %341 = vmatmul.f32.gmra.mxu0 %v46
  %v342 = vpop.f32.mrf.mxu0
  %v343 = vadd.f32 %v287, %v342
  %344 = vmatmul.f32.gmra.mxu0 %v51
  %v345 = vpop.f32.mrf.mxu0
  %v346 = vadd.f32 %v290, %v345
  %347 = vmatmul.f32.gmra.mxu0 %v56
  %v348 = vpop.f32.mrf.mxu0
  %v349 = vadd.f32 %v293, %v348
  %350 = vmatmul.f32.gmra.mxu0 %v61
  %v351 = vpop.f32.mrf.mxu0
  %v352 = vadd.f32 %v296, %v351
  %353 = vmatmul.f32.gmra.mxu0 %v66
  %v354 = vpop.f32.mrf.mxu0
  %v355 = vadd.f32 %v299, %v354
  %356 = vmatmul.f32.gmra.mxu0 %v71
  %v357 = vpop.f32.mrf.mxu0
  %v358 = vadd.f32 %v302, %v357
  %359 = vmatmul.f32.gmra.mxu0 %v76
  %v360 = vpop.f32.mrf.mxu0
  %v361 = vadd.f32 %v305, %v360
  %362 = vdwg.mxu0
  %363 = vmatpush.msra.mxu0 %v142
  %364 = vmatpush.msra.mxu0 %v141
  %365 = vmatpush.msra.mxu0 %v140
  %366 = vmatpush.msra.mxu0 %v139
  %367 = vmatpush.msra.mxu0 %v138
  %368 = vmatpush.msra.mxu0 %v137
  %369 = vmatpush.msra.mxu0 %v136
  %370 = vmatpush.msra.mxu0 %v135
  %371 = vmatpush.msra.mxu0 %v134
  %372 = vmatpush.msra.mxu0 %v133
  %373 = vmatpush.msra.mxu0 %v132
  %374 = vmatpush.msra.mxu0 %v131
  %375 = vmatpush.msra.mxu0 %v130
  %376 = vmatpush.msra.mxu0 %v129
  %377 = vmatpush.msra.mxu0 %v128
  %378 = vmatpush.msra.mxu0 %v127
  %379 = vmatmul.f32.gmra.mxu0 %v17
  %v380 = vpop.f32.mrf.mxu0
  %v381 = vadd.f32 %v325, %v380
  %382 = vmatmul.f32.gmra.mxu0 %v22
  %v383 = vpop.f32.mrf.mxu0
  %v384 = vadd.f32 %v328, %v383
  %385 = vmatmul.f32.gmra.mxu0 %v27
  %v386 = vpop.f32.mrf.mxu0
  %v387 = vadd.f32 %v331, %v386
  %388 = vmatmul.f32.gmra.mxu0 %v32
  %v389 = vpop.f32.mrf.mxu0
  %v390 = vadd.f32 %v334, %v389
  %391 = vmatmul.f32.gmra.mxu0 %v37
  %v392 = vpop.f32.mrf.mxu0
  %v393 = vadd.f32 %v337, %v392
  %394 = vmatmul.f32.gmra.mxu0 %v42
  %v395 = vpop.f32.mrf.mxu0
  %v396 = vadd.f32 %v340, %v395
  %397 = vmatmul.f32.gmra.mxu0 %v47
  %v398 = vpop.f32.mrf.mxu0
  %v399 = vadd.f32 %v343, %v398
  %400 = vmatmul.f32.gmra.mxu0 %v52
  %v401 = vpop.f32.mrf.mxu0
  %v402 = vadd.f32 %v346, %v401
  %403 = vmatmul.f32.gmra.mxu0 %v57
  %v404 = vpop.f32.mrf.mxu0
  %v405 = vadd.f32 %v349, %v404
  %406 = vmatmul.f32.gmra.mxu0 %v62
  %v407 = vpop.f32.mrf.mxu0
  %v408 = vadd.f32 %v352, %v407
  %409 = vmatmul.f32.gmra.mxu0 %v67
  %v410 = vpop.f32.mrf.mxu0
  %v411 = vadd.f32 %v355, %v410
  %412 = vmatmul.f32.gmra.mxu0 %v72
  %v413 = vpop.f32.mrf.mxu0
  %v414 = vadd.f32 %v358, %v413
  %415 = vmatmul.f32.gmra.mxu0 %v77
  %v416 = vpop.f32.mrf.mxu0
  %v417 = vadd.f32 %v361, %v416
  %418 = vdwg.mxu0
  %419 = vmatpush.msra.mxu0 0.0
  %420 = vmatpush.msra.mxu0 0.0
  %421 = vmatpush.msra.mxu0 0.0
  %422 = vmatpush.msra.mxu0 0.0
  %423 = vmatpush.msra.mxu0 0.0
  %424 = vmatpush.msra.mxu0 0.0
  %425 = vmatpush.msra.mxu0 0.0
  %426 = vmatpush.msra.mxu0 0.0
  %427 = vmatpush.msra.mxu0 %v150
  %428 = vmatpush.msra.mxu0 %v149
  %429 = vmatpush.msra.mxu0 %v148
  %430 = vmatpush.msra.mxu0 %v147
  %431 = vmatpush.msra.mxu0 %v146
  %432 = vmatpush.msra.mxu0 %v145
  %433 = vmatpush.msra.mxu0 %v144
  %434 = vmatpush.msra.mxu0 %v143
  %435 = vmatmul.f32.gmra.mxu0 %v157
  %v436 = vpop.f32.mrf.mxu0
  %v437 = vadd.f32 %v381, %v436
  %438 = vmatmul.f32.gmra.mxu0 %v160
  %v439 = vpop.f32.mrf.mxu0
  %v440 = vadd.f32 %v384, %v439
  %441 = vmatmul.f32.gmra.mxu0 %v163
  %v442 = vpop.f32.mrf.mxu0
  %v443 = vadd.f32 %v387, %v442
  %444 = vmatmul.f32.gmra.mxu0 %v166
  %v445 = vpop.f32.mrf.mxu0
  %v446 = vadd.f32 %v390, %v445
  %447 = vmatmul.f32.gmra.mxu0 %v169
  %v448 = vpop.f32.mrf.mxu0
  %v449 = vadd.f32 %v393, %v448
  %450 = vmatmul.f32.gmra.mxu0 %v172
  %v451 = vpop.f32.mrf.mxu0
  %v452 = vadd.f32 %v396, %v451
  %453 = vmatmul.f32.gmra.mxu0 %v175
  %v454 = vpop.f32.mrf.mxu0
  %v455 = vadd.f32 %v399, %v454
  %456 = vmatmul.f32.gmra.mxu0 %v178
  %v457 = vpop.f32.mrf.mxu0
  %v458 = vadd.f32 %v402, %v457
  %459 = vmatmul.f32.gmra.mxu0 %v181
  %v460 = vpop.f32.mrf.mxu0
  %v461 = vadd.f32 %v405, %v460
  %462 = vmatmul.f32.gmra.mxu0 %v184
  %v463 = vpop.f32.mrf.mxu0
  %v464 = vadd.f32 %v408, %v463
  %465 = vmatmul.f32.gmra.mxu0 %v187
  %v466 = vpop.f32.mrf.mxu0
  %v467 = vadd.f32 %v411, %v466
  %468 = vmatmul.f32.gmra.mxu0 %v190
  %v469 = vpop.f32.mrf.mxu0
  %v470 = vadd.f32 %v414, %v469
  %471 = vmatmul.f32.gmra.mxu0 %v193
  %v472 = vpop.f32.mrf.mxu0
  %v473 = vadd.f32 %v417, %v472
  %474 = vdwg.mxu0
  %v475 = vmax.f32 %v437, 0.0
  %v476 = vmax.f32 %v440, 0.0
  %v477 = vmax.f32 %v443, 0.0
  %v478 = vmax.f32 %v446, 0.0
  %v479 = vmax.f32 %v449, 0.0
  %v480 = vmax.f32 %v452, 0.0
  %v481 = vmax.f32 %v455, 0.0
  %v482 = vmax.f32 %v458, 0.0
  %v483 = vmax.f32 %v461, 0.0
  %v484 = vmax.f32 %v464, 0.0
  %v485 = vmax.f32 %v467, 0.0
  %v486 = vmax.f32 %v470, 0.0
  %v487 = vmax.f32 %v473, 0.0
  %488 = vst.msk [vmem:[%s3] sm:$0xff] %vm155, %v475
  %489 = vst.msk [vmem:[%s3 + $0x8] sm:$0xff] %vm155, %v476
  %490 = vst.msk [vmem:[%s3 + $0x10] sm:$0xff] %vm155, %v477
  %491 = vst.msk [vmem:[%s3 + $0x18] sm:$0xff] %vm155, %v478
  %492 = vst.msk [vmem:[%s3 + $0x20] sm:$0xff] %vm155, %v479
  %493 = vst.msk [vmem:[%s3 + $0x28] sm:$0xff] %vm155, %v480
  %494 = vst.msk [vmem:[%s3 + $0x30] sm:$0xff] %vm155, %v481
  %495 = vst.msk [vmem:[%s3 + $0x38] sm:$0xff] %vm155, %v482
  %496 = vst.msk [vmem:[%s3 + $0x40] sm:$0xff] %vm155, %v483
  %497 = vst.msk [vmem:[%s3 + $0x48] sm:$0xff] %vm155, %v484
  %498 = vst.msk [vmem:[%s3 + $0x50] sm:$0xff] %vm155, %v485
  %499 = vst.msk [vmem:[%s3 + $0x58] sm:$0xff] %vm155, %v486
  %vm500 = vcmask 517120
  %501 = vst.msk [vmem:[%s3 + $0x60] sm:$0x3] %vm500, %v487
  // Predicated region
  $region14: #{dueling_dqn_forward.6} parent=0 // pred_check
    _
  $region15: #{dueling_dqn_forward.6} parent=0 // pred_check_branch
    %503 = sbr.rel (0) target = $region17
  $region16: #{dueling_dqn_forward.6} parent=0 // pred_region
    _
  $region17: #{dueling_dqn_forward.6} parent=0 // pred_fallthru
    _
  // Predicated region
  $region18: #{dueling_dqn_forward.6} parent=0 // pred_check
    _
  $region19: #{dueling_dqn_forward.6} parent=0 // pred_check_branch
    %505 = sbr.rel (0) target = $region21
  $region20: #{dueling_dqn_forward.6} parent=0 // pred_region
    _
  $region21: #{dueling_dqn_forward.6} parent=0 // pred_fallthru
    _

// kernel: dueling_dqn_forward.7
$region0: #{dueling_dqn_forward.7}
  #allocation0 [shape = 'u32[]', space=smem, size = 0x4, offset = 0x4, fixed_abs, tag = 'smem constant byte address 0x4 - core index']
  #allocation1 [shape = 'u32[72,128]{1,0:T(1,128)}', space=vmem, size = 0x9000, scoped, tag = 'internal scratch']
  %s0 = inlined_call_operand.vmem [shape: f32[2,3136], index: 0, kind: input, shape index: {}]
  %s1 = inlined_call_operand.vmem [shape: f32[3136,1024], index: 1, kind: input, shape index: {}]
  %s2 = inlined_call_operand.vmem [shape: f32[1,1024], index: 2, kind: input, shape index: {}]
  %s3 = inlined_call_operand.vmem [shape: f32[1024,5], index: 3, kind: input, shape index: {}]
  %s4 = inlined_call_operand.vmem [shape: f32[1,5], index: 4, kind: input, shape index: {}]
  %s5 = inlined_call_operand.hbm [shape: f32[2,4], index: 5, kind: output, shape index: {}]
  %s6 = sld [smem:[#allocation0]]
  $region30: #{dueling_dqn_forward.7} parent=0
    _
  %s8 = ssub.s32 1, %s6
  %s9 = scalar_select 0, %s8, %s6
  $region1: #{dueling_dqn_forward.7} parent=0
    #allocation2 [shape = 'u8[1024]{0}', space=vmem, size = 0x400, scoped, tag = 'output window, operand 0, single buffered']
    #allocation3 [shape = 's32[1]{0}', space=sflag, size = 0x4, scoped, tag = 'scoped memory for dueling_dqn_forward.7']
    %10 = vsyncpa [#allocation3], 0
    // Predicated region
    $region2: #{dueling_dqn_forward.7} parent=1 // pred_check
      _
    $region3: #{dueling_dqn_forward.7} parent=1 // pred_check_branch
      %12 = sbr.rel (0) target = $region5
    $region4: #{dueling_dqn_forward.7} parent=1 // pred_region
      _
    $region5: #{dueling_dqn_forward.7} parent=1 // pred_fallthru
      _
    // Predicated region
    $region6: #{dueling_dqn_forward.7} parent=1 // pred_check
      _
    $region7: #{dueling_dqn_forward.7} parent=1 // pred_check_branch
      %14 = sbr.rel (0) target = $region9
    $region8: #{dueling_dqn_forward.7} parent=1 // pred_region
      _
    $region9: #{dueling_dqn_forward.7} parent=1 // pred_fallthru
      _
    // Predicated region
    $region10: #{dueling_dqn_forward.7} parent=1 // pred_check
      _
    $region11: #{dueling_dqn_forward.7} parent=1 // pred_check_branch
      %16 = sbr.rel (0) target = $region13
    $region12: #{dueling_dqn_forward.7} parent=1 // pred_region
      _
    $region13: #{dueling_dqn_forward.7} parent=1 // pred_fallthru
      _
    // Predicated region
    $region14: #{dueling_dqn_forward.7} parent=1 // pred_check
      _
    $region15: #{dueling_dqn_forward.7} parent=1 // pred_check_branch
      %18 = sbr.rel (0) target = $region17
    $region16: #{dueling_dqn_forward.7} parent=1 // pred_region
      _
    $region17: #{dueling_dqn_forward.7} parent=1 // pred_fallthru
      _
    // Predicated region
    $region18: #{dueling_dqn_forward.7} parent=1 // pred_check
      _
    $region19: #{dueling_dqn_forward.7} parent=1 // pred_check_branch
      %20 = sbr.rel (0) target = $region21
    $region20: #{dueling_dqn_forward.7} parent=1 // pred_region
      _
    $region21: #{dueling_dqn_forward.7} parent=1 // pred_fallthru
      _
    %v21 = vld [vmem:[%s0] sm:$0xff]
    %v22 = vld [vmem:[%s0 + $0x8] sm:$0xff]
    %v23 = vld [vmem:[%s0 + $0x10] sm:$0xff]
    %v24 = vld [vmem:[%s0 + $0x18] sm:$0xff]
    %v25 = vld [vmem:[%s0 + $0x20] sm:$0xff]
    %v26 = vld [vmem:[%s0 + $0x28] sm:$0xff]
    %v27 = vld [vmem:[%s0 + $0x30] sm:$0x3]
    %v28 = vld [vmem:[%s1] sm:$0xff]
    %v29 = vld [vmem:[%s1 + $0x8] sm:$0xff]
    %v30 = vld [vmem:[%s1 + $0x10] sm:$0xff]
    %v31 = vld [vmem:[%s1 + $0x18] sm:$0xff]
    %v32 = vld [vmem:[%s1 + $0x20] sm:$0xff]
    %v33 = vld [vmem:[%s1 + $0x28] sm:$0xff]
    %v34 = vld [vmem:[%s1 + $0x30] sm:$0xff]
    %v35 = vld [vmem:[%s1 + $0x38] sm:$0xff]
    %v36 = vld [vmem:[%s1 + $0x40] sm:$0xff]
    %v37 = vld [vmem:[%s1 + $0x48] sm:$0xff]
    %v38 = vld [vmem:[%s1 + $0x50] sm:$0xff]
    %v39 = vld [vmem:[%s1 + $0x58] sm:$0xff]
    %v40 = vld [vmem:[%s1 + $0x60] sm:$0xff]
    %v41 = vld [vmem:[%s1 + $0x68] sm:$0xff]
    %v42 = vld [vmem:[%s1 + $0x70] sm:$0xff]
    %v43 = vld [vmem:[%s1 + $0x78] sm:$0xff]
    %v44 = vld [vmem:[%s1 + $0x80] sm:$0xff]
    %v45 = vld [vmem:[%s1 + $0x88] sm:$0xff]
    %v46 = vld [vmem:[%s1 + $0x90] sm:$0xff]
    %v47 = vld [vmem:[%s1 + $0x98] sm:$0xff]
    %v48 = vld [vmem:[%s1 + $0xa0] sm:$0xff]
    %v49 = vld [vmem:[%s1 + $0xa8] sm:$0xff]
    %v50 = vld [vmem:[%s1 + $0xb0] sm:$0xff]
    %v51 = vld [vmem:[%s1 + $0xb8] sm:$0xff]
    %v52 = vld [vmem:[%s1 + $0xc0] sm:$0xff]
    %v53 = vld [vmem:[%s1 + $0xc8] sm:$0xff]
    %v54 = vld [vmem:[%s1 + $0xd0] sm:$0xff]
    %v55 = vld [vmem:[%s1 + $0xd8] sm:$0xff]
    %v56 = vld [vmem:[%s1 + $0xe0] sm:$0xff]
    %v57 = vld [vmem:[%s1 + $0xe8] sm:$0xff]
    %v58 = vld [vmem:[%s1 + $0xf0] sm:$0xff]
    %v59 = vld [vmem:[%s1 + $0xf8] sm:$0xff]
    %v60 = vld [vmem:[%s1 + $0x100] sm:$0xff]
    %v61 = vld [vmem:[%s1 + $0x108] sm:$0xff]
    %v62 = vld [vmem:[%s1 + $0x110] sm:$0xff]
    %v63 = vld [vmem:[%s1 + $0x118] sm:$0xff]
    %v64 = vld [vmem:[%s1 + $0x120] sm:$0xff]
    %v65 = vld [vmem:[%s1 + $0x128] sm:$0xff]
    %v66 = vld [vmem:[%s1 + $0x130] sm:$0xff]
    %v67 = vld [vmem:[%s1 + $0x138] sm:$0xff]
    %v68 = vld [vmem:[%s1 + $0x140] sm:$0xff]
    %v69 = vld [vmem:[%s1 + $0x148] sm:$0xff]
    %v70 = vld [vmem:[%s1 + $0x150] sm:$0xff]
    %v71 = vld [vmem:[%s1 + $0x158] sm:$0xff]
    %v72 = vld [vmem:[%s1 + $0x160] sm:$0xff]
    %v73 = vld [vmem:[%s1 + $0x168] sm:$0xff]
    %v74 = vld [vmem:[%s1 + $0x170] sm:$0xff]
    %v75 = vld [vmem:[%s1 + $0x178] sm:$0xff]
    %v76 = vld [vmem:[%s1 + $0x180] sm:$0xff]
    %v77 = vld [vmem:[%s1 + $0x188] sm:$0xff]
    %v78 = vld [vmem:[%s1 + $0x190] sm:$0xff]
    %v79 = vld [vmem:[%s1 + $0x198] sm:$0xff]
    %v80 = vld [vmem:[%s1 + $0x1a0] sm:$0xff]
    %v81 = vld [vmem:[%s1 + $0x1a8] sm:$0xff]
    %v82 = vld [vmem:[%s1 + $0x1b0] sm:$0xff]
    %v83 = vld [vmem:[%s1 + $0x1b8] sm:$0xff]
    %v84 = vld [vmem:[%s1 + $0x1c0] sm:$0xff]
    %v85 = vld [vmem:[%s1 + $0x1c8] sm:$0xff]
    %v86 = vld [vmem:[%s1 + $0x1d0] sm:$0xff]
    %v87 = vld [vmem:[%s1 + $0x1d8] sm:$0xff]
    %v88 = vld [vmem:[%s1 + $0x1e0] sm:$0xff]
    %v89 = vld [vmem:[%s1 + $0x1e8] sm:$0xff]
    %v90 = vld [vmem:[%s1 + $0x1f0] sm:$0xff]
    %v91 = vld [vmem:[%s1 + $0x1f8] sm:$0xff]
    %v92 = vld [vmem:[%s1 + $0x200] sm:$0xff]
    %v93 = vld [vmem:[%s1 + $0x208] sm:$0xff]
    %v94 = vld [vmem:[%s1 + $0x210] sm:$0xff]
    %v95 = vld [vmem:[%s1 + $0x218] sm:$0xff]
    %v96 = vld [vmem:[%s1 + $0x220] sm:$0xff]
    %v97 = vld [vmem:[%s1 + $0x228] sm:$0xff]
    %v98 = vld [vmem:[%s1 + $0x230] sm:$0xff]
    %v99 = vld [vmem:[%s1 + $0x238] sm:$0xff]
    %v100 = vld [vmem:[%s1 + $0x240] sm:$0xff]
    %v101 = vld [vmem:[%s1 + $0x248] sm:$0xff]
    %v102 = vld [vmem:[%s1 + $0x250] sm:$0xff]
    %v103 = vld [vmem:[%s1 + $0x258] sm:$0xff]
    %v104 = vld [vmem:[%s1 + $0x260] sm:$0xff]
    %v105 = vld [vmem:[%s1 + $0x268] sm:$0xff]
    %v106 = vld [vmem:[%s1 + $0x270] sm:$0xff]
    %v107 = vld [vmem:[%s1 + $0x278] sm:$0xff]
    %v108 = vld [vmem:[%s1 + $0x280] sm:$0xff]
    %v109 = vld [vmem:[%s1 + $0x288] sm:$0xff]
    %v110 = vld [vmem:[%s1 + $0x290] sm:$0xff]
    %v111 = vld [vmem:[%s1 + $0x298] sm:$0xff]
    %v112 = vld [vmem:[%s1 + $0x2a0] sm:$0xff]
    %v113 = vld [vmem:[%s1 + $0x2a8] sm:$0xff]
    %v114 = vld [vmem:[%s1 + $0x2b0] sm:$0xff]
    %v115 = vld [vmem:[%s1 + $0x2b8] sm:$0xff]
    %v116 = vld [vmem:[%s1 + $0x2c0] sm:$0xff]
    %v117 = vld [vmem:[%s1 + $0x2c8] sm:$0xff]
    %v118 = vld [vmem:[%s1 + $0x2d0] sm:$0xff]
    %v119 = vld [vmem:[%s1 + $0x2d8] sm:$0xff]
    %v120 = vld [vmem:[%s1 + $0x2e0] sm:$0xff]
    %v121 = vld [vmem:[%s1 + $0x2e8] sm:$0xff]
    %v122 = vld [vmem:[%s1 + $0x2f0] sm:$0xff]
    %v123 = vld [vmem:[%s1 + $0x2f8] sm:$0xff]
    %v124 = vld [vmem:[%s1 + $0x300] sm:$0xff]
    %v125 = vld [vmem:[%s1 + $0x308] sm:$0xff]
    %v126 = vld [vmem:[%s1 + $0x310] sm:$0xff]
    %v127 = vld [vmem:[%s1 + $0x318] sm:$0xff]
    %v128 = vld [vmem:[%s1 + $0x320] sm:$0xff]
    %v129 = vld [vmem:[%s1 + $0x328] sm:$0xff]
    %v130 = vld [vmem:[%s1 + $0x330] sm:$0xff]
    %v131 = vld [vmem:[%s1 + $0x338] sm:$0xff]
    %v132 = vld [vmem:[%s1 + $0x340] sm:$0xff]
    %v133 = vld [vmem:[%s1 + $0x348] sm:$0xff]
    %v134 = vld [vmem:[%s1 + $0x350] sm:$0xff]
    %v135 = vld [vmem:[%s1 + $0x358] sm:$0xff]
    %v136 = vld [vmem:[%s1 + $0x360] sm:$0xff]
    %v137 = vld [vmem:[%s1 + $0x368] sm:$0xff]
    %v138 = vld [vmem:[%s1 + $0x370] sm:$0xff]
    %v139 = vld [vmem:[%s1 + $0x378] sm:$0xff]
    %v140 = vld [vmem:[%s1 + $0x380] sm:$0xff]
    %v141 = vld [vmem:[%s1 + $0x388] sm:$0xff]
    %v142 = vld [vmem:[%s1 + $0x390] sm:$0xff]
    %v143 = vld [vmem:[%s1 + $0x398] sm:$0xff]
    %v144 = vld [vmem:[%s1 + $0x3a0] sm:$0xff]
    %v145 = vld [vmem:[%s1 + $0x3a8] sm:$0xff]
    %v146 = vld [vmem:[%s1 + $0x3b0] sm:$0xff]
    %v147 = vld [vmem:[%s1 + $0x3b8] sm:$0xff]
    %v148 = vld [vmem:[%s1 + $0x3c0] sm:$0xff]
    %v149 = vld [vmem:[%s1 + $0x3c8] sm:$0xff]
    %v150 = vld [vmem:[%s1 + $0x3d0] sm:$0xff]
    %v151 = vld [vmem:[%s1 + $0x3d8] sm:$0xff]
    %v152 = vld [vmem:[%s1 + $0x3e0] sm:$0xff]
    %v153 = vld [vmem:[%s1 + $0x3e8] sm:$0xff]
    %v154 = vld [vmem:[%s1 + $0x3f0] sm:$0xff]
    %v155 = vld [vmem:[%s1 + $0x3f8] sm:$0xff]
    %v156 = vld [vmem:[%s1 + $0x400] sm:$0xff]
    %v157 = vld [vmem:[%s1 + $0x408] sm:$0xff]
    %v158 = vld [vmem:[%s1 + $0x410] sm:$0xff]
    %v159 = vld [vmem:[%s1 + $0x418] sm:$0xff]
    %v160 = vld [vmem:[%s1 + $0x420] sm:$0xff]
    %v161 = vld [vmem:[%s1 + $0x428] sm:$0xff]
    %v162 = vld [vmem:[%s1 + $0x430] sm:$0xff]
    %v163 = vld [vmem:[%s1 + $0x438] sm:$0xff]
    %v164 = vld [vmem:[%s1 + $0x440] sm:$0xff]
    %v165 = vld [vmem:[%s1 + $0x448] sm:$0xff]
    %v166 = vld [vmem:[%s1 + $0x450] sm:$0xff]
    %v167 = vld [vmem:[%s1 + $0x458] sm:$0xff]
    %v168 = vld [vmem:[%s1 + $0x460] sm:$0xff]
    %v169 = vld [vmem:[%s1 + $0x468] sm:$0xff]
    %v170 = vld [vmem:[%s1 + $0x470] sm:$0xff]
    %v171 = vld [vmem:[%s1 + $0x478] sm:$0xff]
    %v172 = vld [vmem:[%s1 + $0x480] sm:$0xff]
    %v173 = vld [vmem:[%s1 + $0x488] sm:$0xff]
    %v174 = vld [vmem:[%s1 + $0x490] sm:$0xff]
    %v175 = vld [vmem:[%s1 + $0x498] sm:$0xff]
    %v176 = vld [vmem:[%s1 + $0x4a0] sm:$0xff]
    %v177 = vld [vmem:[%s1 + $0x4a8] sm:$0xff]
    %v178 = vld [vmem:[%s1 + $0x4b0] sm:$0xff]
    %v179 = vld [vmem:[%s1 + $0x4b8] sm:$0xff]
    %v180 = vld [vmem:[%s1 + $0x4c0] sm:$0xff]
    %v181 = vld [vmem:[%s1 + $0x4c8] sm:$0xff]
    %v182 = vld [vmem:[%s1 + $0x4d0] sm:$0xff]
    %v183 = vld [vmem:[%s1 + $0x4d8] sm:$0xff]
    %v184 = vld [vmem:[%s1 + $0x4e0] sm:$0xff]
    %v185 = vld [vmem:[%s1 + $0x4e8] sm:$0xff]
    %v186 = vld [vmem:[%s1 + $0x4f0] sm:$0xff]
    %v187 = vld [vmem:[%s1 + $0x4f8] sm:$0xff]
    %v188 = vld [vmem:[%s1 + $0x500] sm:$0xff]
    %v189 = vld [vmem:[%s1 + $0x508] sm:$0xff]
    %v190 = vld [vmem:[%s1 + $0x510] sm:$0xff]
    %v191 = vld [vmem:[%s1 + $0x518] sm:$0xff]
    %v192 = vld [vmem:[%s1 + $0x520] sm:$0xff]
    %v193 = vld [vmem:[%s1 + $0x528] sm:$0xff]
    %v194 = vld [vmem:[%s1 + $0x530] sm:$0xff]
    %v195 = vld [vmem:[%s1 + $0x538] sm:$0xff]
    %v196 = vld [vmem:[%s1 + $0x540] sm:$0xff]
    %v197 = vld [vmem:[%s1 + $0x548] sm:$0xff]
    %v198 = vld [vmem:[%s1 + $0x550] sm:$0xff]
    %v199 = vld [vmem:[%s1 + $0x558] sm:$0xff]
    %v200 = vld [vmem:[%s1 + $0x560] sm:$0xff]
    %v201 = vld [vmem:[%s1 + $0x568] sm:$0xff]
    %v202 = vld [vmem:[%s1 + $0x570] sm:$0xff]
    %v203 = vld [vmem:[%s1 + $0x578] sm:$0xff]
    %v204 = vld [vmem:[%s1 + $0x580] sm:$0xff]
    %v205 = vld [vmem:[%s1 + $0x588] sm:$0xff]
    %v206 = vld [vmem:[%s1 + $0x590] sm:$0xff]
    %v207 = vld [vmem:[%s1 + $0x598] sm:$0xff]
    %v208 = vld [vmem:[%s1 + $0x5a0] sm:$0xff]
    %v209 = vld [vmem:[%s1 + $0x5a8] sm:$0xff]
    %v210 = vld [vmem:[%s1 + $0x5b0] sm:$0xff]
    %v211 = vld [vmem:[%s1 + $0x5b8] sm:$0xff]
    %v212 = vld [vmem:[%s1 + $0x5c0] sm:$0xff]
    %v213 = vld [vmem:[%s1 + $0x5c8] sm:$0xff]
    %v214 = vld [vmem:[%s1 + $0x5d0] sm:$0xff]
    %v215 = vld [vmem:[%s1 + $0x5d8] sm:$0xff]
    %v216 = vld [vmem:[%s1 + $0x5e0] sm:$0xff]
    %v217 = vld [vmem:[%s1 + $0x5e8] sm:$0xff]
    %v218 = vld [vmem:[%s1 + $0x5f0] sm:$0xff]
    %v219 = vld [vmem:[%s1 + $0x5f8] sm:$0xff]
    %v220 = vld [vmem:[%s1 + $0x600] sm:$0xff]
    %v221 = vld [vmem:[%s1 + $0x608] sm:$0xff]
    %v222 = vld [vmem:[%s1 + $0x610] sm:$0xff]
    %v223 = vld [vmem:[%s1 + $0x618] sm:$0xff]
    %v224 = vld [vmem:[%s1 + $0x620] sm:$0xff]
    %v225 = vld [vmem:[%s1 + $0x628] sm:$0xff]
    %v226 = vld [vmem:[%s1 + $0x630] sm:$0xff]
    %v227 = vld [vmem:[%s1 + $0x638] sm:$0xff]
    %v228 = vld [vmem:[%s1 + $0x640] sm:$0xff]
    %v229 = vld [vmem:[%s1 + $0x648] sm:$0xff]
    %v230 = vld [vmem:[%s1 + $0x650] sm:$0xff]
    %v231 = vld [vmem:[%s1 + $0x658] sm:$0xff]
    %v232 = vld [vmem:[%s1 + $0x660] sm:$0xff]
    %v233 = vld [vmem:[%s1 + $0x668] sm:$0xff]
    %v234 = vld [vmem:[%s1 + $0x670] sm:$0xff]
    %v235 = vld [vmem:[%s1 + $0x678] sm:$0xff]
    %v236 = vld [vmem:[%s1 + $0x680] sm:$0xff]
    %v237 = vld [vmem:[%s1 + $0x688] sm:$0xff]
    %v238 = vld [vmem:[%s1 + $0x690] sm:$0xff]
    %v239 = vld [vmem:[%s1 + $0x698] sm:$0xff]
    %v240 = vld [vmem:[%s1 + $0x6a0] sm:$0xff]
    %v241 = vld [vmem:[%s1 + $0x6a8] sm:$0xff]
    %v242 = vld [vmem:[%s1 + $0x6b0] sm:$0xff]
    %v243 = vld [vmem:[%s1 + $0x6b8] sm:$0xff]
    %v244 = vld [vmem:[%s1 + $0x6c0] sm:$0xff]
    %v245 = vld [vmem:[%s1 + $0x6c8] sm:$0xff]
    %v246 = vld [vmem:[%s1 + $0x6d0] sm:$0xff]
    %v247 = vld [vmem:[%s1 + $0x6d8] sm:$0xff]
    %v248 = vld [vmem:[%s1 + $0x6e0] sm:$0xff]
    %v249 = vld [vmem:[%s1 + $0x6e8] sm:$0xff]
    %v250 = vld [vmem:[%s1 + $0x6f0] sm:$0xff]
    %v251 = vld [vmem:[%s1 + $0x6f8] sm:$0xff]
    %v252 = vld [vmem:[%s1 + $0x700] sm:$0xff]
    %v253 = vld [vmem:[%s1 + $0x708] sm:$0xff]
    %v254 = vld [vmem:[%s1 + $0x710] sm:$0xff]
    %v255 = vld [vmem:[%s1 + $0x718] sm:$0xff]
    %v256 = vld [vmem:[%s1 + $0x720] sm:$0xff]
    %v257 = vld [vmem:[%s1 + $0x728] sm:$0xff]
    %v258 = vld [vmem:[%s1 + $0x730] sm:$0xff]
    %v259 = vld [vmem:[%s1 + $0x738] sm:$0xff]
    %v260 = vld [vmem:[%s1 + $0x740] sm:$0xff]
    %v261 = vld [vmem:[%s1 + $0x748] sm:$0xff]
    %v262 = vld [vmem:[%s1 + $0x750] sm:$0xff]
    %v263 = vld [vmem:[%s1 + $0x758] sm:$0xff]
    %v264 = vld [vmem:[%s1 + $0x760] sm:$0xff]
    %v265 = vld [vmem:[%s1 + $0x768] sm:$0xff]
    %v266 = vld [vmem:[%s1 + $0x770] sm:$0xff]
    %v267 = vld [vmem:[%s1 + $0x778] sm:$0xff]
    %v268 = vld [vmem:[%s1 + $0x780] sm:$0xff]
    %v269 = vld [vmem:[%s1 + $0x788] sm:$0xff]
    %v270 = vld [vmem:[%s1 + $0x790] sm:$0xff]
    %v271 = vld [vmem:[%s1 + $0x798] sm:$0xff]
    %v272 = vld [vmem:[%s1 + $0x7a0] sm:$0xff]
    %v273 = vld [vmem:[%s1 + $0x7a8] sm:$0xff]
    %v274 = vld [vmem:[%s1 + $0x7b0] sm:$0xff]
    %v275 = vld [vmem:[%s1 + $0x7b8] sm:$0xff]
    %v276 = vld [vmem:[%s1 + $0x7c0] sm:$0xff]
    %v277 = vld [vmem:[%s1 + $0x7c8] sm:$0xff]
    %v278 = vld [vmem:[%s1 + $0x7d0] sm:$0xff]
    %v279 = vld [vmem:[%s1 + $0x7d8] sm:$0xff]
    %v280 = vld [vmem:[%s1 + $0x7e0] sm:$0xff]
    %v281 = vld [vmem:[%s1 + $0x7e8] sm:$0xff]
    %v282 = vld [vmem:[%s1 + $0x7f0] sm:$0xff]
    %v283 = vld [vmem:[%s1 + $0x7f8] sm:$0xff]
    %v284 = vld [vmem:[%s1 + $0x800] sm:$0xff]
    %v285 = vld [vmem:[%s1 + $0x808] sm:$0xff]
    %v286 = vld [vmem:[%s1 + $0x810] sm:$0xff]
    %v287 = vld [vmem:[%s1 + $0x818] sm:$0xff]
    %v288 = vld [vmem:[%s1 + $0x820] sm:$0xff]
    %v289 = vld [vmem:[%s1 + $0x828] sm:$0xff]
    %v290 = vld [vmem:[%s1 + $0x830] sm:$0xff]
    %v291 = vld [vmem:[%s1 + $0x838] sm:$0xff]
    %v292 = vld [vmem:[%s1 + $0x840] sm:$0xff]
    %v293 = vld [vmem:[%s1 + $0x848] sm:$0xff]
    %v294 = vld [vmem:[%s1 + $0x850] sm:$0xff]
    %v295 = vld [vmem:[%s1 + $0x858] sm:$0xff]
    %v296 = vld [vmem:[%s1 + $0x860] sm:$0xff]
    %v297 = vld [vmem:[%s1 + $0x868] sm:$0xff]
    %v298 = vld [vmem:[%s1 + $0x870] sm:$0xff]
    %v299 = vld [vmem:[%s1 + $0x878] sm:$0xff]
    %v300 = vld [vmem:[%s1 + $0x880] sm:$0xff]
    %v301 = vld [vmem:[%s1 + $0x888] sm:$0xff]
    %v302 = vld [vmem:[%s1 + $0x890] sm:$0xff]
    %v303 = vld [vmem:[%s1 + $0x898] sm:$0xff]
    %v304 = vld [vmem:[%s1 + $0x8a0] sm:$0xff]
    %v305 = vld [vmem:[%s1 + $0x8a8] sm:$0xff]
    %v306 = vld [vmem:[%s1 + $0x8b0] sm:$0xff]
    %v307 = vld [vmem:[%s1 + $0x8b8] sm:$0xff]
    %v308 = vld [vmem:[%s1 + $0x8c0] sm:$0xff]
    %v309 = vld [vmem:[%s1 + $0x8c8] sm:$0xff]
    %v310 = vld [vmem:[%s1 + $0x8d0] sm:$0xff]
    %v311 = vld [vmem:[%s1 + $0x8d8] sm:$0xff]
    %v312 = vld [vmem:[%s1 + $0x8e0] sm:$0xff]
    %v313 = vld [vmem:[%s1 + $0x8e8] sm:$0xff]
    %v314 = vld [vmem:[%s1 + $0x8f0] sm:$0xff]
    %v315 = vld [vmem:[%s1 + $0x8f8] sm:$0xff]
    %v316 = vld [vmem:[%s1 + $0x900] sm:$0xff]
    %v317 = vld [vmem:[%s1 + $0x908] sm:$0xff]
    %v318 = vld [vmem:[%s1 + $0x910] sm:$0xff]
    %v319 = vld [vmem:[%s1 + $0x918] sm:$0xff]
    %v320 = vld [vmem:[%s1 + $0x920] sm:$0xff]
    %v321 = vld [vmem:[%s1 + $0x928] sm:$0xff]
    %v322 = vld [vmem:[%s1 + $0x930] sm:$0xff]
    %v323 = vld [vmem:[%s1 + $0x938] sm:$0xff]
    %v324 = vld [vmem:[%s1 + $0x940] sm:$0xff]
    %v325 = vld [vmem:[%s1 + $0x948] sm:$0xff]
    %v326 = vld [vmem:[%s1 + $0x950] sm:$0xff]
    %v327 = vld [vmem:[%s1 + $0x958] sm:$0xff]
    %v328 = vld [vmem:[%s1 + $0x960] sm:$0xff]
    %v329 = vld [vmem:[%s1 + $0x968] sm:$0xff]
    %v330 = vld [vmem:[%s1 + $0x970] sm:$0xff]
    %v331 = vld [vmem:[%s1 + $0x978] sm:$0xff]
    %v332 = vld [vmem:[%s1 + $0x980] sm:$0xff]
    %v333 = vld [vmem:[%s1 + $0x988] sm:$0xff]
    %v334 = vld [vmem:[%s1 + $0x990] sm:$0xff]
    %v335 = vld [vmem:[%s1 + $0x998] sm:$0xff]
    %v336 = vld [vmem:[%s1 + $0x9a0] sm:$0xff]
    %v337 = vld [vmem:[%s1 + $0x9a8] sm:$0xff]
    %v338 = vld [vmem:[%s1 + $0x9b0] sm:$0xff]
    %v339 = vld [vmem:[%s1 + $0x9b8] sm:$0xff]
    %v340 = vld [vmem:[%s1 + $0x9c0] sm:$0xff]
    %v341 = vld [vmem:[%s1 + $0x9c8] sm:$0xff]
    %v342 = vld [vmem:[%s1 + $0x9d0] sm:$0xff]
    %v343 = vld [vmem:[%s1 + $0x9d8] sm:$0xff]
    %v344 = vld [vmem:[%s1 + $0x9e0] sm:$0xff]
    %v345 = vld [vmem:[%s1 + $0x9e8] sm:$0xff]
    %v346 = vld [vmem:[%s1 + $0x9f0] sm:$0xff]
    %v347 = vld [vmem:[%s1 + $0x9f8] sm:$0xff]
    %v348 = vld [vmem:[%s1 + $0xa00] sm:$0xff]
    %v349 = vld [vmem:[%s1 + $0xa08] sm:$0xff]
    %v350 = vld [vmem:[%s1 + $0xa10] sm:$0xff]
    %v351 = vld [vmem:[%s1 + $0xa18] sm:$0xff]
    %v352 = vld [vmem:[%s1 + $0xa20] sm:$0xff]
    %v353 = vld [vmem:[%s1 + $0xa28] sm:$0xff]
    %v354 = vld [vmem:[%s1 + $0xa30] sm:$0xff]
    %v355 = vld [vmem:[%s1 + $0xa38] sm:$0xff]
    %v356 = vld [vmem:[%s1 + $0xa40] sm:$0xff]
    %v357 = vld [vmem:[%s1 + $0xa48] sm:$0xff]
    %v358 = vld [vmem:[%s1 + $0xa50] sm:$0xff]
    %v359 = vld [vmem:[%s1 + $0xa58] sm:$0xff]
    %v360 = vld [vmem:[%s1 + $0xa60] sm:$0xff]
    %v361 = vld [vmem:[%s1 + $0xa68] sm:$0xff]
    %v362 = vld [vmem:[%s1 + $0xa70] sm:$0xff]
    %v363 = vld [vmem:[%s1 + $0xa78] sm:$0xff]
    %v364 = vld [vmem:[%s1 + $0xa80] sm:$0xff]
    %v365 = vld [vmem:[%s1 + $0xa88] sm:$0xff]
    %v366 = vld [vmem:[%s1 + $0xa90] sm:$0xff]
    %v367 = vld [vmem:[%s1 + $0xa98] sm:$0xff]
    %v368 = vld [vmem:[%s1 + $0xaa0] sm:$0xff]
    %v369 = vld [vmem:[%s1 + $0xaa8] sm:$0xff]
    %v370 = vld [vmem:[%s1 + $0xab0] sm:$0xff]
    %v371 = vld [vmem:[%s1 + $0xab8] sm:$0xff]
    %v372 = vld [vmem:[%s1 + $0xac0] sm:$0xff]
    %v373 = vld [vmem:[%s1 + $0xac8] sm:$0xff]
    %v374 = vld [vmem:[%s1 + $0xad0] sm:$0xff]
    %v375 = vld [vmem:[%s1 + $0xad8] sm:$0xff]
    %v376 = vld [vmem:[%s1 + $0xae0] sm:$0xff]
    %v377 = vld [vmem:[%s1 + $0xae8] sm:$0xff]
    %v378 = vld [vmem:[%s1 + $0xaf0] sm:$0xff]
    %v379 = vld [vmem:[%s1 + $0xaf8] sm:$0xff]
    %v380 = vld [vmem:[%s1 + $0xb00] sm:$0xff]
    %v381 = vld [vmem:[%s1 + $0xb08] sm:$0xff]
    %v382 = vld [vmem:[%s1 + $0xb10] sm:$0xff]
    %v383 = vld [vmem:[%s1 + $0xb18] sm:$0xff]
    %v384 = vld [vmem:[%s1 + $0xb20] sm:$0xff]
    %v385 = vld [vmem:[%s1 + $0xb28] sm:$0xff]
    %v386 = vld [vmem:[%s1 + $0xb30] sm:$0xff]
    %v387 = vld [vmem:[%s1 + $0xb38] sm:$0xff]
    %v388 = vld [vmem:[%s1 + $0xb40] sm:$0xff]
    %v389 = vld [vmem:[%s1 + $0xb48] sm:$0xff]
    %v390 = vld [vmem:[%s1 + $0xb50] sm:$0xff]
    %v391 = vld [vmem:[%s1 + $0xb58] sm:$0xff]
    %v392 = vld [vmem:[%s1 + $0xb60] sm:$0xff]
    %v393 = vld [vmem:[%s1 + $0xb68] sm:$0xff]
    %v394 = vld [vmem:[%s1 + $0xb70] sm:$0xff]
    %v395 = vld [vmem:[%s1 + $0xb78] sm:$0xff]
    %v396 = vld [vmem:[%s1 + $0xb80] sm:$0xff]
    %v397 = vld [vmem:[%s1 + $0xb88] sm:$0xff]
    %v398 = vld [vmem:[%s1 + $0xb90] sm:$0xff]
    %v399 = vld [vmem:[%s1 + $0xb98] sm:$0xff]
    %v400 = vld [vmem:[%s1 + $0xba0] sm:$0xff]
    %v401 = vld [vmem:[%s1 + $0xba8] sm:$0xff]
    %v402 = vld [vmem:[%s1 + $0xbb0] sm:$0xff]
    %v403 = vld [vmem:[%s1 + $0xbb8] sm:$0xff]
    %v404 = vld [vmem:[%s1 + $0xbc0] sm:$0xff]
    %v405 = vld [vmem:[%s1 + $0xbc8] sm:$0xff]
    %v406 = vld [vmem:[%s1 + $0xbd0] sm:$0xff]
    %v407 = vld [vmem:[%s1 + $0xbd8] sm:$0xff]
    %v408 = vld [vmem:[%s1 + $0xbe0] sm:$0xff]
    %v409 = vld [vmem:[%s1 + $0xbe8] sm:$0xff]
    %v410 = vld [vmem:[%s1 + $0xbf0] sm:$0xff]
    %v411 = vld [vmem:[%s1 + $0xbf8] sm:$0xff]
    %v412 = vld [vmem:[%s1 + $0xc00] sm:$0xff]
    %v413 = vld [vmem:[%s1 + $0xc08] sm:$0xff]
    %v414 = vld [vmem:[%s1 + $0xc10] sm:$0xff]
    %v415 = vld [vmem:[%s1 + $0xc18] sm:$0xff]
    %v416 = vld [vmem:[%s1 + $0xc20] sm:$0xff]
    %v417 = vld [vmem:[%s1 + $0xc28] sm:$0xff]
    %v418 = vld [vmem:[%s1 + $0xc30] sm:$0xff]
    %v419 = vld [vmem:[%s1 + $0xc38] sm:$0xff]
    %v420 = vld [vmem:[%s1 + $0xc40] sm:$0xff]
    %v421 = vld [vmem:[%s1 + $0xc48] sm:$0xff]
    %v422 = vld [vmem:[%s1 + $0xc50] sm:$0xff]
    %v423 = vld [vmem:[%s1 + $0xc58] sm:$0xff]
    %v424 = vld [vmem:[%s1 + $0xc60] sm:$0xff]
    %v425 = vld [vmem:[%s1 + $0xc68] sm:$0xff]
    %v426 = vld [vmem:[%s1 + $0xc70] sm:$0xff]
    %v427 = vld [vmem:[%s1 + $0xc78] sm:$0xff]
    %v428 = vld [vmem:[%s1 + $0xc80] sm:$0xff]
    %v429 = vld [vmem:[%s1 + $0xc88] sm:$0xff]
    %v430 = vld [vmem:[%s1 + $0xc90] sm:$0xff]
    %v431 = vld [vmem:[%s1 + $0xc98] sm:$0xff]
    %v432 = vld [vmem:[%s1 + $0xca0] sm:$0xff]
    %v433 = vld [vmem:[%s1 + $0xca8] sm:$0xff]
    %v434 = vld [vmem:[%s1 + $0xcb0] sm:$0xff]
    %v435 = vld [vmem:[%s1 + $0xcb8] sm:$0xff]
    %v436 = vld [vmem:[%s1 + $0xcc0] sm:$0xff]
    %v437 = vld [vmem:[%s1 + $0xcc8] sm:$0xff]
    %v438 = vld [vmem:[%s1 + $0xcd0] sm:$0xff]
    %v439 = vld [vmem:[%s1 + $0xcd8] sm:$0xff]
    %v440 = vld [vmem:[%s1 + $0xce0] sm:$0xff]
    %v441 = vld [vmem:[%s1 + $0xce8] sm:$0xff]
    %v442 = vld [vmem:[%s1 + $0xcf0] sm:$0xff]
    %v443 = vld [vmem:[%s1 + $0xcf8] sm:$0xff]
    %v444 = vld [vmem:[%s1 + $0xd00] sm:$0xff]
    %v445 = vld [vmem:[%s1 + $0xd08] sm:$0xff]
    %v446 = vld [vmem:[%s1 + $0xd10] sm:$0xff]
    %v447 = vld [vmem:[%s1 + $0xd18] sm:$0xff]
    %v448 = vld [vmem:[%s1 + $0xd20] sm:$0xff]
    %v449 = vld [vmem:[%s1 + $0xd28] sm:$0xff]
    %v450 = vld [vmem:[%s1 + $0xd30] sm:$0xff]
    %v451 = vld [vmem:[%s1 + $0xd38] sm:$0xff]
    %v452 = vld [vmem:[%s1 + $0xd40] sm:$0xff]
    %v453 = vld [vmem:[%s1 + $0xd48] sm:$0xff]
    %v454 = vld [vmem:[%s1 + $0xd50] sm:$0xff]
    %v455 = vld [vmem:[%s1 + $0xd58] sm:$0xff]
    %v456 = vld [vmem:[%s1 + $0xd60] sm:$0xff]
    %v457 = vld [vmem:[%s1 + $0xd68] sm:$0xff]
    %v458 = vld [vmem:[%s1 + $0xd70] sm:$0xff]
    %v459 = vld [vmem:[%s1 + $0xd78] sm:$0xff]
    %v460 = vld [vmem:[%s1 + $0xd80] sm:$0xff]
    %v461 = vld [vmem:[%s1 + $0xd88] sm:$0xff]
    %v462 = vld [vmem:[%s1 + $0xd90] sm:$0xff]
    %v463 = vld [vmem:[%s1 + $0xd98] sm:$0xff]
    %v464 = vld [vmem:[%s1 + $0xda0] sm:$0xff]
    %v465 = vld [vmem:[%s1 + $0xda8] sm:$0xff]
    %v466 = vld [vmem:[%s1 + $0xdb0] sm:$0xff]
    %v467 = vld [vmem:[%s1 + $0xdb8] sm:$0xff]
    %v468 = vld [vmem:[%s1 + $0xdc0] sm:$0xff]
    %v469 = vld [vmem:[%s1 + $0xdc8] sm:$0xff]
    %v470 = vld [vmem:[%s1 + $0xdd0] sm:$0xff]
    %v471 = vld [vmem:[%s1 + $0xdd8] sm:$0xff]
    %v472 = vld [vmem:[%s1 + $0xde0] sm:$0xff]
    %v473 = vld [vmem:[%s1 + $0xde8] sm:$0xff]
    %v474 = vld [vmem:[%s1 + $0xdf0] sm:$0xff]
    %v475 = vld [vmem:[%s1 + $0xdf8] sm:$0xff]
    %v476 = vld [vmem:[%s1 + $0xe00] sm:$0xff]
    %v477 = vld [vmem:[%s1 + $0xe08] sm:$0xff]
    %v478 = vld [vmem:[%s1 + $0xe10] sm:$0xff]
    %v479 = vld [vmem:[%s1 + $0xe18] sm:$0xff]
    %v480 = vld [vmem:[%s1 + $0xe20] sm:$0xff]
    %v481 = vld [vmem:[%s1 + $0xe28] sm:$0xff]
    %v482 = vld [vmem:[%s1 + $0xe30] sm:$0xff]
    %v483 = vld [vmem:[%s1 + $0xe38] sm:$0xff]
    %v484 = vld [vmem:[%s1 + $0xe40] sm:$0xff]
    %v485 = vld [vmem:[%s1 + $0xe48] sm:$0xff]
    %v486 = vld [vmem:[%s1 + $0xe50] sm:$0xff]
    %v487 = vld [vmem:[%s1 + $0xe58] sm:$0xff]
    %v488 = vld [vmem:[%s1 + $0xe60] sm:$0xff]
    %v489 = vld [vmem:[%s1 + $0xe68] sm:$0xff]
    %v490 = vld [vmem:[%s1 + $0xe70] sm:$0xff]
    %v491 = vld [vmem:[%s1 + $0xe78] sm:$0xff]
    %v492 = vld [vmem:[%s1 + $0xe80] sm:$0xff]
    %v493 = vld [vmem:[%s1 + $0xe88] sm:$0xff]
    %v494 = vld [vmem:[%s1 + $0xe90] sm:$0xff]
    %v495 = vld [vmem:[%s1 + $0xe98] sm:$0xff]
    %v496 = vld [vmem:[%s1 + $0xea0] sm:$0xff]
    %v497 = vld [vmem:[%s1 + $0xea8] sm:$0xff]
    %v498 = vld [vmem:[%s1 + $0xeb0] sm:$0xff]
    %v499 = vld [vmem:[%s1 + $0xeb8] sm:$0xff]
    %v500 = vld [vmem:[%s1 + $0xec0] sm:$0xff]
    %v501 = vld [vmem:[%s1 + $0xec8] sm:$0xff]
    %v502 = vld [vmem:[%s1 + $0xed0] sm:$0xff]
    %v503 = vld [vmem:[%s1 + $0xed8] sm:$0xff]
    %v504 = vld [vmem:[%s1 + $0xee0] sm:$0xff]
    %v505 = vld [vmem:[%s1 + $0xee8] sm:$0xff]
    %v506 = vld [vmem:[%s1 + $0xef0] sm:$0xff]
    %v507 = vld [vmem:[%s1 + $0xef8] sm:$0xff]
    %v508 = vld [vmem:[%s1 + $0xf00] sm:$0xff]
    %v509 = vld [vmem:[%s1 + $0xf08] sm:$0xff]
    %v510 = vld [vmem:[%s1 + $0xf10] sm:$0xff]
    %v511 = vld [vmem:[%s1 + $0xf18] sm:$0xff]
    %v512 = vld [vmem:[%s1 + $0xf20] sm:$0xff]
    %v513 = vld [vmem:[%s1 + $0xf28] sm:$0xff]
    %v514 = vld [vmem:[%s1 + $0xf30] sm:$0xff]
    %v515 = vld [vmem:[%s1 + $0xf38] sm:$0xff]
    %v516 = vld [vmem:[%s1 + $0xf40] sm:$0xff]
    %v517 = vld [vmem:[%s1 + $0xf48] sm:$0xff]
    %v518 = vld [vmem:[%s1 + $0xf50] sm:$0xff]
    %v519 = vld [vmem:[%s1 + $0xf58] sm:$0xff]
    %v520 = vld [vmem:[%s1 + $0xf60] sm:$0xff]
    %v521 = vld [vmem:[%s1 + $0xf68] sm:$0xff]
    %v522 = vld [vmem:[%s1 + $0xf70] sm:$0xff]
    %v523 = vld [vmem:[%s1 + $0xf78] sm:$0xff]
    %v524 = vld [vmem:[%s1 + $0xf80] sm:$0xff]
    %v525 = vld [vmem:[%s1 + $0xf88] sm:$0xff]
    %v526 = vld [vmem:[%s1 + $0xf90] sm:$0xff]
    %v527 = vld [vmem:[%s1 + $0xf98] sm:$0xff]
    %v528 = vld [vmem:[%s1 + $0xfa0] sm:$0xff]
    %v529 = vld [vmem:[%s1 + $0xfa8] sm:$0xff]
    %v530 = vld [vmem:[%s1 + $0xfb0] sm:$0xff]
    %v531 = vld [vmem:[%s1 + $0xfb8] sm:$0xff]
    %v532 = vld [vmem:[%s1 + $0xfc0] sm:$0xff]
    %v533 = vld [vmem:[%s1 + $0xfc8] sm:$0xff]
    %v534 = vld [vmem:[%s1 + $0xfd0] sm:$0xff]
    %v535 = vld [vmem:[%s1 + $0xfd8] sm:$0xff]
    %v536 = vld [vmem:[%s1 + $0xfe0] sm:$0xff]
    %v537 = vld [vmem:[%s1 + $0xfe8] sm:$0xff]
    %v538 = vld [vmem:[%s1 + $0xff0] sm:$0xff]
    %v539 = vld [vmem:[%s1 + $0xff8] sm:$0xff]
    %v540 = vld [vmem:[%s1 + $0x1000] sm:$0xff]
    %v541 = vld [vmem:[%s1 + $0x1008] sm:$0xff]
    %v542 = vld [vmem:[%s1 + $0x1010] sm:$0xff]
    %v543 = vld [vmem:[%s1 + $0x1018] sm:$0xff]
    %v544 = vld [vmem:[%s1 + $0x1020] sm:$0xff]
    %v545 = vld [vmem:[%s1 + $0x1028] sm:$0xff]
    %v546 = vld [vmem:[%s1 + $0x1030] sm:$0xff]
    %v547 = vld [vmem:[%s1 + $0x1038] sm:$0xff]
    %v548 = vld [vmem:[%s1 + $0x1040] sm:$0xff]
    %v549 = vld [vmem:[%s1 + $0x1048] sm:$0xff]
    %v550 = vld [vmem:[%s1 + $0x1050] sm:$0xff]
    %v551 = vld [vmem:[%s1 + $0x1058] sm:$0xff]
    %v552 = vld [vmem:[%s1 + $0x1060] sm:$0xff]
    %v553 = vld [vmem:[%s1 + $0x1068] sm:$0xff]
    %v554 = vld [vmem:[%s1 + $0x1070] sm:$0xff]
    %v555 = vld [vmem:[%s1 + $0x1078] sm:$0xff]
    %v556 = vld [vmem:[%s1 + $0x1080] sm:$0xff]
    %v557 = vld [vmem:[%s1 + $0x1088] sm:$0xff]
    %v558 = vld [vmem:[%s1 + $0x1090] sm:$0xff]
    %v559 = vld [vmem:[%s1 + $0x1098] sm:$0xff]
    %v560 = vld [vmem:[%s1 + $0x10a0] sm:$0xff]
    %v561 = vld [vmem:[%s1 + $0x10a8] sm:$0xff]
    %v562 = vld [vmem:[%s1 + $0x10b0] sm:$0xff]
    %v563 = vld [vmem:[%s1 + $0x10b8] sm:$0xff]
    %v564 = vld [vmem:[%s1 + $0x10c0] sm:$0xff]
    %v565 = vld [vmem:[%s1 + $0x10c8] sm:$0xff]
    %v566 = vld [vmem:[%s1 + $0x10d0] sm:$0xff]
    %v567 = vld [vmem:[%s1 + $0x10d8] sm:$0xff]
    %v568 = vld [vmem:[%s1 + $0x10e0] sm:$0xff]
    %v569 = vld [vmem:[%s1 + $0x10e8] sm:$0xff]
    %v570 = vld [vmem:[%s1 + $0x10f0] sm:$0xff]
    %v571 = vld [vmem:[%s1 + $0x10f8] sm:$0xff]
    %v572 = vld [vmem:[%s1 + $0x1100] sm:$0xff]
    %v573 = vld [vmem:[%s1 + $0x1108] sm:$0xff]
    %v574 = vld [vmem:[%s1 + $0x1110] sm:$0xff]
    %v575 = vld [vmem:[%s1 + $0x1118] sm:$0xff]
    %v576 = vld [vmem:[%s1 + $0x1120] sm:$0xff]
    %v577 = vld [vmem:[%s1 + $0x1128] sm:$0xff]
    %v578 = vld [vmem:[%s1 + $0x1130] sm:$0xff]
    %v579 = vld [vmem:[%s1 + $0x1138] sm:$0xff]
    %v580 = vld [vmem:[%s1 + $0x1140] sm:$0xff]
    %v581 = vld [vmem:[%s1 + $0x1148] sm:$0xff]
    %v582 = vld [vmem:[%s1 + $0x1150] sm:$0xff]
    %v583 = vld [vmem:[%s1 + $0x1158] sm:$0xff]
    %v584 = vld [vmem:[%s1 + $0x1160] sm:$0xff]
    %v585 = vld [vmem:[%s1 + $0x1168] sm:$0xff]
    %v586 = vld [vmem:[%s1 + $0x1170] sm:$0xff]
    %v587 = vld [vmem:[%s1 + $0x1178] sm:$0xff]
    %v588 = vld [vmem:[%s1 + $0x1180] sm:$0xff]
    %v589 = vld [vmem:[%s1 + $0x1188] sm:$0xff]
    %v590 = vld [vmem:[%s1 + $0x1190] sm:$0xff]
    %v591 = vld [vmem:[%s1 + $0x1198] sm:$0xff]
    %v592 = vld [vmem:[%s1 + $0x11a0] sm:$0xff]
    %v593 = vld [vmem:[%s1 + $0x11a8] sm:$0xff]
    %v594 = vld [vmem:[%s1 + $0x11b0] sm:$0xff]
    %v595 = vld [vmem:[%s1 + $0x11b8] sm:$0xff]
    %v596 = vld [vmem:[%s1 + $0x11c0] sm:$0xff]
    %v597 = vld [vmem:[%s1 + $0x11c8] sm:$0xff]
    %v598 = vld [vmem:[%s1 + $0x11d0] sm:$0xff]
    %v599 = vld [vmem:[%s1 + $0x11d8] sm:$0xff]
    %v600 = vld [vmem:[%s1 + $0x11e0] sm:$0xff]
    %v601 = vld [vmem:[%s1 + $0x11e8] sm:$0xff]
    %v602 = vld [vmem:[%s1 + $0x11f0] sm:$0xff]
    %v603 = vld [vmem:[%s1 + $0x11f8] sm:$0xff]
    %v604 = vld [vmem:[%s1 + $0x1200] sm:$0xff]
    %v605 = vld [vmem:[%s1 + $0x1208] sm:$0xff]
    %v606 = vld [vmem:[%s1 + $0x1210] sm:$0xff]
    %v607 = vld [vmem:[%s1 + $0x1218] sm:$0xff]
    %v608 = vld [vmem:[%s1 + $0x1220] sm:$0xff]
    %v609 = vld [vmem:[%s1 + $0x1228] sm:$0xff]
    %v610 = vld [vmem:[%s1 + $0x1230] sm:$0xff]
    %v611 = vld [vmem:[%s1 + $0x1238] sm:$0xff]
    %v612 = vld [vmem:[%s1 + $0x1240] sm:$0xff]
    %v613 = vld [vmem:[%s1 + $0x1248] sm:$0xff]
    %v614 = vld [vmem:[%s1 + $0x1250] sm:$0xff]
    %v615 = vld [vmem:[%s1 + $0x1258] sm:$0xff]
    %v616 = vld [vmem:[%s1 + $0x1260] sm:$0xff]
    %v617 = vld [vmem:[%s1 + $0x1268] sm:$0xff]
    %v618 = vld [vmem:[%s1 + $0x1270] sm:$0xff]
    %v619 = vld [vmem:[%s1 + $0x1278] sm:$0xff]
    %v620 = vld [vmem:[%s1 + $0x1280] sm:$0xff]
    %v621 = vld [vmem:[%s1 + $0x1288] sm:$0xff]
    %v622 = vld [vmem:[%s1 + $0x1290] sm:$0xff]
    %v623 = vld [vmem:[%s1 + $0x1298] sm:$0xff]
    %v624 = vld [vmem:[%s1 + $0x12a0] sm:$0xff]
    %v625 = vld [vmem:[%s1 + $0x12a8] sm:$0xff]
    %v626 = vld [vmem:[%s1 + $0x12b0] sm:$0xff]
    %v627 = vld [vmem:[%s1 + $0x12b8] sm:$0xff]
    %v628 = vld [vmem:[%s1 + $0x12c0] sm:$0xff]
    %v629 = vld [vmem:[%s1 + $0x12c8] sm:$0xff]
    %v630 = vld [vmem:[%s1 + $0x12d0] sm:$0xff]
    %v631 = vld [vmem:[%s1 + $0x12d8] sm:$0xff]
    %v632 = vld [vmem:[%s1 + $0x12e0] sm:$0xff]
    %v633 = vld [vmem:[%s1 + $0x12e8] sm:$0xff]
    %v634 = vld [vmem:[%s1 + $0x12f0] sm:$0xff]
    %v635 = vld [vmem:[%s1 + $0x12f8] sm:$0xff]
    %v636 = vld [vmem:[%s1 + $0x1300] sm:$0xff]
    %v637 = vld [vmem:[%s1 + $0x1308] sm:$0xff]
    %v638 = vld [vmem:[%s1 + $0x1310] sm:$0xff]
    %v639 = vld [vmem:[%s1 + $0x1318] sm:$0xff]
    %v640 = vld [vmem:[%s1 + $0x1320] sm:$0xff]
    %v641 = vld [vmem:[%s1 + $0x1328] sm:$0xff]
    %v642 = vld [vmem:[%s1 + $0x1330] sm:$0xff]
    %v643 = vld [vmem:[%s1 + $0x1338] sm:$0xff]
    %v644 = vld [vmem:[%s1 + $0x1340] sm:$0xff]
    %v645 = vld [vmem:[%s1 + $0x1348] sm:$0xff]
    %v646 = vld [vmem:[%s1 + $0x1350] sm:$0xff]
    %v647 = vld [vmem:[%s1 + $0x1358] sm:$0xff]
    %v648 = vld [vmem:[%s1 + $0x1360] sm:$0xff]
    %v649 = vld [vmem:[%s1 + $0x1368] sm:$0xff]
    %v650 = vld [vmem:[%s1 + $0x1370] sm:$0xff]
    %v651 = vld [vmem:[%s1 + $0x1378] sm:$0xff]
    %v652 = vld [vmem:[%s1 + $0x1380] sm:$0xff]
    %v653 = vld [vmem:[%s1 + $0x1388] sm:$0xff]
    %v654 = vld [vmem:[%s1 + $0x1390] sm:$0xff]
    %v655 = vld [vmem:[%s1 + $0x1398] sm:$0xff]
    %v656 = vld [vmem:[%s1 + $0x13a0] sm:$0xff]
    %v657 = vld [vmem:[%s1 + $0x13a8] sm:$0xff]
    %v658 = vld [vmem:[%s1 + $0x13b0] sm:$0xff]
    %v659 = vld [vmem:[%s1 + $0x13b8] sm:$0xff]
    %v660 = vld [vmem:[%s1 + $0x13c0] sm:$0xff]
    %v661 = vld [vmem:[%s1 + $0x13c8] sm:$0xff]
    %v662 = vld [vmem:[%s1 + $0x13d0] sm:$0xff]
    %v663 = vld [vmem:[%s1 + $0x13d8] sm:$0xff]
    %v664 = vld [vmem:[%s1 + $0x13e0] sm:$0xff]
    %v665 = vld [vmem:[%s1 + $0x13e8] sm:$0xff]
    %v666 = vld [vmem:[%s1 + $0x13f0] sm:$0xff]
    %v667 = vld [vmem:[%s1 + $0x13f8] sm:$0xff]
    %v668 = vld [vmem:[%s1 + $0x1400] sm:$0xff]
    %v669 = vld [vmem:[%s1 + $0x1408] sm:$0xff]
    %v670 = vld [vmem:[%s1 + $0x1410] sm:$0xff]
    %v671 = vld [vmem:[%s1 + $0x1418] sm:$0xff]
    %v672 = vld [vmem:[%s1 + $0x1420] sm:$0xff]
    %v673 = vld [vmem:[%s1 + $0x1428] sm:$0xff]
    %v674 = vld [vmem:[%s1 + $0x1430] sm:$0xff]
    %v675 = vld [vmem:[%s1 + $0x1438] sm:$0xff]
    %v676 = vld [vmem:[%s1 + $0x1440] sm:$0xff]
    %v677 = vld [vmem:[%s1 + $0x1448] sm:$0xff]
    %v678 = vld [vmem:[%s1 + $0x1450] sm:$0xff]
    %v679 = vld [vmem:[%s1 + $0x1458] sm:$0xff]
    %v680 = vld [vmem:[%s1 + $0x1460] sm:$0xff]
    %v681 = vld [vmem:[%s1 + $0x1468] sm:$0xff]
    %v682 = vld [vmem:[%s1 + $0x1470] sm:$0xff]
    %v683 = vld [vmem:[%s1 + $0x1478] sm:$0xff]
    %v684 = vld [vmem:[%s1 + $0x1480] sm:$0xff]
    %v685 = vld [vmem:[%s1 + $0x1488] sm:$0xff]
    %v686 = vld [vmem:[%s1 + $0x1490] sm:$0xff]
    %v687 = vld [vmem:[%s1 + $0x1498] sm:$0xff]
    %v688 = vld [vmem:[%s1 + $0x14a0] sm:$0xff]
    %v689 = vld [vmem:[%s1 + $0x14a8] sm:$0xff]
    %v690 = vld [vmem:[%s1 + $0x14b0] sm:$0xff]
    %v691 = vld [vmem:[%s1 + $0x14b8] sm:$0xff]
    %v692 = vld [vmem:[%s1 + $0x14c0] sm:$0xff]
    %v693 = vld [vmem:[%s1 + $0x14c8] sm:$0xff]
    %v694 = vld [vmem:[%s1 + $0x14d0] sm:$0xff]
    %v695 = vld [vmem:[%s1 + $0x14d8] sm:$0xff]
    %v696 = vld [vmem:[%s1 + $0x14e0] sm:$0xff]
    %v697 = vld [vmem:[%s1 + $0x14e8] sm:$0xff]
    %v698 = vld [vmem:[%s1 + $0x14f0] sm:$0xff]
    %v699 = vld [vmem:[%s1 + $0x14f8] sm:$0xff]
    %v700 = vld [vmem:[%s1 + $0x1500] sm:$0xff]
    %v701 = vld [vmem:[%s1 + $0x1508] sm:$0xff]
    %v702 = vld [vmem:[%s1 + $0x1510] sm:$0xff]
    %v703 = vld [vmem:[%s1 + $0x1518] sm:$0xff]
    %v704 = vld [vmem:[%s1 + $0x1520] sm:$0xff]
    %v705 = vld [vmem:[%s1 + $0x1528] sm:$0xff]
    %v706 = vld [vmem:[%s1 + $0x1530] sm:$0xff]
    %v707 = vld [vmem:[%s1 + $0x1538] sm:$0xff]
    %v708 = vld [vmem:[%s1 + $0x1540] sm:$0xff]
    %v709 = vld [vmem:[%s1 + $0x1548] sm:$0xff]
    %v710 = vld [vmem:[%s1 + $0x1550] sm:$0xff]
    %v711 = vld [vmem:[%s1 + $0x1558] sm:$0xff]
    %v712 = vld [vmem:[%s1 + $0x1560] sm:$0xff]
    %v713 = vld [vmem:[%s1 + $0x1568] sm:$0xff]
    %v714 = vld [vmem:[%s1 + $0x1570] sm:$0xff]
    %v715 = vld [vmem:[%s1 + $0x1578] sm:$0xff]
    %v716 = vld [vmem:[%s1 + $0x1580] sm:$0xff]
    %v717 = vld [vmem:[%s1 + $0x1588] sm:$0xff]
    %v718 = vld [vmem:[%s1 + $0x1590] sm:$0xff]
    %v719 = vld [vmem:[%s1 + $0x1598] sm:$0xff]
    %v720 = vld [vmem:[%s1 + $0x15a0] sm:$0xff]
    %v721 = vld [vmem:[%s1 + $0x15a8] sm:$0xff]
    %v722 = vld [vmem:[%s1 + $0x15b0] sm:$0xff]
    %v723 = vld [vmem:[%s1 + $0x15b8] sm:$0xff]
    %v724 = vld [vmem:[%s1 + $0x15c0] sm:$0xff]
    %v725 = vld [vmem:[%s1 + $0x15c8] sm:$0xff]
    %v726 = vld [vmem:[%s1 + $0x15d0] sm:$0xff]
    %v727 = vld [vmem:[%s1 + $0x15d8] sm:$0xff]
    %v728 = vld [vmem:[%s1 + $0x15e0] sm:$0xff]
    %v729 = vld [vmem:[%s1 + $0x15e8] sm:$0xff]
    %v730 = vld [vmem:[%s1 + $0x15f0] sm:$0xff]
    %v731 = vld [vmem:[%s1 + $0x15f8] sm:$0xff]
    %v732 = vld [vmem:[%s1 + $0x1600] sm:$0xff]
    %v733 = vld [vmem:[%s1 + $0x1608] sm:$0xff]
    %v734 = vld [vmem:[%s1 + $0x1610] sm:$0xff]
    %v735 = vld [vmem:[%s1 + $0x1618] sm:$0xff]
    %v736 = vld [vmem:[%s1 + $0x1620] sm:$0xff]
    %v737 = vld [vmem:[%s1 + $0x1628] sm:$0xff]
    %v738 = vld [vmem:[%s1 + $0x1630] sm:$0xff]
    %v739 = vld [vmem:[%s1 + $0x1638] sm:$0xff]
    %v740 = vld [vmem:[%s1 + $0x1640] sm:$0xff]
    %v741 = vld [vmem:[%s1 + $0x1648] sm:$0xff]
    %v742 = vld [vmem:[%s1 + $0x1650] sm:$0xff]
    %v743 = vld [vmem:[%s1 + $0x1658] sm:$0xff]
    %v744 = vld [vmem:[%s1 + $0x1660] sm:$0xff]
    %v745 = vld [vmem:[%s1 + $0x1668] sm:$0xff]
    %v746 = vld [vmem:[%s1 + $0x1670] sm:$0xff]
    %v747 = vld [vmem:[%s1 + $0x1678] sm:$0xff]
    %v748 = vld [vmem:[%s1 + $0x1680] sm:$0xff]
    %v749 = vld [vmem:[%s1 + $0x1688] sm:$0xff]
    %v750 = vld [vmem:[%s1 + $0x1690] sm:$0xff]
    %v751 = vld [vmem:[%s1 + $0x1698] sm:$0xff]
    %v752 = vld [vmem:[%s1 + $0x16a0] sm:$0xff]
    %v753 = vld [vmem:[%s1 + $0x16a8] sm:$0xff]
    %v754 = vld [vmem:[%s1 + $0x16b0] sm:$0xff]
    %v755 = vld [vmem:[%s1 + $0x16b8] sm:$0xff]
    %v756 = vld [vmem:[%s1 + $0x16c0] sm:$0xff]
    %v757 = vld [vmem:[%s1 + $0x16c8] sm:$0xff]
    %v758 = vld [vmem:[%s1 + $0x16d0] sm:$0xff]
    %v759 = vld [vmem:[%s1 + $0x16d8] sm:$0xff]
    %v760 = vld [vmem:[%s1 + $0x16e0] sm:$0xff]
    %v761 = vld [vmem:[%s1 + $0x16e8] sm:$0xff]
    %v762 = vld [vmem:[%s1 + $0x16f0] sm:$0xff]
    %v763 = vld [vmem:[%s1 + $0x16f8] sm:$0xff]
    %v764 = vld [vmem:[%s1 + $0x1700] sm:$0xff]
    %v765 = vld [vmem:[%s1 + $0x1708] sm:$0xff]
    %v766 = vld [vmem:[%s1 + $0x1710] sm:$0xff]
    %v767 = vld [vmem:[%s1 + $0x1718] sm:$0xff]
    %v768 = vld [vmem:[%s1 + $0x1720] sm:$0xff]
    %v769 = vld [vmem:[%s1 + $0x1728] sm:$0xff]
    %v770 = vld [vmem:[%s1 + $0x1730] sm:$0xff]
    %v771 = vld [vmem:[%s1 + $0x1738] sm:$0xff]
    %v772 = vld [vmem:[%s1 + $0x1740] sm:$0xff]
    %v773 = vld [vmem:[%s1 + $0x1748] sm:$0xff]
    %v774 = vld [vmem:[%s1 + $0x1750] sm:$0xff]
    %v775 = vld [vmem:[%s1 + $0x1758] sm:$0xff]
    %v776 = vld [vmem:[%s1 + $0x1760] sm:$0xff]
    %v777 = vld [vmem:[%s1 + $0x1768] sm:$0xff]
    %v778 = vld [vmem:[%s1 + $0x1770] sm:$0xff]
    %v779 = vld [vmem:[%s1 + $0x1778] sm:$0xff]
    %v780 = vld [vmem:[%s1 + $0x1780] sm:$0xff]
    %v781 = vld [vmem:[%s1 + $0x1788] sm:$0xff]
    %v782 = vld [vmem:[%s1 + $0x1790] sm:$0xff]
    %v783 = vld [vmem:[%s1 + $0x1798] sm:$0xff]
    %v784 = vld [vmem:[%s1 + $0x17a0] sm:$0xff]
    %v785 = vld [vmem:[%s1 + $0x17a8] sm:$0xff]
    %v786 = vld [vmem:[%s1 + $0x17b0] sm:$0xff]
    %v787 = vld [vmem:[%s1 + $0x17b8] sm:$0xff]
    %v788 = vld [vmem:[%s1 + $0x17c0] sm:$0xff]
    %v789 = vld [vmem:[%s1 + $0x17c8] sm:$0xff]
    %v790 = vld [vmem:[%s1 + $0x17d0] sm:$0xff]
    %v791 = vld [vmem:[%s1 + $0x17d8] sm:$0xff]
    %v792 = vld [vmem:[%s1 + $0x17e0] sm:$0xff]
    %v793 = vld [vmem:[%s1 + $0x17e8] sm:$0xff]
    %v794 = vld [vmem:[%s1 + $0x17f0] sm:$0xff]
    %v795 = vld [vmem:[%s1 + $0x17f8] sm:$0xff]
    %v796 = vld [vmem:[%s1 + $0x1800] sm:$0xff]
    %v797 = vld [vmem:[%s1 + $0x1808] sm:$0xff]
    %v798 = vld [vmem:[%s1 + $0x1810] sm:$0xff]
    %v799 = vld [vmem:[%s1 + $0x1818] sm:$0xff]
    %v800 = vld [vmem:[%s1 + $0x1820] sm:$0xff]
    %v801 = vld [vmem:[%s1 + $0x1828] sm:$0xff]
    %v802 = vld [vmem:[%s1 + $0x1830] sm:$0xff]
    %v803 = vld [vmem:[%s1 + $0x1838] sm:$0xff]
    %v804 = vld [vmem:[%s1 + $0x1840] sm:$0xff]
    %v805 = vld [vmem:[%s1 + $0x1848] sm:$0xff]
    %v806 = vld [vmem:[%s1 + $0x1850] sm:$0xff]
    %v807 = vld [vmem:[%s1 + $0x1858] sm:$0xff]
    %v808 = vld [vmem:[%s1 + $0x1860] sm:$0xff]
    %v809 = vld [vmem:[%s1 + $0x1868] sm:$0xff]
    %v810 = vld [vmem:[%s1 + $0x1870] sm:$0xff]
    %v811 = vld [vmem:[%s1 + $0x1878] sm:$0xff]
    %v812 = vld [vmem:[%s1 + $0x1880] sm:$0xff]
    %v813 = vld [vmem:[%s1 + $0x1888] sm:$0xff]
    %v814 = vld [vmem:[%s1 + $0x1890] sm:$0xff]
    %v815 = vld [vmem:[%s1 + $0x1898] sm:$0xff]
    %v816 = vld [vmem:[%s1 + $0x18a0] sm:$0xff]
    %v817 = vld [vmem:[%s1 + $0x18a8] sm:$0xff]
    %v818 = vld [vmem:[%s1 + $0x18b0] sm:$0xff]
    %v819 = vld [vmem:[%s1 + $0x18b8] sm:$0xff]
    %v820 = vld [vmem:[%s1 + $0x18c0] sm:$0xff]
    %v821 = vld [vmem:[%s1 + $0x18c8] sm:$0xff]
    %v822 = vld [vmem:[%s1 + $0x18d0] sm:$0xff]
    %v823 = vld [vmem:[%s1 + $0x18d8] sm:$0xff]
    %v824 = vld [vmem:[%s1 + $0x18e0] sm:$0xff]
    %v825 = vld [vmem:[%s1 + $0x18e8] sm:$0xff]
    %v826 = vld [vmem:[%s1 + $0x18f0] sm:$0xff]
    %v827 = vld [vmem:[%s1 + $0x18f8] sm:$0xff]
    %v828 = vld [vmem:[%s1 + $0x1900] sm:$0xff]
    %v829 = vld [vmem:[%s1 + $0x1908] sm:$0xff]
    %v830 = vld [vmem:[%s1 + $0x1910] sm:$0xff]
    %v831 = vld [vmem:[%s1 + $0x1918] sm:$0xff]
    %v832 = vld [vmem:[%s1 + $0x1920] sm:$0xff]
    %v833 = vld [vmem:[%s1 + $0x1928] sm:$0xff]
    %v834 = vld [vmem:[%s1 + $0x1930] sm:$0xff]
    %v835 = vld [vmem:[%s1 + $0x1938] sm:$0xff]
    %v836 = vld [vmem:[%s1 + $0x1940] sm:$0xff]
    %v837 = vld [vmem:[%s1 + $0x1948] sm:$0xff]
    %v838 = vld [vmem:[%s1 + $0x1950] sm:$0xff]
    %v839 = vld [vmem:[%s1 + $0x1958] sm:$0xff]
    %v840 = vld [vmem:[%s1 + $0x1960] sm:$0xff]
    %v841 = vld [vmem:[%s1 + $0x1968] sm:$0xff]
    %v842 = vld [vmem:[%s1 + $0x1970] sm:$0xff]
    %v843 = vld [vmem:[%s1 + $0x1978] sm:$0xff]
    %v844 = vld [vmem:[%s1 + $0x1980] sm:$0xff]
    %v845 = vld [vmem:[%s1 + $0x1988] sm:$0xff]
    %v846 = vld [vmem:[%s1 + $0x1990] sm:$0xff]
    %v847 = vld [vmem:[%s1 + $0x1998] sm:$0xff]
    %v848 = vld [vmem:[%s1 + $0x19a0] sm:$0xff]
    %v849 = vld [vmem:[%s1 + $0x19a8] sm:$0xff]
    %v850 = vld [vmem:[%s1 + $0x19b0] sm:$0xff]
    %v851 = vld [vmem:[%s1 + $0x19b8] sm:$0xff]
    %v852 = vld [vmem:[%s1 + $0x19c0] sm:$0xff]
    %v853 = vld [vmem:[%s1 + $0x19c8] sm:$0xff]
    %v854 = vld [vmem:[%s1 + $0x19d0] sm:$0xff]
    %v855 = vld [vmem:[%s1 + $0x19d8] sm:$0xff]
    %v856 = vld [vmem:[%s1 + $0x19e0] sm:$0xff]
    %v857 = vld [vmem:[%s1 + $0x19e8] sm:$0xff]
    %v858 = vld [vmem:[%s1 + $0x19f0] sm:$0xff]
    %v859 = vld [vmem:[%s1 + $0x19f8] sm:$0xff]
    %v860 = vld [vmem:[%s1 + $0x1a00] sm:$0xff]
    %v861 = vld [vmem:[%s1 + $0x1a08] sm:$0xff]
    %v862 = vld [vmem:[%s1 + $0x1a10] sm:$0xff]
    %v863 = vld [vmem:[%s1 + $0x1a18] sm:$0xff]
    %v864 = vld [vmem:[%s1 + $0x1a20] sm:$0xff]
    %v865 = vld [vmem:[%s1 + $0x1a28] sm:$0xff]
    %v866 = vld [vmem:[%s1 + $0x1a30] sm:$0xff]
    %v867 = vld [vmem:[%s1 + $0x1a38] sm:$0xff]
    %v868 = vld [vmem:[%s1 + $0x1a40] sm:$0xff]
    %v869 = vld [vmem:[%s1 + $0x1a48] sm:$0xff]
    %v870 = vld [vmem:[%s1 + $0x1a50] sm:$0xff]
    %v871 = vld [vmem:[%s1 + $0x1a58] sm:$0xff]
    %v872 = vld [vmem:[%s1 + $0x1a60] sm:$0xff]
    %v873 = vld [vmem:[%s1 + $0x1a68] sm:$0xff]
    %v874 = vld [vmem:[%s1 + $0x1a70] sm:$0xff]
    %v875 = vld [vmem:[%s1 + $0x1a78] sm:$0xff]
    %v876 = vld [vmem:[%s1 + $0x1a80] sm:$0xff]
    %v877 = vld [vmem:[%s1 + $0x1a88] sm:$0xff]
    %v878 = vld [vmem:[%s1 + $0x1a90] sm:$0xff]
    %v879 = vld [vmem:[%s1 + $0x1a98] sm:$0xff]
    %v880 = vld [vmem:[%s1 + $0x1aa0] sm:$0xff]
    %v881 = vld [vmem:[%s1 + $0x1aa8] sm:$0xff]
    %v882 = vld [vmem:[%s1 + $0x1ab0] sm:$0xff]
    %v883 = vld [vmem:[%s1 + $0x1ab8] sm:$0xff]
    %v884 = vld [vmem:[%s1 + $0x1ac0] sm:$0xff]
    %v885 = vld [vmem:[%s1 + $0x1ac8] sm:$0xff]
    %v886 = vld [vmem:[%s1 + $0x1ad0] sm:$0xff]
    %v887 = vld [vmem:[%s1 + $0x1ad8] sm:$0xff]
    %v888 = vld [vmem:[%s1 + $0x1ae0] sm:$0xff]
    %v889 = vld [vmem:[%s1 + $0x1ae8] sm:$0xff]
    %v890 = vld [vmem:[%s1 + $0x1af0] sm:$0xff]
    %v891 = vld [vmem:[%s1 + $0x1af8] sm:$0xff]
    %v892 = vld [vmem:[%s1 + $0x1b00] sm:$0xff]
    %v893 = vld [vmem:[%s1 + $0x1b08] sm:$0xff]
    %v894 = vld [vmem:[%s1 + $0x1b10] sm:$0xff]
    %v895 = vld [vmem:[%s1 + $0x1b18] sm:$0xff]
    %v896 = vld [vmem:[%s1 + $0x1b20] sm:$0xff]
    %v897 = vld [vmem:[%s1 + $0x1b28] sm:$0xff]
    %v898 = vld [vmem:[%s1 + $0x1b30] sm:$0xff]
    %v899 = vld [vmem:[%s1 + $0x1b38] sm:$0xff]
    %v900 = vld [vmem:[%s1 + $0x1b40] sm:$0xff]
    %v901 = vld [vmem:[%s1 + $0x1b48] sm:$0xff]
    %v902 = vld [vmem:[%s1 + $0x1b50] sm:$0xff]
    %v903 = vld [vmem:[%s1 + $0x1b58] sm:$0xff]
    %v904 = vld [vmem:[%s1 + $0x1b60] sm:$0xff]
    %v905 = vld [vmem:[%s1 + $0x1b68] sm:$0xff]
    %v906 = vld [vmem:[%s1 + $0x1b70] sm:$0xff]
    %v907 = vld [vmem:[%s1 + $0x1b78] sm:$0xff]
    %v908 = vld [vmem:[%s1 + $0x1b80] sm:$0xff]
    %v909 = vld [vmem:[%s1 + $0x1b88] sm:$0xff]
    %v910 = vld [vmem:[%s1 + $0x1b90] sm:$0xff]
    %v911 = vld [vmem:[%s1 + $0x1b98] sm:$0xff]
    %v912 = vld [vmem:[%s1 + $0x1ba0] sm:$0xff]
    %v913 = vld [vmem:[%s1 + $0x1ba8] sm:$0xff]
    %v914 = vld [vmem:[%s1 + $0x1bb0] sm:$0xff]
    %v915 = vld [vmem:[%s1 + $0x1bb8] sm:$0xff]
    %v916 = vld [vmem:[%s1 + $0x1bc0] sm:$0xff]
    %v917 = vld [vmem:[%s1 + $0x1bc8] sm:$0xff]
    %v918 = vld [vmem:[%s1 + $0x1bd0] sm:$0xff]
    %v919 = vld [vmem:[%s1 + $0x1bd8] sm:$0xff]
    %v920 = vld [vmem:[%s1 + $0x1be0] sm:$0xff]
    %v921 = vld [vmem:[%s1 + $0x1be8] sm:$0xff]
    %v922 = vld [vmem:[%s1 + $0x1bf0] sm:$0xff]
    %v923 = vld [vmem:[%s1 + $0x1bf8] sm:$0xff]
    %v924 = vld [vmem:[%s1 + $0x1c00] sm:$0xff]
    %v925 = vld [vmem:[%s1 + $0x1c08] sm:$0xff]
    %v926 = vld [vmem:[%s1 + $0x1c10] sm:$0xff]
    %v927 = vld [vmem:[%s1 + $0x1c18] sm:$0xff]
    %v928 = vld [vmem:[%s1 + $0x1c20] sm:$0xff]
    %v929 = vld [vmem:[%s1 + $0x1c28] sm:$0xff]
    %v930 = vld [vmem:[%s1 + $0x1c30] sm:$0xff]
    %v931 = vld [vmem:[%s1 + $0x1c38] sm:$0xff]
    %v932 = vld [vmem:[%s1 + $0x1c40] sm:$0xff]
    %v933 = vld [vmem:[%s1 + $0x1c48] sm:$0xff]
    %v934 = vld [vmem:[%s1 + $0x1c50] sm:$0xff]
    %v935 = vld [vmem:[%s1 + $0x1c58] sm:$0xff]
    %v936 = vld [vmem:[%s1 + $0x1c60] sm:$0xff]
    %v937 = vld [vmem:[%s1 + $0x1c68] sm:$0xff]
    %v938 = vld [vmem:[%s1 + $0x1c70] sm:$0xff]
    %v939 = vld [vmem:[%s1 + $0x1c78] sm:$0xff]
    %v940 = vld [vmem:[%s1 + $0x1c80] sm:$0xff]
    %v941 = vld [vmem:[%s1 + $0x1c88] sm:$0xff]
    %v942 = vld [vmem:[%s1 + $0x1c90] sm:$0xff]
    %v943 = vld [vmem:[%s1 + $0x1c98] sm:$0xff]
    %v944 = vld [vmem:[%s1 + $0x1ca0] sm:$0xff]
    %v945 = vld [vmem:[%s1 + $0x1ca8] sm:$0xff]
    %v946 = vld [vmem:[%s1 + $0x1cb0] sm:$0xff]
    %v947 = vld [vmem:[%s1 + $0x1cb8] sm:$0xff]
    %v948 = vld [vmem:[%s1 + $0x1cc0] sm:$0xff]
    %v949 = vld [vmem:[%s1 + $0x1cc8] sm:$0xff]
    %v950 = vld [vmem:[%s1 + $0x1cd0] sm:$0xff]
    %v951 = vld [vmem:[%s1 + $0x1cd8] sm:$0xff]
    %v952 = vld [vmem:[%s1 + $0x1ce0] sm:$0xff]
    %v953 = vld [vmem:[%s1 + $0x1ce8] sm:$0xff]
    %v954 = vld [vmem:[%s1 + $0x1cf0] sm:$0xff]
    %v955 = vld [vmem:[%s1 + $0x1cf8] sm:$0xff]
    %v956 = vld [vmem:[%s1 + $0x1d00] sm:$0xff]
    %v957 = vld [vmem:[%s1 + $0x1d08] sm:$0xff]
    %v958 = vld [vmem:[%s1 + $0x1d10] sm:$0xff]
    %v959 = vld [vmem:[%s1 + $0x1d18] sm:$0xff]
    %v960 = vld [vmem:[%s1 + $0x1d20] sm:$0xff]
    %v961 = vld [vmem:[%s1 + $0x1d28] sm:$0xff]
    %v962 = vld [vmem:[%s1 + $0x1d30] sm:$0xff]
    %v963 = vld [vmem:[%s1 + $0x1d38] sm:$0xff]
    %v964 = vld [vmem:[%s1 + $0x1d40] sm:$0xff]
    %v965 = vld [vmem:[%s1 + $0x1d48] sm:$0xff]
    %v966 = vld [vmem:[%s1 + $0x1d50] sm:$0xff]
    %v967 = vld [vmem:[%s1 + $0x1d58] sm:$0xff]
    %v968 = vld [vmem:[%s1 + $0x1d60] sm:$0xff]
    %v969 = vld [vmem:[%s1 + $0x1d68] sm:$0xff]
    %v970 = vld [vmem:[%s1 + $0x1d70] sm:$0xff]
    %v971 = vld [vmem:[%s1 + $0x1d78] sm:$0xff]
    %v972 = vld [vmem:[%s1 + $0x1d80] sm:$0xff]
    %v973 = vld [vmem:[%s1 + $0x1d88] sm:$0xff]
    %v974 = vld [vmem:[%s1 + $0x1d90] sm:$0xff]
    %v975 = vld [vmem:[%s1 + $0x1d98] sm:$0xff]
    %v976 = vld [vmem:[%s1 + $0x1da0] sm:$0xff]
    %v977 = vld [vmem:[%s1 + $0x1da8] sm:$0xff]
    %v978 = vld [vmem:[%s1 + $0x1db0] sm:$0xff]
    %v979 = vld [vmem:[%s1 + $0x1db8] sm:$0xff]
    %v980 = vld [vmem:[%s1 + $0x1dc0] sm:$0xff]
    %v981 = vld [vmem:[%s1 + $0x1dc8] sm:$0xff]
    %v982 = vld [vmem:[%s1 + $0x1dd0] sm:$0xff]
    %v983 = vld [vmem:[%s1 + $0x1dd8] sm:$0xff]
    %v984 = vld [vmem:[%s1 + $0x1de0] sm:$0xff]
    %v985 = vld [vmem:[%s1 + $0x1de8] sm:$0xff]
    %v986 = vld [vmem:[%s1 + $0x1df0] sm:$0xff]
    %v987 = vld [vmem:[%s1 + $0x1df8] sm:$0xff]
    %v988 = vld [vmem:[%s1 + $0x1e00] sm:$0xff]
    %v989 = vld [vmem:[%s1 + $0x1e08] sm:$0xff]
    %v990 = vld [vmem:[%s1 + $0x1e10] sm:$0xff]
    %v991 = vld [vmem:[%s1 + $0x1e18] sm:$0xff]
    %v992 = vld [vmem:[%s1 + $0x1e20] sm:$0xff]
    %v993 = vld [vmem:[%s1 + $0x1e28] sm:$0xff]
    %v994 = vld [vmem:[%s1 + $0x1e30] sm:$0xff]
    %v995 = vld [vmem:[%s1 + $0x1e38] sm:$0xff]
    %v996 = vld [vmem:[%s1 + $0x1e40] sm:$0xff]
    %v997 = vld [vmem:[%s1 + $0x1e48] sm:$0xff]
    %v998 = vld [vmem:[%s1 + $0x1e50] sm:$0xff]
    %v999 = vld [vmem:[%s1 + $0x1e58] sm:$0xff]
    %v1000 = vld [vmem:[%s1 + $0x1e60] sm:$0xff]
    %v1001 = vld [vmem:[%s1 + $0x1e68] sm:$0xff]
    %v1002 = vld [vmem:[%s1 + $0x1e70] sm:$0xff]
    %v1003 = vld [vmem:[%s1 + $0x1e78] sm:$0xff]
    %v1004 = vld [vmem:[%s1 + $0x1e80] sm:$0xff]
    %v1005 = vld [vmem:[%s1 + $0x1e88] sm:$0xff]
    %v1006 = vld [vmem:[%s1 + $0x1e90] sm:$0xff]
    %v1007 = vld [vmem:[%s1 + $0x1e98] sm:$0xff]
    %v1008 = vld [vmem:[%s1 + $0x1ea0] sm:$0xff]
    %v1009 = vld [vmem:[%s1 + $0x1ea8] sm:$0xff]
    %v1010 = vld [vmem:[%s1 + $0x1eb0] sm:$0xff]
    %v1011 = vld [vmem:[%s1 + $0x1eb8] sm:$0xff]
    %v1012 = vld [vmem:[%s1 + $0x1ec0] sm:$0xff]
    %v1013 = vld [vmem:[%s1 + $0x1ec8] sm:$0xff]
    %v1014 = vld [vmem:[%s1 + $0x1ed0] sm:$0xff]
    %v1015 = vld [vmem:[%s1 + $0x1ed8] sm:$0xff]
    %v1016 = vld [vmem:[%s1 + $0x1ee0] sm:$0xff]
    %v1017 = vld [vmem:[%s1 + $0x1ee8] sm:$0xff]
    %v1018 = vld [vmem:[%s1 + $0x1ef0] sm:$0xff]
    %v1019 = vld [vmem:[%s1 + $0x1ef8] sm:$0xff]
    %v1020 = vld [vmem:[%s1 + $0x1f00] sm:$0xff]
    %v1021 = vld [vmem:[%s1 + $0x1f08] sm:$0xff]
    %v1022 = vld [vmem:[%s1 + $0x1f10] sm:$0xff]
    %v1023 = vld [vmem:[%s1 + $0x1f18] sm:$0xff]
    %v1024 = vld [vmem:[%s1 + $0x1f20] sm:$0xff]
    %v1025 = vld [vmem:[%s1 + $0x1f28] sm:$0xff]
    %v1026 = vld [vmem:[%s1 + $0x1f30] sm:$0xff]
    %v1027 = vld [vmem:[%s1 + $0x1f38] sm:$0xff]
    %v1028 = vld [vmem:[%s1 + $0x1f40] sm:$0xff]
    %v1029 = vld [vmem:[%s1 + $0x1f48] sm:$0xff]
    %v1030 = vld [vmem:[%s1 + $0x1f50] sm:$0xff]
    %v1031 = vld [vmem:[%s1 + $0x1f58] sm:$0xff]
    %v1032 = vld [vmem:[%s1 + $0x1f60] sm:$0xff]
    %v1033 = vld [vmem:[%s1 + $0x1f68] sm:$0xff]
    %v1034 = vld [vmem:[%s1 + $0x1f70] sm:$0xff]
    %v1035 = vld [vmem:[%s1 + $0x1f78] sm:$0xff]
    %v1036 = vld [vmem:[%s1 + $0x1f80] sm:$0xff]
    %v1037 = vld [vmem:[%s1 + $0x1f88] sm:$0xff]
    %v1038 = vld [vmem:[%s1 + $0x1f90] sm:$0xff]
    %v1039 = vld [vmem:[%s1 + $0x1f98] sm:$0xff]
    %v1040 = vld [vmem:[%s1 + $0x1fa0] sm:$0xff]
    %v1041 = vld [vmem:[%s1 + $0x1fa8] sm:$0xff]
    %v1042 = vld [vmem:[%s1 + $0x1fb0] sm:$0xff]
    %v1043 = vld [vmem:[%s1 + $0x1fb8] sm:$0xff]
    %v1044 = vld [vmem:[%s1 + $0x1fc0] sm:$0xff]
    %v1045 = vld [vmem:[%s1 + $0x1fc8] sm:$0xff]
    %v1046 = vld [vmem:[%s1 + $0x1fd0] sm:$0xff]
    %v1047 = vld [vmem:[%s1 + $0x1fd8] sm:$0xff]
    %v1048 = vld [vmem:[%s1 + $0x1fe0] sm:$0xff]
    %v1049 = vld [vmem:[%s1 + $0x1fe8] sm:$0xff]
    %v1050 = vld [vmem:[%s1 + $0x1ff0] sm:$0xff]
    %v1051 = vld [vmem:[%s1 + $0x1ff8] sm:$0xff]
    %v1052 = vld [vmem:[%s1 + $0x2000] sm:$0xff]
    %v1053 = vld [vmem:[%s1 + $0x2008] sm:$0xff]
    %v1054 = vld [vmem:[%s1 + $0x2010] sm:$0xff]
    %v1055 = vld [vmem:[%s1 + $0x2018] sm:$0xff]
    %v1056 = vld [vmem:[%s1 + $0x2020] sm:$0xff]
    %v1057 = vld [vmem:[%s1 + $0x2028] sm:$0xff]
    %v1058 = vld [vmem:[%s1 + $0x2030] sm:$0xff]
    %v1059 = vld [vmem:[%s1 + $0x2038] sm:$0xff]
    %v1060 = vld [vmem:[%s1 + $0x2040] sm:$0xff]
    %v1061 = vld [vmem:[%s1 + $0x2048] sm:$0xff]
    %v1062 = vld [vmem:[%s1 + $0x2050] sm:$0xff]
    %v1063 = vld [vmem:[%s1 + $0x2058] sm:$0xff]
    %v1064 = vld [vmem:[%s1 + $0x2060] sm:$0xff]
    %v1065 = vld [vmem:[%s1 + $0x2068] sm:$0xff]
    %v1066 = vld [vmem:[%s1 + $0x2070] sm:$0xff]
    %v1067 = vld [vmem:[%s1 + $0x2078] sm:$0xff]
    %v1068 = vld [vmem:[%s1 + $0x2080] sm:$0xff]
    %v1069 = vld [vmem:[%s1 + $0x2088] sm:$0xff]
    %v1070 = vld [vmem:[%s1 + $0x2090] sm:$0xff]
    %v1071 = vld [vmem:[%s1 + $0x2098] sm:$0xff]
    %v1072 = vld [vmem:[%s1 + $0x20a0] sm:$0xff]
    %v1073 = vld [vmem:[%s1 + $0x20a8] sm:$0xff]
    %v1074 = vld [vmem:[%s1 + $0x20b0] sm:$0xff]
    %v1075 = vld [vmem:[%s1 + $0x20b8] sm:$0xff]
    %v1076 = vld [vmem:[%s1 + $0x20c0] sm:$0xff]
    %v1077 = vld [vmem:[%s1 + $0x20c8] sm:$0xff]
    %v1078 = vld [vmem:[%s1 + $0x20d0] sm:$0xff]
    %v1079 = vld [vmem:[%s1 + $0x20d8] sm:$0xff]
    %v1080 = vld [vmem:[%s1 + $0x20e0] sm:$0xff]
    %v1081 = vld [vmem:[%s1 + $0x20e8] sm:$0xff]
    %v1082 = vld [vmem:[%s1 + $0x20f0] sm:$0xff]
    %v1083 = vld [vmem:[%s1 + $0x20f8] sm:$0xff]
    %v1084 = vld [vmem:[%s1 + $0x2100] sm:$0xff]
    %v1085 = vld [vmem:[%s1 + $0x2108] sm:$0xff]
    %v1086 = vld [vmem:[%s1 + $0x2110] sm:$0xff]
    %v1087 = vld [vmem:[%s1 + $0x2118] sm:$0xff]
    %v1088 = vld [vmem:[%s1 + $0x2120] sm:$0xff]
    %v1089 = vld [vmem:[%s1 + $0x2128] sm:$0xff]
    %v1090 = vld [vmem:[%s1 + $0x2130] sm:$0xff]
    %v1091 = vld [vmem:[%s1 + $0x2138] sm:$0xff]
    %v1092 = vld [vmem:[%s1 + $0x2140] sm:$0xff]
    %v1093 = vld [vmem:[%s1 + $0x2148] sm:$0xff]
    %v1094 = vld [vmem:[%s1 + $0x2150] sm:$0xff]
    %v1095 = vld [vmem:[%s1 + $0x2158] sm:$0xff]
    %v1096 = vld [vmem:[%s1 + $0x2160] sm:$0xff]
    %v1097 = vld [vmem:[%s1 + $0x2168] sm:$0xff]
    %v1098 = vld [vmem:[%s1 + $0x2170] sm:$0xff]
    %v1099 = vld [vmem:[%s1 + $0x2178] sm:$0xff]
    %v1100 = vld [vmem:[%s1 + $0x2180] sm:$0xff]
    %v1101 = vld [vmem:[%s1 + $0x2188] sm:$0xff]
    %v1102 = vld [vmem:[%s1 + $0x2190] sm:$0xff]
    %v1103 = vld [vmem:[%s1 + $0x2198] sm:$0xff]
    %v1104 = vld [vmem:[%s1 + $0x21a0] sm:$0xff]
    %v1105 = vld [vmem:[%s1 + $0x21a8] sm:$0xff]
    %v1106 = vld [vmem:[%s1 + $0x21b0] sm:$0xff]
    %v1107 = vld [vmem:[%s1 + $0x21b8] sm:$0xff]
    %v1108 = vld [vmem:[%s1 + $0x21c0] sm:$0xff]
    %v1109 = vld [vmem:[%s1 + $0x21c8] sm:$0xff]
    %v1110 = vld [vmem:[%s1 + $0x21d0] sm:$0xff]
    %v1111 = vld [vmem:[%s1 + $0x21d8] sm:$0xff]
    %v1112 = vld [vmem:[%s1 + $0x21e0] sm:$0xff]
    %v1113 = vld [vmem:[%s1 + $0x21e8] sm:$0xff]
    %v1114 = vld [vmem:[%s1 + $0x21f0] sm:$0xff]
    %v1115 = vld [vmem:[%s1 + $0x21f8] sm:$0xff]
    %v1116 = vld [vmem:[%s1 + $0x2200] sm:$0xff]
    %v1117 = vld [vmem:[%s1 + $0x2208] sm:$0xff]
    %v1118 = vld [vmem:[%s1 + $0x2210] sm:$0xff]
    %v1119 = vld [vmem:[%s1 + $0x2218] sm:$0xff]
    %v1120 = vld [vmem:[%s1 + $0x2220] sm:$0xff]
    %v1121 = vld [vmem:[%s1 + $0x2228] sm:$0xff]
    %v1122 = vld [vmem:[%s1 + $0x2230] sm:$0xff]
    %v1123 = vld [vmem:[%s1 + $0x2238] sm:$0xff]
    %v1124 = vld [vmem:[%s1 + $0x2240] sm:$0xff]
    %v1125 = vld [vmem:[%s1 + $0x2248] sm:$0xff]
    %v1126 = vld [vmem:[%s1 + $0x2250] sm:$0xff]
    %v1127 = vld [vmem:[%s1 + $0x2258] sm:$0xff]
    %v1128 = vld [vmem:[%s1 + $0x2260] sm:$0xff]
    %v1129 = vld [vmem:[%s1 + $0x2268] sm:$0xff]
    %v1130 = vld [vmem:[%s1 + $0x2270] sm:$0xff]
    %v1131 = vld [vmem:[%s1 + $0x2278] sm:$0xff]
    %v1132 = vld [vmem:[%s1 + $0x2280] sm:$0xff]
    %v1133 = vld [vmem:[%s1 + $0x2288] sm:$0xff]
    %v1134 = vld [vmem:[%s1 + $0x2290] sm:$0xff]
    %v1135 = vld [vmem:[%s1 + $0x2298] sm:$0xff]
    %v1136 = vld [vmem:[%s1 + $0x22a0] sm:$0xff]
    %v1137 = vld [vmem:[%s1 + $0x22a8] sm:$0xff]
    %v1138 = vld [vmem:[%s1 + $0x22b0] sm:$0xff]
    %v1139 = vld [vmem:[%s1 + $0x22b8] sm:$0xff]
    %v1140 = vld [vmem:[%s1 + $0x22c0] sm:$0xff]
    %v1141 = vld [vmem:[%s1 + $0x22c8] sm:$0xff]
    %v1142 = vld [vmem:[%s1 + $0x22d0] sm:$0xff]
    %v1143 = vld [vmem:[%s1 + $0x22d8] sm:$0xff]
    %v1144 = vld [vmem:[%s1 + $0x22e0] sm:$0xff]
    %v1145 = vld [vmem:[%s1 + $0x22e8] sm:$0xff]
    %v1146 = vld [vmem:[%s1 + $0x22f0] sm:$0xff]
    %v1147 = vld [vmem:[%s1 + $0x22f8] sm:$0xff]
    %v1148 = vld [vmem:[%s1 + $0x2300] sm:$0xff]
    %v1149 = vld [vmem:[%s1 + $0x2308] sm:$0xff]
    %v1150 = vld [vmem:[%s1 + $0x2310] sm:$0xff]
    %v1151 = vld [vmem:[%s1 + $0x2318] sm:$0xff]
    %v1152 = vld [vmem:[%s1 + $0x2320] sm:$0xff]
    %v1153 = vld [vmem:[%s1 + $0x2328] sm:$0xff]
    %v1154 = vld [vmem:[%s1 + $0x2330] sm:$0xff]
    %v1155 = vld [vmem:[%s1 + $0x2338] sm:$0xff]
    %v1156 = vld [vmem:[%s1 + $0x2340] sm:$0xff]
    %v1157 = vld [vmem:[%s1 + $0x2348] sm:$0xff]
    %v1158 = vld [vmem:[%s1 + $0x2350] sm:$0xff]
    %v1159 = vld [vmem:[%s1 + $0x2358] sm:$0xff]
    %v1160 = vld [vmem:[%s1 + $0x2360] sm:$0xff]
    %v1161 = vld [vmem:[%s1 + $0x2368] sm:$0xff]
    %v1162 = vld [vmem:[%s1 + $0x2370] sm:$0xff]
    %v1163 = vld [vmem:[%s1 + $0x2378] sm:$0xff]
    %v1164 = vld [vmem:[%s1 + $0x2380] sm:$0xff]
    %v1165 = vld [vmem:[%s1 + $0x2388] sm:$0xff]
    %v1166 = vld [vmem:[%s1 + $0x2390] sm:$0xff]
    %v1167 = vld [vmem:[%s1 + $0x2398] sm:$0xff]
    %v1168 = vld [vmem:[%s1 + $0x23a0] sm:$0xff]
    %v1169 = vld [vmem:[%s1 + $0x23a8] sm:$0xff]
    %v1170 = vld [vmem:[%s1 + $0x23b0] sm:$0xff]
    %v1171 = vld [vmem:[%s1 + $0x23b8] sm:$0xff]
    %v1172 = vld [vmem:[%s1 + $0x23c0] sm:$0xff]
    %v1173 = vld [vmem:[%s1 + $0x23c8] sm:$0xff]
    %v1174 = vld [vmem:[%s1 + $0x23d0] sm:$0xff]
    %v1175 = vld [vmem:[%s1 + $0x23d8] sm:$0xff]
    %v1176 = vld [vmem:[%s1 + $0x23e0] sm:$0xff]
    %v1177 = vld [vmem:[%s1 + $0x23e8] sm:$0xff]
    %v1178 = vld [vmem:[%s1 + $0x23f0] sm:$0xff]
    %v1179 = vld [vmem:[%s1 + $0x23f8] sm:$0xff]
    %v1180 = vld [vmem:[%s1 + $0x2400] sm:$0xff]
    %v1181 = vld [vmem:[%s1 + $0x2408] sm:$0xff]
    %v1182 = vld [vmem:[%s1 + $0x2410] sm:$0xff]
    %v1183 = vld [vmem:[%s1 + $0x2418] sm:$0xff]
    %v1184 = vld [vmem:[%s1 + $0x2420] sm:$0xff]
    %v1185 = vld [vmem:[%s1 + $0x2428] sm:$0xff]
    %v1186 = vld [vmem:[%s1 + $0x2430] sm:$0xff]
    %v1187 = vld [vmem:[%s1 + $0x2438] sm:$0xff]
    %v1188 = vld [vmem:[%s1 + $0x2440] sm:$0xff]
    %v1189 = vld [vmem:[%s1 + $0x2448] sm:$0xff]
    %v1190 = vld [vmem:[%s1 + $0x2450] sm:$0xff]
    %v1191 = vld [vmem:[%s1 + $0x2458] sm:$0xff]
    %v1192 = vld [vmem:[%s1 + $0x2460] sm:$0xff]
    %v1193 = vld [vmem:[%s1 + $0x2468] sm:$0xff]
    %v1194 = vld [vmem:[%s1 + $0x2470] sm:$0xff]
    %v1195 = vld [vmem:[%s1 + $0x2478] sm:$0xff]
    %v1196 = vld [vmem:[%s1 + $0x2480] sm:$0xff]
    %v1197 = vld [vmem:[%s1 + $0x2488] sm:$0xff]
    %v1198 = vld [vmem:[%s1 + $0x2490] sm:$0xff]
    %v1199 = vld [vmem:[%s1 + $0x2498] sm:$0xff]
    %v1200 = vld [vmem:[%s1 + $0x24a0] sm:$0xff]
    %v1201 = vld [vmem:[%s1 + $0x24a8] sm:$0xff]
    %v1202 = vld [vmem:[%s1 + $0x24b0] sm:$0xff]
    %v1203 = vld [vmem:[%s1 + $0x24b8] sm:$0xff]
    %v1204 = vld [vmem:[%s1 + $0x24c0] sm:$0xff]
    %v1205 = vld [vmem:[%s1 + $0x24c8] sm:$0xff]
    %v1206 = vld [vmem:[%s1 + $0x24d0] sm:$0xff]
    %v1207 = vld [vmem:[%s1 + $0x24d8] sm:$0xff]
    %v1208 = vld [vmem:[%s1 + $0x24e0] sm:$0xff]
    %v1209 = vld [vmem:[%s1 + $0x24e8] sm:$0xff]
    %v1210 = vld [vmem:[%s1 + $0x24f0] sm:$0xff]
    %v1211 = vld [vmem:[%s1 + $0x24f8] sm:$0xff]
    %v1212 = vld [vmem:[%s1 + $0x2500] sm:$0xff]
    %v1213 = vld [vmem:[%s1 + $0x2508] sm:$0xff]
    %v1214 = vld [vmem:[%s1 + $0x2510] sm:$0xff]
    %v1215 = vld [vmem:[%s1 + $0x2518] sm:$0xff]
    %v1216 = vld [vmem:[%s1 + $0x2520] sm:$0xff]
    %v1217 = vld [vmem:[%s1 + $0x2528] sm:$0xff]
    %v1218 = vld [vmem:[%s1 + $0x2530] sm:$0xff]
    %v1219 = vld [vmem:[%s1 + $0x2538] sm:$0xff]
    %v1220 = vld [vmem:[%s1 + $0x2540] sm:$0xff]
    %v1221 = vld [vmem:[%s1 + $0x2548] sm:$0xff]
    %v1222 = vld [vmem:[%s1 + $0x2550] sm:$0xff]
    %v1223 = vld [vmem:[%s1 + $0x2558] sm:$0xff]
    %v1224 = vld [vmem:[%s1 + $0x2560] sm:$0xff]
    %v1225 = vld [vmem:[%s1 + $0x2568] sm:$0xff]
    %v1226 = vld [vmem:[%s1 + $0x2570] sm:$0xff]
    %v1227 = vld [vmem:[%s1 + $0x2578] sm:$0xff]
    %v1228 = vld [vmem:[%s1 + $0x2580] sm:$0xff]
    %v1229 = vld [vmem:[%s1 + $0x2588] sm:$0xff]
    %v1230 = vld [vmem:[%s1 + $0x2590] sm:$0xff]
    %v1231 = vld [vmem:[%s1 + $0x2598] sm:$0xff]
    %v1232 = vld [vmem:[%s1 + $0x25a0] sm:$0xff]
    %v1233 = vld [vmem:[%s1 + $0x25a8] sm:$0xff]
    %v1234 = vld [vmem:[%s1 + $0x25b0] sm:$0xff]
    %v1235 = vld [vmem:[%s1 + $0x25b8] sm:$0xff]
    %v1236 = vld [vmem:[%s1 + $0x25c0] sm:$0xff]
    %v1237 = vld [vmem:[%s1 + $0x25c8] sm:$0xff]
    %v1238 = vld [vmem:[%s1 + $0x25d0] sm:$0xff]
    %v1239 = vld [vmem:[%s1 + $0x25d8] sm:$0xff]
    %v1240 = vld [vmem:[%s1 + $0x25e0] sm:$0xff]
    %v1241 = vld [vmem:[%s1 + $0x25e8] sm:$0xff]
    %v1242 = vld [vmem:[%s1 + $0x25f0] sm:$0xff]
    %v1243 = vld [vmem:[%s1 + $0x25f8] sm:$0xff]
    %v1244 = vld [vmem:[%s1 + $0x2600] sm:$0xff]
    %v1245 = vld [vmem:[%s1 + $0x2608] sm:$0xff]
    %v1246 = vld [vmem:[%s1 + $0x2610] sm:$0xff]
    %v1247 = vld [vmem:[%s1 + $0x2618] sm:$0xff]
    %v1248 = vld [vmem:[%s1 + $0x2620] sm:$0xff]
    %v1249 = vld [vmem:[%s1 + $0x2628] sm:$0xff]
    %v1250 = vld [vmem:[%s1 + $0x2630] sm:$0xff]
    %v1251 = vld [vmem:[%s1 + $0x2638] sm:$0xff]
    %v1252 = vld [vmem:[%s1 + $0x2640] sm:$0xff]
    %v1253 = vld [vmem:[%s1 + $0x2648] sm:$0xff]
    %v1254 = vld [vmem:[%s1 + $0x2650] sm:$0xff]
    %v1255 = vld [vmem:[%s1 + $0x2658] sm:$0xff]
    %v1256 = vld [vmem:[%s1 + $0x2660] sm:$0xff]
    %v1257 = vld [vmem:[%s1 + $0x2668] sm:$0xff]
    %v1258 = vld [vmem:[%s1 + $0x2670] sm:$0xff]
    %v1259 = vld [vmem:[%s1 + $0x2678] sm:$0xff]
    %v1260 = vld [vmem:[%s1 + $0x2680] sm:$0xff]
    %v1261 = vld [vmem:[%s1 + $0x2688] sm:$0xff]
    %v1262 = vld [vmem:[%s1 + $0x2690] sm:$0xff]
    %v1263 = vld [vmem:[%s1 + $0x2698] sm:$0xff]
    %v1264 = vld [vmem:[%s1 + $0x26a0] sm:$0xff]
    %v1265 = vld [vmem:[%s1 + $0x26a8] sm:$0xff]
    %v1266 = vld [vmem:[%s1 + $0x26b0] sm:$0xff]
    %v1267 = vld [vmem:[%s1 + $0x26b8] sm:$0xff]
    %v1268 = vld [vmem:[%s1 + $0x26c0] sm:$0xff]
    %v1269 = vld [vmem:[%s1 + $0x26c8] sm:$0xff]
    %v1270 = vld [vmem:[%s1 + $0x26d0] sm:$0xff]
    %v1271 = vld [vmem:[%s1 + $0x26d8] sm:$0xff]
    %v1272 = vld [vmem:[%s1 + $0x26e0] sm:$0xff]
    %v1273 = vld [vmem:[%s1 + $0x26e8] sm:$0xff]
    %v1274 = vld [vmem:[%s1 + $0x26f0] sm:$0xff]
    %v1275 = vld [vmem:[%s1 + $0x26f8] sm:$0xff]
    %v1276 = vld [vmem:[%s1 + $0x2700] sm:$0xff]
    %v1277 = vld [vmem:[%s1 + $0x2708] sm:$0xff]
    %v1278 = vld [vmem:[%s1 + $0x2710] sm:$0xff]
    %v1279 = vld [vmem:[%s1 + $0x2718] sm:$0xff]
    %v1280 = vld [vmem:[%s1 + $0x2720] sm:$0xff]
    %v1281 = vld [vmem:[%s1 + $0x2728] sm:$0xff]
    %v1282 = vld [vmem:[%s1 + $0x2730] sm:$0xff]
    %v1283 = vld [vmem:[%s1 + $0x2738] sm:$0xff]
    %v1284 = vld [vmem:[%s1 + $0x2740] sm:$0xff]
    %v1285 = vld [vmem:[%s1 + $0x2748] sm:$0xff]
    %v1286 = vld [vmem:[%s1 + $0x2750] sm:$0xff]
    %v1287 = vld [vmem:[%s1 + $0x2758] sm:$0xff]
    %v1288 = vld [vmem:[%s1 + $0x2760] sm:$0xff]
    %v1289 = vld [vmem:[%s1 + $0x2768] sm:$0xff]
    %v1290 = vld [vmem:[%s1 + $0x2770] sm:$0xff]
    %v1291 = vld [vmem:[%s1 + $0x2778] sm:$0xff]
    %v1292 = vld [vmem:[%s1 + $0x2780] sm:$0xff]
    %v1293 = vld [vmem:[%s1 + $0x2788] sm:$0xff]
    %v1294 = vld [vmem:[%s1 + $0x2790] sm:$0xff]
    %v1295 = vld [vmem:[%s1 + $0x2798] sm:$0xff]
    %v1296 = vld [vmem:[%s1 + $0x27a0] sm:$0xff]
    %v1297 = vld [vmem:[%s1 + $0x27a8] sm:$0xff]
    %v1298 = vld [vmem:[%s1 + $0x27b0] sm:$0xff]
    %v1299 = vld [vmem:[%s1 + $0x27b8] sm:$0xff]
    %v1300 = vld [vmem:[%s1 + $0x27c0] sm:$0xff]
    %v1301 = vld [vmem:[%s1 + $0x27c8] sm:$0xff]
    %v1302 = vld [vmem:[%s1 + $0x27d0] sm:$0xff]
    %v1303 = vld [vmem:[%s1 + $0x27d8] sm:$0xff]
    %v1304 = vld [vmem:[%s1 + $0x27e0] sm:$0xff]
    %v1305 = vld [vmem:[%s1 + $0x27e8] sm:$0xff]
    %v1306 = vld [vmem:[%s1 + $0x27f0] sm:$0xff]
    %v1307 = vld [vmem:[%s1 + $0x27f8] sm:$0xff]
    %v1308 = vld [vmem:[%s1 + $0x2800] sm:$0xff]
    %v1309 = vld [vmem:[%s1 + $0x2808] sm:$0xff]
    %v1310 = vld [vmem:[%s1 + $0x2810] sm:$0xff]
    %v1311 = vld [vmem:[%s1 + $0x2818] sm:$0xff]
    %v1312 = vld [vmem:[%s1 + $0x2820] sm:$0xff]
    %v1313 = vld [vmem:[%s1 + $0x2828] sm:$0xff]
    %v1314 = vld [vmem:[%s1 + $0x2830] sm:$0xff]
    %v1315 = vld [vmem:[%s1 + $0x2838] sm:$0xff]
    %v1316 = vld [vmem:[%s1 + $0x2840] sm:$0xff]
    %v1317 = vld [vmem:[%s1 + $0x2848] sm:$0xff]
    %v1318 = vld [vmem:[%s1 + $0x2850] sm:$0xff]
    %v1319 = vld [vmem:[%s1 + $0x2858] sm:$0xff]
    %v1320 = vld [vmem:[%s1 + $0x2860] sm:$0xff]
    %v1321 = vld [vmem:[%s1 + $0x2868] sm:$0xff]
    %v1322 = vld [vmem:[%s1 + $0x2870] sm:$0xff]
    %v1323 = vld [vmem:[%s1 + $0x2878] sm:$0xff]
    %v1324 = vld [vmem:[%s1 + $0x2880] sm:$0xff]
    %v1325 = vld [vmem:[%s1 + $0x2888] sm:$0xff]
    %v1326 = vld [vmem:[%s1 + $0x2890] sm:$0xff]
    %v1327 = vld [vmem:[%s1 + $0x2898] sm:$0xff]
    %v1328 = vld [vmem:[%s1 + $0x28a0] sm:$0xff]
    %v1329 = vld [vmem:[%s1 + $0x28a8] sm:$0xff]
    %v1330 = vld [vmem:[%s1 + $0x28b0] sm:$0xff]
    %v1331 = vld [vmem:[%s1 + $0x28b8] sm:$0xff]
    %v1332 = vld [vmem:[%s1 + $0x28c0] sm:$0xff]
    %v1333 = vld [vmem:[%s1 + $0x28c8] sm:$0xff]
    %v1334 = vld [vmem:[%s1 + $0x28d0] sm:$0xff]
    %v1335 = vld [vmem:[%s1 + $0x28d8] sm:$0xff]
    %v1336 = vld [vmem:[%s1 + $0x28e0] sm:$0xff]
    %v1337 = vld [vmem:[%s1 + $0x28e8] sm:$0xff]
    %v1338 = vld [vmem:[%s1 + $0x28f0] sm:$0xff]
    %v1339 = vld [vmem:[%s1 + $0x28f8] sm:$0xff]
    %v1340 = vld [vmem:[%s1 + $0x2900] sm:$0xff]
    %v1341 = vld [vmem:[%s1 + $0x2908] sm:$0xff]
    %v1342 = vld [vmem:[%s1 + $0x2910] sm:$0xff]
    %v1343 = vld [vmem:[%s1 + $0x2918] sm:$0xff]
    %v1344 = vld [vmem:[%s1 + $0x2920] sm:$0xff]
    %v1345 = vld [vmem:[%s1 + $0x2928] sm:$0xff]
    %v1346 = vld [vmem:[%s1 + $0x2930] sm:$0xff]
    %v1347 = vld [vmem:[%s1 + $0x2938] sm:$0xff]
    %v1348 = vld [vmem:[%s1 + $0x2940] sm:$0xff]
    %v1349 = vld [vmem:[%s1 + $0x2948] sm:$0xff]
    %v1350 = vld [vmem:[%s1 + $0x2950] sm:$0xff]
    %v1351 = vld [vmem:[%s1 + $0x2958] sm:$0xff]
    %v1352 = vld [vmem:[%s1 + $0x2960] sm:$0xff]
    %v1353 = vld [vmem:[%s1 + $0x2968] sm:$0xff]
    %v1354 = vld [vmem:[%s1 + $0x2970] sm:$0xff]
    %v1355 = vld [vmem:[%s1 + $0x2978] sm:$0xff]
    %v1356 = vld [vmem:[%s1 + $0x2980] sm:$0xff]
    %v1357 = vld [vmem:[%s1 + $0x2988] sm:$0xff]
    %v1358 = vld [vmem:[%s1 + $0x2990] sm:$0xff]
    %v1359 = vld [vmem:[%s1 + $0x2998] sm:$0xff]
    %v1360 = vld [vmem:[%s1 + $0x29a0] sm:$0xff]
    %v1361 = vld [vmem:[%s1 + $0x29a8] sm:$0xff]
    %v1362 = vld [vmem:[%s1 + $0x29b0] sm:$0xff]
    %v1363 = vld [vmem:[%s1 + $0x29b8] sm:$0xff]
    %v1364 = vld [vmem:[%s1 + $0x29c0] sm:$0xff]
    %v1365 = vld [vmem:[%s1 + $0x29c8] sm:$0xff]
    %v1366 = vld [vmem:[%s1 + $0x29d0] sm:$0xff]
    %v1367 = vld [vmem:[%s1 + $0x29d8] sm:$0xff]
    %v1368 = vld [vmem:[%s1 + $0x29e0] sm:$0xff]
    %v1369 = vld [vmem:[%s1 + $0x29e8] sm:$0xff]
    %v1370 = vld [vmem:[%s1 + $0x29f0] sm:$0xff]
    %v1371 = vld [vmem:[%s1 + $0x29f8] sm:$0xff]
    %v1372 = vld [vmem:[%s1 + $0x2a00] sm:$0xff]
    %v1373 = vld [vmem:[%s1 + $0x2a08] sm:$0xff]
    %v1374 = vld [vmem:[%s1 + $0x2a10] sm:$0xff]
    %v1375 = vld [vmem:[%s1 + $0x2a18] sm:$0xff]
    %v1376 = vld [vmem:[%s1 + $0x2a20] sm:$0xff]
    %v1377 = vld [vmem:[%s1 + $0x2a28] sm:$0xff]
    %v1378 = vld [vmem:[%s1 + $0x2a30] sm:$0xff]
    %v1379 = vld [vmem:[%s1 + $0x2a38] sm:$0xff]
    %v1380 = vld [vmem:[%s1 + $0x2a40] sm:$0xff]
    %v1381 = vld [vmem:[%s1 + $0x2a48] sm:$0xff]
    %v1382 = vld [vmem:[%s1 + $0x2a50] sm:$0xff]
    %v1383 = vld [vmem:[%s1 + $0x2a58] sm:$0xff]
    %v1384 = vld [vmem:[%s1 + $0x2a60] sm:$0xff]
    %v1385 = vld [vmem:[%s1 + $0x2a68] sm:$0xff]
    %v1386 = vld [vmem:[%s1 + $0x2a70] sm:$0xff]
    %v1387 = vld [vmem:[%s1 + $0x2a78] sm:$0xff]
    %v1388 = vld [vmem:[%s1 + $0x2a80] sm:$0xff]
    %v1389 = vld [vmem:[%s1 + $0x2a88] sm:$0xff]
    %v1390 = vld [vmem:[%s1 + $0x2a90] sm:$0xff]
    %v1391 = vld [vmem:[%s1 + $0x2a98] sm:$0xff]
    %v1392 = vld [vmem:[%s1 + $0x2aa0] sm:$0xff]
    %v1393 = vld [vmem:[%s1 + $0x2aa8] sm:$0xff]
    %v1394 = vld [vmem:[%s1 + $0x2ab0] sm:$0xff]
    %v1395 = vld [vmem:[%s1 + $0x2ab8] sm:$0xff]
    %v1396 = vld [vmem:[%s1 + $0x2ac0] sm:$0xff]
    %v1397 = vld [vmem:[%s1 + $0x2ac8] sm:$0xff]
    %v1398 = vld [vmem:[%s1 + $0x2ad0] sm:$0xff]
    %v1399 = vld [vmem:[%s1 + $0x2ad8] sm:$0xff]
    %v1400 = vld [vmem:[%s1 + $0x2ae0] sm:$0xff]
    %v1401 = vld [vmem:[%s1 + $0x2ae8] sm:$0xff]
    %v1402 = vld [vmem:[%s1 + $0x2af0] sm:$0xff]
    %v1403 = vld [vmem:[%s1 + $0x2af8] sm:$0xff]
    %v1404 = vld [vmem:[%s1 + $0x2b00] sm:$0xff]
    %v1405 = vld [vmem:[%s1 + $0x2b08] sm:$0xff]
    %v1406 = vld [vmem:[%s1 + $0x2b10] sm:$0xff]
    %v1407 = vld [vmem:[%s1 + $0x2b18] sm:$0xff]
    %v1408 = vld [vmem:[%s1 + $0x2b20] sm:$0xff]
    %v1409 = vld [vmem:[%s1 + $0x2b28] sm:$0xff]
    %v1410 = vld [vmem:[%s1 + $0x2b30] sm:$0xff]
    %v1411 = vld [vmem:[%s1 + $0x2b38] sm:$0xff]
    %v1412 = vld [vmem:[%s1 + $0x2b40] sm:$0xff]
    %v1413 = vld [vmem:[%s1 + $0x2b48] sm:$0xff]
    %v1414 = vld [vmem:[%s1 + $0x2b50] sm:$0xff]
    %v1415 = vld [vmem:[%s1 + $0x2b58] sm:$0xff]
    %v1416 = vld [vmem:[%s1 + $0x2b60] sm:$0xff]
    %v1417 = vld [vmem:[%s1 + $0x2b68] sm:$0xff]
    %v1418 = vld [vmem:[%s1 + $0x2b70] sm:$0xff]
    %v1419 = vld [vmem:[%s1 + $0x2b78] sm:$0xff]
    %v1420 = vld [vmem:[%s1 + $0x2b80] sm:$0xff]
    %v1421 = vld [vmem:[%s1 + $0x2b88] sm:$0xff]
    %v1422 = vld [vmem:[%s1 + $0x2b90] sm:$0xff]
    %v1423 = vld [vmem:[%s1 + $0x2b98] sm:$0xff]
    %v1424 = vld [vmem:[%s1 + $0x2ba0] sm:$0xff]
    %v1425 = vld [vmem:[%s1 + $0x2ba8] sm:$0xff]
    %v1426 = vld [vmem:[%s1 + $0x2bb0] sm:$0xff]
    %v1427 = vld [vmem:[%s1 + $0x2bb8] sm:$0xff]
    %v1428 = vld [vmem:[%s1 + $0x2bc0] sm:$0xff]
    %v1429 = vld [vmem:[%s1 + $0x2bc8] sm:$0xff]
    %v1430 = vld [vmem:[%s1 + $0x2bd0] sm:$0xff]
    %v1431 = vld [vmem:[%s1 + $0x2bd8] sm:$0xff]
    %v1432 = vld [vmem:[%s1 + $0x2be0] sm:$0xff]
    %v1433 = vld [vmem:[%s1 + $0x2be8] sm:$0xff]
    %v1434 = vld [vmem:[%s1 + $0x2bf0] sm:$0xff]
    %v1435 = vld [vmem:[%s1 + $0x2bf8] sm:$0xff]
    %v1436 = vld [vmem:[%s1 + $0x2c00] sm:$0xff]
    %v1437 = vld [vmem:[%s1 + $0x2c08] sm:$0xff]
    %v1438 = vld [vmem:[%s1 + $0x2c10] sm:$0xff]
    %v1439 = vld [vmem:[%s1 + $0x2c18] sm:$0xff]
    %v1440 = vld [vmem:[%s1 + $0x2c20] sm:$0xff]
    %v1441 = vld [vmem:[%s1 + $0x2c28] sm:$0xff]
    %v1442 = vld [vmem:[%s1 + $0x2c30] sm:$0xff]
    %v1443 = vld [vmem:[%s1 + $0x2c38] sm:$0xff]
    %v1444 = vld [vmem:[%s1 + $0x2c40] sm:$0xff]
    %v1445 = vld [vmem:[%s1 + $0x2c48] sm:$0xff]
    %v1446 = vld [vmem:[%s1 + $0x2c50] sm:$0xff]
    %v1447 = vld [vmem:[%s1 + $0x2c58] sm:$0xff]
    %v1448 = vld [vmem:[%s1 + $0x2c60] sm:$0xff]
    %v1449 = vld [vmem:[%s1 + $0x2c68] sm:$0xff]
    %v1450 = vld [vmem:[%s1 + $0x2c70] sm:$0xff]
    %v1451 = vld [vmem:[%s1 + $0x2c78] sm:$0xff]
    %v1452 = vld [vmem:[%s1 + $0x2c80] sm:$0xff]
    %v1453 = vld [vmem:[%s1 + $0x2c88] sm:$0xff]
    %v1454 = vld [vmem:[%s1 + $0x2c90] sm:$0xff]
    %v1455 = vld [vmem:[%s1 + $0x2c98] sm:$0xff]
    %v1456 = vld [vmem:[%s1 + $0x2ca0] sm:$0xff]
    %v1457 = vld [vmem:[%s1 + $0x2ca8] sm:$0xff]
    %v1458 = vld [vmem:[%s1 + $0x2cb0] sm:$0xff]
    %v1459 = vld [vmem:[%s1 + $0x2cb8] sm:$0xff]
    %v1460 = vld [vmem:[%s1 + $0x2cc0] sm:$0xff]
    %v1461 = vld [vmem:[%s1 + $0x2cc8] sm:$0xff]
    %v1462 = vld [vmem:[%s1 + $0x2cd0] sm:$0xff]
    %v1463 = vld [vmem:[%s1 + $0x2cd8] sm:$0xff]
    %v1464 = vld [vmem:[%s1 + $0x2ce0] sm:$0xff]
    %v1465 = vld [vmem:[%s1 + $0x2ce8] sm:$0xff]
    %v1466 = vld [vmem:[%s1 + $0x2cf0] sm:$0xff]
    %v1467 = vld [vmem:[%s1 + $0x2cf8] sm:$0xff]
    %v1468 = vld [vmem:[%s1 + $0x2d00] sm:$0xff]
    %v1469 = vld [vmem:[%s1 + $0x2d08] sm:$0xff]
    %v1470 = vld [vmem:[%s1 + $0x2d10] sm:$0xff]
    %v1471 = vld [vmem:[%s1 + $0x2d18] sm:$0xff]
    %v1472 = vld [vmem:[%s1 + $0x2d20] sm:$0xff]
    %v1473 = vld [vmem:[%s1 + $0x2d28] sm:$0xff]
    %v1474 = vld [vmem:[%s1 + $0x2d30] sm:$0xff]
    %v1475 = vld [vmem:[%s1 + $0x2d38] sm:$0xff]
    %v1476 = vld [vmem:[%s1 + $0x2d40] sm:$0xff]
    %v1477 = vld [vmem:[%s1 + $0x2d48] sm:$0xff]
    %v1478 = vld [vmem:[%s1 + $0x2d50] sm:$0xff]
    %v1479 = vld [vmem:[%s1 + $0x2d58] sm:$0xff]
    %v1480 = vld [vmem:[%s1 + $0x2d60] sm:$0xff]
    %v1481 = vld [vmem:[%s1 + $0x2d68] sm:$0xff]
    %v1482 = vld [vmem:[%s1 + $0x2d70] sm:$0xff]
    %v1483 = vld [vmem:[%s1 + $0x2d78] sm:$0xff]
    %v1484 = vld [vmem:[%s1 + $0x2d80] sm:$0xff]
    %v1485 = vld [vmem:[%s1 + $0x2d88] sm:$0xff]
    %v1486 = vld [vmem:[%s1 + $0x2d90] sm:$0xff]
    %v1487 = vld [vmem:[%s1 + $0x2d98] sm:$0xff]
    %v1488 = vld [vmem:[%s1 + $0x2da0] sm:$0xff]
    %v1489 = vld [vmem:[%s1 + $0x2da8] sm:$0xff]
    %v1490 = vld [vmem:[%s1 + $0x2db0] sm:$0xff]
    %v1491 = vld [vmem:[%s1 + $0x2db8] sm:$0xff]
    %v1492 = vld [vmem:[%s1 + $0x2dc0] sm:$0xff]
    %v1493 = vld [vmem:[%s1 + $0x2dc8] sm:$0xff]
    %v1494 = vld [vmem:[%s1 + $0x2dd0] sm:$0xff]
    %v1495 = vld [vmem:[%s1 + $0x2dd8] sm:$0xff]
    %v1496 = vld [vmem:[%s1 + $0x2de0] sm:$0xff]
    %v1497 = vld [vmem:[%s1 + $0x2de8] sm:$0xff]
    %v1498 = vld [vmem:[%s1 + $0x2df0] sm:$0xff]
    %v1499 = vld [vmem:[%s1 + $0x2df8] sm:$0xff]
    %v1500 = vld [vmem:[%s1 + $0x2e00] sm:$0xff]
    %v1501 = vld [vmem:[%s1 + $0x2e08] sm:$0xff]
    %v1502 = vld [vmem:[%s1 + $0x2e10] sm:$0xff]
    %v1503 = vld [vmem:[%s1 + $0x2e18] sm:$0xff]
    %v1504 = vld [vmem:[%s1 + $0x2e20] sm:$0xff]
    %v1505 = vld [vmem:[%s1 + $0x2e28] sm:$0xff]
    %v1506 = vld [vmem:[%s1 + $0x2e30] sm:$0xff]
    %v1507 = vld [vmem:[%s1 + $0x2e38] sm:$0xff]
    %v1508 = vld [vmem:[%s1 + $0x2e40] sm:$0xff]
    %v1509 = vld [vmem:[%s1 + $0x2e48] sm:$0xff]
    %v1510 = vld [vmem:[%s1 + $0x2e50] sm:$0xff]
    %v1511 = vld [vmem:[%s1 + $0x2e58] sm:$0xff]
    %v1512 = vld [vmem:[%s1 + $0x2e60] sm:$0xff]
    %v1513 = vld [vmem:[%s1 + $0x2e68] sm:$0xff]
    %v1514 = vld [vmem:[%s1 + $0x2e70] sm:$0xff]
    %v1515 = vld [vmem:[%s1 + $0x2e78] sm:$0xff]
    %v1516 = vld [vmem:[%s1 + $0x2e80] sm:$0xff]
    %v1517 = vld [vmem:[%s1 + $0x2e88] sm:$0xff]
    %v1518 = vld [vmem:[%s1 + $0x2e90] sm:$0xff]
    %v1519 = vld [vmem:[%s1 + $0x2e98] sm:$0xff]
    %v1520 = vld [vmem:[%s1 + $0x2ea0] sm:$0xff]
    %v1521 = vld [vmem:[%s1 + $0x2ea8] sm:$0xff]
    %v1522 = vld [vmem:[%s1 + $0x2eb0] sm:$0xff]
    %v1523 = vld [vmem:[%s1 + $0x2eb8] sm:$0xff]
    %v1524 = vld [vmem:[%s1 + $0x2ec0] sm:$0xff]
    %v1525 = vld [vmem:[%s1 + $0x2ec8] sm:$0xff]
    %v1526 = vld [vmem:[%s1 + $0x2ed0] sm:$0xff]
    %v1527 = vld [vmem:[%s1 + $0x2ed8] sm:$0xff]
    %v1528 = vld [vmem:[%s1 + $0x2ee0] sm:$0xff]
    %v1529 = vld [vmem:[%s1 + $0x2ee8] sm:$0xff]
    %v1530 = vld [vmem:[%s1 + $0x2ef0] sm:$0xff]
    %v1531 = vld [vmem:[%s1 + $0x2ef8] sm:$0xff]
    %v1532 = vld [vmem:[%s1 + $0x2f00] sm:$0xff]
    %v1533 = vld [vmem:[%s1 + $0x2f08] sm:$0xff]
    %v1534 = vld [vmem:[%s1 + $0x2f10] sm:$0xff]
    %v1535 = vld [vmem:[%s1 + $0x2f18] sm:$0xff]
    %v1536 = vld [vmem:[%s1 + $0x2f20] sm:$0xff]
    %v1537 = vld [vmem:[%s1 + $0x2f28] sm:$0xff]
    %v1538 = vld [vmem:[%s1 + $0x2f30] sm:$0xff]
    %v1539 = vld [vmem:[%s1 + $0x2f38] sm:$0xff]
    %v1540 = vld [vmem:[%s1 + $0x2f40] sm:$0xff]
    %v1541 = vld [vmem:[%s1 + $0x2f48] sm:$0xff]
    %v1542 = vld [vmem:[%s1 + $0x2f50] sm:$0xff]
    %v1543 = vld [vmem:[%s1 + $0x2f58] sm:$0xff]
    %v1544 = vld [vmem:[%s1 + $0x2f60] sm:$0xff]
    %v1545 = vld [vmem:[%s1 + $0x2f68] sm:$0xff]
    %v1546 = vld [vmem:[%s1 + $0x2f70] sm:$0xff]
    %v1547 = vld [vmem:[%s1 + $0x2f78] sm:$0xff]
    %v1548 = vld [vmem:[%s1 + $0x2f80] sm:$0xff]
    %v1549 = vld [vmem:[%s1 + $0x2f88] sm:$0xff]
    %v1550 = vld [vmem:[%s1 + $0x2f90] sm:$0xff]
    %v1551 = vld [vmem:[%s1 + $0x2f98] sm:$0xff]
    %v1552 = vld [vmem:[%s1 + $0x2fa0] sm:$0xff]
    %v1553 = vld [vmem:[%s1 + $0x2fa8] sm:$0xff]
    %v1554 = vld [vmem:[%s1 + $0x2fb0] sm:$0xff]
    %v1555 = vld [vmem:[%s1 + $0x2fb8] sm:$0xff]
    %v1556 = vld [vmem:[%s1 + $0x2fc0] sm:$0xff]
    %v1557 = vld [vmem:[%s1 + $0x2fc8] sm:$0xff]
    %v1558 = vld [vmem:[%s1 + $0x2fd0] sm:$0xff]
    %v1559 = vld [vmem:[%s1 + $0x2fd8] sm:$0xff]
    %v1560 = vld [vmem:[%s1 + $0x2fe0] sm:$0xff]
    %v1561 = vld [vmem:[%s1 + $0x2fe8] sm:$0xff]
    %v1562 = vld [vmem:[%s1 + $0x2ff0] sm:$0xff]
    %v1563 = vld [vmem:[%s1 + $0x2ff8] sm:$0xff]
    %v1564 = vld [vmem:[%s1 + $0x3000] sm:$0xff]
    %v1565 = vld [vmem:[%s1 + $0x3008] sm:$0xff]
    %v1566 = vld [vmem:[%s1 + $0x3010] sm:$0xff]
    %v1567 = vld [vmem:[%s1 + $0x3018] sm:$0xff]
    %v1568 = vld [vmem:[%s1 + $0x3020] sm:$0xff]
    %v1569 = vld [vmem:[%s1 + $0x3028] sm:$0xff]
    %v1570 = vld [vmem:[%s1 + $0x3030] sm:$0xff]
    %v1571 = vld [vmem:[%s1 + $0x3038] sm:$0xff]
    %v1572 = vld [vmem:[%s1 + $0x3040] sm:$0xff]
    %v1573 = vld [vmem:[%s1 + $0x3048] sm:$0xff]
    %v1574 = vld [vmem:[%s1 + $0x3050] sm:$0xff]
    %v1575 = vld [vmem:[%s1 + $0x3058] sm:$0xff]
    %v1576 = vld [vmem:[%s1 + $0x3060] sm:$0xff]
    %v1577 = vld [vmem:[%s1 + $0x3068] sm:$0xff]
    %v1578 = vld [vmem:[%s1 + $0x3070] sm:$0xff]
    %v1579 = vld [vmem:[%s1 + $0x3078] sm:$0xff]
    %v1580 = vld [vmem:[%s1 + $0x3080] sm:$0xff]
    %v1581 = vld [vmem:[%s1 + $0x3088] sm:$0xff]
    %v1582 = vld [vmem:[%s1 + $0x3090] sm:$0xff]
    %v1583 = vld [vmem:[%s1 + $0x3098] sm:$0xff]
    %v1584 = vld [vmem:[%s1 + $0x30a0] sm:$0xff]
    %v1585 = vld [vmem:[%s1 + $0x30a8] sm:$0xff]
    %v1586 = vld [vmem:[%s1 + $0x30b0] sm:$0xff]
    %v1587 = vld [vmem:[%s1 + $0x30b8] sm:$0xff]
    %v1588 = vld [vmem:[%s1 + $0x30c0] sm:$0xff]
    %v1589 = vld [vmem:[%s1 + $0x30c8] sm:$0xff]
    %v1590 = vld [vmem:[%s1 + $0x30d0] sm:$0xff]
    %v1591 = vld [vmem:[%s1 + $0x30d8] sm:$0xff]
    %v1592 = vld [vmem:[%s1 + $0x30e0] sm:$0xff]
    %v1593 = vld [vmem:[%s1 + $0x30e8] sm:$0xff]
    %v1594 = vld [vmem:[%s1 + $0x30f0] sm:$0xff]
    %v1595 = vld [vmem:[%s1 + $0x30f8] sm:$0xff]
    %v1596 = vld [vmem:[%s1 + $0x3100] sm:$0xff]
    %v1597 = vld [vmem:[%s1 + $0x3108] sm:$0xff]
    %v1598 = vld [vmem:[%s1 + $0x3110] sm:$0xff]
    %v1599 = vld [vmem:[%s1 + $0x3118] sm:$0xff]
    %v1600 = vld [vmem:[%s1 + $0x3120] sm:$0xff]
    %v1601 = vld [vmem:[%s1 + $0x3128] sm:$0xff]
    %v1602 = vld [vmem:[%s1 + $0x3130] sm:$0xff]
    %v1603 = vld [vmem:[%s1 + $0x3138] sm:$0xff]
    %v1604 = vld [vmem:[%s1 + $0x3140] sm:$0xff]
    %v1605 = vld [vmem:[%s1 + $0x3148] sm:$0xff]
    %v1606 = vld [vmem:[%s1 + $0x3150] sm:$0xff]
    %v1607 = vld [vmem:[%s1 + $0x3158] sm:$0xff]
    %v1608 = vld [vmem:[%s1 + $0x3160] sm:$0xff]
    %v1609 = vld [vmem:[%s1 + $0x3168] sm:$0xff]
    %v1610 = vld [vmem:[%s1 + $0x3170] sm:$0xff]
    %v1611 = vld [vmem:[%s1 + $0x3178] sm:$0xff]
    %v1612 = vld [vmem:[%s1 + $0x3180] sm:$0xff]
    %v1613 = vld [vmem:[%s1 + $0x3188] sm:$0xff]
    %v1614 = vld [vmem:[%s1 + $0x3190] sm:$0xff]
    %v1615 = vld [vmem:[%s1 + $0x3198] sm:$0xff]
    %v1616 = vld [vmem:[%s1 + $0x31a0] sm:$0xff]
    %v1617 = vld [vmem:[%s1 + $0x31a8] sm:$0xff]
    %v1618 = vld [vmem:[%s1 + $0x31b0] sm:$0xff]
    %v1619 = vld [vmem:[%s1 + $0x31b8] sm:$0xff]
    %v1620 = vld [vmem:[%s1 + $0x31c0] sm:$0xff]
    %v1621 = vld [vmem:[%s1 + $0x31c8] sm:$0xff]
    %v1622 = vld [vmem:[%s1 + $0x31d0] sm:$0xff]
    %v1623 = vld [vmem:[%s1 + $0x31d8] sm:$0xff]
    %v1624 = vld [vmem:[%s1 + $0x31e0] sm:$0xff]
    %v1625 = vld [vmem:[%s1 + $0x31e8] sm:$0xff]
    %v1626 = vld [vmem:[%s1 + $0x31f0] sm:$0xff]
    %v1627 = vld [vmem:[%s1 + $0x31f8] sm:$0xff]
    %v1628 = vld [vmem:[%s1 + $0x3200] sm:$0xff]
    %v1629 = vld [vmem:[%s1 + $0x3208] sm:$0xff]
    %v1630 = vld [vmem:[%s1 + $0x3210] sm:$0xff]
    %v1631 = vld [vmem:[%s1 + $0x3218] sm:$0xff]
    %v1632 = vld [vmem:[%s1 + $0x3220] sm:$0xff]
    %v1633 = vld [vmem:[%s1 + $0x3228] sm:$0xff]
    %v1634 = vld [vmem:[%s1 + $0x3230] sm:$0xff]
    %v1635 = vld [vmem:[%s1 + $0x3238] sm:$0xff]
    %v1636 = vld [vmem:[%s1 + $0x3240] sm:$0xff]
    %v1637 = vld [vmem:[%s1 + $0x3248] sm:$0xff]
    %v1638 = vld [vmem:[%s1 + $0x3250] sm:$0xff]
    %v1639 = vld [vmem:[%s1 + $0x3258] sm:$0xff]
    %v1640 = vld [vmem:[%s1 + $0x3260] sm:$0xff]
    %v1641 = vld [vmem:[%s1 + $0x3268] sm:$0xff]
    %v1642 = vld [vmem:[%s1 + $0x3270] sm:$0xff]
    %v1643 = vld [vmem:[%s1 + $0x3278] sm:$0xff]
    %v1644 = vld [vmem:[%s1 + $0x3280] sm:$0xff]
    %v1645 = vld [vmem:[%s1 + $0x3288] sm:$0xff]
    %v1646 = vld [vmem:[%s1 + $0x3290] sm:$0xff]
    %v1647 = vld [vmem:[%s1 + $0x3298] sm:$0xff]
    %v1648 = vld [vmem:[%s1 + $0x32a0] sm:$0xff]
    %v1649 = vld [vmem:[%s1 + $0x32a8] sm:$0xff]
    %v1650 = vld [vmem:[%s1 + $0x32b0] sm:$0xff]
    %v1651 = vld [vmem:[%s1 + $0x32b8] sm:$0xff]
    %v1652 = vld [vmem:[%s1 + $0x32c0] sm:$0xff]
    %v1653 = vld [vmem:[%s1 + $0x32c8] sm:$0xff]
    %v1654 = vld [vmem:[%s1 + $0x32d0] sm:$0xff]
    %v1655 = vld [vmem:[%s1 + $0x32d8] sm:$0xff]
    %v1656 = vld [vmem:[%s1 + $0x32e0] sm:$0xff]
    %v1657 = vld [vmem:[%s1 + $0x32e8] sm:$0xff]
    %v1658 = vld [vmem:[%s1 + $0x32f0] sm:$0xff]
    %v1659 = vld [vmem:[%s1 + $0x32f8] sm:$0xff]
    %v1660 = vld [vmem:[%s1 + $0x3300] sm:$0xff]
    %v1661 = vld [vmem:[%s1 + $0x3308] sm:$0xff]
    %v1662 = vld [vmem:[%s1 + $0x3310] sm:$0xff]
    %v1663 = vld [vmem:[%s1 + $0x3318] sm:$0xff]
    %v1664 = vld [vmem:[%s1 + $0x3320] sm:$0xff]
    %v1665 = vld [vmem:[%s1 + $0x3328] sm:$0xff]
    %v1666 = vld [vmem:[%s1 + $0x3330] sm:$0xff]
    %v1667 = vld [vmem:[%s1 + $0x3338] sm:$0xff]
    %v1668 = vld [vmem:[%s1 + $0x3340] sm:$0xff]
    %v1669 = vld [vmem:[%s1 + $0x3348] sm:$0xff]
    %v1670 = vld [vmem:[%s1 + $0x3350] sm:$0xff]
    %v1671 = vld [vmem:[%s1 + $0x3358] sm:$0xff]
    %v1672 = vld [vmem:[%s1 + $0x3360] sm:$0xff]
    %v1673 = vld [vmem:[%s1 + $0x3368] sm:$0xff]
    %v1674 = vld [vmem:[%s1 + $0x3370] sm:$0xff]
    %v1675 = vld [vmem:[%s1 + $0x3378] sm:$0xff]
    %v1676 = vld [vmem:[%s1 + $0x3380] sm:$0xff]
    %v1677 = vld [vmem:[%s1 + $0x3388] sm:$0xff]
    %v1678 = vld [vmem:[%s1 + $0x3390] sm:$0xff]
    %v1679 = vld [vmem:[%s1 + $0x3398] sm:$0xff]
    %v1680 = vld [vmem:[%s1 + $0x33a0] sm:$0xff]
    %v1681 = vld [vmem:[%s1 + $0x33a8] sm:$0xff]
    %v1682 = vld [vmem:[%s1 + $0x33b0] sm:$0xff]
    %v1683 = vld [vmem:[%s1 + $0x33b8] sm:$0xff]
    %v1684 = vld [vmem:[%s1 + $0x33c0] sm:$0xff]
    %v1685 = vld [vmem:[%s1 + $0x33c8] sm:$0xff]
    %v1686 = vld [vmem:[%s1 + $0x33d0] sm:$0xff]
    %v1687 = vld [vmem:[%s1 + $0x33d8] sm:$0xff]
    %v1688 = vld [vmem:[%s1 + $0x33e0] sm:$0xff]
    %v1689 = vld [vmem:[%s1 + $0x33e8] sm:$0xff]
    %v1690 = vld [vmem:[%s1 + $0x33f0] sm:$0xff]
    %v1691 = vld [vmem:[%s1 + $0x33f8] sm:$0xff]
    %v1692 = vld [vmem:[%s1 + $0x3400] sm:$0xff]
    %v1693 = vld [vmem:[%s1 + $0x3408] sm:$0xff]
    %v1694 = vld [vmem:[%s1 + $0x3410] sm:$0xff]
    %v1695 = vld [vmem:[%s1 + $0x3418] sm:$0xff]
    %v1696 = vld [vmem:[%s1 + $0x3420] sm:$0xff]
    %v1697 = vld [vmem:[%s1 + $0x3428] sm:$0xff]
    %v1698 = vld [vmem:[%s1 + $0x3430] sm:$0xff]
    %v1699 = vld [vmem:[%s1 + $0x3438] sm:$0xff]
    %v1700 = vld [vmem:[%s1 + $0x3440] sm:$0xff]
    %v1701 = vld [vmem:[%s1 + $0x3448] sm:$0xff]
    %v1702 = vld [vmem:[%s1 + $0x3450] sm:$0xff]
    %v1703 = vld [vmem:[%s1 + $0x3458] sm:$0xff]
    %v1704 = vld [vmem:[%s1 + $0x3460] sm:$0xff]
    %v1705 = vld [vmem:[%s1 + $0x3468] sm:$0xff]
    %v1706 = vld [vmem:[%s1 + $0x3470] sm:$0xff]
    %v1707 = vld [vmem:[%s1 + $0x3478] sm:$0xff]
    %v1708 = vld [vmem:[%s1 + $0x3480] sm:$0xff]
    %v1709 = vld [vmem:[%s1 + $0x3488] sm:$0xff]
    %v1710 = vld [vmem:[%s1 + $0x3490] sm:$0xff]
    %v1711 = vld [vmem:[%s1 + $0x3498] sm:$0xff]
    %v1712 = vld [vmem:[%s1 + $0x34a0] sm:$0xff]
    %v1713 = vld [vmem:[%s1 + $0x34a8] sm:$0xff]
    %v1714 = vld [vmem:[%s1 + $0x34b0] sm:$0xff]
    %v1715 = vld [vmem:[%s1 + $0x34b8] sm:$0xff]
    %v1716 = vld [vmem:[%s1 + $0x34c0] sm:$0xff]
    %v1717 = vld [vmem:[%s1 + $0x34c8] sm:$0xff]
    %v1718 = vld [vmem:[%s1 + $0x34d0] sm:$0xff]
    %v1719 = vld [vmem:[%s1 + $0x34d8] sm:$0xff]
    %v1720 = vld [vmem:[%s1 + $0x34e0] sm:$0xff]
    %v1721 = vld [vmem:[%s1 + $0x34e8] sm:$0xff]
    %v1722 = vld [vmem:[%s1 + $0x34f0] sm:$0xff]
    %v1723 = vld [vmem:[%s1 + $0x34f8] sm:$0xff]
    %v1724 = vld [vmem:[%s1 + $0x3500] sm:$0xff]
    %v1725 = vld [vmem:[%s1 + $0x3508] sm:$0xff]
    %v1726 = vld [vmem:[%s1 + $0x3510] sm:$0xff]
    %v1727 = vld [vmem:[%s1 + $0x3518] sm:$0xff]
    %v1728 = vld [vmem:[%s1 + $0x3520] sm:$0xff]
    %v1729 = vld [vmem:[%s1 + $0x3528] sm:$0xff]
    %v1730 = vld [vmem:[%s1 + $0x3530] sm:$0xff]
    %v1731 = vld [vmem:[%s1 + $0x3538] sm:$0xff]
    %v1732 = vld [vmem:[%s1 + $0x3540] sm:$0xff]
    %v1733 = vld [vmem:[%s1 + $0x3548] sm:$0xff]
    %v1734 = vld [vmem:[%s1 + $0x3550] sm:$0xff]
    %v1735 = vld [vmem:[%s1 + $0x3558] sm:$0xff]
    %v1736 = vld [vmem:[%s1 + $0x3560] sm:$0xff]
    %v1737 = vld [vmem:[%s1 + $0x3568] sm:$0xff]
    %v1738 = vld [vmem:[%s1 + $0x3570] sm:$0xff]
    %v1739 = vld [vmem:[%s1 + $0x3578] sm:$0xff]
    %v1740 = vld [vmem:[%s1 + $0x3580] sm:$0xff]
    %v1741 = vld [vmem:[%s1 + $0x3588] sm:$0xff]
    %v1742 = vld [vmem:[%s1 + $0x3590] sm:$0xff]
    %v1743 = vld [vmem:[%s1 + $0x3598] sm:$0xff]
    %v1744 = vld [vmem:[%s1 + $0x35a0] sm:$0xff]
    %v1745 = vld [vmem:[%s1 + $0x35a8] sm:$0xff]
    %v1746 = vld [vmem:[%s1 + $0x35b0] sm:$0xff]
    %v1747 = vld [vmem:[%s1 + $0x35b8] sm:$0xff]
    %v1748 = vld [vmem:[%s1 + $0x35c0] sm:$0xff]
    %v1749 = vld [vmem:[%s1 + $0x35c8] sm:$0xff]
    %v1750 = vld [vmem:[%s1 + $0x35d0] sm:$0xff]
    %v1751 = vld [vmem:[%s1 + $0x35d8] sm:$0xff]
    %v1752 = vld [vmem:[%s1 + $0x35e0] sm:$0xff]
    %v1753 = vld [vmem:[%s1 + $0x35e8] sm:$0xff]
    %v1754 = vld [vmem:[%s1 + $0x35f0] sm:$0xff]
    %v1755 = vld [vmem:[%s1 + $0x35f8] sm:$0xff]
    %v1756 = vld [vmem:[%s1 + $0x3600] sm:$0xff]
    %v1757 = vld [vmem:[%s1 + $0x3608] sm:$0xff]
    %v1758 = vld [vmem:[%s1 + $0x3610] sm:$0xff]
    %v1759 = vld [vmem:[%s1 + $0x3618] sm:$0xff]
    %v1760 = vld [vmem:[%s1 + $0x3620] sm:$0xff]
    %v1761 = vld [vmem:[%s1 + $0x3628] sm:$0xff]
    %v1762 = vld [vmem:[%s1 + $0x3630] sm:$0xff]
    %v1763 = vld [vmem:[%s1 + $0x3638] sm:$0xff]
    %v1764 = vld [vmem:[%s1 + $0x3640] sm:$0xff]
    %v1765 = vld [vmem:[%s1 + $0x3648] sm:$0xff]
    %v1766 = vld [vmem:[%s1 + $0x3650] sm:$0xff]
    %v1767 = vld [vmem:[%s1 + $0x3658] sm:$0xff]
    %v1768 = vld [vmem:[%s1 + $0x3660] sm:$0xff]
    %v1769 = vld [vmem:[%s1 + $0x3668] sm:$0xff]
    %v1770 = vld [vmem:[%s1 + $0x3670] sm:$0xff]
    %v1771 = vld [vmem:[%s1 + $0x3678] sm:$0xff]
    %v1772 = vld [vmem:[%s1 + $0x3680] sm:$0xff]
    %v1773 = vld [vmem:[%s1 + $0x3688] sm:$0xff]
    %v1774 = vld [vmem:[%s1 + $0x3690] sm:$0xff]
    %v1775 = vld [vmem:[%s1 + $0x3698] sm:$0xff]
    %v1776 = vld [vmem:[%s1 + $0x36a0] sm:$0xff]
    %v1777 = vld [vmem:[%s1 + $0x36a8] sm:$0xff]
    %v1778 = vld [vmem:[%s1 + $0x36b0] sm:$0xff]
    %v1779 = vld [vmem:[%s1 + $0x36b8] sm:$0xff]
    %v1780 = vld [vmem:[%s1 + $0x36c0] sm:$0xff]
    %v1781 = vld [vmem:[%s1 + $0x36c8] sm:$0xff]
    %v1782 = vld [vmem:[%s1 + $0x36d0] sm:$0xff]
    %v1783 = vld [vmem:[%s1 + $0x36d8] sm:$0xff]
    %v1784 = vld [vmem:[%s1 + $0x36e0] sm:$0xff]
    %v1785 = vld [vmem:[%s1 + $0x36e8] sm:$0xff]
    %v1786 = vld [vmem:[%s1 + $0x36f0] sm:$0xff]
    %v1787 = vld [vmem:[%s1 + $0x36f8] sm:$0xff]
    %v1788 = vld [vmem:[%s1 + $0x3700] sm:$0xff]
    %v1789 = vld [vmem:[%s1 + $0x3708] sm:$0xff]
    %v1790 = vld [vmem:[%s1 + $0x3710] sm:$0xff]
    %v1791 = vld [vmem:[%s1 + $0x3718] sm:$0xff]
    %v1792 = vld [vmem:[%s1 + $0x3720] sm:$0xff]
    %v1793 = vld [vmem:[%s1 + $0x3728] sm:$0xff]
    %v1794 = vld [vmem:[%s1 + $0x3730] sm:$0xff]
    %v1795 = vld [vmem:[%s1 + $0x3738] sm:$0xff]
    %v1796 = vld [vmem:[%s1 + $0x3740] sm:$0xff]
    %v1797 = vld [vmem:[%s1 + $0x3748] sm:$0xff]
    %v1798 = vld [vmem:[%s1 + $0x3750] sm:$0xff]
    %v1799 = vld [vmem:[%s1 + $0x3758] sm:$0xff]
    %v1800 = vld [vmem:[%s1 + $0x3760] sm:$0xff]
    %v1801 = vld [vmem:[%s1 + $0x3768] sm:$0xff]
    %v1802 = vld [vmem:[%s1 + $0x3770] sm:$0xff]
    %v1803 = vld [vmem:[%s1 + $0x3778] sm:$0xff]
    %v1804 = vld [vmem:[%s1 + $0x3780] sm:$0xff]
    %v1805 = vld [vmem:[%s1 + $0x3788] sm:$0xff]
    %v1806 = vld [vmem:[%s1 + $0x3790] sm:$0xff]
    %v1807 = vld [vmem:[%s1 + $0x3798] sm:$0xff]
    %v1808 = vld [vmem:[%s1 + $0x37a0] sm:$0xff]
    %v1809 = vld [vmem:[%s1 + $0x37a8] sm:$0xff]
    %v1810 = vld [vmem:[%s1 + $0x37b0] sm:$0xff]
    %v1811 = vld [vmem:[%s1 + $0x37b8] sm:$0xff]
    %v1812 = vld [vmem:[%s1 + $0x37c0] sm:$0xff]
    %v1813 = vld [vmem:[%s1 + $0x37c8] sm:$0xff]
    %v1814 = vld [vmem:[%s1 + $0x37d0] sm:$0xff]
    %v1815 = vld [vmem:[%s1 + $0x37d8] sm:$0xff]
    %v1816 = vld [vmem:[%s1 + $0x37e0] sm:$0xff]
    %v1817 = vld [vmem:[%s1 + $0x37e8] sm:$0xff]
    %v1818 = vld [vmem:[%s1 + $0x37f0] sm:$0xff]
    %v1819 = vld [vmem:[%s1 + $0x37f8] sm:$0xff]
    %v1820 = vld [vmem:[%s1 + $0x3800] sm:$0xff]
    %v1821 = vld [vmem:[%s1 + $0x3808] sm:$0xff]
    %v1822 = vld [vmem:[%s1 + $0x3810] sm:$0xff]
    %v1823 = vld [vmem:[%s1 + $0x3818] sm:$0xff]
    %v1824 = vld [vmem:[%s1 + $0x3820] sm:$0xff]
    %v1825 = vld [vmem:[%s1 + $0x3828] sm:$0xff]
    %v1826 = vld [vmem:[%s1 + $0x3830] sm:$0xff]
    %v1827 = vld [vmem:[%s1 + $0x3838] sm:$0xff]
    %v1828 = vld [vmem:[%s1 + $0x3840] sm:$0xff]
    %v1829 = vld [vmem:[%s1 + $0x3848] sm:$0xff]
    %v1830 = vld [vmem:[%s1 + $0x3850] sm:$0xff]
    %v1831 = vld [vmem:[%s1 + $0x3858] sm:$0xff]
    %v1832 = vld [vmem:[%s1 + $0x3860] sm:$0xff]
    %v1833 = vld [vmem:[%s1 + $0x3868] sm:$0xff]
    %v1834 = vld [vmem:[%s1 + $0x3870] sm:$0xff]
    %v1835 = vld [vmem:[%s1 + $0x3878] sm:$0xff]
    %v1836 = vld [vmem:[%s1 + $0x3880] sm:$0xff]
    %v1837 = vld [vmem:[%s1 + $0x3888] sm:$0xff]
    %v1838 = vld [vmem:[%s1 + $0x3890] sm:$0xff]
    %v1839 = vld [vmem:[%s1 + $0x3898] sm:$0xff]
    %v1840 = vld [vmem:[%s1 + $0x38a0] sm:$0xff]
    %v1841 = vld [vmem:[%s1 + $0x38a8] sm:$0xff]
    %v1842 = vld [vmem:[%s1 + $0x38b0] sm:$0xff]
    %v1843 = vld [vmem:[%s1 + $0x38b8] sm:$0xff]
    %v1844 = vld [vmem:[%s1 + $0x38c0] sm:$0xff]
    %v1845 = vld [vmem:[%s1 + $0x38c8] sm:$0xff]
    %v1846 = vld [vmem:[%s1 + $0x38d0] sm:$0xff]
    %v1847 = vld [vmem:[%s1 + $0x38d8] sm:$0xff]
    %v1848 = vld [vmem:[%s1 + $0x38e0] sm:$0xff]
    %v1849 = vld [vmem:[%s1 + $0x38e8] sm:$0xff]
    %v1850 = vld [vmem:[%s1 + $0x38f0] sm:$0xff]
    %v1851 = vld [vmem:[%s1 + $0x38f8] sm:$0xff]
    %v1852 = vld [vmem:[%s1 + $0x3900] sm:$0xff]
    %v1853 = vld [vmem:[%s1 + $0x3908] sm:$0xff]
    %v1854 = vld [vmem:[%s1 + $0x3910] sm:$0xff]
    %v1855 = vld [vmem:[%s1 + $0x3918] sm:$0xff]
    %v1856 = vld [vmem:[%s1 + $0x3920] sm:$0xff]
    %v1857 = vld [vmem:[%s1 + $0x3928] sm:$0xff]
    %v1858 = vld [vmem:[%s1 + $0x3930] sm:$0xff]
    %v1859 = vld [vmem:[%s1 + $0x3938] sm:$0xff]
    %v1860 = vld [vmem:[%s1 + $0x3940] sm:$0xff]
    %v1861 = vld [vmem:[%s1 + $0x3948] sm:$0xff]
    %v1862 = vld [vmem:[%s1 + $0x3950] sm:$0xff]
    %v1863 = vld [vmem:[%s1 + $0x3958] sm:$0xff]
    %v1864 = vld [vmem:[%s1 + $0x3960] sm:$0xff]
    %v1865 = vld [vmem:[%s1 + $0x3968] sm:$0xff]
    %v1866 = vld [vmem:[%s1 + $0x3970] sm:$0xff]
    %v1867 = vld [vmem:[%s1 + $0x3978] sm:$0xff]
    %v1868 = vld [vmem:[%s1 + $0x3980] sm:$0xff]
    %v1869 = vld [vmem:[%s1 + $0x3988] sm:$0xff]
    %v1870 = vld [vmem:[%s1 + $0x3990] sm:$0xff]
    %v1871 = vld [vmem:[%s1 + $0x3998] sm:$0xff]
    %v1872 = vld [vmem:[%s1 + $0x39a0] sm:$0xff]
    %v1873 = vld [vmem:[%s1 + $0x39a8] sm:$0xff]
    %v1874 = vld [vmem:[%s1 + $0x39b0] sm:$0xff]
    %v1875 = vld [vmem:[%s1 + $0x39b8] sm:$0xff]
    %v1876 = vld [vmem:[%s1 + $0x39c0] sm:$0xff]
    %v1877 = vld [vmem:[%s1 + $0x39c8] sm:$0xff]
    %v1878 = vld [vmem:[%s1 + $0x39d0] sm:$0xff]
    %v1879 = vld [vmem:[%s1 + $0x39d8] sm:$0xff]
    %v1880 = vld [vmem:[%s1 + $0x39e0] sm:$0xff]
    %v1881 = vld [vmem:[%s1 + $0x39e8] sm:$0xff]
    %v1882 = vld [vmem:[%s1 + $0x39f0] sm:$0xff]
    %v1883 = vld [vmem:[%s1 + $0x39f8] sm:$0xff]
    %v1884 = vld [vmem:[%s1 + $0x3a00] sm:$0xff]
    %v1885 = vld [vmem:[%s1 + $0x3a08] sm:$0xff]
    %v1886 = vld [vmem:[%s1 + $0x3a10] sm:$0xff]
    %v1887 = vld [vmem:[%s1 + $0x3a18] sm:$0xff]
    %v1888 = vld [vmem:[%s1 + $0x3a20] sm:$0xff]
    %v1889 = vld [vmem:[%s1 + $0x3a28] sm:$0xff]
    %v1890 = vld [vmem:[%s1 + $0x3a30] sm:$0xff]
    %v1891 = vld [vmem:[%s1 + $0x3a38] sm:$0xff]
    %v1892 = vld [vmem:[%s1 + $0x3a40] sm:$0xff]
    %v1893 = vld [vmem:[%s1 + $0x3a48] sm:$0xff]
    %v1894 = vld [vmem:[%s1 + $0x3a50] sm:$0xff]
    %v1895 = vld [vmem:[%s1 + $0x3a58] sm:$0xff]
    %v1896 = vld [vmem:[%s1 + $0x3a60] sm:$0xff]
    %v1897 = vld [vmem:[%s1 + $0x3a68] sm:$0xff]
    %v1898 = vld [vmem:[%s1 + $0x3a70] sm:$0xff]
    %v1899 = vld [vmem:[%s1 + $0x3a78] sm:$0xff]
    %v1900 = vld [vmem:[%s1 + $0x3a80] sm:$0xff]
    %v1901 = vld [vmem:[%s1 + $0x3a88] sm:$0xff]
    %v1902 = vld [vmem:[%s1 + $0x3a90] sm:$0xff]
    %v1903 = vld [vmem:[%s1 + $0x3a98] sm:$0xff]
    %v1904 = vld [vmem:[%s1 + $0x3aa0] sm:$0xff]
    %v1905 = vld [vmem:[%s1 + $0x3aa8] sm:$0xff]
    %v1906 = vld [vmem:[%s1 + $0x3ab0] sm:$0xff]
    %v1907 = vld [vmem:[%s1 + $0x3ab8] sm:$0xff]
    %v1908 = vld [vmem:[%s1 + $0x3ac0] sm:$0xff]
    %v1909 = vld [vmem:[%s1 + $0x3ac8] sm:$0xff]
    %v1910 = vld [vmem:[%s1 + $0x3ad0] sm:$0xff]
    %v1911 = vld [vmem:[%s1 + $0x3ad8] sm:$0xff]
    %v1912 = vld [vmem:[%s1 + $0x3ae0] sm:$0xff]
    %v1913 = vld [vmem:[%s1 + $0x3ae8] sm:$0xff]
    %v1914 = vld [vmem:[%s1 + $0x3af0] sm:$0xff]
    %v1915 = vld [vmem:[%s1 + $0x3af8] sm:$0xff]
    %v1916 = vld [vmem:[%s1 + $0x3b00] sm:$0xff]
    %v1917 = vld [vmem:[%s1 + $0x3b08] sm:$0xff]
    %v1918 = vld [vmem:[%s1 + $0x3b10] sm:$0xff]
    %v1919 = vld [vmem:[%s1 + $0x3b18] sm:$0xff]
    %v1920 = vld [vmem:[%s1 + $0x3b20] sm:$0xff]
    %v1921 = vld [vmem:[%s1 + $0x3b28] sm:$0xff]
    %v1922 = vld [vmem:[%s1 + $0x3b30] sm:$0xff]
    %v1923 = vld [vmem:[%s1 + $0x3b38] sm:$0xff]
    %v1924 = vld [vmem:[%s1 + $0x3b40] sm:$0xff]
    %v1925 = vld [vmem:[%s1 + $0x3b48] sm:$0xff]
    %v1926 = vld [vmem:[%s1 + $0x3b50] sm:$0xff]
    %v1927 = vld [vmem:[%s1 + $0x3b58] sm:$0xff]
    %v1928 = vld [vmem:[%s1 + $0x3b60] sm:$0xff]
    %v1929 = vld [vmem:[%s1 + $0x3b68] sm:$0xff]
    %v1930 = vld [vmem:[%s1 + $0x3b70] sm:$0xff]
    %v1931 = vld [vmem:[%s1 + $0x3b78] sm:$0xff]
    %v1932 = vld [vmem:[%s1 + $0x3b80] sm:$0xff]
    %v1933 = vld [vmem:[%s1 + $0x3b88] sm:$0xff]
    %v1934 = vld [vmem:[%s1 + $0x3b90] sm:$0xff]
    %v1935 = vld [vmem:[%s1 + $0x3b98] sm:$0xff]
    %v1936 = vld [vmem:[%s1 + $0x3ba0] sm:$0xff]
    %v1937 = vld [vmem:[%s1 + $0x3ba8] sm:$0xff]
    %v1938 = vld [vmem:[%s1 + $0x3bb0] sm:$0xff]
    %v1939 = vld [vmem:[%s1 + $0x3bb8] sm:$0xff]
    %v1940 = vld [vmem:[%s1 + $0x3bc0] sm:$0xff]
    %v1941 = vld [vmem:[%s1 + $0x3bc8] sm:$0xff]
    %v1942 = vld [vmem:[%s1 + $0x3bd0] sm:$0xff]
    %v1943 = vld [vmem:[%s1 + $0x3bd8] sm:$0xff]
    %v1944 = vld [vmem:[%s1 + $0x3be0] sm:$0xff]
    %v1945 = vld [vmem:[%s1 + $0x3be8] sm:$0xff]
    %v1946 = vld [vmem:[%s1 + $0x3bf0] sm:$0xff]
    %v1947 = vld [vmem:[%s1 + $0x3bf8] sm:$0xff]
    %v1948 = vld [vmem:[%s1 + $0x3c00] sm:$0xff]
    %v1949 = vld [vmem:[%s1 + $0x3c08] sm:$0xff]
    %v1950 = vld [vmem:[%s1 + $0x3c10] sm:$0xff]
    %v1951 = vld [vmem:[%s1 + $0x3c18] sm:$0xff]
    %v1952 = vld [vmem:[%s1 + $0x3c20] sm:$0xff]
    %v1953 = vld [vmem:[%s1 + $0x3c28] sm:$0xff]
    %v1954 = vld [vmem:[%s1 + $0x3c30] sm:$0xff]
    %v1955 = vld [vmem:[%s1 + $0x3c38] sm:$0xff]
    %v1956 = vld [vmem:[%s1 + $0x3c40] sm:$0xff]
    %v1957 = vld [vmem:[%s1 + $0x3c48] sm:$0xff]
    %v1958 = vld [vmem:[%s1 + $0x3c50] sm:$0xff]
    %v1959 = vld [vmem:[%s1 + $0x3c58] sm:$0xff]
    %v1960 = vld [vmem:[%s1 + $0x3c60] sm:$0xff]
    %v1961 = vld [vmem:[%s1 + $0x3c68] sm:$0xff]
    %v1962 = vld [vmem:[%s1 + $0x3c70] sm:$0xff]
    %v1963 = vld [vmem:[%s1 + $0x3c78] sm:$0xff]
    %v1964 = vld [vmem:[%s1 + $0x3c80] sm:$0xff]
    %v1965 = vld [vmem:[%s1 + $0x3c88] sm:$0xff]
    %v1966 = vld [vmem:[%s1 + $0x3c90] sm:$0xff]
    %v1967 = vld [vmem:[%s1 + $0x3c98] sm:$0xff]
    %v1968 = vld [vmem:[%s1 + $0x3ca0] sm:$0xff]
    %v1969 = vld [vmem:[%s1 + $0x3ca8] sm:$0xff]
    %v1970 = vld [vmem:[%s1 + $0x3cb0] sm:$0xff]
    %v1971 = vld [vmem:[%s1 + $0x3cb8] sm:$0xff]
    %v1972 = vld [vmem:[%s1 + $0x3cc0] sm:$0xff]
    %v1973 = vld [vmem:[%s1 + $0x3cc8] sm:$0xff]
    %v1974 = vld [vmem:[%s1 + $0x3cd0] sm:$0xff]
    %v1975 = vld [vmem:[%s1 + $0x3cd8] sm:$0xff]
    %v1976 = vld [vmem:[%s1 + $0x3ce0] sm:$0xff]
    %v1977 = vld [vmem:[%s1 + $0x3ce8] sm:$0xff]
    %v1978 = vld [vmem:[%s1 + $0x3cf0] sm:$0xff]
    %v1979 = vld [vmem:[%s1 + $0x3cf8] sm:$0xff]
    %v1980 = vld [vmem:[%s1 + $0x3d00] sm:$0xff]
    %v1981 = vld [vmem:[%s1 + $0x3d08] sm:$0xff]
    %v1982 = vld [vmem:[%s1 + $0x3d10] sm:$0xff]
    %v1983 = vld [vmem:[%s1 + $0x3d18] sm:$0xff]
    %v1984 = vld [vmem:[%s1 + $0x3d20] sm:$0xff]
    %v1985 = vld [vmem:[%s1 + $0x3d28] sm:$0xff]
    %v1986 = vld [vmem:[%s1 + $0x3d30] sm:$0xff]
    %v1987 = vld [vmem:[%s1 + $0x3d38] sm:$0xff]
    %v1988 = vld [vmem:[%s1 + $0x3d40] sm:$0xff]
    %v1989 = vld [vmem:[%s1 + $0x3d48] sm:$0xff]
    %v1990 = vld [vmem:[%s1 + $0x3d50] sm:$0xff]
    %v1991 = vld [vmem:[%s1 + $0x3d58] sm:$0xff]
    %v1992 = vld [vmem:[%s1 + $0x3d60] sm:$0xff]
    %v1993 = vld [vmem:[%s1 + $0x3d68] sm:$0xff]
    %v1994 = vld [vmem:[%s1 + $0x3d70] sm:$0xff]
    %v1995 = vld [vmem:[%s1 + $0x3d78] sm:$0xff]
    %v1996 = vld [vmem:[%s1 + $0x3d80] sm:$0xff]
    %v1997 = vld [vmem:[%s1 + $0x3d88] sm:$0xff]
    %v1998 = vld [vmem:[%s1 + $0x3d90] sm:$0xff]
    %v1999 = vld [vmem:[%s1 + $0x3d98] sm:$0xff]
    %v2000 = vld [vmem:[%s1 + $0x3da0] sm:$0xff]
    %v2001 = vld [vmem:[%s1 + $0x3da8] sm:$0xff]
    %v2002 = vld [vmem:[%s1 + $0x3db0] sm:$0xff]
    %v2003 = vld [vmem:[%s1 + $0x3db8] sm:$0xff]
    %v2004 = vld [vmem:[%s1 + $0x3dc0] sm:$0xff]
    %v2005 = vld [vmem:[%s1 + $0x3dc8] sm:$0xff]
    %v2006 = vld [vmem:[%s1 + $0x3dd0] sm:$0xff]
    %v2007 = vld [vmem:[%s1 + $0x3dd8] sm:$0xff]
    %v2008 = vld [vmem:[%s1 + $0x3de0] sm:$0xff]
    %v2009 = vld [vmem:[%s1 + $0x3de8] sm:$0xff]
    %v2010 = vld [vmem:[%s1 + $0x3df0] sm:$0xff]
    %v2011 = vld [vmem:[%s1 + $0x3df8] sm:$0xff]
    %v2012 = vld [vmem:[%s1 + $0x3e00] sm:$0xff]
    %v2013 = vld [vmem:[%s1 + $0x3e08] sm:$0xff]
    %v2014 = vld [vmem:[%s1 + $0x3e10] sm:$0xff]
    %v2015 = vld [vmem:[%s1 + $0x3e18] sm:$0xff]
    %v2016 = vld [vmem:[%s1 + $0x3e20] sm:$0xff]
    %v2017 = vld [vmem:[%s1 + $0x3e28] sm:$0xff]
    %v2018 = vld [vmem:[%s1 + $0x3e30] sm:$0xff]
    %v2019 = vld [vmem:[%s1 + $0x3e38] sm:$0xff]
    %v2020 = vld [vmem:[%s1 + $0x3e40] sm:$0xff]
    %v2021 = vld [vmem:[%s1 + $0x3e48] sm:$0xff]
    %v2022 = vld [vmem:[%s1 + $0x3e50] sm:$0xff]
    %v2023 = vld [vmem:[%s1 + $0x3e58] sm:$0xff]
    %v2024 = vld [vmem:[%s1 + $0x3e60] sm:$0xff]
    %v2025 = vld [vmem:[%s1 + $0x3e68] sm:$0xff]
    %v2026 = vld [vmem:[%s1 + $0x3e70] sm:$0xff]
    %v2027 = vld [vmem:[%s1 + $0x3e78] sm:$0xff]
    %v2028 = vld [vmem:[%s1 + $0x3e80] sm:$0xff]
    %v2029 = vld [vmem:[%s1 + $0x3e88] sm:$0xff]
    %v2030 = vld [vmem:[%s1 + $0x3e90] sm:$0xff]
    %v2031 = vld [vmem:[%s1 + $0x3e98] sm:$0xff]
    %v2032 = vld [vmem:[%s1 + $0x3ea0] sm:$0xff]
    %v2033 = vld [vmem:[%s1 + $0x3ea8] sm:$0xff]
    %v2034 = vld [vmem:[%s1 + $0x3eb0] sm:$0xff]
    %v2035 = vld [vmem:[%s1 + $0x3eb8] sm:$0xff]
    %v2036 = vld [vmem:[%s1 + $0x3ec0] sm:$0xff]
    %v2037 = vld [vmem:[%s1 + $0x3ec8] sm:$0xff]
    %v2038 = vld [vmem:[%s1 + $0x3ed0] sm:$0xff]
    %v2039 = vld [vmem:[%s1 + $0x3ed8] sm:$0xff]
    %v2040 = vld [vmem:[%s1 + $0x3ee0] sm:$0xff]
    %v2041 = vld [vmem:[%s1 + $0x3ee8] sm:$0xff]
    %v2042 = vld [vmem:[%s1 + $0x3ef0] sm:$0xff]
    %v2043 = vld [vmem:[%s1 + $0x3ef8] sm:$0xff]
    %v2044 = vld [vmem:[%s1 + $0x3f00] sm:$0xff]
    %v2045 = vld [vmem:[%s1 + $0x3f08] sm:$0xff]
    %v2046 = vld [vmem:[%s1 + $0x3f10] sm:$0xff]
    %v2047 = vld [vmem:[%s1 + $0x3f18] sm:$0xff]
    %v2048 = vld [vmem:[%s1 + $0x3f20] sm:$0xff]
    %v2049 = vld [vmem:[%s1 + $0x3f28] sm:$0xff]
    %v2050 = vld [vmem:[%s1 + $0x3f30] sm:$0xff]
    %v2051 = vld [vmem:[%s1 + $0x3f38] sm:$0xff]
    %v2052 = vld [vmem:[%s1 + $0x3f40] sm:$0xff]
    %v2053 = vld [vmem:[%s1 + $0x3f48] sm:$0xff]
    %v2054 = vld [vmem:[%s1 + $0x3f50] sm:$0xff]
    %v2055 = vld [vmem:[%s1 + $0x3f58] sm:$0xff]
    %v2056 = vld [vmem:[%s1 + $0x3f60] sm:$0xff]
    %v2057 = vld [vmem:[%s1 + $0x3f68] sm:$0xff]
    %v2058 = vld [vmem:[%s1 + $0x3f70] sm:$0xff]
    %v2059 = vld [vmem:[%s1 + $0x3f78] sm:$0xff]
    %v2060 = vld [vmem:[%s1 + $0x3f80] sm:$0xff]
    %v2061 = vld [vmem:[%s1 + $0x3f88] sm:$0xff]
    %v2062 = vld [vmem:[%s1 + $0x3f90] sm:$0xff]
    %v2063 = vld [vmem:[%s1 + $0x3f98] sm:$0xff]
    %v2064 = vld [vmem:[%s1 + $0x3fa0] sm:$0xff]
    %v2065 = vld [vmem:[%s1 + $0x3fa8] sm:$0xff]
    %v2066 = vld [vmem:[%s1 + $0x3fb0] sm:$0xff]
    %v2067 = vld [vmem:[%s1 + $0x3fb8] sm:$0xff]
    %v2068 = vld [vmem:[%s1 + $0x3fc0] sm:$0xff]
    %v2069 = vld [vmem:[%s1 + $0x3fc8] sm:$0xff]
    %v2070 = vld [vmem:[%s1 + $0x3fd0] sm:$0xff]
    %v2071 = vld [vmem:[%s1 + $0x3fd8] sm:$0xff]
    %v2072 = vld [vmem:[%s1 + $0x3fe0] sm:$0xff]
    %v2073 = vld [vmem:[%s1 + $0x3fe8] sm:$0xff]
    %v2074 = vld [vmem:[%s1 + $0x3ff0] sm:$0xff]
    %v2075 = vld [vmem:[%s1 + $0x3ff8] sm:$0xff]
    %v2076 = vld [vmem:[%s1 + $0x4000] sm:$0xff]
    %v2077 = vld [vmem:[%s1 + $0x4008] sm:$0xff]
    %v2078 = vld [vmem:[%s1 + $0x4010] sm:$0xff]
    %v2079 = vld [vmem:[%s1 + $0x4018] sm:$0xff]
    %v2080 = vld [vmem:[%s1 + $0x4020] sm:$0xff]
    %v2081 = vld [vmem:[%s1 + $0x4028] sm:$0xff]
    %v2082 = vld [vmem:[%s1 + $0x4030] sm:$0xff]
    %v2083 = vld [vmem:[%s1 + $0x4038] sm:$0xff]
    %v2084 = vld [vmem:[%s1 + $0x4040] sm:$0xff]
    %v2085 = vld [vmem:[%s1 + $0x4048] sm:$0xff]
    %v2086 = vld [vmem:[%s1 + $0x4050] sm:$0xff]
    %v2087 = vld [vmem:[%s1 + $0x4058] sm:$0xff]
    %v2088 = vld [vmem:[%s1 + $0x4060] sm:$0xff]
    %v2089 = vld [vmem:[%s1 + $0x4068] sm:$0xff]
    %v2090 = vld [vmem:[%s1 + $0x4070] sm:$0xff]
    %v2091 = vld [vmem:[%s1 + $0x4078] sm:$0xff]
    %v2092 = vld [vmem:[%s1 + $0x4080] sm:$0xff]
    %v2093 = vld [vmem:[%s1 + $0x4088] sm:$0xff]
    %v2094 = vld [vmem:[%s1 + $0x4090] sm:$0xff]
    %v2095 = vld [vmem:[%s1 + $0x4098] sm:$0xff]
    %v2096 = vld [vmem:[%s1 + $0x40a0] sm:$0xff]
    %v2097 = vld [vmem:[%s1 + $0x40a8] sm:$0xff]
    %v2098 = vld [vmem:[%s1 + $0x40b0] sm:$0xff]
    %v2099 = vld [vmem:[%s1 + $0x40b8] sm:$0xff]
    %v2100 = vld [vmem:[%s1 + $0x40c0] sm:$0xff]
    %v2101 = vld [vmem:[%s1 + $0x40c8] sm:$0xff]
    %v2102 = vld [vmem:[%s1 + $0x40d0] sm:$0xff]
    %v2103 = vld [vmem:[%s1 + $0x40d8] sm:$0xff]
    %v2104 = vld [vmem:[%s1 + $0x40e0] sm:$0xff]
    %v2105 = vld [vmem:[%s1 + $0x40e8] sm:$0xff]
    %v2106 = vld [vmem:[%s1 + $0x40f0] sm:$0xff]
    %v2107 = vld [vmem:[%s1 + $0x40f8] sm:$0xff]
    %v2108 = vld [vmem:[%s1 + $0x4100] sm:$0xff]
    %v2109 = vld [vmem:[%s1 + $0x4108] sm:$0xff]
    %v2110 = vld [vmem:[%s1 + $0x4110] sm:$0xff]
    %v2111 = vld [vmem:[%s1 + $0x4118] sm:$0xff]
    %v2112 = vld [vmem:[%s1 + $0x4120] sm:$0xff]
    %v2113 = vld [vmem:[%s1 + $0x4128] sm:$0xff]
    %v2114 = vld [vmem:[%s1 + $0x4130] sm:$0xff]
    %v2115 = vld [vmem:[%s1 + $0x4138] sm:$0xff]
    %v2116 = vld [vmem:[%s1 + $0x4140] sm:$0xff]
    %v2117 = vld [vmem:[%s1 + $0x4148] sm:$0xff]
    %v2118 = vld [vmem:[%s1 + $0x4150] sm:$0xff]
    %v2119 = vld [vmem:[%s1 + $0x4158] sm:$0xff]
    %v2120 = vld [vmem:[%s1 + $0x4160] sm:$0xff]
    %v2121 = vld [vmem:[%s1 + $0x4168] sm:$0xff]
    %v2122 = vld [vmem:[%s1 + $0x4170] sm:$0xff]
    %v2123 = vld [vmem:[%s1 + $0x4178] sm:$0xff]
    %v2124 = vld [vmem:[%s1 + $0x4180] sm:$0xff]
    %v2125 = vld [vmem:[%s1 + $0x4188] sm:$0xff]
    %v2126 = vld [vmem:[%s1 + $0x4190] sm:$0xff]
    %v2127 = vld [vmem:[%s1 + $0x4198] sm:$0xff]
    %v2128 = vld [vmem:[%s1 + $0x41a0] sm:$0xff]
    %v2129 = vld [vmem:[%s1 + $0x41a8] sm:$0xff]
    %v2130 = vld [vmem:[%s1 + $0x41b0] sm:$0xff]
    %v2131 = vld [vmem:[%s1 + $0x41b8] sm:$0xff]
    %v2132 = vld [vmem:[%s1 + $0x41c0] sm:$0xff]
    %v2133 = vld [vmem:[%s1 + $0x41c8] sm:$0xff]
    %v2134 = vld [vmem:[%s1 + $0x41d0] sm:$0xff]
    %v2135 = vld [vmem:[%s1 + $0x41d8] sm:$0xff]
    %v2136 = vld [vmem:[%s1 + $0x41e0] sm:$0xff]
    %v2137 = vld [vmem:[%s1 + $0x41e8] sm:$0xff]
    %v2138 = vld [vmem:[%s1 + $0x41f0] sm:$0xff]
    %v2139 = vld [vmem:[%s1 + $0x41f8] sm:$0xff]
    %v2140 = vld [vmem:[%s1 + $0x4200] sm:$0xff]
    %v2141 = vld [vmem:[%s1 + $0x4208] sm:$0xff]
    %v2142 = vld [vmem:[%s1 + $0x4210] sm:$0xff]
    %v2143 = vld [vmem:[%s1 + $0x4218] sm:$0xff]
    %v2144 = vld [vmem:[%s1 + $0x4220] sm:$0xff]
    %v2145 = vld [vmem:[%s1 + $0x4228] sm:$0xff]
    %v2146 = vld [vmem:[%s1 + $0x4230] sm:$0xff]
    %v2147 = vld [vmem:[%s1 + $0x4238] sm:$0xff]
    %v2148 = vld [vmem:[%s1 + $0x4240] sm:$0xff]
    %v2149 = vld [vmem:[%s1 + $0x4248] sm:$0xff]
    %v2150 = vld [vmem:[%s1 + $0x4250] sm:$0xff]
    %v2151 = vld [vmem:[%s1 + $0x4258] sm:$0xff]
    %v2152 = vld [vmem:[%s1 + $0x4260] sm:$0xff]
    %v2153 = vld [vmem:[%s1 + $0x4268] sm:$0xff]
    %v2154 = vld [vmem:[%s1 + $0x4270] sm:$0xff]
    %v2155 = vld [vmem:[%s1 + $0x4278] sm:$0xff]
    %v2156 = vld [vmem:[%s1 + $0x4280] sm:$0xff]
    %v2157 = vld [vmem:[%s1 + $0x4288] sm:$0xff]
    %v2158 = vld [vmem:[%s1 + $0x4290] sm:$0xff]
    %v2159 = vld [vmem:[%s1 + $0x4298] sm:$0xff]
    %v2160 = vld [vmem:[%s1 + $0x42a0] sm:$0xff]
    %v2161 = vld [vmem:[%s1 + $0x42a8] sm:$0xff]
    %v2162 = vld [vmem:[%s1 + $0x42b0] sm:$0xff]
    %v2163 = vld [vmem:[%s1 + $0x42b8] sm:$0xff]
    %v2164 = vld [vmem:[%s1 + $0x42c0] sm:$0xff]
    %v2165 = vld [vmem:[%s1 + $0x42c8] sm:$0xff]
    %v2166 = vld [vmem:[%s1 + $0x42d0] sm:$0xff]
    %v2167 = vld [vmem:[%s1 + $0x42d8] sm:$0xff]
    %v2168 = vld [vmem:[%s1 + $0x42e0] sm:$0xff]
    %v2169 = vld [vmem:[%s1 + $0x42e8] sm:$0xff]
    %v2170 = vld [vmem:[%s1 + $0x42f0] sm:$0xff]
    %v2171 = vld [vmem:[%s1 + $0x42f8] sm:$0xff]
    %v2172 = vld [vmem:[%s1 + $0x4300] sm:$0xff]
    %v2173 = vld [vmem:[%s1 + $0x4308] sm:$0xff]
    %v2174 = vld [vmem:[%s1 + $0x4310] sm:$0xff]
    %v2175 = vld [vmem:[%s1 + $0x4318] sm:$0xff]
    %v2176 = vld [vmem:[%s1 + $0x4320] sm:$0xff]
    %v2177 = vld [vmem:[%s1 + $0x4328] sm:$0xff]
    %v2178 = vld [vmem:[%s1 + $0x4330] sm:$0xff]
    %v2179 = vld [vmem:[%s1 + $0x4338] sm:$0xff]
    %v2180 = vld [vmem:[%s1 + $0x4340] sm:$0xff]
    %v2181 = vld [vmem:[%s1 + $0x4348] sm:$0xff]
    %v2182 = vld [vmem:[%s1 + $0x4350] sm:$0xff]
    %v2183 = vld [vmem:[%s1 + $0x4358] sm:$0xff]
    %v2184 = vld [vmem:[%s1 + $0x4360] sm:$0xff]
    %v2185 = vld [vmem:[%s1 + $0x4368] sm:$0xff]
    %v2186 = vld [vmem:[%s1 + $0x4370] sm:$0xff]
    %v2187 = vld [vmem:[%s1 + $0x4378] sm:$0xff]
    %v2188 = vld [vmem:[%s1 + $0x4380] sm:$0xff]
    %v2189 = vld [vmem:[%s1 + $0x4388] sm:$0xff]
    %v2190 = vld [vmem:[%s1 + $0x4390] sm:$0xff]
    %v2191 = vld [vmem:[%s1 + $0x4398] sm:$0xff]
    %v2192 = vld [vmem:[%s1 + $0x43a0] sm:$0xff]
    %v2193 = vld [vmem:[%s1 + $0x43a8] sm:$0xff]
    %v2194 = vld [vmem:[%s1 + $0x43b0] sm:$0xff]
    %v2195 = vld [vmem:[%s1 + $0x43b8] sm:$0xff]
    %v2196 = vld [vmem:[%s1 + $0x43c0] sm:$0xff]
    %v2197 = vld [vmem:[%s1 + $0x43c8] sm:$0xff]
    %v2198 = vld [vmem:[%s1 + $0x43d0] sm:$0xff]
    %v2199 = vld [vmem:[%s1 + $0x43d8] sm:$0xff]
    %v2200 = vld [vmem:[%s1 + $0x43e0] sm:$0xff]
    %v2201 = vld [vmem:[%s1 + $0x43e8] sm:$0xff]
    %v2202 = vld [vmem:[%s1 + $0x43f0] sm:$0xff]
    %v2203 = vld [vmem:[%s1 + $0x43f8] sm:$0xff]
    %v2204 = vld [vmem:[%s1 + $0x4400] sm:$0xff]
    %v2205 = vld [vmem:[%s1 + $0x4408] sm:$0xff]
    %v2206 = vld [vmem:[%s1 + $0x4410] sm:$0xff]
    %v2207 = vld [vmem:[%s1 + $0x4418] sm:$0xff]
    %v2208 = vld [vmem:[%s1 + $0x4420] sm:$0xff]
    %v2209 = vld [vmem:[%s1 + $0x4428] sm:$0xff]
    %v2210 = vld [vmem:[%s1 + $0x4430] sm:$0xff]
    %v2211 = vld [vmem:[%s1 + $0x4438] sm:$0xff]
    %v2212 = vld [vmem:[%s1 + $0x4440] sm:$0xff]
    %v2213 = vld [vmem:[%s1 + $0x4448] sm:$0xff]
    %v2214 = vld [vmem:[%s1 + $0x4450] sm:$0xff]
    %v2215 = vld [vmem:[%s1 + $0x4458] sm:$0xff]
    %v2216 = vld [vmem:[%s1 + $0x4460] sm:$0xff]
    %v2217 = vld [vmem:[%s1 + $0x4468] sm:$0xff]
    %v2218 = vld [vmem:[%s1 + $0x4470] sm:$0xff]
    %v2219 = vld [vmem:[%s1 + $0x4478] sm:$0xff]
    %v2220 = vld [vmem:[%s1 + $0x4480] sm:$0xff]
    %v2221 = vld [vmem:[%s1 + $0x4488] sm:$0xff]
    %v2222 = vld [vmem:[%s1 + $0x4490] sm:$0xff]
    %v2223 = vld [vmem:[%s1 + $0x4498] sm:$0xff]
    %v2224 = vld [vmem:[%s1 + $0x44a0] sm:$0xff]
    %v2225 = vld [vmem:[%s1 + $0x44a8] sm:$0xff]
    %v2226 = vld [vmem:[%s1 + $0x44b0] sm:$0xff]
    %v2227 = vld [vmem:[%s1 + $0x44b8] sm:$0xff]
    %v2228 = vld [vmem:[%s1 + $0x44c0] sm:$0xff]
    %v2229 = vld [vmem:[%s1 + $0x44c8] sm:$0xff]
    %v2230 = vld [vmem:[%s1 + $0x44d0] sm:$0xff]
    %v2231 = vld [vmem:[%s1 + $0x44d8] sm:$0xff]
    %v2232 = vld [vmem:[%s1 + $0x44e0] sm:$0xff]
    %v2233 = vld [vmem:[%s1 + $0x44e8] sm:$0xff]
    %v2234 = vld [vmem:[%s1 + $0x44f0] sm:$0xff]
    %v2235 = vld [vmem:[%s1 + $0x44f8] sm:$0xff]
    %v2236 = vld [vmem:[%s1 + $0x4500] sm:$0xff]
    %v2237 = vld [vmem:[%s1 + $0x4508] sm:$0xff]
    %v2238 = vld [vmem:[%s1 + $0x4510] sm:$0xff]
    %v2239 = vld [vmem:[%s1 + $0x4518] sm:$0xff]
    %v2240 = vld [vmem:[%s1 + $0x4520] sm:$0xff]
    %v2241 = vld [vmem:[%s1 + $0x4528] sm:$0xff]
    %v2242 = vld [vmem:[%s1 + $0x4530] sm:$0xff]
    %v2243 = vld [vmem:[%s1 + $0x4538] sm:$0xff]
    %v2244 = vld [vmem:[%s1 + $0x4540] sm:$0xff]
    %v2245 = vld [vmem:[%s1 + $0x4548] sm:$0xff]
    %v2246 = vld [vmem:[%s1 + $0x4550] sm:$0xff]
    %v2247 = vld [vmem:[%s1 + $0x4558] sm:$0xff]
    %v2248 = vld [vmem:[%s1 + $0x4560] sm:$0xff]
    %v2249 = vld [vmem:[%s1 + $0x4568] sm:$0xff]
    %v2250 = vld [vmem:[%s1 + $0x4570] sm:$0xff]
    %v2251 = vld [vmem:[%s1 + $0x4578] sm:$0xff]
    %v2252 = vld [vmem:[%s1 + $0x4580] sm:$0xff]
    %v2253 = vld [vmem:[%s1 + $0x4588] sm:$0xff]
    %v2254 = vld [vmem:[%s1 + $0x4590] sm:$0xff]
    %v2255 = vld [vmem:[%s1 + $0x4598] sm:$0xff]
    %v2256 = vld [vmem:[%s1 + $0x45a0] sm:$0xff]
    %v2257 = vld [vmem:[%s1 + $0x45a8] sm:$0xff]
    %v2258 = vld [vmem:[%s1 + $0x45b0] sm:$0xff]
    %v2259 = vld [vmem:[%s1 + $0x45b8] sm:$0xff]
    %v2260 = vld [vmem:[%s1 + $0x45c0] sm:$0xff]
    %v2261 = vld [vmem:[%s1 + $0x45c8] sm:$0xff]
    %v2262 = vld [vmem:[%s1 + $0x45d0] sm:$0xff]
    %v2263 = vld [vmem:[%s1 + $0x45d8] sm:$0xff]
    %v2264 = vld [vmem:[%s1 + $0x45e0] sm:$0xff]
    %v2265 = vld [vmem:[%s1 + $0x45e8] sm:$0xff]
    %v2266 = vld [vmem:[%s1 + $0x45f0] sm:$0xff]
    %v2267 = vld [vmem:[%s1 + $0x45f8] sm:$0xff]
    %v2268 = vld [vmem:[%s1 + $0x4600] sm:$0xff]
    %v2269 = vld [vmem:[%s1 + $0x4608] sm:$0xff]
    %v2270 = vld [vmem:[%s1 + $0x4610] sm:$0xff]
    %v2271 = vld [vmem:[%s1 + $0x4618] sm:$0xff]
    %v2272 = vld [vmem:[%s1 + $0x4620] sm:$0xff]
    %v2273 = vld [vmem:[%s1 + $0x4628] sm:$0xff]
    %v2274 = vld [vmem:[%s1 + $0x4630] sm:$0xff]
    %v2275 = vld [vmem:[%s1 + $0x4638] sm:$0xff]
    %v2276 = vld [vmem:[%s1 + $0x4640] sm:$0xff]
    %v2277 = vld [vmem:[%s1 + $0x4648] sm:$0xff]
    %v2278 = vld [vmem:[%s1 + $0x4650] sm:$0xff]
    %v2279 = vld [vmem:[%s1 + $0x4658] sm:$0xff]
    %v2280 = vld [vmem:[%s1 + $0x4660] sm:$0xff]
    %v2281 = vld [vmem:[%s1 + $0x4668] sm:$0xff]
    %v2282 = vld [vmem:[%s1 + $0x4670] sm:$0xff]
    %v2283 = vld [vmem:[%s1 + $0x4678] sm:$0xff]
    %v2284 = vld [vmem:[%s1 + $0x4680] sm:$0xff]
    %v2285 = vld [vmem:[%s1 + $0x4688] sm:$0xff]
    %v2286 = vld [vmem:[%s1 + $0x4690] sm:$0xff]
    %v2287 = vld [vmem:[%s1 + $0x4698] sm:$0xff]
    %v2288 = vld [vmem:[%s1 + $0x46a0] sm:$0xff]
    %v2289 = vld [vmem:[%s1 + $0x46a8] sm:$0xff]
    %v2290 = vld [vmem:[%s1 + $0x46b0] sm:$0xff]
    %v2291 = vld [vmem:[%s1 + $0x46b8] sm:$0xff]
    %v2292 = vld [vmem:[%s1 + $0x46c0] sm:$0xff]
    %v2293 = vld [vmem:[%s1 + $0x46c8] sm:$0xff]
    %v2294 = vld [vmem:[%s1 + $0x46d0] sm:$0xff]
    %v2295 = vld [vmem:[%s1 + $0x46d8] sm:$0xff]
    %v2296 = vld [vmem:[%s1 + $0x46e0] sm:$0xff]
    %v2297 = vld [vmem:[%s1 + $0x46e8] sm:$0xff]
    %v2298 = vld [vmem:[%s1 + $0x46f0] sm:$0xff]
    %v2299 = vld [vmem:[%s1 + $0x46f8] sm:$0xff]
    %v2300 = vld [vmem:[%s1 + $0x4700] sm:$0xff]
    %v2301 = vld [vmem:[%s1 + $0x4708] sm:$0xff]
    %v2302 = vld [vmem:[%s1 + $0x4710] sm:$0xff]
    %v2303 = vld [vmem:[%s1 + $0x4718] sm:$0xff]
    %v2304 = vld [vmem:[%s1 + $0x4720] sm:$0xff]
    %v2305 = vld [vmem:[%s1 + $0x4728] sm:$0xff]
    %v2306 = vld [vmem:[%s1 + $0x4730] sm:$0xff]
    %v2307 = vld [vmem:[%s1 + $0x4738] sm:$0xff]
    %v2308 = vld [vmem:[%s1 + $0x4740] sm:$0xff]
    %v2309 = vld [vmem:[%s1 + $0x4748] sm:$0xff]
    %v2310 = vld [vmem:[%s1 + $0x4750] sm:$0xff]
    %v2311 = vld [vmem:[%s1 + $0x4758] sm:$0xff]
    %v2312 = vld [vmem:[%s1 + $0x4760] sm:$0xff]
    %v2313 = vld [vmem:[%s1 + $0x4768] sm:$0xff]
    %v2314 = vld [vmem:[%s1 + $0x4770] sm:$0xff]
    %v2315 = vld [vmem:[%s1 + $0x4778] sm:$0xff]
    %v2316 = vld [vmem:[%s1 + $0x4780] sm:$0xff]
    %v2317 = vld [vmem:[%s1 + $0x4788] sm:$0xff]
    %v2318 = vld [vmem:[%s1 + $0x4790] sm:$0xff]
    %v2319 = vld [vmem:[%s1 + $0x4798] sm:$0xff]
    %v2320 = vld [vmem:[%s1 + $0x47a0] sm:$0xff]
    %v2321 = vld [vmem:[%s1 + $0x47a8] sm:$0xff]
    %v2322 = vld [vmem:[%s1 + $0x47b0] sm:$0xff]
    %v2323 = vld [vmem:[%s1 + $0x47b8] sm:$0xff]
    %v2324 = vld [vmem:[%s1 + $0x47c0] sm:$0xff]
    %v2325 = vld [vmem:[%s1 + $0x47c8] sm:$0xff]
    %v2326 = vld [vmem:[%s1 + $0x47d0] sm:$0xff]
    %v2327 = vld [vmem:[%s1 + $0x47d8] sm:$0xff]
    %v2328 = vld [vmem:[%s1 + $0x47e0] sm:$0xff]
    %v2329 = vld [vmem:[%s1 + $0x47e8] sm:$0xff]
    %v2330 = vld [vmem:[%s1 + $0x47f0] sm:$0xff]
    %v2331 = vld [vmem:[%s1 + $0x47f8] sm:$0xff]
    %v2332 = vld [vmem:[%s1 + $0x4800] sm:$0xff]
    %v2333 = vld [vmem:[%s1 + $0x4808] sm:$0xff]
    %v2334 = vld [vmem:[%s1 + $0x4810] sm:$0xff]
    %v2335 = vld [vmem:[%s1 + $0x4818] sm:$0xff]
    %v2336 = vld [vmem:[%s1 + $0x4820] sm:$0xff]
    %v2337 = vld [vmem:[%s1 + $0x4828] sm:$0xff]
    %v2338 = vld [vmem:[%s1 + $0x4830] sm:$0xff]
    %v2339 = vld [vmem:[%s1 + $0x4838] sm:$0xff]
    %v2340 = vld [vmem:[%s1 + $0x4840] sm:$0xff]
    %v2341 = vld [vmem:[%s1 + $0x4848] sm:$0xff]
    %v2342 = vld [vmem:[%s1 + $0x4850] sm:$0xff]
    %v2343 = vld [vmem:[%s1 + $0x4858] sm:$0xff]
    %v2344 = vld [vmem:[%s1 + $0x4860] sm:$0xff]
    %v2345 = vld [vmem:[%s1 + $0x4868] sm:$0xff]
    %v2346 = vld [vmem:[%s1 + $0x4870] sm:$0xff]
    %v2347 = vld [vmem:[%s1 + $0x4878] sm:$0xff]
    %v2348 = vld [vmem:[%s1 + $0x4880] sm:$0xff]
    %v2349 = vld [vmem:[%s1 + $0x4888] sm:$0xff]
    %v2350 = vld [vmem:[%s1 + $0x4890] sm:$0xff]
    %v2351 = vld [vmem:[%s1 + $0x4898] sm:$0xff]
    %v2352 = vld [vmem:[%s1 + $0x48a0] sm:$0xff]
    %v2353 = vld [vmem:[%s1 + $0x48a8] sm:$0xff]
    %v2354 = vld [vmem:[%s1 + $0x48b0] sm:$0xff]
    %v2355 = vld [vmem:[%s1 + $0x48b8] sm:$0xff]
    %v2356 = vld [vmem:[%s1 + $0x48c0] sm:$0xff]
    %v2357 = vld [vmem:[%s1 + $0x48c8] sm:$0xff]
    %v2358 = vld [vmem:[%s1 + $0x48d0] sm:$0xff]
    %v2359 = vld [vmem:[%s1 + $0x48d8] sm:$0xff]
    %v2360 = vld [vmem:[%s1 + $0x48e0] sm:$0xff]
    %v2361 = vld [vmem:[%s1 + $0x48e8] sm:$0xff]
    %v2362 = vld [vmem:[%s1 + $0x48f0] sm:$0xff]
    %v2363 = vld [vmem:[%s1 + $0x48f8] sm:$0xff]
    %v2364 = vld [vmem:[%s1 + $0x4900] sm:$0xff]
    %v2365 = vld [vmem:[%s1 + $0x4908] sm:$0xff]
    %v2366 = vld [vmem:[%s1 + $0x4910] sm:$0xff]
    %v2367 = vld [vmem:[%s1 + $0x4918] sm:$0xff]
    %v2368 = vld [vmem:[%s1 + $0x4920] sm:$0xff]
    %v2369 = vld [vmem:[%s1 + $0x4928] sm:$0xff]
    %v2370 = vld [vmem:[%s1 + $0x4930] sm:$0xff]
    %v2371 = vld [vmem:[%s1 + $0x4938] sm:$0xff]
    %v2372 = vld [vmem:[%s1 + $0x4940] sm:$0xff]
    %v2373 = vld [vmem:[%s1 + $0x4948] sm:$0xff]
    %v2374 = vld [vmem:[%s1 + $0x4950] sm:$0xff]
    %v2375 = vld [vmem:[%s1 + $0x4958] sm:$0xff]
    %v2376 = vld [vmem:[%s1 + $0x4960] sm:$0xff]
    %v2377 = vld [vmem:[%s1 + $0x4968] sm:$0xff]
    %v2378 = vld [vmem:[%s1 + $0x4970] sm:$0xff]
    %v2379 = vld [vmem:[%s1 + $0x4978] sm:$0xff]
    %v2380 = vld [vmem:[%s1 + $0x4980] sm:$0xff]
    %v2381 = vld [vmem:[%s1 + $0x4988] sm:$0xff]
    %v2382 = vld [vmem:[%s1 + $0x4990] sm:$0xff]
    %v2383 = vld [vmem:[%s1 + $0x4998] sm:$0xff]
    %v2384 = vld [vmem:[%s1 + $0x49a0] sm:$0xff]
    %v2385 = vld [vmem:[%s1 + $0x49a8] sm:$0xff]
    %v2386 = vld [vmem:[%s1 + $0x49b0] sm:$0xff]
    %v2387 = vld [vmem:[%s1 + $0x49b8] sm:$0xff]
    %v2388 = vld [vmem:[%s1 + $0x49c0] sm:$0xff]
    %v2389 = vld [vmem:[%s1 + $0x49c8] sm:$0xff]
    %v2390 = vld [vmem:[%s1 + $0x49d0] sm:$0xff]
    %v2391 = vld [vmem:[%s1 + $0x49d8] sm:$0xff]
    %v2392 = vld [vmem:[%s1 + $0x49e0] sm:$0xff]
    %v2393 = vld [vmem:[%s1 + $0x49e8] sm:$0xff]
    %v2394 = vld [vmem:[%s1 + $0x49f0] sm:$0xff]
    %v2395 = vld [vmem:[%s1 + $0x49f8] sm:$0xff]
    %v2396 = vld [vmem:[%s1 + $0x4a00] sm:$0xff]
    %v2397 = vld [vmem:[%s1 + $0x4a08] sm:$0xff]
    %v2398 = vld [vmem:[%s1 + $0x4a10] sm:$0xff]
    %v2399 = vld [vmem:[%s1 + $0x4a18] sm:$0xff]
    %v2400 = vld [vmem:[%s1 + $0x4a20] sm:$0xff]
    %v2401 = vld [vmem:[%s1 + $0x4a28] sm:$0xff]
    %v2402 = vld [vmem:[%s1 + $0x4a30] sm:$0xff]
    %v2403 = vld [vmem:[%s1 + $0x4a38] sm:$0xff]
    %v2404 = vld [vmem:[%s1 + $0x4a40] sm:$0xff]
    %v2405 = vld [vmem:[%s1 + $0x4a48] sm:$0xff]
    %v2406 = vld [vmem:[%s1 + $0x4a50] sm:$0xff]
    %v2407 = vld [vmem:[%s1 + $0x4a58] sm:$0xff]
    %v2408 = vld [vmem:[%s1 + $0x4a60] sm:$0xff]
    %v2409 = vld [vmem:[%s1 + $0x4a68] sm:$0xff]
    %v2410 = vld [vmem:[%s1 + $0x4a70] sm:$0xff]
    %v2411 = vld [vmem:[%s1 + $0x4a78] sm:$0xff]
    %v2412 = vld [vmem:[%s1 + $0x4a80] sm:$0xff]
    %v2413 = vld [vmem:[%s1 + $0x4a88] sm:$0xff]
    %v2414 = vld [vmem:[%s1 + $0x4a90] sm:$0xff]
    %v2415 = vld [vmem:[%s1 + $0x4a98] sm:$0xff]
    %v2416 = vld [vmem:[%s1 + $0x4aa0] sm:$0xff]
    %v2417 = vld [vmem:[%s1 + $0x4aa8] sm:$0xff]
    %v2418 = vld [vmem:[%s1 + $0x4ab0] sm:$0xff]
    %v2419 = vld [vmem:[%s1 + $0x4ab8] sm:$0xff]
    %v2420 = vld [vmem:[%s1 + $0x4ac0] sm:$0xff]
    %v2421 = vld [vmem:[%s1 + $0x4ac8] sm:$0xff]
    %v2422 = vld [vmem:[%s1 + $0x4ad0] sm:$0xff]
    %v2423 = vld [vmem:[%s1 + $0x4ad8] sm:$0xff]
    %v2424 = vld [vmem:[%s1 + $0x4ae0] sm:$0xff]
    %v2425 = vld [vmem:[%s1 + $0x4ae8] sm:$0xff]
    %v2426 = vld [vmem:[%s1 + $0x4af0] sm:$0xff]
    %v2427 = vld [vmem:[%s1 + $0x4af8] sm:$0xff]
    %v2428 = vld [vmem:[%s1 + $0x4b00] sm:$0xff]
    %v2429 = vld [vmem:[%s1 + $0x4b08] sm:$0xff]
    %v2430 = vld [vmem:[%s1 + $0x4b10] sm:$0xff]
    %v2431 = vld [vmem:[%s1 + $0x4b18] sm:$0xff]
    %v2432 = vld [vmem:[%s1 + $0x4b20] sm:$0xff]
    %v2433 = vld [vmem:[%s1 + $0x4b28] sm:$0xff]
    %v2434 = vld [vmem:[%s1 + $0x4b30] sm:$0xff]
    %v2435 = vld [vmem:[%s1 + $0x4b38] sm:$0xff]
    %v2436 = vld [vmem:[%s1 + $0x4b40] sm:$0xff]
    %v2437 = vld [vmem:[%s1 + $0x4b48] sm:$0xff]
    %v2438 = vld [vmem:[%s1 + $0x4b50] sm:$0xff]
    %v2439 = vld [vmem:[%s1 + $0x4b58] sm:$0xff]
    %v2440 = vld [vmem:[%s1 + $0x4b60] sm:$0xff]
    %v2441 = vld [vmem:[%s1 + $0x4b68] sm:$0xff]
    %v2442 = vld [vmem:[%s1 + $0x4b70] sm:$0xff]
    %v2443 = vld [vmem:[%s1 + $0x4b78] sm:$0xff]
    %v2444 = vld [vmem:[%s1 + $0x4b80] sm:$0xff]
    %v2445 = vld [vmem:[%s1 + $0x4b88] sm:$0xff]
    %v2446 = vld [vmem:[%s1 + $0x4b90] sm:$0xff]
    %v2447 = vld [vmem:[%s1 + $0x4b98] sm:$0xff]
    %v2448 = vld [vmem:[%s1 + $0x4ba0] sm:$0xff]
    %v2449 = vld [vmem:[%s1 + $0x4ba8] sm:$0xff]
    %v2450 = vld [vmem:[%s1 + $0x4bb0] sm:$0xff]
    %v2451 = vld [vmem:[%s1 + $0x4bb8] sm:$0xff]
    %v2452 = vld [vmem:[%s1 + $0x4bc0] sm:$0xff]
    %v2453 = vld [vmem:[%s1 + $0x4bc8] sm:$0xff]
    %v2454 = vld [vmem:[%s1 + $0x4bd0] sm:$0xff]
    %v2455 = vld [vmem:[%s1 + $0x4bd8] sm:$0xff]
    %v2456 = vld [vmem:[%s1 + $0x4be0] sm:$0xff]
    %v2457 = vld [vmem:[%s1 + $0x4be8] sm:$0xff]
    %v2458 = vld [vmem:[%s1 + $0x4bf0] sm:$0xff]
    %v2459 = vld [vmem:[%s1 + $0x4bf8] sm:$0xff]
    %v2460 = vld [vmem:[%s1 + $0x4c00] sm:$0xff]
    %v2461 = vld [vmem:[%s1 + $0x4c08] sm:$0xff]
    %v2462 = vld [vmem:[%s1 + $0x4c10] sm:$0xff]
    %v2463 = vld [vmem:[%s1 + $0x4c18] sm:$0xff]
    %v2464 = vld [vmem:[%s1 + $0x4c20] sm:$0xff]
    %v2465 = vld [vmem:[%s1 + $0x4c28] sm:$0xff]
    %v2466 = vld [vmem:[%s1 + $0x4c30] sm:$0xff]
    %v2467 = vld [vmem:[%s1 + $0x4c38] sm:$0xff]
    %v2468 = vld [vmem:[%s1 + $0x4c40] sm:$0xff]
    %v2469 = vld [vmem:[%s1 + $0x4c48] sm:$0xff]
    %v2470 = vld [vmem:[%s1 + $0x4c50] sm:$0xff]
    %v2471 = vld [vmem:[%s1 + $0x4c58] sm:$0xff]
    %v2472 = vld [vmem:[%s1 + $0x4c60] sm:$0xff]
    %v2473 = vld [vmem:[%s1 + $0x4c68] sm:$0xff]
    %v2474 = vld [vmem:[%s1 + $0x4c70] sm:$0xff]
    %v2475 = vld [vmem:[%s1 + $0x4c78] sm:$0xff]
    %v2476 = vld [vmem:[%s1 + $0x4c80] sm:$0xff]
    %v2477 = vld [vmem:[%s1 + $0x4c88] sm:$0xff]
    %v2478 = vld [vmem:[%s1 + $0x4c90] sm:$0xff]
    %v2479 = vld [vmem:[%s1 + $0x4c98] sm:$0xff]
    %v2480 = vld [vmem:[%s1 + $0x4ca0] sm:$0xff]
    %v2481 = vld [vmem:[%s1 + $0x4ca8] sm:$0xff]
    %v2482 = vld [vmem:[%s1 + $0x4cb0] sm:$0xff]
    %v2483 = vld [vmem:[%s1 + $0x4cb8] sm:$0xff]
    %v2484 = vld [vmem:[%s1 + $0x4cc0] sm:$0xff]
    %v2485 = vld [vmem:[%s1 + $0x4cc8] sm:$0xff]
    %v2486 = vld [vmem:[%s1 + $0x4cd0] sm:$0xff]
    %v2487 = vld [vmem:[%s1 + $0x4cd8] sm:$0xff]
    %v2488 = vld [vmem:[%s1 + $0x4ce0] sm:$0xff]
    %v2489 = vld [vmem:[%s1 + $0x4ce8] sm:$0xff]
    %v2490 = vld [vmem:[%s1 + $0x4cf0] sm:$0xff]
    %v2491 = vld [vmem:[%s1 + $0x4cf8] sm:$0xff]
    %v2492 = vld [vmem:[%s1 + $0x4d00] sm:$0xff]
    %v2493 = vld [vmem:[%s1 + $0x4d08] sm:$0xff]
    %v2494 = vld [vmem:[%s1 + $0x4d10] sm:$0xff]
    %v2495 = vld [vmem:[%s1 + $0x4d18] sm:$0xff]
    %v2496 = vld [vmem:[%s1 + $0x4d20] sm:$0xff]
    %v2497 = vld [vmem:[%s1 + $0x4d28] sm:$0xff]
    %v2498 = vld [vmem:[%s1 + $0x4d30] sm:$0xff]
    %v2499 = vld [vmem:[%s1 + $0x4d38] sm:$0xff]
    %v2500 = vld [vmem:[%s1 + $0x4d40] sm:$0xff]
    %v2501 = vld [vmem:[%s1 + $0x4d48] sm:$0xff]
    %v2502 = vld [vmem:[%s1 + $0x4d50] sm:$0xff]
    %v2503 = vld [vmem:[%s1 + $0x4d58] sm:$0xff]
    %v2504 = vld [vmem:[%s1 + $0x4d60] sm:$0xff]
    %v2505 = vld [vmem:[%s1 + $0x4d68] sm:$0xff]
    %v2506 = vld [vmem:[%s1 + $0x4d70] sm:$0xff]
    %v2507 = vld [vmem:[%s1 + $0x4d78] sm:$0xff]
    %v2508 = vld [vmem:[%s1 + $0x4d80] sm:$0xff]
    %v2509 = vld [vmem:[%s1 + $0x4d88] sm:$0xff]
    %v2510 = vld [vmem:[%s1 + $0x4d90] sm:$0xff]
    %v2511 = vld [vmem:[%s1 + $0x4d98] sm:$0xff]
    %v2512 = vld [vmem:[%s1 + $0x4da0] sm:$0xff]
    %v2513 = vld [vmem:[%s1 + $0x4da8] sm:$0xff]
    %v2514 = vld [vmem:[%s1 + $0x4db0] sm:$0xff]
    %v2515 = vld [vmem:[%s1 + $0x4db8] sm:$0xff]
    %v2516 = vld [vmem:[%s1 + $0x4dc0] sm:$0xff]
    %v2517 = vld [vmem:[%s1 + $0x4dc8] sm:$0xff]
    %v2518 = vld [vmem:[%s1 + $0x4dd0] sm:$0xff]
    %v2519 = vld [vmem:[%s1 + $0x4dd8] sm:$0xff]
    %v2520 = vld [vmem:[%s1 + $0x4de0] sm:$0xff]
    %v2521 = vld [vmem:[%s1 + $0x4de8] sm:$0xff]
    %v2522 = vld [vmem:[%s1 + $0x4df0] sm:$0xff]
    %v2523 = vld [vmem:[%s1 + $0x4df8] sm:$0xff]
    %v2524 = vld [vmem:[%s1 + $0x4e00] sm:$0xff]
    %v2525 = vld [vmem:[%s1 + $0x4e08] sm:$0xff]
    %v2526 = vld [vmem:[%s1 + $0x4e10] sm:$0xff]
    %v2527 = vld [vmem:[%s1 + $0x4e18] sm:$0xff]
    %v2528 = vld [vmem:[%s1 + $0x4e20] sm:$0xff]
    %v2529 = vld [vmem:[%s1 + $0x4e28] sm:$0xff]
    %v2530 = vld [vmem:[%s1 + $0x4e30] sm:$0xff]
    %v2531 = vld [vmem:[%s1 + $0x4e38] sm:$0xff]
    %v2532 = vld [vmem:[%s1 + $0x4e40] sm:$0xff]
    %v2533 = vld [vmem:[%s1 + $0x4e48] sm:$0xff]
    %v2534 = vld [vmem:[%s1 + $0x4e50] sm:$0xff]
    %v2535 = vld [vmem:[%s1 + $0x4e58] sm:$0xff]
    %v2536 = vld [vmem:[%s1 + $0x4e60] sm:$0xff]
    %v2537 = vld [vmem:[%s1 + $0x4e68] sm:$0xff]
    %v2538 = vld [vmem:[%s1 + $0x4e70] sm:$0xff]
    %v2539 = vld [vmem:[%s1 + $0x4e78] sm:$0xff]
    %v2540 = vld [vmem:[%s1 + $0x4e80] sm:$0xff]
    %v2541 = vld [vmem:[%s1 + $0x4e88] sm:$0xff]
    %v2542 = vld [vmem:[%s1 + $0x4e90] sm:$0xff]
    %v2543 = vld [vmem:[%s1 + $0x4e98] sm:$0xff]
    %v2544 = vld [vmem:[%s1 + $0x4ea0] sm:$0xff]
    %v2545 = vld [vmem:[%s1 + $0x4ea8] sm:$0xff]
    %v2546 = vld [vmem:[%s1 + $0x4eb0] sm:$0xff]
    %v2547 = vld [vmem:[%s1 + $0x4eb8] sm:$0xff]
    %v2548 = vld [vmem:[%s1 + $0x4ec0] sm:$0xff]
    %v2549 = vld [vmem:[%s1 + $0x4ec8] sm:$0xff]
    %v2550 = vld [vmem:[%s1 + $0x4ed0] sm:$0xff]
    %v2551 = vld [vmem:[%s1 + $0x4ed8] sm:$0xff]
    %v2552 = vld [vmem:[%s1 + $0x4ee0] sm:$0xff]
    %v2553 = vld [vmem:[%s1 + $0x4ee8] sm:$0xff]
    %v2554 = vld [vmem:[%s1 + $0x4ef0] sm:$0xff]
    %v2555 = vld [vmem:[%s1 + $0x4ef8] sm:$0xff]
    %v2556 = vld [vmem:[%s1 + $0x4f00] sm:$0xff]
    %v2557 = vld [vmem:[%s1 + $0x4f08] sm:$0xff]
    %v2558 = vld [vmem:[%s1 + $0x4f10] sm:$0xff]
    %v2559 = vld [vmem:[%s1 + $0x4f18] sm:$0xff]
    %v2560 = vld [vmem:[%s1 + $0x4f20] sm:$0xff]
    %v2561 = vld [vmem:[%s1 + $0x4f28] sm:$0xff]
    %v2562 = vld [vmem:[%s1 + $0x4f30] sm:$0xff]
    %v2563 = vld [vmem:[%s1 + $0x4f38] sm:$0xff]
    %v2564 = vld [vmem:[%s1 + $0x4f40] sm:$0xff]
    %v2565 = vld [vmem:[%s1 + $0x4f48] sm:$0xff]
    %v2566 = vld [vmem:[%s1 + $0x4f50] sm:$0xff]
    %v2567 = vld [vmem:[%s1 + $0x4f58] sm:$0xff]
    %v2568 = vld [vmem:[%s1 + $0x4f60] sm:$0xff]
    %v2569 = vld [vmem:[%s1 + $0x4f68] sm:$0xff]
    %v2570 = vld [vmem:[%s1 + $0x4f70] sm:$0xff]
    %v2571 = vld [vmem:[%s1 + $0x4f78] sm:$0xff]
    %v2572 = vld [vmem:[%s1 + $0x4f80] sm:$0xff]
    %v2573 = vld [vmem:[%s1 + $0x4f88] sm:$0xff]
    %v2574 = vld [vmem:[%s1 + $0x4f90] sm:$0xff]
    %v2575 = vld [vmem:[%s1 + $0x4f98] sm:$0xff]
    %v2576 = vld [vmem:[%s1 + $0x4fa0] sm:$0xff]
    %v2577 = vld [vmem:[%s1 + $0x4fa8] sm:$0xff]
    %v2578 = vld [vmem:[%s1 + $0x4fb0] sm:$0xff]
    %v2579 = vld [vmem:[%s1 + $0x4fb8] sm:$0xff]
    %v2580 = vld [vmem:[%s1 + $0x4fc0] sm:$0xff]
    %v2581 = vld [vmem:[%s1 + $0x4fc8] sm:$0xff]
    %v2582 = vld [vmem:[%s1 + $0x4fd0] sm:$0xff]
    %v2583 = vld [vmem:[%s1 + $0x4fd8] sm:$0xff]
    %v2584 = vld [vmem:[%s1 + $0x4fe0] sm:$0xff]
    %v2585 = vld [vmem:[%s1 + $0x4fe8] sm:$0xff]
    %v2586 = vld [vmem:[%s1 + $0x4ff0] sm:$0xff]
    %v2587 = vld [vmem:[%s1 + $0x4ff8] sm:$0xff]
    %v2588 = vld [vmem:[%s1 + $0x5000] sm:$0xff]
    %v2589 = vld [vmem:[%s1 + $0x5008] sm:$0xff]
    %v2590 = vld [vmem:[%s1 + $0x5010] sm:$0xff]
    %v2591 = vld [vmem:[%s1 + $0x5018] sm:$0xff]
    %v2592 = vld [vmem:[%s1 + $0x5020] sm:$0xff]
    %v2593 = vld [vmem:[%s1 + $0x5028] sm:$0xff]
    %v2594 = vld [vmem:[%s1 + $0x5030] sm:$0xff]
    %v2595 = vld [vmem:[%s1 + $0x5038] sm:$0xff]
    %v2596 = vld [vmem:[%s1 + $0x5040] sm:$0xff]
    %v2597 = vld [vmem:[%s1 + $0x5048] sm:$0xff]
    %v2598 = vld [vmem:[%s1 + $0x5050] sm:$0xff]
    %v2599 = vld [vmem:[%s1 + $0x5058] sm:$0xff]
    %v2600 = vld [vmem:[%s1 + $0x5060] sm:$0xff]
    %v2601 = vld [vmem:[%s1 + $0x5068] sm:$0xff]
    %v2602 = vld [vmem:[%s1 + $0x5070] sm:$0xff]
    %v2603 = vld [vmem:[%s1 + $0x5078] sm:$0xff]
    %v2604 = vld [vmem:[%s1 + $0x5080] sm:$0xff]
    %v2605 = vld [vmem:[%s1 + $0x5088] sm:$0xff]
    %v2606 = vld [vmem:[%s1 + $0x5090] sm:$0xff]
    %v2607 = vld [vmem:[%s1 + $0x5098] sm:$0xff]
    %v2608 = vld [vmem:[%s1 + $0x50a0] sm:$0xff]
    %v2609 = vld [vmem:[%s1 + $0x50a8] sm:$0xff]
    %v2610 = vld [vmem:[%s1 + $0x50b0] sm:$0xff]
    %v2611 = vld [vmem:[%s1 + $0x50b8] sm:$0xff]
    %v2612 = vld [vmem:[%s1 + $0x50c0] sm:$0xff]
    %v2613 = vld [vmem:[%s1 + $0x50c8] sm:$0xff]
    %v2614 = vld [vmem:[%s1 + $0x50d0] sm:$0xff]
    %v2615 = vld [vmem:[%s1 + $0x50d8] sm:$0xff]
    %v2616 = vld [vmem:[%s1 + $0x50e0] sm:$0xff]
    %v2617 = vld [vmem:[%s1 + $0x50e8] sm:$0xff]
    %v2618 = vld [vmem:[%s1 + $0x50f0] sm:$0xff]
    %v2619 = vld [vmem:[%s1 + $0x50f8] sm:$0xff]
    %v2620 = vld [vmem:[%s1 + $0x5100] sm:$0xff]
    %v2621 = vld [vmem:[%s1 + $0x5108] sm:$0xff]
    %v2622 = vld [vmem:[%s1 + $0x5110] sm:$0xff]
    %v2623 = vld [vmem:[%s1 + $0x5118] sm:$0xff]
    %v2624 = vld [vmem:[%s1 + $0x5120] sm:$0xff]
    %v2625 = vld [vmem:[%s1 + $0x5128] sm:$0xff]
    %v2626 = vld [vmem:[%s1 + $0x5130] sm:$0xff]
    %v2627 = vld [vmem:[%s1 + $0x5138] sm:$0xff]
    %v2628 = vld [vmem:[%s1 + $0x5140] sm:$0xff]
    %v2629 = vld [vmem:[%s1 + $0x5148] sm:$0xff]
    %v2630 = vld [vmem:[%s1 + $0x5150] sm:$0xff]
    %v2631 = vld [vmem:[%s1 + $0x5158] sm:$0xff]
    %v2632 = vld [vmem:[%s1 + $0x5160] sm:$0xff]
    %v2633 = vld [vmem:[%s1 + $0x5168] sm:$0xff]
    %v2634 = vld [vmem:[%s1 + $0x5170] sm:$0xff]
    %v2635 = vld [vmem:[%s1 + $0x5178] sm:$0xff]
    %v2636 = vld [vmem:[%s1 + $0x5180] sm:$0xff]
    %v2637 = vld [vmem:[%s1 + $0x5188] sm:$0xff]
    %v2638 = vld [vmem:[%s1 + $0x5190] sm:$0xff]
    %v2639 = vld [vmem:[%s1 + $0x5198] sm:$0xff]
    %v2640 = vld [vmem:[%s1 + $0x51a0] sm:$0xff]
    %v2641 = vld [vmem:[%s1 + $0x51a8] sm:$0xff]
    %v2642 = vld [vmem:[%s1 + $0x51b0] sm:$0xff]
    %v2643 = vld [vmem:[%s1 + $0x51b8] sm:$0xff]
    %v2644 = vld [vmem:[%s1 + $0x51c0] sm:$0xff]
    %v2645 = vld [vmem:[%s1 + $0x51c8] sm:$0xff]
    %v2646 = vld [vmem:[%s1 + $0x51d0] sm:$0xff]
    %v2647 = vld [vmem:[%s1 + $0x51d8] sm:$0xff]
    %v2648 = vld [vmem:[%s1 + $0x51e0] sm:$0xff]
    %v2649 = vld [vmem:[%s1 + $0x51e8] sm:$0xff]
    %v2650 = vld [vmem:[%s1 + $0x51f0] sm:$0xff]
    %v2651 = vld [vmem:[%s1 + $0x51f8] sm:$0xff]
    %v2652 = vld [vmem:[%s1 + $0x5200] sm:$0xff]
    %v2653 = vld [vmem:[%s1 + $0x5208] sm:$0xff]
    %v2654 = vld [vmem:[%s1 + $0x5210] sm:$0xff]
    %v2655 = vld [vmem:[%s1 + $0x5218] sm:$0xff]
    %v2656 = vld [vmem:[%s1 + $0x5220] sm:$0xff]
    %v2657 = vld [vmem:[%s1 + $0x5228] sm:$0xff]
    %v2658 = vld [vmem:[%s1 + $0x5230] sm:$0xff]
    %v2659 = vld [vmem:[%s1 + $0x5238] sm:$0xff]
    %v2660 = vld [vmem:[%s1 + $0x5240] sm:$0xff]
    %v2661 = vld [vmem:[%s1 + $0x5248] sm:$0xff]
    %v2662 = vld [vmem:[%s1 + $0x5250] sm:$0xff]
    %v2663 = vld [vmem:[%s1 + $0x5258] sm:$0xff]
    %v2664 = vld [vmem:[%s1 + $0x5260] sm:$0xff]
    %v2665 = vld [vmem:[%s1 + $0x5268] sm:$0xff]
    %v2666 = vld [vmem:[%s1 + $0x5270] sm:$0xff]
    %v2667 = vld [vmem:[%s1 + $0x5278] sm:$0xff]
    %v2668 = vld [vmem:[%s1 + $0x5280] sm:$0xff]
    %v2669 = vld [vmem:[%s1 + $0x5288] sm:$0xff]
    %v2670 = vld [vmem:[%s1 + $0x5290] sm:$0xff]
    %v2671 = vld [vmem:[%s1 + $0x5298] sm:$0xff]
    %v2672 = vld [vmem:[%s1 + $0x52a0] sm:$0xff]
    %v2673 = vld [vmem:[%s1 + $0x52a8] sm:$0xff]
    %v2674 = vld [vmem:[%s1 + $0x52b0] sm:$0xff]
    %v2675 = vld [vmem:[%s1 + $0x52b8] sm:$0xff]
    %v2676 = vld [vmem:[%s1 + $0x52c0] sm:$0xff]
    %v2677 = vld [vmem:[%s1 + $0x52c8] sm:$0xff]
    %v2678 = vld [vmem:[%s1 + $0x52d0] sm:$0xff]
    %v2679 = vld [vmem:[%s1 + $0x52d8] sm:$0xff]
    %v2680 = vld [vmem:[%s1 + $0x52e0] sm:$0xff]
    %v2681 = vld [vmem:[%s1 + $0x52e8] sm:$0xff]
    %v2682 = vld [vmem:[%s1 + $0x52f0] sm:$0xff]
    %v2683 = vld [vmem:[%s1 + $0x52f8] sm:$0xff]
    %v2684 = vld [vmem:[%s1 + $0x5300] sm:$0xff]
    %v2685 = vld [vmem:[%s1 + $0x5308] sm:$0xff]
    %v2686 = vld [vmem:[%s1 + $0x5310] sm:$0xff]
    %v2687 = vld [vmem:[%s1 + $0x5318] sm:$0xff]
    %v2688 = vld [vmem:[%s1 + $0x5320] sm:$0xff]
    %v2689 = vld [vmem:[%s1 + $0x5328] sm:$0xff]
    %v2690 = vld [vmem:[%s1 + $0x5330] sm:$0xff]
    %v2691 = vld [vmem:[%s1 + $0x5338] sm:$0xff]
    %v2692 = vld [vmem:[%s1 + $0x5340] sm:$0xff]
    %v2693 = vld [vmem:[%s1 + $0x5348] sm:$0xff]
    %v2694 = vld [vmem:[%s1 + $0x5350] sm:$0xff]
    %v2695 = vld [vmem:[%s1 + $0x5358] sm:$0xff]
    %v2696 = vld [vmem:[%s1 + $0x5360] sm:$0xff]
    %v2697 = vld [vmem:[%s1 + $0x5368] sm:$0xff]
    %v2698 = vld [vmem:[%s1 + $0x5370] sm:$0xff]
    %v2699 = vld [vmem:[%s1 + $0x5378] sm:$0xff]
    %v2700 = vld [vmem:[%s1 + $0x5380] sm:$0xff]
    %v2701 = vld [vmem:[%s1 + $0x5388] sm:$0xff]
    %v2702 = vld [vmem:[%s1 + $0x5390] sm:$0xff]
    %v2703 = vld [vmem:[%s1 + $0x5398] sm:$0xff]
    %v2704 = vld [vmem:[%s1 + $0x53a0] sm:$0xff]
    %v2705 = vld [vmem:[%s1 + $0x53a8] sm:$0xff]
    %v2706 = vld [vmem:[%s1 + $0x53b0] sm:$0xff]
    %v2707 = vld [vmem:[%s1 + $0x53b8] sm:$0xff]
    %v2708 = vld [vmem:[%s1 + $0x53c0] sm:$0xff]
    %v2709 = vld [vmem:[%s1 + $0x53c8] sm:$0xff]
    %v2710 = vld [vmem:[%s1 + $0x53d0] sm:$0xff]
    %v2711 = vld [vmem:[%s1 + $0x53d8] sm:$0xff]
    %v2712 = vld [vmem:[%s1 + $0x53e0] sm:$0xff]
    %v2713 = vld [vmem:[%s1 + $0x53e8] sm:$0xff]
    %v2714 = vld [vmem:[%s1 + $0x53f0] sm:$0xff]
    %v2715 = vld [vmem:[%s1 + $0x53f8] sm:$0xff]
    %v2716 = vld [vmem:[%s1 + $0x5400] sm:$0xff]
    %v2717 = vld [vmem:[%s1 + $0x5408] sm:$0xff]
    %v2718 = vld [vmem:[%s1 + $0x5410] sm:$0xff]
    %v2719 = vld [vmem:[%s1 + $0x5418] sm:$0xff]
    %v2720 = vld [vmem:[%s1 + $0x5420] sm:$0xff]
    %v2721 = vld [vmem:[%s1 + $0x5428] sm:$0xff]
    %v2722 = vld [vmem:[%s1 + $0x5430] sm:$0xff]
    %v2723 = vld [vmem:[%s1 + $0x5438] sm:$0xff]
    %v2724 = vld [vmem:[%s1 + $0x5440] sm:$0xff]
    %v2725 = vld [vmem:[%s1 + $0x5448] sm:$0xff]
    %v2726 = vld [vmem:[%s1 + $0x5450] sm:$0xff]
    %v2727 = vld [vmem:[%s1 + $0x5458] sm:$0xff]
    %v2728 = vld [vmem:[%s1 + $0x5460] sm:$0xff]
    %v2729 = vld [vmem:[%s1 + $0x5468] sm:$0xff]
    %v2730 = vld [vmem:[%s1 + $0x5470] sm:$0xff]
    %v2731 = vld [vmem:[%s1 + $0x5478] sm:$0xff]
    %v2732 = vld [vmem:[%s1 + $0x5480] sm:$0xff]
    %v2733 = vld [vmem:[%s1 + $0x5488] sm:$0xff]
    %v2734 = vld [vmem:[%s1 + $0x5490] sm:$0xff]
    %v2735 = vld [vmem:[%s1 + $0x5498] sm:$0xff]
    %v2736 = vld [vmem:[%s1 + $0x54a0] sm:$0xff]
    %v2737 = vld [vmem:[%s1 + $0x54a8] sm:$0xff]
    %v2738 = vld [vmem:[%s1 + $0x54b0] sm:$0xff]
    %v2739 = vld [vmem:[%s1 + $0x54b8] sm:$0xff]
    %v2740 = vld [vmem:[%s1 + $0x54c0] sm:$0xff]
    %v2741 = vld [vmem:[%s1 + $0x54c8] sm:$0xff]
    %v2742 = vld [vmem:[%s1 + $0x54d0] sm:$0xff]
    %v2743 = vld [vmem:[%s1 + $0x54d8] sm:$0xff]
    %v2744 = vld [vmem:[%s1 + $0x54e0] sm:$0xff]
    %v2745 = vld [vmem:[%s1 + $0x54e8] sm:$0xff]
    %v2746 = vld [vmem:[%s1 + $0x54f0] sm:$0xff]
    %v2747 = vld [vmem:[%s1 + $0x54f8] sm:$0xff]
    %v2748 = vld [vmem:[%s1 + $0x5500] sm:$0xff]
    %v2749 = vld [vmem:[%s1 + $0x5508] sm:$0xff]
    %v2750 = vld [vmem:[%s1 + $0x5510] sm:$0xff]
    %v2751 = vld [vmem:[%s1 + $0x5518] sm:$0xff]
    %v2752 = vld [vmem:[%s1 + $0x5520] sm:$0xff]
    %v2753 = vld [vmem:[%s1 + $0x5528] sm:$0xff]
    %v2754 = vld [vmem:[%s1 + $0x5530] sm:$0xff]
    %v2755 = vld [vmem:[%s1 + $0x5538] sm:$0xff]
    %v2756 = vld [vmem:[%s1 + $0x5540] sm:$0xff]
    %v2757 = vld [vmem:[%s1 + $0x5548] sm:$0xff]
    %v2758 = vld [vmem:[%s1 + $0x5550] sm:$0xff]
    %v2759 = vld [vmem:[%s1 + $0x5558] sm:$0xff]
    %v2760 = vld [vmem:[%s1 + $0x5560] sm:$0xff]
    %v2761 = vld [vmem:[%s1 + $0x5568] sm:$0xff]
    %v2762 = vld [vmem:[%s1 + $0x5570] sm:$0xff]
    %v2763 = vld [vmem:[%s1 + $0x5578] sm:$0xff]
    %v2764 = vld [vmem:[%s1 + $0x5580] sm:$0xff]
    %v2765 = vld [vmem:[%s1 + $0x5588] sm:$0xff]
    %v2766 = vld [vmem:[%s1 + $0x5590] sm:$0xff]
    %v2767 = vld [vmem:[%s1 + $0x5598] sm:$0xff]
    %v2768 = vld [vmem:[%s1 + $0x55a0] sm:$0xff]
    %v2769 = vld [vmem:[%s1 + $0x55a8] sm:$0xff]
    %v2770 = vld [vmem:[%s1 + $0x55b0] sm:$0xff]
    %v2771 = vld [vmem:[%s1 + $0x55b8] sm:$0xff]
    %v2772 = vld [vmem:[%s1 + $0x55c0] sm:$0xff]
    %v2773 = vld [vmem:[%s1 + $0x55c8] sm:$0xff]
    %v2774 = vld [vmem:[%s1 + $0x55d0] sm:$0xff]
    %v2775 = vld [vmem:[%s1 + $0x55d8] sm:$0xff]
    %v2776 = vld [vmem:[%s1 + $0x55e0] sm:$0xff]
    %v2777 = vld [vmem:[%s1 + $0x55e8] sm:$0xff]
    %v2778 = vld [vmem:[%s1 + $0x55f0] sm:$0xff]
    %v2779 = vld [vmem:[%s1 + $0x55f8] sm:$0xff]
    %v2780 = vld [vmem:[%s1 + $0x5600] sm:$0xff]
    %v2781 = vld [vmem:[%s1 + $0x5608] sm:$0xff]
    %v2782 = vld [vmem:[%s1 + $0x5610] sm:$0xff]
    %v2783 = vld [vmem:[%s1 + $0x5618] sm:$0xff]
    %v2784 = vld [vmem:[%s1 + $0x5620] sm:$0xff]
    %v2785 = vld [vmem:[%s1 + $0x5628] sm:$0xff]
    %v2786 = vld [vmem:[%s1 + $0x5630] sm:$0xff]
    %v2787 = vld [vmem:[%s1 + $0x5638] sm:$0xff]
    %v2788 = vld [vmem:[%s1 + $0x5640] sm:$0xff]
    %v2789 = vld [vmem:[%s1 + $0x5648] sm:$0xff]
    %v2790 = vld [vmem:[%s1 + $0x5650] sm:$0xff]
    %v2791 = vld [vmem:[%s1 + $0x5658] sm:$0xff]
    %v2792 = vld [vmem:[%s1 + $0x5660] sm:$0xff]
    %v2793 = vld [vmem:[%s1 + $0x5668] sm:$0xff]
    %v2794 = vld [vmem:[%s1 + $0x5670] sm:$0xff]
    %v2795 = vld [vmem:[%s1 + $0x5678] sm:$0xff]
    %v2796 = vld [vmem:[%s1 + $0x5680] sm:$0xff]
    %v2797 = vld [vmem:[%s1 + $0x5688] sm:$0xff]
    %v2798 = vld [vmem:[%s1 + $0x5690] sm:$0xff]
    %v2799 = vld [vmem:[%s1 + $0x5698] sm:$0xff]
    %v2800 = vld [vmem:[%s1 + $0x56a0] sm:$0xff]
    %v2801 = vld [vmem:[%s1 + $0x56a8] sm:$0xff]
    %v2802 = vld [vmem:[%s1 + $0x56b0] sm:$0xff]
    %v2803 = vld [vmem:[%s1 + $0x56b8] sm:$0xff]
    %v2804 = vld [vmem:[%s1 + $0x56c0] sm:$0xff]
    %v2805 = vld [vmem:[%s1 + $0x56c8] sm:$0xff]
    %v2806 = vld [vmem:[%s1 + $0x56d0] sm:$0xff]
    %v2807 = vld [vmem:[%s1 + $0x56d8] sm:$0xff]
    %v2808 = vld [vmem:[%s1 + $0x56e0] sm:$0xff]
    %v2809 = vld [vmem:[%s1 + $0x56e8] sm:$0xff]
    %v2810 = vld [vmem:[%s1 + $0x56f0] sm:$0xff]
    %v2811 = vld [vmem:[%s1 + $0x56f8] sm:$0xff]
    %v2812 = vld [vmem:[%s1 + $0x5700] sm:$0xff]
    %v2813 = vld [vmem:[%s1 + $0x5708] sm:$0xff]
    %v2814 = vld [vmem:[%s1 + $0x5710] sm:$0xff]
    %v2815 = vld [vmem:[%s1 + $0x5718] sm:$0xff]
    %v2816 = vld [vmem:[%s1 + $0x5720] sm:$0xff]
    %v2817 = vld [vmem:[%s1 + $0x5728] sm:$0xff]
    %v2818 = vld [vmem:[%s1 + $0x5730] sm:$0xff]
    %v2819 = vld [vmem:[%s1 + $0x5738] sm:$0xff]
    %v2820 = vld [vmem:[%s1 + $0x5740] sm:$0xff]
    %v2821 = vld [vmem:[%s1 + $0x5748] sm:$0xff]
    %v2822 = vld [vmem:[%s1 + $0x5750] sm:$0xff]
    %v2823 = vld [vmem:[%s1 + $0x5758] sm:$0xff]
    %v2824 = vld [vmem:[%s1 + $0x5760] sm:$0xff]
    %v2825 = vld [vmem:[%s1 + $0x5768] sm:$0xff]
    %v2826 = vld [vmem:[%s1 + $0x5770] sm:$0xff]
    %v2827 = vld [vmem:[%s1 + $0x5778] sm:$0xff]
    %v2828 = vld [vmem:[%s1 + $0x5780] sm:$0xff]
    %v2829 = vld [vmem:[%s1 + $0x5788] sm:$0xff]
    %v2830 = vld [vmem:[%s1 + $0x5790] sm:$0xff]
    %v2831 = vld [vmem:[%s1 + $0x5798] sm:$0xff]
    %v2832 = vld [vmem:[%s1 + $0x57a0] sm:$0xff]
    %v2833 = vld [vmem:[%s1 + $0x57a8] sm:$0xff]
    %v2834 = vld [vmem:[%s1 + $0x57b0] sm:$0xff]
    %v2835 = vld [vmem:[%s1 + $0x57b8] sm:$0xff]
    %v2836 = vld [vmem:[%s1 + $0x57c0] sm:$0xff]
    %v2837 = vld [vmem:[%s1 + $0x57c8] sm:$0xff]
    %v2838 = vld [vmem:[%s1 + $0x57d0] sm:$0xff]
    %v2839 = vld [vmem:[%s1 + $0x57d8] sm:$0xff]
    %v2840 = vld [vmem:[%s1 + $0x57e0] sm:$0xff]
    %v2841 = vld [vmem:[%s1 + $0x57e8] sm:$0xff]
    %v2842 = vld [vmem:[%s1 + $0x57f0] sm:$0xff]
    %v2843 = vld [vmem:[%s1 + $0x57f8] sm:$0xff]
    %v2844 = vld [vmem:[%s1 + $0x5800] sm:$0xff]
    %v2845 = vld [vmem:[%s1 + $0x5808] sm:$0xff]
    %v2846 = vld [vmem:[%s1 + $0x5810] sm:$0xff]
    %v2847 = vld [vmem:[%s1 + $0x5818] sm:$0xff]
    %v2848 = vld [vmem:[%s1 + $0x5820] sm:$0xff]
    %v2849 = vld [vmem:[%s1 + $0x5828] sm:$0xff]
    %v2850 = vld [vmem:[%s1 + $0x5830] sm:$0xff]
    %v2851 = vld [vmem:[%s1 + $0x5838] sm:$0xff]
    %v2852 = vld [vmem:[%s1 + $0x5840] sm:$0xff]
    %v2853 = vld [vmem:[%s1 + $0x5848] sm:$0xff]
    %v2854 = vld [vmem:[%s1 + $0x5850] sm:$0xff]
    %v2855 = vld [vmem:[%s1 + $0x5858] sm:$0xff]
    %v2856 = vld [vmem:[%s1 + $0x5860] sm:$0xff]
    %v2857 = vld [vmem:[%s1 + $0x5868] sm:$0xff]
    %v2858 = vld [vmem:[%s1 + $0x5870] sm:$0xff]
    %v2859 = vld [vmem:[%s1 + $0x5878] sm:$0xff]
    %v2860 = vld [vmem:[%s1 + $0x5880] sm:$0xff]
    %v2861 = vld [vmem:[%s1 + $0x5888] sm:$0xff]
    %v2862 = vld [vmem:[%s1 + $0x5890] sm:$0xff]
    %v2863 = vld [vmem:[%s1 + $0x5898] sm:$0xff]
    %v2864 = vld [vmem:[%s1 + $0x58a0] sm:$0xff]
    %v2865 = vld [vmem:[%s1 + $0x58a8] sm:$0xff]
    %v2866 = vld [vmem:[%s1 + $0x58b0] sm:$0xff]
    %v2867 = vld [vmem:[%s1 + $0x58b8] sm:$0xff]
    %v2868 = vld [vmem:[%s1 + $0x58c0] sm:$0xff]
    %v2869 = vld [vmem:[%s1 + $0x58c8] sm:$0xff]
    %v2870 = vld [vmem:[%s1 + $0x58d0] sm:$0xff]
    %v2871 = vld [vmem:[%s1 + $0x58d8] sm:$0xff]
    %v2872 = vld [vmem:[%s1 + $0x58e0] sm:$0xff]
    %v2873 = vld [vmem:[%s1 + $0x58e8] sm:$0xff]
    %v2874 = vld [vmem:[%s1 + $0x58f0] sm:$0xff]
    %v2875 = vld [vmem:[%s1 + $0x58f8] sm:$0xff]
    %v2876 = vld [vmem:[%s1 + $0x5900] sm:$0xff]
    %v2877 = vld [vmem:[%s1 + $0x5908] sm:$0xff]
    %v2878 = vld [vmem:[%s1 + $0x5910] sm:$0xff]
    %v2879 = vld [vmem:[%s1 + $0x5918] sm:$0xff]
    %v2880 = vld [vmem:[%s1 + $0x5920] sm:$0xff]
    %v2881 = vld [vmem:[%s1 + $0x5928] sm:$0xff]
    %v2882 = vld [vmem:[%s1 + $0x5930] sm:$0xff]
    %v2883 = vld [vmem:[%s1 + $0x5938] sm:$0xff]
    %v2884 = vld [vmem:[%s1 + $0x5940] sm:$0xff]
    %v2885 = vld [vmem:[%s1 + $0x5948] sm:$0xff]
    %v2886 = vld [vmem:[%s1 + $0x5950] sm:$0xff]
    %v2887 = vld [vmem:[%s1 + $0x5958] sm:$0xff]
    %v2888 = vld [vmem:[%s1 + $0x5960] sm:$0xff]
    %v2889 = vld [vmem:[%s1 + $0x5968] sm:$0xff]
    %v2890 = vld [vmem:[%s1 + $0x5970] sm:$0xff]
    %v2891 = vld [vmem:[%s1 + $0x5978] sm:$0xff]
    %v2892 = vld [vmem:[%s1 + $0x5980] sm:$0xff]
    %v2893 = vld [vmem:[%s1 + $0x5988] sm:$0xff]
    %v2894 = vld [vmem:[%s1 + $0x5990] sm:$0xff]
    %v2895 = vld [vmem:[%s1 + $0x5998] sm:$0xff]
    %v2896 = vld [vmem:[%s1 + $0x59a0] sm:$0xff]
    %v2897 = vld [vmem:[%s1 + $0x59a8] sm:$0xff]
    %v2898 = vld [vmem:[%s1 + $0x59b0] sm:$0xff]
    %v2899 = vld [vmem:[%s1 + $0x59b8] sm:$0xff]
    %v2900 = vld [vmem:[%s1 + $0x59c0] sm:$0xff]
    %v2901 = vld [vmem:[%s1 + $0x59c8] sm:$0xff]
    %v2902 = vld [vmem:[%s1 + $0x59d0] sm:$0xff]
    %v2903 = vld [vmem:[%s1 + $0x59d8] sm:$0xff]
    %v2904 = vld [vmem:[%s1 + $0x59e0] sm:$0xff]
    %v2905 = vld [vmem:[%s1 + $0x59e8] sm:$0xff]
    %v2906 = vld [vmem:[%s1 + $0x59f0] sm:$0xff]
    %v2907 = vld [vmem:[%s1 + $0x59f8] sm:$0xff]
    %v2908 = vld [vmem:[%s1 + $0x5a00] sm:$0xff]
    %v2909 = vld [vmem:[%s1 + $0x5a08] sm:$0xff]
    %v2910 = vld [vmem:[%s1 + $0x5a10] sm:$0xff]
    %v2911 = vld [vmem:[%s1 + $0x5a18] sm:$0xff]
    %v2912 = vld [vmem:[%s1 + $0x5a20] sm:$0xff]
    %v2913 = vld [vmem:[%s1 + $0x5a28] sm:$0xff]
    %v2914 = vld [vmem:[%s1 + $0x5a30] sm:$0xff]
    %v2915 = vld [vmem:[%s1 + $0x5a38] sm:$0xff]
    %v2916 = vld [vmem:[%s1 + $0x5a40] sm:$0xff]
    %v2917 = vld [vmem:[%s1 + $0x5a48] sm:$0xff]
    %v2918 = vld [vmem:[%s1 + $0x5a50] sm:$0xff]
    %v2919 = vld [vmem:[%s1 + $0x5a58] sm:$0xff]
    %v2920 = vld [vmem:[%s1 + $0x5a60] sm:$0xff]
    %v2921 = vld [vmem:[%s1 + $0x5a68] sm:$0xff]
    %v2922 = vld [vmem:[%s1 + $0x5a70] sm:$0xff]
    %v2923 = vld [vmem:[%s1 + $0x5a78] sm:$0xff]
    %v2924 = vld [vmem:[%s1 + $0x5a80] sm:$0xff]
    %v2925 = vld [vmem:[%s1 + $0x5a88] sm:$0xff]
    %v2926 = vld [vmem:[%s1 + $0x5a90] sm:$0xff]
    %v2927 = vld [vmem:[%s1 + $0x5a98] sm:$0xff]
    %v2928 = vld [vmem:[%s1 + $0x5aa0] sm:$0xff]
    %v2929 = vld [vmem:[%s1 + $0x5aa8] sm:$0xff]
    %v2930 = vld [vmem:[%s1 + $0x5ab0] sm:$0xff]
    %v2931 = vld [vmem:[%s1 + $0x5ab8] sm:$0xff]
    %v2932 = vld [vmem:[%s1 + $0x5ac0] sm:$0xff]
    %v2933 = vld [vmem:[%s1 + $0x5ac8] sm:$0xff]
    %v2934 = vld [vmem:[%s1 + $0x5ad0] sm:$0xff]
    %v2935 = vld [vmem:[%s1 + $0x5ad8] sm:$0xff]
    %v2936 = vld [vmem:[%s1 + $0x5ae0] sm:$0xff]
    %v2937 = vld [vmem:[%s1 + $0x5ae8] sm:$0xff]
    %v2938 = vld [vmem:[%s1 + $0x5af0] sm:$0xff]
    %v2939 = vld [vmem:[%s1 + $0x5af8] sm:$0xff]
    %v2940 = vld [vmem:[%s1 + $0x5b00] sm:$0xff]
    %v2941 = vld [vmem:[%s1 + $0x5b08] sm:$0xff]
    %v2942 = vld [vmem:[%s1 + $0x5b10] sm:$0xff]
    %v2943 = vld [vmem:[%s1 + $0x5b18] sm:$0xff]
    %v2944 = vld [vmem:[%s1 + $0x5b20] sm:$0xff]
    %v2945 = vld [vmem:[%s1 + $0x5b28] sm:$0xff]
    %v2946 = vld [vmem:[%s1 + $0x5b30] sm:$0xff]
    %v2947 = vld [vmem:[%s1 + $0x5b38] sm:$0xff]
    %v2948 = vld [vmem:[%s1 + $0x5b40] sm:$0xff]
    %v2949 = vld [vmem:[%s1 + $0x5b48] sm:$0xff]
    %v2950 = vld [vmem:[%s1 + $0x5b50] sm:$0xff]
    %v2951 = vld [vmem:[%s1 + $0x5b58] sm:$0xff]
    %v2952 = vld [vmem:[%s1 + $0x5b60] sm:$0xff]
    %v2953 = vld [vmem:[%s1 + $0x5b68] sm:$0xff]
    %v2954 = vld [vmem:[%s1 + $0x5b70] sm:$0xff]
    %v2955 = vld [vmem:[%s1 + $0x5b78] sm:$0xff]
    %v2956 = vld [vmem:[%s1 + $0x5b80] sm:$0xff]
    %v2957 = vld [vmem:[%s1 + $0x5b88] sm:$0xff]
    %v2958 = vld [vmem:[%s1 + $0x5b90] sm:$0xff]
    %v2959 = vld [vmem:[%s1 + $0x5b98] sm:$0xff]
    %v2960 = vld [vmem:[%s1 + $0x5ba0] sm:$0xff]
    %v2961 = vld [vmem:[%s1 + $0x5ba8] sm:$0xff]
    %v2962 = vld [vmem:[%s1 + $0x5bb0] sm:$0xff]
    %v2963 = vld [vmem:[%s1 + $0x5bb8] sm:$0xff]
    %v2964 = vld [vmem:[%s1 + $0x5bc0] sm:$0xff]
    %v2965 = vld [vmem:[%s1 + $0x5bc8] sm:$0xff]
    %v2966 = vld [vmem:[%s1 + $0x5bd0] sm:$0xff]
    %v2967 = vld [vmem:[%s1 + $0x5bd8] sm:$0xff]
    %v2968 = vld [vmem:[%s1 + $0x5be0] sm:$0xff]
    %v2969 = vld [vmem:[%s1 + $0x5be8] sm:$0xff]
    %v2970 = vld [vmem:[%s1 + $0x5bf0] sm:$0xff]
    %v2971 = vld [vmem:[%s1 + $0x5bf8] sm:$0xff]
    %v2972 = vld [vmem:[%s1 + $0x5c00] sm:$0xff]
    %v2973 = vld [vmem:[%s1 + $0x5c08] sm:$0xff]
    %v2974 = vld [vmem:[%s1 + $0x5c10] sm:$0xff]
    %v2975 = vld [vmem:[%s1 + $0x5c18] sm:$0xff]
    %v2976 = vld [vmem:[%s1 + $0x5c20] sm:$0xff]
    %v2977 = vld [vmem:[%s1 + $0x5c28] sm:$0xff]
    %v2978 = vld [vmem:[%s1 + $0x5c30] sm:$0xff]
    %v2979 = vld [vmem:[%s1 + $0x5c38] sm:$0xff]
    %v2980 = vld [vmem:[%s1 + $0x5c40] sm:$0xff]
    %v2981 = vld [vmem:[%s1 + $0x5c48] sm:$0xff]
    %v2982 = vld [vmem:[%s1 + $0x5c50] sm:$0xff]
    %v2983 = vld [vmem:[%s1 + $0x5c58] sm:$0xff]
    %v2984 = vld [vmem:[%s1 + $0x5c60] sm:$0xff]
    %v2985 = vld [vmem:[%s1 + $0x5c68] sm:$0xff]
    %v2986 = vld [vmem:[%s1 + $0x5c70] sm:$0xff]
    %v2987 = vld [vmem:[%s1 + $0x5c78] sm:$0xff]
    %v2988 = vld [vmem:[%s1 + $0x5c80] sm:$0xff]
    %v2989 = vld [vmem:[%s1 + $0x5c88] sm:$0xff]
    %v2990 = vld [vmem:[%s1 + $0x5c90] sm:$0xff]
    %v2991 = vld [vmem:[%s1 + $0x5c98] sm:$0xff]
    %v2992 = vld [vmem:[%s1 + $0x5ca0] sm:$0xff]
    %v2993 = vld [vmem:[%s1 + $0x5ca8] sm:$0xff]
    %v2994 = vld [vmem:[%s1 + $0x5cb0] sm:$0xff]
    %v2995 = vld [vmem:[%s1 + $0x5cb8] sm:$0xff]
    %v2996 = vld [vmem:[%s1 + $0x5cc0] sm:$0xff]
    %v2997 = vld [vmem:[%s1 + $0x5cc8] sm:$0xff]
    %v2998 = vld [vmem:[%s1 + $0x5cd0] sm:$0xff]
    %v2999 = vld [vmem:[%s1 + $0x5cd8] sm:$0xff]
    %v3000 = vld [vmem:[%s1 + $0x5ce0] sm:$0xff]
    %v3001 = vld [vmem:[%s1 + $0x5ce8] sm:$0xff]
    %v3002 = vld [vmem:[%s1 + $0x5cf0] sm:$0xff]
    %v3003 = vld [vmem:[%s1 + $0x5cf8] sm:$0xff]
    %v3004 = vld [vmem:[%s1 + $0x5d00] sm:$0xff]
    %v3005 = vld [vmem:[%s1 + $0x5d08] sm:$0xff]
    %v3006 = vld [vmem:[%s1 + $0x5d10] sm:$0xff]
    %v3007 = vld [vmem:[%s1 + $0x5d18] sm:$0xff]
    %v3008 = vld [vmem:[%s1 + $0x5d20] sm:$0xff]
    %v3009 = vld [vmem:[%s1 + $0x5d28] sm:$0xff]
    %v3010 = vld [vmem:[%s1 + $0x5d30] sm:$0xff]
    %v3011 = vld [vmem:[%s1 + $0x5d38] sm:$0xff]
    %v3012 = vld [vmem:[%s1 + $0x5d40] sm:$0xff]
    %v3013 = vld [vmem:[%s1 + $0x5d48] sm:$0xff]
    %v3014 = vld [vmem:[%s1 + $0x5d50] sm:$0xff]
    %v3015 = vld [vmem:[%s1 + $0x5d58] sm:$0xff]
    %v3016 = vld [vmem:[%s1 + $0x5d60] sm:$0xff]
    %v3017 = vld [vmem:[%s1 + $0x5d68] sm:$0xff]
    %v3018 = vld [vmem:[%s1 + $0x5d70] sm:$0xff]
    %v3019 = vld [vmem:[%s1 + $0x5d78] sm:$0xff]
    %v3020 = vld [vmem:[%s1 + $0x5d80] sm:$0xff]
    %v3021 = vld [vmem:[%s1 + $0x5d88] sm:$0xff]
    %v3022 = vld [vmem:[%s1 + $0x5d90] sm:$0xff]
    %v3023 = vld [vmem:[%s1 + $0x5d98] sm:$0xff]
    %v3024 = vld [vmem:[%s1 + $0x5da0] sm:$0xff]
    %v3025 = vld [vmem:[%s1 + $0x5da8] sm:$0xff]
    %v3026 = vld [vmem:[%s1 + $0x5db0] sm:$0xff]
    %v3027 = vld [vmem:[%s1 + $0x5db8] sm:$0xff]
    %v3028 = vld [vmem:[%s1 + $0x5dc0] sm:$0xff]
    %v3029 = vld [vmem:[%s1 + $0x5dc8] sm:$0xff]
    %v3030 = vld [vmem:[%s1 + $0x5dd0] sm:$0xff]
    %v3031 = vld [vmem:[%s1 + $0x5dd8] sm:$0xff]
    %v3032 = vld [vmem:[%s1 + $0x5de0] sm:$0xff]
    %v3033 = vld [vmem:[%s1 + $0x5de8] sm:$0xff]
    %v3034 = vld [vmem:[%s1 + $0x5df0] sm:$0xff]
    %v3035 = vld [vmem:[%s1 + $0x5df8] sm:$0xff]
    %v3036 = vld [vmem:[%s1 + $0x5e00] sm:$0xff]
    %v3037 = vld [vmem:[%s1 + $0x5e08] sm:$0xff]
    %v3038 = vld [vmem:[%s1 + $0x5e10] sm:$0xff]
    %v3039 = vld [vmem:[%s1 + $0x5e18] sm:$0xff]
    %v3040 = vld [vmem:[%s1 + $0x5e20] sm:$0xff]
    %v3041 = vld [vmem:[%s1 + $0x5e28] sm:$0xff]
    %v3042 = vld [vmem:[%s1 + $0x5e30] sm:$0xff]
    %v3043 = vld [vmem:[%s1 + $0x5e38] sm:$0xff]
    %v3044 = vld [vmem:[%s1 + $0x5e40] sm:$0xff]
    %v3045 = vld [vmem:[%s1 + $0x5e48] sm:$0xff]
    %v3046 = vld [vmem:[%s1 + $0x5e50] sm:$0xff]
    %v3047 = vld [vmem:[%s1 + $0x5e58] sm:$0xff]
    %v3048 = vld [vmem:[%s1 + $0x5e60] sm:$0xff]
    %v3049 = vld [vmem:[%s1 + $0x5e68] sm:$0xff]
    %v3050 = vld [vmem:[%s1 + $0x5e70] sm:$0xff]
    %v3051 = vld [vmem:[%s1 + $0x5e78] sm:$0xff]
    %v3052 = vld [vmem:[%s1 + $0x5e80] sm:$0xff]
    %v3053 = vld [vmem:[%s1 + $0x5e88] sm:$0xff]
    %v3054 = vld [vmem:[%s1 + $0x5e90] sm:$0xff]
    %v3055 = vld [vmem:[%s1 + $0x5e98] sm:$0xff]
    %v3056 = vld [vmem:[%s1 + $0x5ea0] sm:$0xff]
    %v3057 = vld [vmem:[%s1 + $0x5ea8] sm:$0xff]
    %v3058 = vld [vmem:[%s1 + $0x5eb0] sm:$0xff]
    %v3059 = vld [vmem:[%s1 + $0x5eb8] sm:$0xff]
    %v3060 = vld [vmem:[%s1 + $0x5ec0] sm:$0xff]
    %v3061 = vld [vmem:[%s1 + $0x5ec8] sm:$0xff]
    %v3062 = vld [vmem:[%s1 + $0x5ed0] sm:$0xff]
    %v3063 = vld [vmem:[%s1 + $0x5ed8] sm:$0xff]
    %v3064 = vld [vmem:[%s1 + $0x5ee0] sm:$0xff]
    %v3065 = vld [vmem:[%s1 + $0x5ee8] sm:$0xff]
    %v3066 = vld [vmem:[%s1 + $0x5ef0] sm:$0xff]
    %v3067 = vld [vmem:[%s1 + $0x5ef8] sm:$0xff]
    %v3068 = vld [vmem:[%s1 + $0x5f00] sm:$0xff]
    %v3069 = vld [vmem:[%s1 + $0x5f08] sm:$0xff]
    %v3070 = vld [vmem:[%s1 + $0x5f10] sm:$0xff]
    %v3071 = vld [vmem:[%s1 + $0x5f18] sm:$0xff]
    %v3072 = vld [vmem:[%s1 + $0x5f20] sm:$0xff]
    %v3073 = vld [vmem:[%s1 + $0x5f28] sm:$0xff]
    %v3074 = vld [vmem:[%s1 + $0x5f30] sm:$0xff]
    %v3075 = vld [vmem:[%s1 + $0x5f38] sm:$0xff]
    %v3076 = vld [vmem:[%s1 + $0x5f40] sm:$0xff]
    %v3077 = vld [vmem:[%s1 + $0x5f48] sm:$0xff]
    %v3078 = vld [vmem:[%s1 + $0x5f50] sm:$0xff]
    %v3079 = vld [vmem:[%s1 + $0x5f58] sm:$0xff]
    %v3080 = vld [vmem:[%s1 + $0x5f60] sm:$0xff]
    %v3081 = vld [vmem:[%s1 + $0x5f68] sm:$0xff]
    %v3082 = vld [vmem:[%s1 + $0x5f70] sm:$0xff]
    %v3083 = vld [vmem:[%s1 + $0x5f78] sm:$0xff]
    %v3084 = vld [vmem:[%s1 + $0x5f80] sm:$0xff]
    %v3085 = vld [vmem:[%s1 + $0x5f88] sm:$0xff]
    %v3086 = vld [vmem:[%s1 + $0x5f90] sm:$0xff]
    %v3087 = vld [vmem:[%s1 + $0x5f98] sm:$0xff]
    %v3088 = vld [vmem:[%s1 + $0x5fa0] sm:$0xff]
    %v3089 = vld [vmem:[%s1 + $0x5fa8] sm:$0xff]
    %v3090 = vld [vmem:[%s1 + $0x5fb0] sm:$0xff]
    %v3091 = vld [vmem:[%s1 + $0x5fb8] sm:$0xff]
    %v3092 = vld [vmem:[%s1 + $0x5fc0] sm:$0xff]
    %v3093 = vld [vmem:[%s1 + $0x5fc8] sm:$0xff]
    %v3094 = vld [vmem:[%s1 + $0x5fd0] sm:$0xff]
    %v3095 = vld [vmem:[%s1 + $0x5fd8] sm:$0xff]
    %v3096 = vld [vmem:[%s1 + $0x5fe0] sm:$0xff]
    %v3097 = vld [vmem:[%s1 + $0x5fe8] sm:$0xff]
    %v3098 = vld [vmem:[%s1 + $0x5ff0] sm:$0xff]
    %v3099 = vld [vmem:[%s1 + $0x5ff8] sm:$0xff]
    %v3100 = vld [vmem:[%s1 + $0x6000] sm:$0xff]
    %v3101 = vld [vmem:[%s1 + $0x6008] sm:$0xff]
    %v3102 = vld [vmem:[%s1 + $0x6010] sm:$0xff]
    %v3103 = vld [vmem:[%s1 + $0x6018] sm:$0xff]
    %v3104 = vld [vmem:[%s1 + $0x6020] sm:$0xff]
    %v3105 = vld [vmem:[%s1 + $0x6028] sm:$0xff]
    %v3106 = vld [vmem:[%s1 + $0x6030] sm:$0xff]
    %v3107 = vld [vmem:[%s1 + $0x6038] sm:$0xff]
    %v3108 = vld [vmem:[%s1 + $0x6040] sm:$0xff]
    %v3109 = vld [vmem:[%s1 + $0x6048] sm:$0xff]
    %v3110 = vld [vmem:[%s1 + $0x6050] sm:$0xff]
    %v3111 = vld [vmem:[%s1 + $0x6058] sm:$0xff]
    %v3112 = vld [vmem:[%s1 + $0x6060] sm:$0xff]
    %v3113 = vld [vmem:[%s1 + $0x6068] sm:$0xff]
    %v3114 = vld [vmem:[%s1 + $0x6070] sm:$0xff]
    %v3115 = vld [vmem:[%s1 + $0x6078] sm:$0xff]
    %v3116 = vld [vmem:[%s1 + $0x6080] sm:$0xff]
    %v3117 = vld [vmem:[%s1 + $0x6088] sm:$0xff]
    %v3118 = vld [vmem:[%s1 + $0x6090] sm:$0xff]
    %v3119 = vld [vmem:[%s1 + $0x6098] sm:$0xff]
    %v3120 = vld [vmem:[%s1 + $0x60a0] sm:$0xff]
    %v3121 = vld [vmem:[%s1 + $0x60a8] sm:$0xff]
    %v3122 = vld [vmem:[%s1 + $0x60b0] sm:$0xff]
    %v3123 = vld [vmem:[%s1 + $0x60b8] sm:$0xff]
    %v3124 = vld [vmem:[%s1 + $0x60c0] sm:$0xff]
    %v3125 = vld [vmem:[%s1 + $0x60c8] sm:$0xff]
    %v3126 = vld [vmem:[%s1 + $0x60d0] sm:$0xff]
    %v3127 = vld [vmem:[%s1 + $0x60d8] sm:$0xff]
    %v3128 = vld [vmem:[%s1 + $0x60e0] sm:$0xff]
    %v3129 = vld [vmem:[%s1 + $0x60e8] sm:$0xff]
    %v3130 = vld [vmem:[%s1 + $0x60f0] sm:$0xff]
    %v3131 = vld [vmem:[%s1 + $0x60f8] sm:$0xff]
    %v3132 = vld [vmem:[%s1 + $0x6100] sm:$0xff]
    %v3133 = vld [vmem:[%s1 + $0x6108] sm:$0xff]
    %v3134 = vld [vmem:[%s1 + $0x6110] sm:$0xff]
    %v3135 = vld [vmem:[%s1 + $0x6118] sm:$0xff]
    %v3136 = vld [vmem:[%s1 + $0x6120] sm:$0xff]
    %v3137 = vld [vmem:[%s1 + $0x6128] sm:$0xff]
    %v3138 = vld [vmem:[%s1 + $0x6130] sm:$0xff]
    %v3139 = vld [vmem:[%s1 + $0x6138] sm:$0xff]
    %v3140 = vld [vmem:[%s1 + $0x6140] sm:$0xff]
    %v3141 = vld [vmem:[%s1 + $0x6148] sm:$0xff]
    %v3142 = vld [vmem:[%s1 + $0x6150] sm:$0xff]
    %v3143 = vld [vmem:[%s1 + $0x6158] sm:$0xff]
    %v3144 = vld [vmem:[%s1 + $0x6160] sm:$0xff]
    %v3145 = vld [vmem:[%s1 + $0x6168] sm:$0xff]
    %v3146 = vld [vmem:[%s1 + $0x6170] sm:$0xff]
    %v3147 = vld [vmem:[%s1 + $0x6178] sm:$0xff]
    %v3148 = vld [vmem:[%s1 + $0x6180] sm:$0xff]
    %v3149 = vld [vmem:[%s1 + $0x6188] sm:$0xff]
    %v3150 = vld [vmem:[%s1 + $0x6190] sm:$0xff]
    %v3151 = vld [vmem:[%s1 + $0x6198] sm:$0xff]
    %v3152 = vld [vmem:[%s1 + $0x61a0] sm:$0xff]
    %v3153 = vld [vmem:[%s1 + $0x61a8] sm:$0xff]
    %v3154 = vld [vmem:[%s1 + $0x61b0] sm:$0xff]
    %v3155 = vld [vmem:[%s1 + $0x61b8] sm:$0xff]
    %v3156 = vld [vmem:[%s1 + $0x61c0] sm:$0xff]
    %v3157 = vld [vmem:[%s1 + $0x61c8] sm:$0xff]
    %v3158 = vld [vmem:[%s1 + $0x61d0] sm:$0xff]
    %v3159 = vld [vmem:[%s1 + $0x61d8] sm:$0xff]
    %v3160 = vld [vmem:[%s1 + $0x61e0] sm:$0xff]
    %v3161 = vld [vmem:[%s1 + $0x61e8] sm:$0xff]
    %v3162 = vld [vmem:[%s1 + $0x61f0] sm:$0xff]
    %v3163 = vld [vmem:[%s1 + $0x61f8] sm:$0xff]
    %v3164 = vld [vmem:[%s2] sm:$0xff]
    %v3166 = vperm.slane %v3164, 0
    %v3167 = vperm.slane %v3164, 1
    %v3168 = vperm.slane %v3164, 2
    %v3169 = vperm.slane %v3164, 3
    %v3170 = vperm.slane %v3164, 4
    %v3171 = vperm.slane %v3164, 5
    %v3172 = vperm.slane %v3164, 6
    %v3173 = vperm.slane %v3164, 7
    %3189 = vst [vmem:[#allocation1] ss:$4 sm:$0xff] %v21
    %s3190 = scalar_lea.vmem [#allocation1], 32
    %3191 = vst [vmem:[%s3190] ss:$4 sm:$0xff] %v22
    %v3192 = vld.sshfl [vmem:[#allocation1] sm:$0xff pattern:$0x73625140]
    %v3193 = vld.sshfl [vmem:[#allocation1 + $0x8] sm:$0xff pattern:$0x73625140]
    %v3194 = vld.sshfl [vmem:[#allocation1 + $0x10] sm:$0xff pattern:$0x73625140]
    %v3195 = vld.sshfl [vmem:[#allocation1 + $0x18] sm:$0xff pattern:$0x73625140]
    %v3196 = vld.sshfl [vmem:[#allocation1 + $0x20] sm:$0xff pattern:$0x73625140]
    %v3197 = vld.sshfl [vmem:[#allocation1 + $0x28] sm:$0xff pattern:$0x73625140]
    %v3198 = vld.sshfl [vmem:[#allocation1 + $0x30] sm:$0xff pattern:$0x73625140]
    %v3199 = vld.sshfl [vmem:[#allocation1 + $0x38] sm:$0xff pattern:$0x73625140]
    %3200 = vst [vmem:[#allocation1] ss:$4 sm:$0xff] %v23
    %3201 = vst [vmem:[%s3190] ss:$4 sm:$0xff] %v24
    %v3202 = vld.sshfl [vmem:[#allocation1] sm:$0xff pattern:$0x73625140]
    %v3203 = vld.sshfl [vmem:[#allocation1 + $0x8] sm:$0xff pattern:$0x73625140]
    %v3204 = vld.sshfl [vmem:[#allocation1 + $0x10] sm:$0xff pattern:$0x73625140]
    %v3205 = vld.sshfl [vmem:[#allocation1 + $0x18] sm:$0xff pattern:$0x73625140]
    %v3206 = vld.sshfl [vmem:[#allocation1 + $0x20] sm:$0xff pattern:$0x73625140]
    %v3207 = vld.sshfl [vmem:[#allocation1 + $0x28] sm:$0xff pattern:$0x73625140]
    %v3208 = vld.sshfl [vmem:[#allocation1 + $0x30] sm:$0xff pattern:$0x73625140]
    %v3209 = vld.sshfl [vmem:[#allocation1 + $0x38] sm:$0xff pattern:$0x73625140]
    %3210 = vst [vmem:[#allocation1] ss:$4 sm:$0xff] %v25
    %3211 = vst [vmem:[%s3190] ss:$4 sm:$0xff] %v26
    %v3212 = vld.sshfl [vmem:[#allocation1] sm:$0xff pattern:$0x73625140]
    %v3213 = vld.sshfl [vmem:[#allocation1 + $0x8] sm:$0xff pattern:$0x73625140]
    %v3214 = vld.sshfl [vmem:[#allocation1 + $0x10] sm:$0xff pattern:$0x73625140]
    %v3215 = vld.sshfl [vmem:[#allocation1 + $0x18] sm:$0xff pattern:$0x73625140]
    %v3216 = vld.sshfl [vmem:[#allocation1 + $0x20] sm:$0xff pattern:$0x73625140]
    %v3217 = vld.sshfl [vmem:[#allocation1 + $0x28] sm:$0xff pattern:$0x73625140]
    %v3218 = vld.sshfl [vmem:[#allocation1 + $0x30] sm:$0xff pattern:$0x73625140]
    %v3219 = vld.sshfl [vmem:[#allocation1 + $0x38] sm:$0xff pattern:$0x73625140]
    %3220 = vst [vmem:[#allocation1] ss:$4 sm:$0xff] %v27
    %v3221 = vld.sshfl [vmem:[#allocation1] sm:$0xff pattern:$0x73625140]
    %vm3246 = vcmask 523264
    %v3247 = vsel %vm3246, %v3221, 0
    %3249 = vmatpush.msra.mxu0 %v148
    %3250 = vmatpush.msra.mxu0 %v140
    %3251 = vmatpush.msra.mxu0 %v132
    %3252 = vmatpush.msra.mxu0 %v124
    %3253 = vmatpush.msra.mxu0 %v116
    %3254 = vmatpush.msra.mxu0 %v108
    %3255 = vmatpush.msra.mxu0 %v100
    %3256 = vmatpush.msra.mxu0 %v92
    %3257 = vmatpush.msra.mxu0 %v84
    %3258 = vmatpush.msra.mxu0 %v76
    %3259 = vmatpush.msra.mxu0 %v68
    %3260 = vmatpush.msra.mxu0 %v60
    %3261 = vmatpush.msra.mxu0 %v52
    %3262 = vmatpush.msra.mxu0 %v44
    %3263 = vmatpush.msra.mxu0 %v36
    %3264 = vmatpush.msra.mxu0 %v28
    %3265 = vmatmul.f32.gmra.mxu0 %v3192
    %v3266 = vpop.f32.mrf.mxu0
    %v3267 = vadd.f32 %v3166, %v3266
    %3268 = vdwg.mxu0
    %3269 = vmatpush.msra.mxu0 %v276
    %3270 = vmatpush.msra.mxu0 %v268
    %3271 = vmatpush.msra.mxu0 %v260
    %3272 = vmatpush.msra.mxu0 %v252
    %3273 = vmatpush.msra.mxu0 %v244
    %3274 = vmatpush.msra.mxu0 %v236
    %3275 = vmatpush.msra.mxu0 %v228
    %3276 = vmatpush.msra.mxu0 %v220
    %3277 = vmatpush.msra.mxu0 %v212
    %3278 = vmatpush.msra.mxu0 %v204
    %3279 = vmatpush.msra.mxu0 %v196
    %3280 = vmatpush.msra.mxu0 %v188
    %3281 = vmatpush.msra.mxu0 %v180
    %3282 = vmatpush.msra.mxu0 %v172
    %3283 = vmatpush.msra.mxu0 %v164
    %3284 = vmatpush.msra.mxu0 %v156
    %3285 = vmatmul.f32.gmra.mxu0 %v3193
    %v3286 = vpop.f32.mrf.mxu0
    %v3287 = vadd.f32 %v3267, %v3286
    %3288 = vdwg.mxu0
    %3289 = vmatpush.msra.mxu0 %v404
    %3290 = vmatpush.msra.mxu0 %v396
    %3291 = vmatpush.msra.mxu0 %v388
    %3292 = vmatpush.msra.mxu0 %v380
    %3293 = vmatpush.msra.mxu0 %v372
    %3294 = vmatpush.msra.mxu0 %v364
    %3295 = vmatpush.msra.mxu0 %v356
    %3296 = vmatpush.msra.mxu0 %v348
    %3297 = vmatpush.msra.mxu0 %v340
    %3298 = vmatpush.msra.mxu0 %v332
    %3299 = vmatpush.msra.mxu0 %v324
    %3300 = vmatpush.msra.mxu0 %v316
    %3301 = vmatpush.msra.mxu0 %v308
    %3302 = vmatpush.msra.mxu0 %v300
    %3303 = vmatpush.msra.mxu0 %v292
    %3304 = vmatpush.msra.mxu0 %v284
    %3305 = vmatmul.f32.gmra.mxu0 %v3194
    %v3306 = vpop.f32.mrf.mxu0
    %v3307 = vadd.f32 %v3287, %v3306
    %3308 = vdwg.mxu0
    %3309 = vmatpush.msra.mxu0 %v532
    %3310 = vmatpush.msra.mxu0 %v524
    %3311 = vmatpush.msra.mxu0 %v516
    %3312 = vmatpush.msra.mxu0 %v508
    %3313 = vmatpush.msra.mxu0 %v500
    %3314 = vmatpush.msra.mxu0 %v492
    %3315 = vmatpush.msra.mxu0 %v484
    %3316 = vmatpush.msra.mxu0 %v476
    %3317 = vmatpush.msra.mxu0 %v468
    %3318 = vmatpush.msra.mxu0 %v460
    %3319 = vmatpush.msra.mxu0 %v452
    %3320 = vmatpush.msra.mxu0 %v444
    %3321 = vmatpush.msra.mxu0 %v436
    %3322 = vmatpush.msra.mxu0 %v428
    %3323 = vmatpush.msra.mxu0 %v420
    %3324 = vmatpush.msra.mxu0 %v412
    %3325 = vmatmul.f32.gmra.mxu0 %v3195
    %v3326 = vpop.f32.mrf.mxu0
    %v3327 = vadd.f32 %v3307, %v3326
    %3328 = vdwg.mxu0
    %3329 = vmatpush.msra.mxu0 %v660
    %3330 = vmatpush.msra.mxu0 %v652
    %3331 = vmatpush.msra.mxu0 %v644
    %3332 = vmatpush.msra.mxu0 %v636
    %3333 = vmatpush.msra.mxu0 %v628
    %3334 = vmatpush.msra.mxu0 %v620
    %3335 = vmatpush.msra.mxu0 %v612
    %3336 = vmatpush.msra.mxu0 %v604
    %3337 = vmatpush.msra.mxu0 %v596
    %3338 = vmatpush.msra.mxu0 %v588
    %3339 = vmatpush.msra.mxu0 %v580
    %3340 = vmatpush.msra.mxu0 %v572
    %3341 = vmatpush.msra.mxu0 %v564
    %3342 = vmatpush.msra.mxu0 %v556
    %3343 = vmatpush.msra.mxu0 %v548
    %3344 = vmatpush.msra.mxu0 %v540
    %3345 = vmatmul.f32.gmra.mxu0 %v3196
    %v3346 = vpop.f32.mrf.mxu0
    %v3347 = vadd.f32 %v3327, %v3346
    %3348 = vdwg.mxu0
    %3349 = vmatpush.msra.mxu0 %v788
    %3350 = vmatpush.msra.mxu0 %v780
    %3351 = vmatpush.msra.mxu0 %v772
    %3352 = vmatpush.msra.mxu0 %v764
    %3353 = vmatpush.msra.mxu0 %v756
    %3354 = vmatpush.msra.mxu0 %v748
    %3355 = vmatpush.msra.mxu0 %v740
    %3356 = vmatpush.msra.mxu0 %v732
    %3357 = vmatpush.msra.mxu0 %v724
    %3358 = vmatpush.msra.mxu0 %v716
    %3359 = vmatpush.msra.mxu0 %v708
    %3360 = vmatpush.msra.mxu0 %v700
    %3361 = vmatpush.msra.mxu0 %v692
    %3362 = vmatpush.msra.mxu0 %v684
    %3363 = vmatpush.msra.mxu0 %v676
    %3364 = vmatpush.msra.mxu0 %v668
    %3365 = vmatmul.f32.gmra.mxu0 %v3197
    %v3366 = vpop.f32.mrf.mxu0
    %v3367 = vadd.f32 %v3347, %v3366
    %3368 = vdwg.mxu0
    %3369 = vmatpush.msra.mxu0 %v916
    %3370 = vmatpush.msra.mxu0 %v908
    %3371 = vmatpush.msra.mxu0 %v900
    %3372 = vmatpush.msra.mxu0 %v892
    %3373 = vmatpush.msra.mxu0 %v884
    %3374 = vmatpush.msra.mxu0 %v876
    %3375 = vmatpush.msra.mxu0 %v868
    %3376 = vmatpush.msra.mxu0 %v860
    %3377 = vmatpush.msra.mxu0 %v852
    %3378 = vmatpush.msra.mxu0 %v844
    %3379 = vmatpush.msra.mxu0 %v836
    %3380 = vmatpush.msra.mxu0 %v828
    %3381 = vmatpush.msra.mxu0 %v820
    %3382 = vmatpush.msra.mxu0 %v812
    %3383 = vmatpush.msra.mxu0 %v804
    %3384 = vmatpush.msra.mxu0 %v796
    %3385 = vmatmul.f32.gmra.mxu0 %v3198
    %v3386 = vpop.f32.mrf.mxu0
    %v3387 = vadd.f32 %v3367, %v3386
    %3388 = vdwg.mxu0
    %3389 = vmatpush.msra.mxu0 %v1044
    %3390 = vmatpush.msra.mxu0 %v1036
    %3391 = vmatpush.msra.mxu0 %v1028
    %3392 = vmatpush.msra.mxu0 %v1020
    %3393 = vmatpush.msra.mxu0 %v1012
    %3394 = vmatpush.msra.mxu0 %v1004
    %3395 = vmatpush.msra.mxu0 %v996
    %3396 = vmatpush.msra.mxu0 %v988
    %3397 = vmatpush.msra.mxu0 %v980
    %3398 = vmatpush.msra.mxu0 %v972
    %3399 = vmatpush.msra.mxu0 %v964
    %3400 = vmatpush.msra.mxu0 %v956
    %3401 = vmatpush.msra.mxu0 %v948
    %3402 = vmatpush.msra.mxu0 %v940
    %3403 = vmatpush.msra.mxu0 %v932
    %3404 = vmatpush.msra.mxu0 %v924
    %3405 = vmatmul.f32.gmra.mxu0 %v3199
    %v3406 = vpop.f32.mrf.mxu0
    %v3407 = vadd.f32 %v3387, %v3406
    %3408 = vdwg.mxu0
    %3409 = vmatpush.msra.mxu0 %v1172
    %3410 = vmatpush.msra.mxu0 %v1164
    %3411 = vmatpush.msra.mxu0 %v1156
    %3412 = vmatpush.msra.mxu0 %v1148
    %3413 = vmatpush.msra.mxu0 %v1140
    %3414 = vmatpush.msra.mxu0 %v1132
    %3415 = vmatpush.msra.mxu0 %v1124
    %3416 = vmatpush.msra.mxu0 %v1116
    %3417 = vmatpush.msra.mxu0 %v1108
    %3418 = vmatpush.msra.mxu0 %v1100
    %3419 = vmatpush.msra.mxu0 %v1092
    %3420 = vmatpush.msra.mxu0 %v1084
    %3421 = vmatpush.msra.mxu0 %v1076
    %3422 = vmatpush.msra.mxu0 %v1068
    %3423 = vmatpush.msra.mxu0 %v1060
    %3424 = vmatpush.msra.mxu0 %v1052
    %3425 = vmatmul.f32.gmra.mxu0 %v3202
    %v3426 = vpop.f32.mrf.mxu0
    %v3427 = vadd.f32 %v3407, %v3426
    %3428 = vdwg.mxu0
    %3429 = vmatpush.msra.mxu0 %v1300
    %3430 = vmatpush.msra.mxu0 %v1292
    %3431 = vmatpush.msra.mxu0 %v1284
    %3432 = vmatpush.msra.mxu0 %v1276
    %3433 = vmatpush.msra.mxu0 %v1268
    %3434 = vmatpush.msra.mxu0 %v1260
    %3435 = vmatpush.msra.mxu0 %v1252
    %3436 = vmatpush.msra.mxu0 %v1244
    %3437 = vmatpush.msra.mxu0 %v1236
    %3438 = vmatpush.msra.mxu0 %v1228
    %3439 = vmatpush.msra.mxu0 %v1220
    %3440 = vmatpush.msra.mxu0 %v1212
    %3441 = vmatpush.msra.mxu0 %v1204
    %3442 = vmatpush.msra.mxu0 %v1196
    %3443 = vmatpush.msra.mxu0 %v1188
    %3444 = vmatpush.msra.mxu0 %v1180
    %3445 = vmatmul.f32.gmra.mxu0 %v3203
    %v3446 = vpop.f32.mrf.mxu0
    %v3447 = vadd.f32 %v3427, %v3446
    %3448 = vdwg.mxu0
    %3449 = vmatpush.msra.mxu0 %v1428
    %3450 = vmatpush.msra.mxu0 %v1420
    %3451 = vmatpush.msra.mxu0 %v1412
    %3452 = vmatpush.msra.mxu0 %v1404
    %3453 = vmatpush.msra.mxu0 %v1396
    %3454 = vmatpush.msra.mxu0 %v1388
    %3455 = vmatpush.msra.mxu0 %v1380
    %3456 = vmatpush.msra.mxu0 %v1372
    %3457 = vmatpush.msra.mxu0 %v1364
    %3458 = vmatpush.msra.mxu0 %v1356
    %3459 = vmatpush.msra.mxu0 %v1348
    %3460 = vmatpush.msra.mxu0 %v1340
    %3461 = vmatpush.msra.mxu0 %v1332
    %3462 = vmatpush.msra.mxu0 %v1324
    %3463 = vmatpush.msra.mxu0 %v1316
    %3464 = vmatpush.msra.mxu0 %v1308
    %3465 = vmatmul.f32.gmra.mxu0 %v3204
    %v3466 = vpop.f32.mrf.mxu0
    %v3467 = vadd.f32 %v3447, %v3466
    %3468 = vdwg.mxu0
    %3469 = vmatpush.msra.mxu0 %v1556
    %3470 = vmatpush.msra.mxu0 %v1548
    %3471 = vmatpush.msra.mxu0 %v1540
    %3472 = vmatpush.msra.mxu0 %v1532
    %3473 = vmatpush.msra.mxu0 %v1524
    %3474 = vmatpush.msra.mxu0 %v1516
    %3475 = vmatpush.msra.mxu0 %v1508
    %3476 = vmatpush.msra.mxu0 %v1500
    %3477 = vmatpush.msra.mxu0 %v1492
    %3478 = vmatpush.msra.mxu0 %v1484
    %3479 = vmatpush.msra.mxu0 %v1476
    %3480 = vmatpush.msra.mxu0 %v1468
    %3481 = vmatpush.msra.mxu0 %v1460
    %3482 = vmatpush.msra.mxu0 %v1452
    %3483 = vmatpush.msra.mxu0 %v1444
    %3484 = vmatpush.msra.mxu0 %v1436
    %3485 = vmatmul.f32.gmra.mxu0 %v3205
    %v3486 = vpop.f32.mrf.mxu0
    %v3487 = vadd.f32 %v3467, %v3486
    %3488 = vdwg.mxu0
    %3489 = vmatpush.msra.mxu0 %v1684
    %3490 = vmatpush.msra.mxu0 %v1676
    %3491 = vmatpush.msra.mxu0 %v1668
    %3492 = vmatpush.msra.mxu0 %v1660
    %3493 = vmatpush.msra.mxu0 %v1652
    %3494 = vmatpush.msra.mxu0 %v1644
    %3495 = vmatpush.msra.mxu0 %v1636
    %3496 = vmatpush.msra.mxu0 %v1628
    %3497 = vmatpush.msra.mxu0 %v1620
    %3498 = vmatpush.msra.mxu0 %v1612
    %3499 = vmatpush.msra.mxu0 %v1604
    %3500 = vmatpush.msra.mxu0 %v1596
    %3501 = vmatpush.msra.mxu0 %v1588
    %3502 = vmatpush.msra.mxu0 %v1580
    %3503 = vmatpush.msra.mxu0 %v1572
    %3504 = vmatpush.msra.mxu0 %v1564
    %3505 = vmatmul.f32.gmra.mxu0 %v3206
    %v3506 = vpop.f32.mrf.mxu0
    %v3507 = vadd.f32 %v3487, %v3506
    %3508 = vdwg.mxu0
    %3509 = vmatpush.msra.mxu0 %v1812
    %3510 = vmatpush.msra.mxu0 %v1804
    %3511 = vmatpush.msra.mxu0 %v1796
    %3512 = vmatpush.msra.mxu0 %v1788
    %3513 = vmatpush.msra.mxu0 %v1780
    %3514 = vmatpush.msra.mxu0 %v1772
    %3515 = vmatpush.msra.mxu0 %v1764
    %3516 = vmatpush.msra.mxu0 %v1756
    %3517 = vmatpush.msra.mxu0 %v1748
    %3518 = vmatpush.msra.mxu0 %v1740
    %3519 = vmatpush.msra.mxu0 %v1732
    %3520 = vmatpush.msra.mxu0 %v1724
    %3521 = vmatpush.msra.mxu0 %v1716
    %3522 = vmatpush.msra.mxu0 %v1708
    %3523 = vmatpush.msra.mxu0 %v1700
    %3524 = vmatpush.msra.mxu0 %v1692
    %3525 = vmatmul.f32.gmra.mxu0 %v3207
    %v3526 = vpop.f32.mrf.mxu0
    %v3527 = vadd.f32 %v3507, %v3526
    %3528 = vdwg.mxu0
    %3529 = vmatpush.msra.mxu0 %v1940
    %3530 = vmatpush.msra.mxu0 %v1932
    %3531 = vmatpush.msra.mxu0 %v1924
    %3532 = vmatpush.msra.mxu0 %v1916
    %3533 = vmatpush.msra.mxu0 %v1908
    %3534 = vmatpush.msra.mxu0 %v1900
    %3535 = vmatpush.msra.mxu0 %v1892
    %3536 = vmatpush.msra.mxu0 %v1884
    %3537 = vmatpush.msra.mxu0 %v1876
    %3538 = vmatpush.msra.mxu0 %v1868
    %3539 = vmatpush.msra.mxu0 %v1860
    %3540 = vmatpush.msra.mxu0 %v1852
    %3541 = vmatpush.msra.mxu0 %v1844
    %3542 = vmatpush.msra.mxu0 %v1836
    %3543 = vmatpush.msra.mxu0 %v1828
    %3544 = vmatpush.msra.mxu0 %v1820
    %3545 = vmatmul.f32.gmra.mxu0 %v3208
    %v3546 = vpop.f32.mrf.mxu0
    %v3547 = vadd.f32 %v3527, %v3546
    %3548 = vdwg.mxu0
    %3549 = vmatpush.msra.mxu0 %v2068
    %3550 = vmatpush.msra.mxu0 %v2060
    %3551 = vmatpush.msra.mxu0 %v2052
    %3552 = vmatpush.msra.mxu0 %v2044
    %3553 = vmatpush.msra.mxu0 %v2036
    %3554 = vmatpush.msra.mxu0 %v2028
    %3555 = vmatpush.msra.mxu0 %v2020
    %3556 = vmatpush.msra.mxu0 %v2012
    %3557 = vmatpush.msra.mxu0 %v2004
    %3558 = vmatpush.msra.mxu0 %v1996
    %3559 = vmatpush.msra.mxu0 %v1988
    %3560 = vmatpush.msra.mxu0 %v1980
    %3561 = vmatpush.msra.mxu0 %v1972
    %3562 = vmatpush.msra.mxu0 %v1964
    %3563 = vmatpush.msra.mxu0 %v1956
    %3564 = vmatpush.msra.mxu0 %v1948
    %3565 = vmatmul.f32.gmra.mxu0 %v3209
    %v3566 = vpop.f32.mrf.mxu0
    %v3567 = vadd.f32 %v3547, %v3566
    %3568 = vdwg.mxu0
    %3569 = vmatpush.msra.mxu0 %v2196
    %3570 = vmatpush.msra.mxu0 %v2188
    %3571 = vmatpush.msra.mxu0 %v2180
    %3572 = vmatpush.msra.mxu0 %v2172
    %3573 = vmatpush.msra.mxu0 %v2164
    %3574 = vmatpush.msra.mxu0 %v2156
    %3575 = vmatpush.msra.mxu0 %v2148
    %3576 = vmatpush.msra.mxu0 %v2140
    %3577 = vmatpush.msra.mxu0 %v2132
    %3578 = vmatpush.msra.mxu0 %v2124
    %3579 = vmatpush.msra.mxu0 %v2116
    %3580 = vmatpush.msra.mxu0 %v2108
    %3581 = vmatpush.msra.mxu0 %v2100
    %3582 = vmatpush.msra.mxu0 %v2092
    %3583 = vmatpush.msra.mxu0 %v2084
    %3584 = vmatpush.msra.mxu0 %v2076
    %3585 = vmatmul.f32.gmra.mxu0 %v3212
    %v3586 = vpop.f32.mrf.mxu0
    %v3587 = vadd.f32 %v3567, %v3586
    %3588 = vdwg.mxu0
    %3589 = vmatpush.msra.mxu0 %v2324
    %3590 = vmatpush.msra.mxu0 %v2316
    %3591 = vmatpush.msra.mxu0 %v2308
    %3592 = vmatpush.msra.mxu0 %v2300
    %3593 = vmatpush.msra.mxu0 %v2292
    %3594 = vmatpush.msra.mxu0 %v2284
    %3595 = vmatpush.msra.mxu0 %v2276
    %3596 = vmatpush.msra.mxu0 %v2268
    %3597 = vmatpush.msra.mxu0 %v2260
    %3598 = vmatpush.msra.mxu0 %v2252
    %3599 = vmatpush.msra.mxu0 %v2244
    %3600 = vmatpush.msra.mxu0 %v2236
    %3601 = vmatpush.msra.mxu0 %v2228
    %3602 = vmatpush.msra.mxu0 %v2220
    %3603 = vmatpush.msra.mxu0 %v2212
    %3604 = vmatpush.msra.mxu0 %v2204
    %3605 = vmatmul.f32.gmra.mxu0 %v3213
    %v3606 = vpop.f32.mrf.mxu0
    %v3607 = vadd.f32 %v3587, %v3606
    %3608 = vdwg.mxu0
    %3609 = vmatpush.msra.mxu0 %v2452
    %3610 = vmatpush.msra.mxu0 %v2444
    %3611 = vmatpush.msra.mxu0 %v2436
    %3612 = vmatpush.msra.mxu0 %v2428
    %3613 = vmatpush.msra.mxu0 %v2420
    %3614 = vmatpush.msra.mxu0 %v2412
    %3615 = vmatpush.msra.mxu0 %v2404
    %3616 = vmatpush.msra.mxu0 %v2396
    %3617 = vmatpush.msra.mxu0 %v2388
    %3618 = vmatpush.msra.mxu0 %v2380
    %3619 = vmatpush.msra.mxu0 %v2372
    %3620 = vmatpush.msra.mxu0 %v2364
    %3621 = vmatpush.msra.mxu0 %v2356
    %3622 = vmatpush.msra.mxu0 %v2348
    %3623 = vmatpush.msra.mxu0 %v2340
    %3624 = vmatpush.msra.mxu0 %v2332
    %3625 = vmatmul.f32.gmra.mxu0 %v3214
    %v3626 = vpop.f32.mrf.mxu0
    %v3627 = vadd.f32 %v3607, %v3626
    %3628 = vdwg.mxu0
    %3629 = vmatpush.msra.mxu0 %v2580
    %3630 = vmatpush.msra.mxu0 %v2572
    %3631 = vmatpush.msra.mxu0 %v2564
    %3632 = vmatpush.msra.mxu0 %v2556
    %3633 = vmatpush.msra.mxu0 %v2548
    %3634 = vmatpush.msra.mxu0 %v2540
    %3635 = vmatpush.msra.mxu0 %v2532
    %3636 = vmatpush.msra.mxu0 %v2524
    %3637 = vmatpush.msra.mxu0 %v2516
    %3638 = vmatpush.msra.mxu0 %v2508
    %3639 = vmatpush.msra.mxu0 %v2500
    %3640 = vmatpush.msra.mxu0 %v2492
    %3641 = vmatpush.msra.mxu0 %v2484
    %3642 = vmatpush.msra.mxu0 %v2476
    %3643 = vmatpush.msra.mxu0 %v2468
    %3644 = vmatpush.msra.mxu0 %v2460
    %3645 = vmatmul.f32.gmra.mxu0 %v3215
    %v3646 = vpop.f32.mrf.mxu0
    %v3647 = vadd.f32 %v3627, %v3646
    %3648 = vdwg.mxu0
    %3649 = vmatpush.msra.mxu0 %v2708
    %3650 = vmatpush.msra.mxu0 %v2700
    %3651 = vmatpush.msra.mxu0 %v2692
    %3652 = vmatpush.msra.mxu0 %v2684
    %3653 = vmatpush.msra.mxu0 %v2676
    %3654 = vmatpush.msra.mxu0 %v2668
    %3655 = vmatpush.msra.mxu0 %v2660
    %3656 = vmatpush.msra.mxu0 %v2652
    %3657 = vmatpush.msra.mxu0 %v2644
    %3658 = vmatpush.msra.mxu0 %v2636
    %3659 = vmatpush.msra.mxu0 %v2628
    %3660 = vmatpush.msra.mxu0 %v2620
    %3661 = vmatpush.msra.mxu0 %v2612
    %3662 = vmatpush.msra.mxu0 %v2604
    %3663 = vmatpush.msra.mxu0 %v2596
    %3664 = vmatpush.msra.mxu0 %v2588
    %3665 = vmatmul.f32.gmra.mxu0 %v3216
    %v3666 = vpop.f32.mrf.mxu0
    %v3667 = vadd.f32 %v3647, %v3666
    %3668 = vdwg.mxu0
    %3669 = vmatpush.msra.mxu0 %v2836
    %3670 = vmatpush.msra.mxu0 %v2828
    %3671 = vmatpush.msra.mxu0 %v2820
    %3672 = vmatpush.msra.mxu0 %v2812
    %3673 = vmatpush.msra.mxu0 %v2804
    %3674 = vmatpush.msra.mxu0 %v2796
    %3675 = vmatpush.msra.mxu0 %v2788
    %3676 = vmatpush.msra.mxu0 %v2780
    %3677 = vmatpush.msra.mxu0 %v2772
    %3678 = vmatpush.msra.mxu0 %v2764
    %3679 = vmatpush.msra.mxu0 %v2756
    %3680 = vmatpush.msra.mxu0 %v2748
    %3681 = vmatpush.msra.mxu0 %v2740
    %3682 = vmatpush.msra.mxu0 %v2732
    %3683 = vmatpush.msra.mxu0 %v2724
    %3684 = vmatpush.msra.mxu0 %v2716
    %3685 = vmatmul.f32.gmra.mxu0 %v3217
    %v3686 = vpop.f32.mrf.mxu0
    %v3687 = vadd.f32 %v3667, %v3686
    %3688 = vdwg.mxu0
    %3689 = vmatpush.msra.mxu0 %v2964
    %3690 = vmatpush.msra.mxu0 %v2956
    %3691 = vmatpush.msra.mxu0 %v2948
    %3692 = vmatpush.msra.mxu0 %v2940
    %3693 = vmatpush.msra.mxu0 %v2932
    %3694 = vmatpush.msra.mxu0 %v2924
    %3695 = vmatpush.msra.mxu0 %v2916
    %3696 = vmatpush.msra.mxu0 %v2908
    %3697 = vmatpush.msra.mxu0 %v2900
    %3698 = vmatpush.msra.mxu0 %v2892
    %3699 = vmatpush.msra.mxu0 %v2884
    %3700 = vmatpush.msra.mxu0 %v2876
    %3701 = vmatpush.msra.mxu0 %v2868
    %3702 = vmatpush.msra.mxu0 %v2860
    %3703 = vmatpush.msra.mxu0 %v2852
    %3704 = vmatpush.msra.mxu0 %v2844
    %3705 = vmatmul.f32.gmra.mxu0 %v3218
    %v3706 = vpop.f32.mrf.mxu0
    %v3707 = vadd.f32 %v3687, %v3706
    %3708 = vdwg.mxu0
    %3709 = vmatpush.msra.mxu0 %v3092
    %3710 = vmatpush.msra.mxu0 %v3084
    %3711 = vmatpush.msra.mxu0 %v3076
    %3712 = vmatpush.msra.mxu0 %v3068
    %3713 = vmatpush.msra.mxu0 %v3060
    %3714 = vmatpush.msra.mxu0 %v3052
    %3715 = vmatpush.msra.mxu0 %v3044
    %3716 = vmatpush.msra.mxu0 %v3036
    %3717 = vmatpush.msra.mxu0 %v3028
    %3718 = vmatpush.msra.mxu0 %v3020
    %3719 = vmatpush.msra.mxu0 %v3012
    %3720 = vmatpush.msra.mxu0 %v3004
    %3721 = vmatpush.msra.mxu0 %v2996
    %3722 = vmatpush.msra.mxu0 %v2988
    %3723 = vmatpush.msra.mxu0 %v2980
    %3724 = vmatpush.msra.mxu0 %v2972
    %3725 = vmatmul.f32.gmra.mxu0 %v3219
    %v3726 = vpop.f32.mrf.mxu0
    %v3727 = vadd.f32 %v3707, %v3726
    %3728 = vdwg.mxu0
    %3729 = vmatpush.msra.mxu0 0.0
    %3730 = vmatpush.msra.mxu0 0.0
    %3731 = vmatpush.msra.mxu0 0.0
    %3732 = vmatpush.msra.mxu0 0.0
    %3733 = vmatpush.msra.mxu0 0.0
    %3734 = vmatpush.msra.mxu0 0.0
    %3735 = vmatpush.msra.mxu0 0.0
    %3736 = vmatpush.msra.mxu0 0.0
    %3737 = vmatpush.msra.mxu0 %v3156
    %3738 = vmatpush.msra.mxu0 %v3148
    %3739 = vmatpush.msra.mxu0 %v3140
    %3740 = vmatpush.msra.mxu0 %v3132
    %3741 = vmatpush.msra.mxu0 %v3124
    %3742 = vmatpush.msra.mxu0 %v3116
    %3743 = vmatpush.msra.mxu0 %v3108
    %3744 = vmatpush.msra.mxu0 %v3100
    %3745 = vmatmul.f32.gmra.mxu0 %v3247
    %v3746 = vpop.f32.mrf.mxu0
    %v3747 = vadd.f32 %v3727, %v3746
    %3748 = vdwg.mxu0
    %3749 = vmatpush.msra.mxu0 %v149
    %3750 = vmatpush.msra.mxu0 %v141
    %3751 = vmatpush.msra.mxu0 %v133
    %3752 = vmatpush.msra.mxu0 %v125
    %3753 = vmatpush.msra.mxu0 %v117
    %3754 = vmatpush.msra.mxu0 %v109
    %3755 = vmatpush.msra.mxu0 %v101
    %3756 = vmatpush.msra.mxu0 %v93
    %3757 = vmatpush.msra.mxu0 %v85
    %3758 = vmatpush.msra.mxu0 %v77
    %3759 = vmatpush.msra.mxu0 %v69
    %3760 = vmatpush.msra.mxu0 %v61
    %3761 = vmatpush.msra.mxu0 %v53
    %3762 = vmatpush.msra.mxu0 %v45
    %3763 = vmatpush.msra.mxu0 %v37
    %3764 = vmatpush.msra.mxu0 %v29
    %3765 = vmatmul.f32.gmra.mxu0 %v3192
    %v3766 = vpop.f32.mrf.mxu0
    %v3767 = vadd.f32 %v3167, %v3766
    %3768 = vdwg.mxu0
    %3769 = vmatpush.msra.mxu0 %v277
    %3770 = vmatpush.msra.mxu0 %v269
    %3771 = vmatpush.msra.mxu0 %v261
    %3772 = vmatpush.msra.mxu0 %v253
    %3773 = vmatpush.msra.mxu0 %v245
    %3774 = vmatpush.msra.mxu0 %v237
    %3775 = vmatpush.msra.mxu0 %v229
    %3776 = vmatpush.msra.mxu0 %v221
    %3777 = vmatpush.msra.mxu0 %v213
    %3778 = vmatpush.msra.mxu0 %v205
    %3779 = vmatpush.msra.mxu0 %v197
    %3780 = vmatpush.msra.mxu0 %v189
    %3781 = vmatpush.msra.mxu0 %v181
    %3782 = vmatpush.msra.mxu0 %v173
    %3783 = vmatpush.msra.mxu0 %v165
    %3784 = vmatpush.msra.mxu0 %v157
    %3785 = vmatmul.f32.gmra.mxu0 %v3193
    %v3786 = vpop.f32.mrf.mxu0
    %v3787 = vadd.f32 %v3767, %v3786
    %3788 = vdwg.mxu0
    %3789 = vmatpush.msra.mxu0 %v405
    %3790 = vmatpush.msra.mxu0 %v397
    %3791 = vmatpush.msra.mxu0 %v389
    %3792 = vmatpush.msra.mxu0 %v381
    %3793 = vmatpush.msra.mxu0 %v373
    %3794 = vmatpush.msra.mxu0 %v365
    %3795 = vmatpush.msra.mxu0 %v357
    %3796 = vmatpush.msra.mxu0 %v349
    %3797 = vmatpush.msra.mxu0 %v341
    %3798 = vmatpush.msra.mxu0 %v333
    %3799 = vmatpush.msra.mxu0 %v325
    %3800 = vmatpush.msra.mxu0 %v317
    %3801 = vmatpush.msra.mxu0 %v309
    %3802 = vmatpush.msra.mxu0 %v301
    %3803 = vmatpush.msra.mxu0 %v293
    %3804 = vmatpush.msra.mxu0 %v285
    %3805 = vmatmul.f32.gmra.mxu0 %v3194
    %v3806 = vpop.f32.mrf.mxu0
    %v3807 = vadd.f32 %v3787, %v3806
    %3808 = vdwg.mxu0
    %3809 = vmatpush.msra.mxu0 %v533
    %3810 = vmatpush.msra.mxu0 %v525
    %3811 = vmatpush.msra.mxu0 %v517
    %3812 = vmatpush.msra.mxu0 %v509
    %3813 = vmatpush.msra.mxu0 %v501
    %3814 = vmatpush.msra.mxu0 %v493
    %3815 = vmatpush.msra.mxu0 %v485
    %3816 = vmatpush.msra.mxu0 %v477
    %3817 = vmatpush.msra.mxu0 %v469
    %3818 = vmatpush.msra.mxu0 %v461
    %3819 = vmatpush.msra.mxu0 %v453
    %3820 = vmatpush.msra.mxu0 %v445
    %3821 = vmatpush.msra.mxu0 %v437
    %3822 = vmatpush.msra.mxu0 %v429
    %3823 = vmatpush.msra.mxu0 %v421
    %3824 = vmatpush.msra.mxu0 %v413
    %3825 = vmatmul.f32.gmra.mxu0 %v3195
    %v3826 = vpop.f32.mrf.mxu0
    %v3827 = vadd.f32 %v3807, %v3826
    %3828 = vdwg.mxu0
    %3829 = vmatpush.msra.mxu0 %v661
    %3830 = vmatpush.msra.mxu0 %v653
    %3831 = vmatpush.msra.mxu0 %v645
    %3832 = vmatpush.msra.mxu0 %v637
    %3833 = vmatpush.msra.mxu0 %v629
    %3834 = vmatpush.msra.mxu0 %v621
    %3835 = vmatpush.msra.mxu0 %v613
    %3836 = vmatpush.msra.mxu0 %v605
    %3837 = vmatpush.msra.mxu0 %v597
    %3838 = vmatpush.msra.mxu0 %v589
    %3839 = vmatpush.msra.mxu0 %v581
    %3840 = vmatpush.msra.mxu0 %v573
    %3841 = vmatpush.msra.mxu0 %v565
    %3842 = vmatpush.msra.mxu0 %v557
    %3843 = vmatpush.msra.mxu0 %v549
    %3844 = vmatpush.msra.mxu0 %v541
    %3845 = vmatmul.f32.gmra.mxu0 %v3196
    %v3846 = vpop.f32.mrf.mxu0
    %v3847 = vadd.f32 %v3827, %v3846
    %3848 = vdwg.mxu0
    %3849 = vmatpush.msra.mxu0 %v789
    %3850 = vmatpush.msra.mxu0 %v781
    %3851 = vmatpush.msra.mxu0 %v773
    %3852 = vmatpush.msra.mxu0 %v765
    %3853 = vmatpush.msra.mxu0 %v757
    %3854 = vmatpush.msra.mxu0 %v749
    %3855 = vmatpush.msra.mxu0 %v741
    %3856 = vmatpush.msra.mxu0 %v733
    %3857 = vmatpush.msra.mxu0 %v725
    %3858 = vmatpush.msra.mxu0 %v717
    %3859 = vmatpush.msra.mxu0 %v709
    %3860 = vmatpush.msra.mxu0 %v701
    %3861 = vmatpush.msra.mxu0 %v693
    %3862 = vmatpush.msra.mxu0 %v685
    %3863 = vmatpush.msra.mxu0 %v677
    %3864 = vmatpush.msra.mxu0 %v669
    %3865 = vmatmul.f32.gmra.mxu0 %v3197
    %v3866 = vpop.f32.mrf.mxu0
    %v3867 = vadd.f32 %v3847, %v3866
    %3868 = vdwg.mxu0
    %3869 = vmatpush.msra.mxu0 %v917
    %3870 = vmatpush.msra.mxu0 %v909
    %3871 = vmatpush.msra.mxu0 %v901
    %3872 = vmatpush.msra.mxu0 %v893
    %3873 = vmatpush.msra.mxu0 %v885
    %3874 = vmatpush.msra.mxu0 %v877
    %3875 = vmatpush.msra.mxu0 %v869
    %3876 = vmatpush.msra.mxu0 %v861
    %3877 = vmatpush.msra.mxu0 %v853
    %3878 = vmatpush.msra.mxu0 %v845
    %3879 = vmatpush.msra.mxu0 %v837
    %3880 = vmatpush.msra.mxu0 %v829
    %3881 = vmatpush.msra.mxu0 %v821
    %3882 = vmatpush.msra.mxu0 %v813
    %3883 = vmatpush.msra.mxu0 %v805
    %3884 = vmatpush.msra.mxu0 %v797
    %3885 = vmatmul.f32.gmra.mxu0 %v3198
    %v3886 = vpop.f32.mrf.mxu0
    %v3887 = vadd.f32 %v3867, %v3886
    %3888 = vdwg.mxu0
    %3889 = vmatpush.msra.mxu0 %v1045
    %3890 = vmatpush.msra.mxu0 %v1037
    %3891 = vmatpush.msra.mxu0 %v1029
    %3892 = vmatpush.msra.mxu0 %v1021
    %3893 = vmatpush.msra.mxu0 %v1013
    %3894 = vmatpush.msra.mxu0 %v1005
    %3895 = vmatpush.msra.mxu0 %v997
    %3896 = vmatpush.msra.mxu0 %v989
    %3897 = vmatpush.msra.mxu0 %v981
    %3898 = vmatpush.msra.mxu0 %v973
    %3899 = vmatpush.msra.mxu0 %v965
    %3900 = vmatpush.msra.mxu0 %v957
    %3901 = vmatpush.msra.mxu0 %v949
    %3902 = vmatpush.msra.mxu0 %v941
    %3903 = vmatpush.msra.mxu0 %v933
    %3904 = vmatpush.msra.mxu0 %v925
    %3905 = vmatmul.f32.gmra.mxu0 %v3199
    %v3906 = vpop.f32.mrf.mxu0
    %v3907 = vadd.f32 %v3887, %v3906
    %3908 = vdwg.mxu0
    %3909 = vmatpush.msra.mxu0 %v1173
    %3910 = vmatpush.msra.mxu0 %v1165
    %3911 = vmatpush.msra.mxu0 %v1157
    %3912 = vmatpush.msra.mxu0 %v1149
    %3913 = vmatpush.msra.mxu0 %v1141
    %3914 = vmatpush.msra.mxu0 %v1133
    %3915 = vmatpush.msra.mxu0 %v1125
    %3916 = vmatpush.msra.mxu0 %v1117
    %3917 = vmatpush.msra.mxu0 %v1109
    %3918 = vmatpush.msra.mxu0 %v1101
    %3919 = vmatpush.msra.mxu0 %v1093
    %3920 = vmatpush.msra.mxu0 %v1085
    %3921 = vmatpush.msra.mxu0 %v1077
    %3922 = vmatpush.msra.mxu0 %v1069
    %3923 = vmatpush.msra.mxu0 %v1061
    %3924 = vmatpush.msra.mxu0 %v1053
    %3925 = vmatmul.f32.gmra.mxu0 %v3202
    %v3926 = vpop.f32.mrf.mxu0
    %v3927 = vadd.f32 %v3907, %v3926
    %3928 = vdwg.mxu0
    %3929 = vmatpush.msra.mxu0 %v1301
    %3930 = vmatpush.msra.mxu0 %v1293
    %3931 = vmatpush.msra.mxu0 %v1285
    %3932 = vmatpush.msra.mxu0 %v1277
    %3933 = vmatpush.msra.mxu0 %v1269
    %3934 = vmatpush.msra.mxu0 %v1261
    %3935 = vmatpush.msra.mxu0 %v1253
    %3936 = vmatpush.msra.mxu0 %v1245
    %3937 = vmatpush.msra.mxu0 %v1237
    %3938 = vmatpush.msra.mxu0 %v1229
    %3939 = vmatpush.msra.mxu0 %v1221
    %3940 = vmatpush.msra.mxu0 %v1213
    %3941 = vmatpush.msra.mxu0 %v1205
    %3942 = vmatpush.msra.mxu0 %v1197
    %3943 = vmatpush.msra.mxu0 %v1189
    %3944 = vmatpush.msra.mxu0 %v1181
    %3945 = vmatmul.f32.gmra.mxu0 %v3203
    %v3946 = vpop.f32.mrf.mxu0
    %v3947 = vadd.f32 %v3927, %v3946
    %3948 = vdwg.mxu0
    %3949 = vmatpush.msra.mxu0 %v1429
    %3950 = vmatpush.msra.mxu0 %v1421
    %3951 = vmatpush.msra.mxu0 %v1413
    %3952 = vmatpush.msra.mxu0 %v1405
    %3953 = vmatpush.msra.mxu0 %v1397
    %3954 = vmatpush.msra.mxu0 %v1389
    %3955 = vmatpush.msra.mxu0 %v1381
    %3956 = vmatpush.msra.mxu0 %v1373
    %3957 = vmatpush.msra.mxu0 %v1365
    %3958 = vmatpush.msra.mxu0 %v1357
    %3959 = vmatpush.msra.mxu0 %v1349
    %3960 = vmatpush.msra.mxu0 %v1341
    %3961 = vmatpush.msra.mxu0 %v1333
    %3962 = vmatpush.msra.mxu0 %v1325
    %3963 = vmatpush.msra.mxu0 %v1317
    %3964 = vmatpush.msra.mxu0 %v1309
    %3965 = vmatmul.f32.gmra.mxu0 %v3204
    %v3966 = vpop.f32.mrf.mxu0
    %v3967 = vadd.f32 %v3947, %v3966
    %3968 = vdwg.mxu0
    %3969 = vmatpush.msra.mxu0 %v1557
    %3970 = vmatpush.msra.mxu0 %v1549
    %3971 = vmatpush.msra.mxu0 %v1541
    %3972 = vmatpush.msra.mxu0 %v1533
    %3973 = vmatpush.msra.mxu0 %v1525
    %3974 = vmatpush.msra.mxu0 %v1517
    %3975 = vmatpush.msra.mxu0 %v1509
    %3976 = vmatpush.msra.mxu0 %v1501
    %3977 = vmatpush.msra.mxu0 %v1493
    %3978 = vmatpush.msra.mxu0 %v1485
    %3979 = vmatpush.msra.mxu0 %v1477
    %3980 = vmatpush.msra.mxu0 %v1469
    %3981 = vmatpush.msra.mxu0 %v1461
    %3982 = vmatpush.msra.mxu0 %v1453
    %3983 = vmatpush.msra.mxu0 %v1445
    %3984 = vmatpush.msra.mxu0 %v1437
    %3985 = vmatmul.f32.gmra.mxu0 %v3205
    %v3986 = vpop.f32.mrf.mxu0
    %v3987 = vadd.f32 %v3967, %v3986
    %3988 = vdwg.mxu0
    %3989 = vmatpush.msra.mxu0 %v1685
    %3990 = vmatpush.msra.mxu0 %v1677
    %3991 = vmatpush.msra.mxu0 %v1669
    %3992 = vmatpush.msra.mxu0 %v1661
    %3993 = vmatpush.msra.mxu0 %v1653
    %3994 = vmatpush.msra.mxu0 %v1645
    %3995 = vmatpush.msra.mxu0 %v1637
    %3996 = vmatpush.msra.mxu0 %v1629
    %3997 = vmatpush.msra.mxu0 %v1621
    %3998 = vmatpush.msra.mxu0 %v1613
    %3999 = vmatpush.msra.mxu0 %v1605
    %4000 = vmatpush.msra.mxu0 %v1597
    %4001 = vmatpush.msra.mxu0 %v1589
    %4002 = vmatpush.msra.mxu0 %v1581
    %4003 = vmatpush.msra.mxu0 %v1573
    %4004 = vmatpush.msra.mxu0 %v1565
    %4005 = vmatmul.f32.gmra.mxu0 %v3206
    %v4006 = vpop.f32.mrf.mxu0
    %v4007 = vadd.f32 %v3987, %v4006
    %4008 = vdwg.mxu0
    %4009 = vmatpush.msra.mxu0 %v1813
    %4010 = vmatpush.msra.mxu0 %v1805
    %4011 = vmatpush.msra.mxu0 %v1797
    %4012 = vmatpush.msra.mxu0 %v1789
    %4013 = vmatpush.msra.mxu0 %v1781
    %4014 = vmatpush.msra.mxu0 %v1773
    %4015 = vmatpush.msra.mxu0 %v1765
    %4016 = vmatpush.msra.mxu0 %v1757
    %4017 = vmatpush.msra.mxu0 %v1749
    %4018 = vmatpush.msra.mxu0 %v1741
    %4019 = vmatpush.msra.mxu0 %v1733
    %4020 = vmatpush.msra.mxu0 %v1725
    %4021 = vmatpush.msra.mxu0 %v1717
    %4022 = vmatpush.msra.mxu0 %v1709
    %4023 = vmatpush.msra.mxu0 %v1701
    %4024 = vmatpush.msra.mxu0 %v1693
    %4025 = vmatmul.f32.gmra.mxu0 %v3207
    %v4026 = vpop.f32.mrf.mxu0
    %v4027 = vadd.f32 %v4007, %v4026
    %4028 = vdwg.mxu0
    %4029 = vmatpush.msra.mxu0 %v1941
    %4030 = vmatpush.msra.mxu0 %v1933
    %4031 = vmatpush.msra.mxu0 %v1925
    %4032 = vmatpush.msra.mxu0 %v1917
    %4033 = vmatpush.msra.mxu0 %v1909
    %4034 = vmatpush.msra.mxu0 %v1901
    %4035 = vmatpush.msra.mxu0 %v1893
    %4036 = vmatpush.msra.mxu0 %v1885
    %4037 = vmatpush.msra.mxu0 %v1877
    %4038 = vmatpush.msra.mxu0 %v1869
    %4039 = vmatpush.msra.mxu0 %v1861
    %4040 = vmatpush.msra.mxu0 %v1853
    %4041 = vmatpush.msra.mxu0 %v1845
    %4042 = vmatpush.msra.mxu0 %v1837
    %4043 = vmatpush.msra.mxu0 %v1829
    %4044 = vmatpush.msra.mxu0 %v1821
    %4045 = vmatmul.f32.gmra.mxu0 %v3208
    %v4046 = vpop.f32.mrf.mxu0
    %v4047 = vadd.f32 %v4027, %v4046
    %4048 = vdwg.mxu0
    %4049 = vmatpush.msra.mxu0 %v2069
    %4050 = vmatpush.msra.mxu0 %v2061
    %4051 = vmatpush.msra.mxu0 %v2053
    %4052 = vmatpush.msra.mxu0 %v2045
    %4053 = vmatpush.msra.mxu0 %v2037
    %4054 = vmatpush.msra.mxu0 %v2029
    %4055 = vmatpush.msra.mxu0 %v2021
    %4056 = vmatpush.msra.mxu0 %v2013
    %4057 = vmatpush.msra.mxu0 %v2005
    %4058 = vmatpush.msra.mxu0 %v1997
    %4059 = vmatpush.msra.mxu0 %v1989
    %4060 = vmatpush.msra.mxu0 %v1981
    %4061 = vmatpush.msra.mxu0 %v1973
    %4062 = vmatpush.msra.mxu0 %v1965
    %4063 = vmatpush.msra.mxu0 %v1957
    %4064 = vmatpush.msra.mxu0 %v1949
    %4065 = vmatmul.f32.gmra.mxu0 %v3209
    %v4066 = vpop.f32.mrf.mxu0
    %v4067 = vadd.f32 %v4047, %v4066
    %4068 = vdwg.mxu0
    %4069 = vmatpush.msra.mxu0 %v2197
    %4070 = vmatpush.msra.mxu0 %v2189
    %4071 = vmatpush.msra.mxu0 %v2181
    %4072 = vmatpush.msra.mxu0 %v2173
    %4073 = vmatpush.msra.mxu0 %v2165
    %4074 = vmatpush.msra.mxu0 %v2157
    %4075 = vmatpush.msra.mxu0 %v2149
    %4076 = vmatpush.msra.mxu0 %v2141
    %4077 = vmatpush.msra.mxu0 %v2133
    %4078 = vmatpush.msra.mxu0 %v2125
    %4079 = vmatpush.msra.mxu0 %v2117
    %4080 = vmatpush.msra.mxu0 %v2109
    %4081 = vmatpush.msra.mxu0 %v2101
    %4082 = vmatpush.msra.mxu0 %v2093
    %4083 = vmatpush.msra.mxu0 %v2085
    %4084 = vmatpush.msra.mxu0 %v2077
    %4085 = vmatmul.f32.gmra.mxu0 %v3212
    %v4086 = vpop.f32.mrf.mxu0
    %v4087 = vadd.f32 %v4067, %v4086
    %4088 = vdwg.mxu0
    %4089 = vmatpush.msra.mxu0 %v2325
    %4090 = vmatpush.msra.mxu0 %v2317
    %4091 = vmatpush.msra.mxu0 %v2309
    %4092 = vmatpush.msra.mxu0 %v2301
    %4093 = vmatpush.msra.mxu0 %v2293
    %4094 = vmatpush.msra.mxu0 %v2285
    %4095 = vmatpush.msra.mxu0 %v2277
    %4096 = vmatpush.msra.mxu0 %v2269
    %4097 = vmatpush.msra.mxu0 %v2261
    %4098 = vmatpush.msra.mxu0 %v2253
    %4099 = vmatpush.msra.mxu0 %v2245
    %4100 = vmatpush.msra.mxu0 %v2237
    %4101 = vmatpush.msra.mxu0 %v2229
    %4102 = vmatpush.msra.mxu0 %v2221
    %4103 = vmatpush.msra.mxu0 %v2213
    %4104 = vmatpush.msra.mxu0 %v2205
    %4105 = vmatmul.f32.gmra.mxu0 %v3213
    %v4106 = vpop.f32.mrf.mxu0
    %v4107 = vadd.f32 %v4087, %v4106
    %4108 = vdwg.mxu0
    %4109 = vmatpush.msra.mxu0 %v2453
    %4110 = vmatpush.msra.mxu0 %v2445
    %4111 = vmatpush.msra.mxu0 %v2437
    %4112 = vmatpush.msra.mxu0 %v2429
    %4113 = vmatpush.msra.mxu0 %v2421
    %4114 = vmatpush.msra.mxu0 %v2413
    %4115 = vmatpush.msra.mxu0 %v2405
    %4116 = vmatpush.msra.mxu0 %v2397
    %4117 = vmatpush.msra.mxu0 %v2389
    %4118 = vmatpush.msra.mxu0 %v2381
    %4119 = vmatpush.msra.mxu0 %v2373
    %4120 = vmatpush.msra.mxu0 %v2365
    %4121 = vmatpush.msra.mxu0 %v2357
    %4122 = vmatpush.msra.mxu0 %v2349
    %4123 = vmatpush.msra.mxu0 %v2341
    %4124 = vmatpush.msra.mxu0 %v2333
    %4125 = vmatmul.f32.gmra.mxu0 %v3214
    %v4126 = vpop.f32.mrf.mxu0
    %v4127 = vadd.f32 %v4107, %v4126
    %4128 = vdwg.mxu0
    %4129 = vmatpush.msra.mxu0 %v2581
    %4130 = vmatpush.msra.mxu0 %v2573
    %4131 = vmatpush.msra.mxu0 %v2565
    %4132 = vmatpush.msra.mxu0 %v2557
    %4133 = vmatpush.msra.mxu0 %v2549
    %4134 = vmatpush.msra.mxu0 %v2541
    %4135 = vmatpush.msra.mxu0 %v2533
    %4136 = vmatpush.msra.mxu0 %v2525
    %4137 = vmatpush.msra.mxu0 %v2517
    %4138 = vmatpush.msra.mxu0 %v2509
    %4139 = vmatpush.msra.mxu0 %v2501
    %4140 = vmatpush.msra.mxu0 %v2493
    %4141 = vmatpush.msra.mxu0 %v2485
    %4142 = vmatpush.msra.mxu0 %v2477
    %4143 = vmatpush.msra.mxu0 %v2469
    %4144 = vmatpush.msra.mxu0 %v2461
    %4145 = vmatmul.f32.gmra.mxu0 %v3215
    %v4146 = vpop.f32.mrf.mxu0
    %v4147 = vadd.f32 %v4127, %v4146
    %4148 = vdwg.mxu0
    %4149 = vmatpush.msra.mxu0 %v2709
    %4150 = vmatpush.msra.mxu0 %v2701
    %4151 = vmatpush.msra.mxu0 %v2693
    %4152 = vmatpush.msra.mxu0 %v2685
    %4153 = vmatpush.msra.mxu0 %v2677
    %4154 = vmatpush.msra.mxu0 %v2669
    %4155 = vmatpush.msra.mxu0 %v2661
    %4156 = vmatpush.msra.mxu0 %v2653
    %4157 = vmatpush.msra.mxu0 %v2645
    %4158 = vmatpush.msra.mxu0 %v2637
    %4159 = vmatpush.msra.mxu0 %v2629
    %4160 = vmatpush.msra.mxu0 %v2621
    %4161 = vmatpush.msra.mxu0 %v2613
    %4162 = vmatpush.msra.mxu0 %v2605
    %4163 = vmatpush.msra.mxu0 %v2597
    %4164 = vmatpush.msra.mxu0 %v2589
    %4165 = vmatmul.f32.gmra.mxu0 %v3216
    %v4166 = vpop.f32.mrf.mxu0
    %v4167 = vadd.f32 %v4147, %v4166
    %4168 = vdwg.mxu0
    %4169 = vmatpush.msra.mxu0 %v2837
    %4170 = vmatpush.msra.mxu0 %v2829
    %4171 = vmatpush.msra.mxu0 %v2821
    %4172 = vmatpush.msra.mxu0 %v2813
    %4173 = vmatpush.msra.mxu0 %v2805
    %4174 = vmatpush.msra.mxu0 %v2797
    %4175 = vmatpush.msra.mxu0 %v2789
    %4176 = vmatpush.msra.mxu0 %v2781
    %4177 = vmatpush.msra.mxu0 %v2773
    %4178 = vmatpush.msra.mxu0 %v2765
    %4179 = vmatpush.msra.mxu0 %v2757
    %4180 = vmatpush.msra.mxu0 %v2749
    %4181 = vmatpush.msra.mxu0 %v2741
    %4182 = vmatpush.msra.mxu0 %v2733
    %4183 = vmatpush.msra.mxu0 %v2725
    %4184 = vmatpush.msra.mxu0 %v2717
    %4185 = vmatmul.f32.gmra.mxu0 %v3217
    %v4186 = vpop.f32.mrf.mxu0
    %v4187 = vadd.f32 %v4167, %v4186
    %4188 = vdwg.mxu0
    %4189 = vmatpush.msra.mxu0 %v2965
    %4190 = vmatpush.msra.mxu0 %v2957
    %4191 = vmatpush.msra.mxu0 %v2949
    %4192 = vmatpush.msra.mxu0 %v2941
    %4193 = vmatpush.msra.mxu0 %v2933
    %4194 = vmatpush.msra.mxu0 %v2925
    %4195 = vmatpush.msra.mxu0 %v2917
    %4196 = vmatpush.msra.mxu0 %v2909
    %4197 = vmatpush.msra.mxu0 %v2901
    %4198 = vmatpush.msra.mxu0 %v2893
    %4199 = vmatpush.msra.mxu0 %v2885
    %4200 = vmatpush.msra.mxu0 %v2877
    %4201 = vmatpush.msra.mxu0 %v2869
    %4202 = vmatpush.msra.mxu0 %v2861
    %4203 = vmatpush.msra.mxu0 %v2853
    %4204 = vmatpush.msra.mxu0 %v2845
    %4205 = vmatmul.f32.gmra.mxu0 %v3218
    %v4206 = vpop.f32.mrf.mxu0
    %v4207 = vadd.f32 %v4187, %v4206
    %4208 = vdwg.mxu0
    %4209 = vmatpush.msra.mxu0 %v3093
    %4210 = vmatpush.msra.mxu0 %v3085
    %4211 = vmatpush.msra.mxu0 %v3077
    %4212 = vmatpush.msra.mxu0 %v3069
    %4213 = vmatpush.msra.mxu0 %v3061
    %4214 = vmatpush.msra.mxu0 %v3053
    %4215 = vmatpush.msra.mxu0 %v3045
    %4216 = vmatpush.msra.mxu0 %v3037
    %4217 = vmatpush.msra.mxu0 %v3029
    %4218 = vmatpush.msra.mxu0 %v3021
    %4219 = vmatpush.msra.mxu0 %v3013
    %4220 = vmatpush.msra.mxu0 %v3005
    %4221 = vmatpush.msra.mxu0 %v2997
    %4222 = vmatpush.msra.mxu0 %v2989
    %4223 = vmatpush.msra.mxu0 %v2981
    %4224 = vmatpush.msra.mxu0 %v2973
    %4225 = vmatmul.f32.gmra.mxu0 %v3219
    %v4226 = vpop.f32.mrf.mxu0
    %v4227 = vadd.f32 %v4207, %v4226
    %4228 = vdwg.mxu0
    %4229 = vmatpush.msra.mxu0 0.0
    %4230 = vmatpush.msra.mxu0 0.0
    %4231 = vmatpush.msra.mxu0 0.0
    %4232 = vmatpush.msra.mxu0 0.0
    %4233 = vmatpush.msra.mxu0 0.0
    %4234 = vmatpush.msra.mxu0 0.0
    %4235 = vmatpush.msra.mxu0 0.0
    %4236 = vmatpush.msra.mxu0 0.0
    %4237 = vmatpush.msra.mxu0 %v3157
    %4238 = vmatpush.msra.mxu0 %v3149
    %4239 = vmatpush.msra.mxu0 %v3141
    %4240 = vmatpush.msra.mxu0 %v3133
    %4241 = vmatpush.msra.mxu0 %v3125
    %4242 = vmatpush.msra.mxu0 %v3117
    %4243 = vmatpush.msra.mxu0 %v3109
    %4244 = vmatpush.msra.mxu0 %v3101
    %4245 = vmatmul.f32.gmra.mxu0 %v3247
    %v4246 = vpop.f32.mrf.mxu0
    %v4247 = vadd.f32 %v4227, %v4246
    %4248 = vdwg.mxu0
    %4249 = vmatpush.msra.mxu0 %v150
    %4250 = vmatpush.msra.mxu0 %v142
    %4251 = vmatpush.msra.mxu0 %v134
    %4252 = vmatpush.msra.mxu0 %v126
    %4253 = vmatpush.msra.mxu0 %v118
    %4254 = vmatpush.msra.mxu0 %v110
    %4255 = vmatpush.msra.mxu0 %v102
    %4256 = vmatpush.msra.mxu0 %v94
    %4257 = vmatpush.msra.mxu0 %v86
    %4258 = vmatpush.msra.mxu0 %v78
    %4259 = vmatpush.msra.mxu0 %v70
    %4260 = vmatpush.msra.mxu0 %v62
    %4261 = vmatpush.msra.mxu0 %v54
    %4262 = vmatpush.msra.mxu0 %v46
    %4263 = vmatpush.msra.mxu0 %v38
    %4264 = vmatpush.msra.mxu0 %v30
    %4265 = vmatmul.f32.gmra.mxu0 %v3192
    %v4266 = vpop.f32.mrf.mxu0
    %v4267 = vadd.f32 %v3168, %v4266
    %4268 = vdwg.mxu0
    %4269 = vmatpush.msra.mxu0 %v278
    %4270 = vmatpush.msra.mxu0 %v270
    %4271 = vmatpush.msra.mxu0 %v262
    %4272 = vmatpush.msra.mxu0 %v254
    %4273 = vmatpush.msra.mxu0 %v246
    %4274 = vmatpush.msra.mxu0 %v238
    %4275 = vmatpush.msra.mxu0 %v230
    %4276 = vmatpush.msra.mxu0 %v222
    %4277 = vmatpush.msra.mxu0 %v214
    %4278 = vmatpush.msra.mxu0 %v206
    %4279 = vmatpush.msra.mxu0 %v198
    %4280 = vmatpush.msra.mxu0 %v190
    %4281 = vmatpush.msra.mxu0 %v182
    %4282 = vmatpush.msra.mxu0 %v174
    %4283 = vmatpush.msra.mxu0 %v166
    %4284 = vmatpush.msra.mxu0 %v158
    %4285 = vmatmul.f32.gmra.mxu0 %v3193
    %v4286 = vpop.f32.mrf.mxu0
    %v4287 = vadd.f32 %v4267, %v4286
    %4288 = vdwg.mxu0
    %4289 = vmatpush.msra.mxu0 %v406
    %4290 = vmatpush.msra.mxu0 %v398
    %4291 = vmatpush.msra.mxu0 %v390
    %4292 = vmatpush.msra.mxu0 %v382
    %4293 = vmatpush.msra.mxu0 %v374
    %4294 = vmatpush.msra.mxu0 %v366
    %4295 = vmatpush.msra.mxu0 %v358
    %4296 = vmatpush.msra.mxu0 %v350
    %4297 = vmatpush.msra.mxu0 %v342
    %4298 = vmatpush.msra.mxu0 %v334
    %4299 = vmatpush.msra.mxu0 %v326
    %4300 = vmatpush.msra.mxu0 %v318
    %4301 = vmatpush.msra.mxu0 %v310
    %4302 = vmatpush.msra.mxu0 %v302
    %4303 = vmatpush.msra.mxu0 %v294
    %4304 = vmatpush.msra.mxu0 %v286
    %4305 = vmatmul.f32.gmra.mxu0 %v3194
    %v4306 = vpop.f32.mrf.mxu0
    %v4307 = vadd.f32 %v4287, %v4306
    %4308 = vdwg.mxu0
    %4309 = vmatpush.msra.mxu0 %v534
    %4310 = vmatpush.msra.mxu0 %v526
    %4311 = vmatpush.msra.mxu0 %v518
    %4312 = vmatpush.msra.mxu0 %v510
    %4313 = vmatpush.msra.mxu0 %v502
    %4314 = vmatpush.msra.mxu0 %v494
    %4315 = vmatpush.msra.mxu0 %v486
    %4316 = vmatpush.msra.mxu0 %v478
    %4317 = vmatpush.msra.mxu0 %v470
    %4318 = vmatpush.msra.mxu0 %v462
    %4319 = vmatpush.msra.mxu0 %v454
    %4320 = vmatpush.msra.mxu0 %v446
    %4321 = vmatpush.msra.mxu0 %v438
    %4322 = vmatpush.msra.mxu0 %v430
    %4323 = vmatpush.msra.mxu0 %v422
    %4324 = vmatpush.msra.mxu0 %v414
    %4325 = vmatmul.f32.gmra.mxu0 %v3195
    %v4326 = vpop.f32.mrf.mxu0
    %v4327 = vadd.f32 %v4307, %v4326
    %4328 = vdwg.mxu0
    %4329 = vmatpush.msra.mxu0 %v662
    %4330 = vmatpush.msra.mxu0 %v654
    %4331 = vmatpush.msra.mxu0 %v646
    %4332 = vmatpush.msra.mxu0 %v638
    %4333 = vmatpush.msra.mxu0 %v630
    %4334 = vmatpush.msra.mxu0 %v622
    %4335 = vmatpush.msra.mxu0 %v614
    %4336 = vmatpush.msra.mxu0 %v606
    %4337 = vmatpush.msra.mxu0 %v598
    %4338 = vmatpush.msra.mxu0 %v590
    %4339 = vmatpush.msra.mxu0 %v582
    %4340 = vmatpush.msra.mxu0 %v574
    %4341 = vmatpush.msra.mxu0 %v566
    %4342 = vmatpush.msra.mxu0 %v558
    %4343 = vmatpush.msra.mxu0 %v550
    %4344 = vmatpush.msra.mxu0 %v542
    %4345 = vmatmul.f32.gmra.mxu0 %v3196
    %v4346 = vpop.f32.mrf.mxu0
    %v4347 = vadd.f32 %v4327, %v4346
    %4348 = vdwg.mxu0
    %4349 = vmatpush.msra.mxu0 %v790
    %4350 = vmatpush.msra.mxu0 %v782
    %4351 = vmatpush.msra.mxu0 %v774
    %4352 = vmatpush.msra.mxu0 %v766
    %4353 = vmatpush.msra.mxu0 %v758
    %4354 = vmatpush.msra.mxu0 %v750
    %4355 = vmatpush.msra.mxu0 %v742
    %4356 = vmatpush.msra.mxu0 %v734
    %4357 = vmatpush.msra.mxu0 %v726
    %4358 = vmatpush.msra.mxu0 %v718
    %4359 = vmatpush.msra.mxu0 %v710
    %4360 = vmatpush.msra.mxu0 %v702
    %4361 = vmatpush.msra.mxu0 %v694
    %4362 = vmatpush.msra.mxu0 %v686
    %4363 = vmatpush.msra.mxu0 %v678
    %4364 = vmatpush.msra.mxu0 %v670
    %4365 = vmatmul.f32.gmra.mxu0 %v3197
    %v4366 = vpop.f32.mrf.mxu0
    %v4367 = vadd.f32 %v4347, %v4366
    %4368 = vdwg.mxu0
    %4369 = vmatpush.msra.mxu0 %v918
    %4370 = vmatpush.msra.mxu0 %v910
    %4371 = vmatpush.msra.mxu0 %v902
    %4372 = vmatpush.msra.mxu0 %v894
    %4373 = vmatpush.msra.mxu0 %v886
    %4374 = vmatpush.msra.mxu0 %v878
    %4375 = vmatpush.msra.mxu0 %v870
    %4376 = vmatpush.msra.mxu0 %v862
    %4377 = vmatpush.msra.mxu0 %v854
    %4378 = vmatpush.msra.mxu0 %v846
    %4379 = vmatpush.msra.mxu0 %v838
    %4380 = vmatpush.msra.mxu0 %v830
    %4381 = vmatpush.msra.mxu0 %v822
    %4382 = vmatpush.msra.mxu0 %v814
    %4383 = vmatpush.msra.mxu0 %v806
    %4384 = vmatpush.msra.mxu0 %v798
    %4385 = vmatmul.f32.gmra.mxu0 %v3198
    %v4386 = vpop.f32.mrf.mxu0
    %v4387 = vadd.f32 %v4367, %v4386
    %4388 = vdwg.mxu0
    %4389 = vmatpush.msra.mxu0 %v1046
    %4390 = vmatpush.msra.mxu0 %v1038
    %4391 = vmatpush.msra.mxu0 %v1030
    %4392 = vmatpush.msra.mxu0 %v1022
    %4393 = vmatpush.msra.mxu0 %v1014
    %4394 = vmatpush.msra.mxu0 %v1006
    %4395 = vmatpush.msra.mxu0 %v998
    %4396 = vmatpush.msra.mxu0 %v990
    %4397 = vmatpush.msra.mxu0 %v982
    %4398 = vmatpush.msra.mxu0 %v974
    %4399 = vmatpush.msra.mxu0 %v966
    %4400 = vmatpush.msra.mxu0 %v958
    %4401 = vmatpush.msra.mxu0 %v950
    %4402 = vmatpush.msra.mxu0 %v942
    %4403 = vmatpush.msra.mxu0 %v934
    %4404 = vmatpush.msra.mxu0 %v926
    %4405 = vmatmul.f32.gmra.mxu0 %v3199
    %v4406 = vpop.f32.mrf.mxu0
    %v4407 = vadd.f32 %v4387, %v4406
    %4408 = vdwg.mxu0
    %4409 = vmatpush.msra.mxu0 %v1174
    %4410 = vmatpush.msra.mxu0 %v1166
    %4411 = vmatpush.msra.mxu0 %v1158
    %4412 = vmatpush.msra.mxu0 %v1150
    %4413 = vmatpush.msra.mxu0 %v1142
    %4414 = vmatpush.msra.mxu0 %v1134
    %4415 = vmatpush.msra.mxu0 %v1126
    %4416 = vmatpush.msra.mxu0 %v1118
    %4417 = vmatpush.msra.mxu0 %v1110
    %4418 = vmatpush.msra.mxu0 %v1102
    %4419 = vmatpush.msra.mxu0 %v1094
    %4420 = vmatpush.msra.mxu0 %v1086
    %4421 = vmatpush.msra.mxu0 %v1078
    %4422 = vmatpush.msra.mxu0 %v1070
    %4423 = vmatpush.msra.mxu0 %v1062
    %4424 = vmatpush.msra.mxu0 %v1054
    %4425 = vmatmul.f32.gmra.mxu0 %v3202
    %v4426 = vpop.f32.mrf.mxu0
    %v4427 = vadd.f32 %v4407, %v4426
    %4428 = vdwg.mxu0
    %4429 = vmatpush.msra.mxu0 %v1302
    %4430 = vmatpush.msra.mxu0 %v1294
    %4431 = vmatpush.msra.mxu0 %v1286
    %4432 = vmatpush.msra.mxu0 %v1278
    %4433 = vmatpush.msra.mxu0 %v1270
    %4434 = vmatpush.msra.mxu0 %v1262
    %4435 = vmatpush.msra.mxu0 %v1254
    %4436 = vmatpush.msra.mxu0 %v1246
    %4437 = vmatpush.msra.mxu0 %v1238
    %4438 = vmatpush.msra.mxu0 %v1230
    %4439 = vmatpush.msra.mxu0 %v1222
    %4440 = vmatpush.msra.mxu0 %v1214
    %4441 = vmatpush.msra.mxu0 %v1206
    %4442 = vmatpush.msra.mxu0 %v1198
    %4443 = vmatpush.msra.mxu0 %v1190
    %4444 = vmatpush.msra.mxu0 %v1182
    %4445 = vmatmul.f32.gmra.mxu0 %v3203
    %v4446 = vpop.f32.mrf.mxu0
    %v4447 = vadd.f32 %v4427, %v4446
    %4448 = vdwg.mxu0
    %4449 = vmatpush.msra.mxu0 %v1430
    %4450 = vmatpush.msra.mxu0 %v1422
    %4451 = vmatpush.msra.mxu0 %v1414
    %4452 = vmatpush.msra.mxu0 %v1406
    %4453 = vmatpush.msra.mxu0 %v1398
    %4454 = vmatpush.msra.mxu0 %v1390
    %4455 = vmatpush.msra.mxu0 %v1382
    %4456 = vmatpush.msra.mxu0 %v1374
    %4457 = vmatpush.msra.mxu0 %v1366
    %4458 = vmatpush.msra.mxu0 %v1358
    %4459 = vmatpush.msra.mxu0 %v1350
    %4460 = vmatpush.msra.mxu0 %v1342
    %4461 = vmatpush.msra.mxu0 %v1334
    %4462 = vmatpush.msra.mxu0 %v1326
    %4463 = vmatpush.msra.mxu0 %v1318
    %4464 = vmatpush.msra.mxu0 %v1310
    %4465 = vmatmul.f32.gmra.mxu0 %v3204
    %v4466 = vpop.f32.mrf.mxu0
    %v4467 = vadd.f32 %v4447, %v4466
    %4468 = vdwg.mxu0
    %4469 = vmatpush.msra.mxu0 %v1558
    %4470 = vmatpush.msra.mxu0 %v1550
    %4471 = vmatpush.msra.mxu0 %v1542
    %4472 = vmatpush.msra.mxu0 %v1534
    %4473 = vmatpush.msra.mxu0 %v1526
    %4474 = vmatpush.msra.mxu0 %v1518
    %4475 = vmatpush.msra.mxu0 %v1510
    %4476 = vmatpush.msra.mxu0 %v1502
    %4477 = vmatpush.msra.mxu0 %v1494
    %4478 = vmatpush.msra.mxu0 %v1486
    %4479 = vmatpush.msra.mxu0 %v1478
    %4480 = vmatpush.msra.mxu0 %v1470
    %4481 = vmatpush.msra.mxu0 %v1462
    %4482 = vmatpush.msra.mxu0 %v1454
    %4483 = vmatpush.msra.mxu0 %v1446
    %4484 = vmatpush.msra.mxu0 %v1438
    %4485 = vmatmul.f32.gmra.mxu0 %v3205
    %v4486 = vpop.f32.mrf.mxu0
    %v4487 = vadd.f32 %v4467, %v4486
    %4488 = vdwg.mxu0
    %4489 = vmatpush.msra.mxu0 %v1686
    %4490 = vmatpush.msra.mxu0 %v1678
    %4491 = vmatpush.msra.mxu0 %v1670
    %4492 = vmatpush.msra.mxu0 %v1662
    %4493 = vmatpush.msra.mxu0 %v1654
    %4494 = vmatpush.msra.mxu0 %v1646
    %4495 = vmatpush.msra.mxu0 %v1638
    %4496 = vmatpush.msra.mxu0 %v1630
    %4497 = vmatpush.msra.mxu0 %v1622
    %4498 = vmatpush.msra.mxu0 %v1614
    %4499 = vmatpush.msra.mxu0 %v1606
    %4500 = vmatpush.msra.mxu0 %v1598
    %4501 = vmatpush.msra.mxu0 %v1590
    %4502 = vmatpush.msra.mxu0 %v1582
    %4503 = vmatpush.msra.mxu0 %v1574
    %4504 = vmatpush.msra.mxu0 %v1566
    %4505 = vmatmul.f32.gmra.mxu0 %v3206
    %v4506 = vpop.f32.mrf.mxu0
    %v4507 = vadd.f32 %v4487, %v4506
    %4508 = vdwg.mxu0
    %4509 = vmatpush.msra.mxu0 %v1814
    %4510 = vmatpush.msra.mxu0 %v1806
    %4511 = vmatpush.msra.mxu0 %v1798
    %4512 = vmatpush.msra.mxu0 %v1790
    %4513 = vmatpush.msra.mxu0 %v1782
    %4514 = vmatpush.msra.mxu0 %v1774
    %4515 = vmatpush.msra.mxu0 %v1766
    %4516 = vmatpush.msra.mxu0 %v1758
    %4517 = vmatpush.msra.mxu0 %v1750
    %4518 = vmatpush.msra.mxu0 %v1742
    %4519 = vmatpush.msra.mxu0 %v1734
    %4520 = vmatpush.msra.mxu0 %v1726
    %4521 = vmatpush.msra.mxu0 %v1718
    %4522 = vmatpush.msra.mxu0 %v1710
    %4523 = vmatpush.msra.mxu0 %v1702
    %4524 = vmatpush.msra.mxu0 %v1694
    %4525 = vmatmul.f32.gmra.mxu0 %v3207
    %v4526 = vpop.f32.mrf.mxu0
    %v4527 = vadd.f32 %v4507, %v4526
    %4528 = vdwg.mxu0
    %4529 = vmatpush.msra.mxu0 %v1942
    %4530 = vmatpush.msra.mxu0 %v1934
    %4531 = vmatpush.msra.mxu0 %v1926
    %4532 = vmatpush.msra.mxu0 %v1918
    %4533 = vmatpush.msra.mxu0 %v1910
    %4534 = vmatpush.msra.mxu0 %v1902
    %4535 = vmatpush.msra.mxu0 %v1894
    %4536 = vmatpush.msra.mxu0 %v1886
    %4537 = vmatpush.msra.mxu0 %v1878
    %4538 = vmatpush.msra.mxu0 %v1870
    %4539 = vmatpush.msra.mxu0 %v1862
    %4540 = vmatpush.msra.mxu0 %v1854
    %4541 = vmatpush.msra.mxu0 %v1846
    %4542 = vmatpush.msra.mxu0 %v1838
    %4543 = vmatpush.msra.mxu0 %v1830
    %4544 = vmatpush.msra.mxu0 %v1822
    %4545 = vmatmul.f32.gmra.mxu0 %v3208
    %v4546 = vpop.f32.mrf.mxu0
    %v4547 = vadd.f32 %v4527, %v4546
    %4548 = vdwg.mxu0
    %4549 = vmatpush.msra.mxu0 %v2070
    %4550 = vmatpush.msra.mxu0 %v2062
    %4551 = vmatpush.msra.mxu0 %v2054
    %4552 = vmatpush.msra.mxu0 %v2046
    %4553 = vmatpush.msra.mxu0 %v2038
    %4554 = vmatpush.msra.mxu0 %v2030
    %4555 = vmatpush.msra.mxu0 %v2022
    %4556 = vmatpush.msra.mxu0 %v2014
    %4557 = vmatpush.msra.mxu0 %v2006
    %4558 = vmatpush.msra.mxu0 %v1998
    %4559 = vmatpush.msra.mxu0 %v1990
    %4560 = vmatpush.msra.mxu0 %v1982
    %4561 = vmatpush.msra.mxu0 %v1974
    %4562 = vmatpush.msra.mxu0 %v1966
    %4563 = vmatpush.msra.mxu0 %v1958
    %4564 = vmatpush.msra.mxu0 %v1950
    %4565 = vmatmul.f32.gmra.mxu0 %v3209
    %v4566 = vpop.f32.mrf.mxu0
    %v4567 = vadd.f32 %v4547, %v4566
    %4568 = vdwg.mxu0
    %4569 = vmatpush.msra.mxu0 %v2198
    %4570 = vmatpush.msra.mxu0 %v2190
    %4571 = vmatpush.msra.mxu0 %v2182
    %4572 = vmatpush.msra.mxu0 %v2174
    %4573 = vmatpush.msra.mxu0 %v2166
    %4574 = vmatpush.msra.mxu0 %v2158
    %4575 = vmatpush.msra.mxu0 %v2150
    %4576 = vmatpush.msra.mxu0 %v2142
    %4577 = vmatpush.msra.mxu0 %v2134
    %4578 = vmatpush.msra.mxu0 %v2126
    %4579 = vmatpush.msra.mxu0 %v2118
    %4580 = vmatpush.msra.mxu0 %v2110
    %4581 = vmatpush.msra.mxu0 %v2102
    %4582 = vmatpush.msra.mxu0 %v2094
    %4583 = vmatpush.msra.mxu0 %v2086
    %4584 = vmatpush.msra.mxu0 %v2078
    %4585 = vmatmul.f32.gmra.mxu0 %v3212
    %v4586 = vpop.f32.mrf.mxu0
    %v4587 = vadd.f32 %v4567, %v4586
    %4588 = vdwg.mxu0
    %4589 = vmatpush.msra.mxu0 %v2326
    %4590 = vmatpush.msra.mxu0 %v2318
    %4591 = vmatpush.msra.mxu0 %v2310
    %4592 = vmatpush.msra.mxu0 %v2302
    %4593 = vmatpush.msra.mxu0 %v2294
    %4594 = vmatpush.msra.mxu0 %v2286
    %4595 = vmatpush.msra.mxu0 %v2278
    %4596 = vmatpush.msra.mxu0 %v2270
    %4597 = vmatpush.msra.mxu0 %v2262
    %4598 = vmatpush.msra.mxu0 %v2254
    %4599 = vmatpush.msra.mxu0 %v2246
    %4600 = vmatpush.msra.mxu0 %v2238
    %4601 = vmatpush.msra.mxu0 %v2230
    %4602 = vmatpush.msra.mxu0 %v2222
    %4603 = vmatpush.msra.mxu0 %v2214
    %4604 = vmatpush.msra.mxu0 %v2206
    %4605 = vmatmul.f32.gmra.mxu0 %v3213
    %v4606 = vpop.f32.mrf.mxu0
    %v4607 = vadd.f32 %v4587, %v4606
    %4608 = vdwg.mxu0
    %4609 = vmatpush.msra.mxu0 %v2454
    %4610 = vmatpush.msra.mxu0 %v2446
    %4611 = vmatpush.msra.mxu0 %v2438
    %4612 = vmatpush.msra.mxu0 %v2430
    %4613 = vmatpush.msra.mxu0 %v2422
    %4614 = vmatpush.msra.mxu0 %v2414
    %4615 = vmatpush.msra.mxu0 %v2406
    %4616 = vmatpush.msra.mxu0 %v2398
    %4617 = vmatpush.msra.mxu0 %v2390
    %4618 = vmatpush.msra.mxu0 %v2382
    %4619 = vmatpush.msra.mxu0 %v2374
    %4620 = vmatpush.msra.mxu0 %v2366
    %4621 = vmatpush.msra.mxu0 %v2358
    %4622 = vmatpush.msra.mxu0 %v2350
    %4623 = vmatpush.msra.mxu0 %v2342
    %4624 = vmatpush.msra.mxu0 %v2334
    %4625 = vmatmul.f32.gmra.mxu0 %v3214
    %v4626 = vpop.f32.mrf.mxu0
    %v4627 = vadd.f32 %v4607, %v4626
    %4628 = vdwg.mxu0
    %4629 = vmatpush.msra.mxu0 %v2582
    %4630 = vmatpush.msra.mxu0 %v2574
    %4631 = vmatpush.msra.mxu0 %v2566
    %4632 = vmatpush.msra.mxu0 %v2558
    %4633 = vmatpush.msra.mxu0 %v2550
    %4634 = vmatpush.msra.mxu0 %v2542
    %4635 = vmatpush.msra.mxu0 %v2534
    %4636 = vmatpush.msra.mxu0 %v2526
    %4637 = vmatpush.msra.mxu0 %v2518
    %4638 = vmatpush.msra.mxu0 %v2510
    %4639 = vmatpush.msra.mxu0 %v2502
    %4640 = vmatpush.msra.mxu0 %v2494
    %4641 = vmatpush.msra.mxu0 %v2486
    %4642 = vmatpush.msra.mxu0 %v2478
    %4643 = vmatpush.msra.mxu0 %v2470
    %4644 = vmatpush.msra.mxu0 %v2462
    %4645 = vmatmul.f32.gmra.mxu0 %v3215
    %v4646 = vpop.f32.mrf.mxu0
    %v4647 = vadd.f32 %v4627, %v4646
    %4648 = vdwg.mxu0
    %4649 = vmatpush.msra.mxu0 %v2710
    %4650 = vmatpush.msra.mxu0 %v2702
    %4651 = vmatpush.msra.mxu0 %v2694
    %4652 = vmatpush.msra.mxu0 %v2686
    %4653 = vmatpush.msra.mxu0 %v2678
    %4654 = vmatpush.msra.mxu0 %v2670
    %4655 = vmatpush.msra.mxu0 %v2662
    %4656 = vmatpush.msra.mxu0 %v2654
    %4657 = vmatpush.msra.mxu0 %v2646
    %4658 = vmatpush.msra.mxu0 %v2638
    %4659 = vmatpush.msra.mxu0 %v2630
    %4660 = vmatpush.msra.mxu0 %v2622
    %4661 = vmatpush.msra.mxu0 %v2614
    %4662 = vmatpush.msra.mxu0 %v2606
    %4663 = vmatpush.msra.mxu0 %v2598
    %4664 = vmatpush.msra.mxu0 %v2590
    %4665 = vmatmul.f32.gmra.mxu0 %v3216
    %v4666 = vpop.f32.mrf.mxu0
    %v4667 = vadd.f32 %v4647, %v4666
    %4668 = vdwg.mxu0
    %4669 = vmatpush.msra.mxu0 %v2838
    %4670 = vmatpush.msra.mxu0 %v2830
    %4671 = vmatpush.msra.mxu0 %v2822
    %4672 = vmatpush.msra.mxu0 %v2814
    %4673 = vmatpush.msra.mxu0 %v2806
    %4674 = vmatpush.msra.mxu0 %v2798
    %4675 = vmatpush.msra.mxu0 %v2790
    %4676 = vmatpush.msra.mxu0 %v2782
    %4677 = vmatpush.msra.mxu0 %v2774
    %4678 = vmatpush.msra.mxu0 %v2766
    %4679 = vmatpush.msra.mxu0 %v2758
    %4680 = vmatpush.msra.mxu0 %v2750
    %4681 = vmatpush.msra.mxu0 %v2742
    %4682 = vmatpush.msra.mxu0 %v2734
    %4683 = vmatpush.msra.mxu0 %v2726
    %4684 = vmatpush.msra.mxu0 %v2718
    %4685 = vmatmul.f32.gmra.mxu0 %v3217
    %v4686 = vpop.f32.mrf.mxu0
    %v4687 = vadd.f32 %v4667, %v4686
    %4688 = vdwg.mxu0
    %4689 = vmatpush.msra.mxu0 %v2966
    %4690 = vmatpush.msra.mxu0 %v2958
    %4691 = vmatpush.msra.mxu0 %v2950
    %4692 = vmatpush.msra.mxu0 %v2942
    %4693 = vmatpush.msra.mxu0 %v2934
    %4694 = vmatpush.msra.mxu0 %v2926
    %4695 = vmatpush.msra.mxu0 %v2918
    %4696 = vmatpush.msra.mxu0 %v2910
    %4697 = vmatpush.msra.mxu0 %v2902
    %4698 = vmatpush.msra.mxu0 %v2894
    %4699 = vmatpush.msra.mxu0 %v2886
    %4700 = vmatpush.msra.mxu0 %v2878
    %4701 = vmatpush.msra.mxu0 %v2870
    %4702 = vmatpush.msra.mxu0 %v2862
    %4703 = vmatpush.msra.mxu0 %v2854
    %4704 = vmatpush.msra.mxu0 %v2846
    %4705 = vmatmul.f32.gmra.mxu0 %v3218
    %v4706 = vpop.f32.mrf.mxu0
    %v4707 = vadd.f32 %v4687, %v4706
    %4708 = vdwg.mxu0
    %4709 = vmatpush.msra.mxu0 %v3094
    %4710 = vmatpush.msra.mxu0 %v3086
    %4711 = vmatpush.msra.mxu0 %v3078
    %4712 = vmatpush.msra.mxu0 %v3070
    %4713 = vmatpush.msra.mxu0 %v3062
    %4714 = vmatpush.msra.mxu0 %v3054
    %4715 = vmatpush.msra.mxu0 %v3046
    %4716 = vmatpush.msra.mxu0 %v3038
    %4717 = vmatpush.msra.mxu0 %v3030
    %4718 = vmatpush.msra.mxu0 %v3022
    %4719 = vmatpush.msra.mxu0 %v3014
    %4720 = vmatpush.msra.mxu0 %v3006
    %4721 = vmatpush.msra.mxu0 %v2998
    %4722 = vmatpush.msra.mxu0 %v2990
    %4723 = vmatpush.msra.mxu0 %v2982
    %4724 = vmatpush.msra.mxu0 %v2974
    %4725 = vmatmul.f32.gmra.mxu0 %v3219
    %v4726 = vpop.f32.mrf.mxu0
    %v4727 = vadd.f32 %v4707, %v4726
    %4728 = vdwg.mxu0
    %4729 = vmatpush.msra.mxu0 0.0
    %4730 = vmatpush.msra.mxu0 0.0
    %4731 = vmatpush.msra.mxu0 0.0
    %4732 = vmatpush.msra.mxu0 0.0
    %4733 = vmatpush.msra.mxu0 0.0
    %4734 = vmatpush.msra.mxu0 0.0
    %4735 = vmatpush.msra.mxu0 0.0
    %4736 = vmatpush.msra.mxu0 0.0
    %4737 = vmatpush.msra.mxu0 %v3158
    %4738 = vmatpush.msra.mxu0 %v3150
    %4739 = vmatpush.msra.mxu0 %v3142
    %4740 = vmatpush.msra.mxu0 %v3134
    %4741 = vmatpush.msra.mxu0 %v3126
    %4742 = vmatpush.msra.mxu0 %v3118
    %4743 = vmatpush.msra.mxu0 %v3110
    %4744 = vmatpush.msra.mxu0 %v3102
    %4745 = vmatmul.f32.gmra.mxu0 %v3247
    %v4746 = vpop.f32.mrf.mxu0
    %v4747 = vadd.f32 %v4727, %v4746
    %4748 = vdwg.mxu0
    %4749 = vmatpush.msra.mxu0 %v151
    %4750 = vmatpush.msra.mxu0 %v143
    %4751 = vmatpush.msra.mxu0 %v135
    %4752 = vmatpush.msra.mxu0 %v127
    %4753 = vmatpush.msra.mxu0 %v119
    %4754 = vmatpush.msra.mxu0 %v111
    %4755 = vmatpush.msra.mxu0 %v103
    %4756 = vmatpush.msra.mxu0 %v95
    %4757 = vmatpush.msra.mxu0 %v87
    %4758 = vmatpush.msra.mxu0 %v79
    %4759 = vmatpush.msra.mxu0 %v71
    %4760 = vmatpush.msra.mxu0 %v63
    %4761 = vmatpush.msra.mxu0 %v55
    %4762 = vmatpush.msra.mxu0 %v47
    %4763 = vmatpush.msra.mxu0 %v39
    %4764 = vmatpush.msra.mxu0 %v31
    %4765 = vmatmul.f32.gmra.mxu0 %v3192
    %v4766 = vpop.f32.mrf.mxu0
    %v4767 = vadd.f32 %v3169, %v4766
    %4768 = vdwg.mxu0
    %4769 = vmatpush.msra.mxu0 %v279
    %4770 = vmatpush.msra.mxu0 %v271
    %4771 = vmatpush.msra.mxu0 %v263
    %4772 = vmatpush.msra.mxu0 %v255
    %4773 = vmatpush.msra.mxu0 %v247
    %4774 = vmatpush.msra.mxu0 %v239
    %4775 = vmatpush.msra.mxu0 %v231
    %4776 = vmatpush.msra.mxu0 %v223
    %4777 = vmatpush.msra.mxu0 %v215
    %4778 = vmatpush.msra.mxu0 %v207
    %4779 = vmatpush.msra.mxu0 %v199
    %4780 = vmatpush.msra.mxu0 %v191
    %4781 = vmatpush.msra.mxu0 %v183
    %4782 = vmatpush.msra.mxu0 %v175
    %4783 = vmatpush.msra.mxu0 %v167
    %4784 = vmatpush.msra.mxu0 %v159
    %4785 = vmatmul.f32.gmra.mxu0 %v3193
    %v4786 = vpop.f32.mrf.mxu0
    %v4787 = vadd.f32 %v4767, %v4786
    %4788 = vdwg.mxu0
    %4789 = vmatpush.msra.mxu0 %v407
    %4790 = vmatpush.msra.mxu0 %v399
    %4791 = vmatpush.msra.mxu0 %v391
    %4792 = vmatpush.msra.mxu0 %v383
    %4793 = vmatpush.msra.mxu0 %v375
    %4794 = vmatpush.msra.mxu0 %v367
    %4795 = vmatpush.msra.mxu0 %v359
    %4796 = vmatpush.msra.mxu0 %v351
    %4797 = vmatpush.msra.mxu0 %v343
    %4798 = vmatpush.msra.mxu0 %v335
    %4799 = vmatpush.msra.mxu0 %v327
    %4800 = vmatpush.msra.mxu0 %v319
    %4801 = vmatpush.msra.mxu0 %v311
    %4802 = vmatpush.msra.mxu0 %v303
    %4803 = vmatpush.msra.mxu0 %v295
    %4804 = vmatpush.msra.mxu0 %v287
    %4805 = vmatmul.f32.gmra.mxu0 %v3194
    %v4806 = vpop.f32.mrf.mxu0
    %v4807 = vadd.f32 %v4787, %v4806
    %4808 = vdwg.mxu0
    %4809 = vmatpush.msra.mxu0 %v535
    %4810 = vmatpush.msra.mxu0 %v527
    %4811 = vmatpush.msra.mxu0 %v519
    %4812 = vmatpush.msra.mxu0 %v511
    %4813 = vmatpush.msra.mxu0 %v503
    %4814 = vmatpush.msra.mxu0 %v495
    %4815 = vmatpush.msra.mxu0 %v487
    %4816 = vmatpush.msra.mxu0 %v479
    %4817 = vmatpush.msra.mxu0 %v471
    %4818 = vmatpush.msra.mxu0 %v463
    %4819 = vmatpush.msra.mxu0 %v455
    %4820 = vmatpush.msra.mxu0 %v447
    %4821 = vmatpush.msra.mxu0 %v439
    %4822 = vmatpush.msra.mxu0 %v431
    %4823 = vmatpush.msra.mxu0 %v423
    %4824 = vmatpush.msra.mxu0 %v415
    %4825 = vmatmul.f32.gmra.mxu0 %v3195
    %v4826 = vpop.f32.mrf.mxu0
    %v4827 = vadd.f32 %v4807, %v4826
    %4828 = vdwg.mxu0
    %4829 = vmatpush.msra.mxu0 %v663
    %4830 = vmatpush.msra.mxu0 %v655
    %4831 = vmatpush.msra.mxu0 %v647
    %4832 = vmatpush.msra.mxu0 %v639
    %4833 = vmatpush.msra.mxu0 %v631
    %4834 = vmatpush.msra.mxu0 %v623
    %4835 = vmatpush.msra.mxu0 %v615
    %4836 = vmatpush.msra.mxu0 %v607
    %4837 = vmatpush.msra.mxu0 %v599
    %4838 = vmatpush.msra.mxu0 %v591
    %4839 = vmatpush.msra.mxu0 %v583
    %4840 = vmatpush.msra.mxu0 %v575
    %4841 = vmatpush.msra.mxu0 %v567
    %4842 = vmatpush.msra.mxu0 %v559
    %4843 = vmatpush.msra.mxu0 %v551
    %4844 = vmatpush.msra.mxu0 %v543
    %4845 = vmatmul.f32.gmra.mxu0 %v3196
    %v4846 = vpop.f32.mrf.mxu0
    %v4847 = vadd.f32 %v4827, %v4846
    %4848 = vdwg.mxu0
    %4849 = vmatpush.msra.mxu0 %v791
    %4850 = vmatpush.msra.mxu0 %v783
    %4851 = vmatpush.msra.mxu0 %v775
    %4852 = vmatpush.msra.mxu0 %v767
    %4853 = vmatpush.msra.mxu0 %v759
    %4854 = vmatpush.msra.mxu0 %v751
    %4855 = vmatpush.msra.mxu0 %v743
    %4856 = vmatpush.msra.mxu0 %v735
    %4857 = vmatpush.msra.mxu0 %v727
    %4858 = vmatpush.msra.mxu0 %v719
    %4859 = vmatpush.msra.mxu0 %v711
    %4860 = vmatpush.msra.mxu0 %v703
    %4861 = vmatpush.msra.mxu0 %v695
    %4862 = vmatpush.msra.mxu0 %v687
    %4863 = vmatpush.msra.mxu0 %v679
    %4864 = vmatpush.msra.mxu0 %v671
    %4865 = vmatmul.f32.gmra.mxu0 %v3197
    %v4866 = vpop.f32.mrf.mxu0
    %v4867 = vadd.f32 %v4847, %v4866
    %4868 = vdwg.mxu0
    %4869 = vmatpush.msra.mxu0 %v919
    %4870 = vmatpush.msra.mxu0 %v911
    %4871 = vmatpush.msra.mxu0 %v903
    %4872 = vmatpush.msra.mxu0 %v895
    %4873 = vmatpush.msra.mxu0 %v887
    %4874 = vmatpush.msra.mxu0 %v879
    %4875 = vmatpush.msra.mxu0 %v871
    %4876 = vmatpush.msra.mxu0 %v863
    %4877 = vmatpush.msra.mxu0 %v855
    %4878 = vmatpush.msra.mxu0 %v847
    %4879 = vmatpush.msra.mxu0 %v839
    %4880 = vmatpush.msra.mxu0 %v831
    %4881 = vmatpush.msra.mxu0 %v823
    %4882 = vmatpush.msra.mxu0 %v815
    %4883 = vmatpush.msra.mxu0 %v807
    %4884 = vmatpush.msra.mxu0 %v799
    %4885 = vmatmul.f32.gmra.mxu0 %v3198
    %v4886 = vpop.f32.mrf.mxu0
    %v4887 = vadd.f32 %v4867, %v4886
    %4888 = vdwg.mxu0
    %4889 = vmatpush.msra.mxu0 %v1047
    %4890 = vmatpush.msra.mxu0 %v1039
    %4891 = vmatpush.msra.mxu0 %v1031
    %4892 = vmatpush.msra.mxu0 %v1023
    %4893 = vmatpush.msra.mxu0 %v1015
    %4894 = vmatpush.msra.mxu0 %v1007
    %4895 = vmatpush.msra.mxu0 %v999
    %4896 = vmatpush.msra.mxu0 %v991
    %4897 = vmatpush.msra.mxu0 %v983
    %4898 = vmatpush.msra.mxu0 %v975
    %4899 = vmatpush.msra.mxu0 %v967
    %4900 = vmatpush.msra.mxu0 %v959
    %4901 = vmatpush.msra.mxu0 %v951
    %4902 = vmatpush.msra.mxu0 %v943
    %4903 = vmatpush.msra.mxu0 %v935
    %4904 = vmatpush.msra.mxu0 %v927
    %4905 = vmatmul.f32.gmra.mxu0 %v3199
    %v4906 = vpop.f32.mrf.mxu0
    %v4907 = vadd.f32 %v4887, %v4906
    %4908 = vdwg.mxu0
    %4909 = vmatpush.msra.mxu0 %v1175
    %4910 = vmatpush.msra.mxu0 %v1167
    %4911 = vmatpush.msra.mxu0 %v1159
    %4912 = vmatpush.msra.mxu0 %v1151
    %4913 = vmatpush.msra.mxu0 %v1143
    %4914 = vmatpush.msra.mxu0 %v1135
    %4915 = vmatpush.msra.mxu0 %v1127
    %4916 = vmatpush.msra.mxu0 %v1119
    %4917 = vmatpush.msra.mxu0 %v1111
    %4918 = vmatpush.msra.mxu0 %v1103
    %4919 = vmatpush.msra.mxu0 %v1095
    %4920 = vmatpush.msra.mxu0 %v1087
    %4921 = vmatpush.msra.mxu0 %v1079
    %4922 = vmatpush.msra.mxu0 %v1071
    %4923 = vmatpush.msra.mxu0 %v1063
    %4924 = vmatpush.msra.mxu0 %v1055
    %4925 = vmatmul.f32.gmra.mxu0 %v3202
    %v4926 = vpop.f32.mrf.mxu0
    %v4927 = vadd.f32 %v4907, %v4926
    %4928 = vdwg.mxu0
    %4929 = vmatpush.msra.mxu0 %v1303
    %4930 = vmatpush.msra.mxu0 %v1295
    %4931 = vmatpush.msra.mxu0 %v1287
    %4932 = vmatpush.msra.mxu0 %v1279
    %4933 = vmatpush.msra.mxu0 %v1271
    %4934 = vmatpush.msra.mxu0 %v1263
    %4935 = vmatpush.msra.mxu0 %v1255
    %4936 = vmatpush.msra.mxu0 %v1247
    %4937 = vmatpush.msra.mxu0 %v1239
    %4938 = vmatpush.msra.mxu0 %v1231
    %4939 = vmatpush.msra.mxu0 %v1223
    %4940 = vmatpush.msra.mxu0 %v1215
    %4941 = vmatpush.msra.mxu0 %v1207
    %4942 = vmatpush.msra.mxu0 %v1199
    %4943 = vmatpush.msra.mxu0 %v1191
    %4944 = vmatpush.msra.mxu0 %v1183
    %4945 = vmatmul.f32.gmra.mxu0 %v3203
    %v4946 = vpop.f32.mrf.mxu0
    %v4947 = vadd.f32 %v4927, %v4946
    %4948 = vdwg.mxu0
    %4949 = vmatpush.msra.mxu0 %v1431
    %4950 = vmatpush.msra.mxu0 %v1423
    %4951 = vmatpush.msra.mxu0 %v1415
    %4952 = vmatpush.msra.mxu0 %v1407
    %4953 = vmatpush.msra.mxu0 %v1399
    %4954 = vmatpush.msra.mxu0 %v1391
    %4955 = vmatpush.msra.mxu0 %v1383
    %4956 = vmatpush.msra.mxu0 %v1375
    %4957 = vmatpush.msra.mxu0 %v1367
    %4958 = vmatpush.msra.mxu0 %v1359
    %4959 = vmatpush.msra.mxu0 %v1351
    %4960 = vmatpush.msra.mxu0 %v1343
    %4961 = vmatpush.msra.mxu0 %v1335
    %4962 = vmatpush.msra.mxu0 %v1327
    %4963 = vmatpush.msra.mxu0 %v1319
    %4964 = vmatpush.msra.mxu0 %v1311
    %4965 = vmatmul.f32.gmra.mxu0 %v3204
    %v4966 = vpop.f32.mrf.mxu0
    %v4967 = vadd.f32 %v4947, %v4966
    %4968 = vdwg.mxu0
    %4969 = vmatpush.msra.mxu0 %v1559
    %4970 = vmatpush.msra.mxu0 %v1551
    %4971 = vmatpush.msra.mxu0 %v1543
    %4972 = vmatpush.msra.mxu0 %v1535
    %4973 = vmatpush.msra.mxu0 %v1527
    %4974 = vmatpush.msra.mxu0 %v1519
    %4975 = vmatpush.msra.mxu0 %v1511
    %4976 = vmatpush.msra.mxu0 %v1503
    %4977 = vmatpush.msra.mxu0 %v1495
    %4978 = vmatpush.msra.mxu0 %v1487
    %4979 = vmatpush.msra.mxu0 %v1479
    %4980 = vmatpush.msra.mxu0 %v1471
    %4981 = vmatpush.msra.mxu0 %v1463
    %4982 = vmatpush.msra.mxu0 %v1455
    %4983 = vmatpush.msra.mxu0 %v1447
    %4984 = vmatpush.msra.mxu0 %v1439
    %4985 = vmatmul.f32.gmra.mxu0 %v3205
    %v4986 = vpop.f32.mrf.mxu0
    %v4987 = vadd.f32 %v4967, %v4986
    %4988 = vdwg.mxu0
    %4989 = vmatpush.msra.mxu0 %v1687
    %4990 = vmatpush.msra.mxu0 %v1679
    %4991 = vmatpush.msra.mxu0 %v1671
    %4992 = vmatpush.msra.mxu0 %v1663
    %4993 = vmatpush.msra.mxu0 %v1655
    %4994 = vmatpush.msra.mxu0 %v1647
    %4995 = vmatpush.msra.mxu0 %v1639
    %4996 = vmatpush.msra.mxu0 %v1631
    %4997 = vmatpush.msra.mxu0 %v1623
    %4998 = vmatpush.msra.mxu0 %v1615
    %4999 = vmatpush.msra.mxu0 %v1607
    %5000 = vmatpush.msra.mxu0 %v1599
    %5001 = vmatpush.msra.mxu0 %v1591
    %5002 = vmatpush.msra.mxu0 %v1583
    %5003 = vmatpush.msra.mxu0 %v1575
    %5004 = vmatpush.msra.mxu0 %v1567
    %5005 = vmatmul.f32.gmra.mxu0 %v3206
    %v5006 = vpop.f32.mrf.mxu0
    %v5007 = vadd.f32 %v4987, %v5006
    %5008 = vdwg.mxu0
    %5009 = vmatpush.msra.mxu0 %v1815
    %5010 = vmatpush.msra.mxu0 %v1807
    %5011 = vmatpush.msra.mxu0 %v1799
    %5012 = vmatpush.msra.mxu0 %v1791
    %5013 = vmatpush.msra.mxu0 %v1783
    %5014 = vmatpush.msra.mxu0 %v1775
    %5015 = vmatpush.msra.mxu0 %v1767
    %5016 = vmatpush.msra.mxu0 %v1759
    %5017 = vmatpush.msra.mxu0 %v1751
    %5018 = vmatpush.msra.mxu0 %v1743
    %5019 = vmatpush.msra.mxu0 %v1735
    %5020 = vmatpush.msra.mxu0 %v1727
    %5021 = vmatpush.msra.mxu0 %v1719
    %5022 = vmatpush.msra.mxu0 %v1711
    %5023 = vmatpush.msra.mxu0 %v1703
    %5024 = vmatpush.msra.mxu0 %v1695
    %5025 = vmatmul.f32.gmra.mxu0 %v3207
    %v5026 = vpop.f32.mrf.mxu0
    %v5027 = vadd.f32 %v5007, %v5026
    %5028 = vdwg.mxu0
    %5029 = vmatpush.msra.mxu0 %v1943
    %5030 = vmatpush.msra.mxu0 %v1935
    %5031 = vmatpush.msra.mxu0 %v1927
    %5032 = vmatpush.msra.mxu0 %v1919
    %5033 = vmatpush.msra.mxu0 %v1911
    %5034 = vmatpush.msra.mxu0 %v1903
    %5035 = vmatpush.msra.mxu0 %v1895
    %5036 = vmatpush.msra.mxu0 %v1887
    %5037 = vmatpush.msra.mxu0 %v1879
    %5038 = vmatpush.msra.mxu0 %v1871
    %5039 = vmatpush.msra.mxu0 %v1863
    %5040 = vmatpush.msra.mxu0 %v1855
    %5041 = vmatpush.msra.mxu0 %v1847
    %5042 = vmatpush.msra.mxu0 %v1839
    %5043 = vmatpush.msra.mxu0 %v1831
    %5044 = vmatpush.msra.mxu0 %v1823
    %5045 = vmatmul.f32.gmra.mxu0 %v3208
    %v5046 = vpop.f32.mrf.mxu0
    %v5047 = vadd.f32 %v5027, %v5046
    %5048 = vdwg.mxu0
    %5049 = vmatpush.msra.mxu0 %v2071
    %5050 = vmatpush.msra.mxu0 %v2063
    %5051 = vmatpush.msra.mxu0 %v2055
    %5052 = vmatpush.msra.mxu0 %v2047
    %5053 = vmatpush.msra.mxu0 %v2039
    %5054 = vmatpush.msra.mxu0 %v2031
    %5055 = vmatpush.msra.mxu0 %v2023
    %5056 = vmatpush.msra.mxu0 %v2015
    %5057 = vmatpush.msra.mxu0 %v2007
    %5058 = vmatpush.msra.mxu0 %v1999
    %5059 = vmatpush.msra.mxu0 %v1991
    %5060 = vmatpush.msra.mxu0 %v1983
    %5061 = vmatpush.msra.mxu0 %v1975
    %5062 = vmatpush.msra.mxu0 %v1967
    %5063 = vmatpush.msra.mxu0 %v1959
    %5064 = vmatpush.msra.mxu0 %v1951
    %5065 = vmatmul.f32.gmra.mxu0 %v3209
    %v5066 = vpop.f32.mrf.mxu0
    %v5067 = vadd.f32 %v5047, %v5066
    %5068 = vdwg.mxu0
    %5069 = vmatpush.msra.mxu0 %v2199
    %5070 = vmatpush.msra.mxu0 %v2191
    %5071 = vmatpush.msra.mxu0 %v2183
    %5072 = vmatpush.msra.mxu0 %v2175
    %5073 = vmatpush.msra.mxu0 %v2167
    %5074 = vmatpush.msra.mxu0 %v2159
    %5075 = vmatpush.msra.mxu0 %v2151
    %5076 = vmatpush.msra.mxu0 %v2143
    %5077 = vmatpush.msra.mxu0 %v2135
    %5078 = vmatpush.msra.mxu0 %v2127
    %5079 = vmatpush.msra.mxu0 %v2119
    %5080 = vmatpush.msra.mxu0 %v2111
    %5081 = vmatpush.msra.mxu0 %v2103
    %5082 = vmatpush.msra.mxu0 %v2095
    %5083 = vmatpush.msra.mxu0 %v2087
    %5084 = vmatpush.msra.mxu0 %v2079
    %5085 = vmatmul.f32.gmra.mxu0 %v3212
    %v5086 = vpop.f32.mrf.mxu0
    %v5087 = vadd.f32 %v5067, %v5086
    %5088 = vdwg.mxu0
    %5089 = vmatpush.msra.mxu0 %v2327
    %5090 = vmatpush.msra.mxu0 %v2319
    %5091 = vmatpush.msra.mxu0 %v2311
    %5092 = vmatpush.msra.mxu0 %v2303
    %5093 = vmatpush.msra.mxu0 %v2295
    %5094 = vmatpush.msra.mxu0 %v2287
    %5095 = vmatpush.msra.mxu0 %v2279
    %5096 = vmatpush.msra.mxu0 %v2271
    %5097 = vmatpush.msra.mxu0 %v2263
    %5098 = vmatpush.msra.mxu0 %v2255
    %5099 = vmatpush.msra.mxu0 %v2247
    %5100 = vmatpush.msra.mxu0 %v2239
    %5101 = vmatpush.msra.mxu0 %v2231
    %5102 = vmatpush.msra.mxu0 %v2223
    %5103 = vmatpush.msra.mxu0 %v2215
    %5104 = vmatpush.msra.mxu0 %v2207
    %5105 = vmatmul.f32.gmra.mxu0 %v3213
    %v5106 = vpop.f32.mrf.mxu0
    %v5107 = vadd.f32 %v5087, %v5106
    %5108 = vdwg.mxu0
    %5109 = vmatpush.msra.mxu0 %v2455
    %5110 = vmatpush.msra.mxu0 %v2447
    %5111 = vmatpush.msra.mxu0 %v2439
    %5112 = vmatpush.msra.mxu0 %v2431
    %5113 = vmatpush.msra.mxu0 %v2423
    %5114 = vmatpush.msra.mxu0 %v2415
    %5115 = vmatpush.msra.mxu0 %v2407
    %5116 = vmatpush.msra.mxu0 %v2399
    %5117 = vmatpush.msra.mxu0 %v2391
    %5118 = vmatpush.msra.mxu0 %v2383
    %5119 = vmatpush.msra.mxu0 %v2375
    %5120 = vmatpush.msra.mxu0 %v2367
    %5121 = vmatpush.msra.mxu0 %v2359
    %5122 = vmatpush.msra.mxu0 %v2351
    %5123 = vmatpush.msra.mxu0 %v2343
    %5124 = vmatpush.msra.mxu0 %v2335
    %5125 = vmatmul.f32.gmra.mxu0 %v3214
    %v5126 = vpop.f32.mrf.mxu0
    %v5127 = vadd.f32 %v5107, %v5126
    %5128 = vdwg.mxu0
    %5129 = vmatpush.msra.mxu0 %v2583
    %5130 = vmatpush.msra.mxu0 %v2575
    %5131 = vmatpush.msra.mxu0 %v2567
    %5132 = vmatpush.msra.mxu0 %v2559
    %5133 = vmatpush.msra.mxu0 %v2551
    %5134 = vmatpush.msra.mxu0 %v2543
    %5135 = vmatpush.msra.mxu0 %v2535
    %5136 = vmatpush.msra.mxu0 %v2527
    %5137 = vmatpush.msra.mxu0 %v2519
    %5138 = vmatpush.msra.mxu0 %v2511
    %5139 = vmatpush.msra.mxu0 %v2503
    %5140 = vmatpush.msra.mxu0 %v2495
    %5141 = vmatpush.msra.mxu0 %v2487
    %5142 = vmatpush.msra.mxu0 %v2479
    %5143 = vmatpush.msra.mxu0 %v2471
    %5144 = vmatpush.msra.mxu0 %v2463
    %5145 = vmatmul.f32.gmra.mxu0 %v3215
    %v5146 = vpop.f32.mrf.mxu0
    %v5147 = vadd.f32 %v5127, %v5146
    %5148 = vdwg.mxu0
    %5149 = vmatpush.msra.mxu0 %v2711
    %5150 = vmatpush.msra.mxu0 %v2703
    %5151 = vmatpush.msra.mxu0 %v2695
    %5152 = vmatpush.msra.mxu0 %v2687
    %5153 = vmatpush.msra.mxu0 %v2679
    %5154 = vmatpush.msra.mxu0 %v2671
    %5155 = vmatpush.msra.mxu0 %v2663
    %5156 = vmatpush.msra.mxu0 %v2655
    %5157 = vmatpush.msra.mxu0 %v2647
    %5158 = vmatpush.msra.mxu0 %v2639
    %5159 = vmatpush.msra.mxu0 %v2631
    %5160 = vmatpush.msra.mxu0 %v2623
    %5161 = vmatpush.msra.mxu0 %v2615
    %5162 = vmatpush.msra.mxu0 %v2607
    %5163 = vmatpush.msra.mxu0 %v2599
    %5164 = vmatpush.msra.mxu0 %v2591
    %5165 = vmatmul.f32.gmra.mxu0 %v3216
    %v5166 = vpop.f32.mrf.mxu0
    %v5167 = vadd.f32 %v5147, %v5166
    %5168 = vdwg.mxu0
    %5169 = vmatpush.msra.mxu0 %v2839
    %5170 = vmatpush.msra.mxu0 %v2831
    %5171 = vmatpush.msra.mxu0 %v2823
    %5172 = vmatpush.msra.mxu0 %v2815
    %5173 = vmatpush.msra.mxu0 %v2807
    %5174 = vmatpush.msra.mxu0 %v2799
    %5175 = vmatpush.msra.mxu0 %v2791
    %5176 = vmatpush.msra.mxu0 %v2783
    %5177 = vmatpush.msra.mxu0 %v2775
    %5178 = vmatpush.msra.mxu0 %v2767
    %5179 = vmatpush.msra.mxu0 %v2759
    %5180 = vmatpush.msra.mxu0 %v2751
    %5181 = vmatpush.msra.mxu0 %v2743
    %5182 = vmatpush.msra.mxu0 %v2735
    %5183 = vmatpush.msra.mxu0 %v2727
    %5184 = vmatpush.msra.mxu0 %v2719
    %5185 = vmatmul.f32.gmra.mxu0 %v3217
    %v5186 = vpop.f32.mrf.mxu0
    %v5187 = vadd.f32 %v5167, %v5186
    %5188 = vdwg.mxu0
    %5189 = vmatpush.msra.mxu0 %v2967
    %5190 = vmatpush.msra.mxu0 %v2959
    %5191 = vmatpush.msra.mxu0 %v2951
    %5192 = vmatpush.msra.mxu0 %v2943
    %5193 = vmatpush.msra.mxu0 %v2935
    %5194 = vmatpush.msra.mxu0 %v2927
    %5195 = vmatpush.msra.mxu0 %v2919
    %5196 = vmatpush.msra.mxu0 %v2911
    %5197 = vmatpush.msra.mxu0 %v2903
    %5198 = vmatpush.msra.mxu0 %v2895
    %5199 = vmatpush.msra.mxu0 %v2887
    %5200 = vmatpush.msra.mxu0 %v2879
    %5201 = vmatpush.msra.mxu0 %v2871
    %5202 = vmatpush.msra.mxu0 %v2863
    %5203 = vmatpush.msra.mxu0 %v2855
    %5204 = vmatpush.msra.mxu0 %v2847
    %5205 = vmatmul.f32.gmra.mxu0 %v3218
    %v5206 = vpop.f32.mrf.mxu0
    %v5207 = vadd.f32 %v5187, %v5206
    %5208 = vdwg.mxu0
    %5209 = vmatpush.msra.mxu0 %v3095
    %5210 = vmatpush.msra.mxu0 %v3087
    %5211 = vmatpush.msra.mxu0 %v3079
    %5212 = vmatpush.msra.mxu0 %v3071
    %5213 = vmatpush.msra.mxu0 %v3063
    %5214 = vmatpush.msra.mxu0 %v3055
    %5215 = vmatpush.msra.mxu0 %v3047
    %5216 = vmatpush.msra.mxu0 %v3039
    %5217 = vmatpush.msra.mxu0 %v3031
    %5218 = vmatpush.msra.mxu0 %v3023
    %5219 = vmatpush.msra.mxu0 %v3015
    %5220 = vmatpush.msra.mxu0 %v3007
    %5221 = vmatpush.msra.mxu0 %v2999
    %5222 = vmatpush.msra.mxu0 %v2991
    %5223 = vmatpush.msra.mxu0 %v2983
    %5224 = vmatpush.msra.mxu0 %v2975
    %5225 = vmatmul.f32.gmra.mxu0 %v3219
    %v5226 = vpop.f32.mrf.mxu0
    %v5227 = vadd.f32 %v5207, %v5226
    %5228 = vdwg.mxu0
    %5229 = vmatpush.msra.mxu0 0.0
    %5230 = vmatpush.msra.mxu0 0.0
    %5231 = vmatpush.msra.mxu0 0.0
    %5232 = vmatpush.msra.mxu0 0.0
    %5233 = vmatpush.msra.mxu0 0.0
    %5234 = vmatpush.msra.mxu0 0.0
    %5235 = vmatpush.msra.mxu0 0.0
    %5236 = vmatpush.msra.mxu0 0.0
    %5237 = vmatpush.msra.mxu0 %v3159
    %5238 = vmatpush.msra.mxu0 %v3151
    %5239 = vmatpush.msra.mxu0 %v3143
    %5240 = vmatpush.msra.mxu0 %v3135
    %5241 = vmatpush.msra.mxu0 %v3127
    %5242 = vmatpush.msra.mxu0 %v3119
    %5243 = vmatpush.msra.mxu0 %v3111
    %5244 = vmatpush.msra.mxu0 %v3103
    %5245 = vmatmul.f32.gmra.mxu0 %v3247
    %v5246 = vpop.f32.mrf.mxu0
    %v5247 = vadd.f32 %v5227, %v5246
    %5248 = vdwg.mxu0
    %5249 = vmatpush.msra.mxu0 %v152
    %5250 = vmatpush.msra.mxu0 %v144
    %5251 = vmatpush.msra.mxu0 %v136
    %5252 = vmatpush.msra.mxu0 %v128
    %5253 = vmatpush.msra.mxu0 %v120
    %5254 = vmatpush.msra.mxu0 %v112
    %5255 = vmatpush.msra.mxu0 %v104
    %5256 = vmatpush.msra.mxu0 %v96
    %5257 = vmatpush.msra.mxu0 %v88
    %5258 = vmatpush.msra.mxu0 %v80
    %5259 = vmatpush.msra.mxu0 %v72
    %5260 = vmatpush.msra.mxu0 %v64
    %5261 = vmatpush.msra.mxu0 %v56
    %5262 = vmatpush.msra.mxu0 %v48
    %5263 = vmatpush.msra.mxu0 %v40
    %5264 = vmatpush.msra.mxu0 %v32
    %5265 = vmatmul.f32.gmra.mxu0 %v3192
    %v5266 = vpop.f32.mrf.mxu0
    %v5267 = vadd.f32 %v3170, %v5266
    %5268 = vdwg.mxu0
    %5269 = vmatpush.msra.mxu0 %v280
    %5270 = vmatpush.msra.mxu0 %v272
    %5271 = vmatpush.msra.mxu0 %v264
    %5272 = vmatpush.msra.mxu0 %v256
    %5273 = vmatpush.msra.mxu0 %v248
    %5274 = vmatpush.msra.mxu0 %v240
    %5275 = vmatpush.msra.mxu0 %v232
    %5276 = vmatpush.msra.mxu0 %v224
    %5277 = vmatpush.msra.mxu0 %v216
    %5278 = vmatpush.msra.mxu0 %v208
    %5279 = vmatpush.msra.mxu0 %v200
    %5280 = vmatpush.msra.mxu0 %v192
    %5281 = vmatpush.msra.mxu0 %v184
    %5282 = vmatpush.msra.mxu0 %v176
    %5283 = vmatpush.msra.mxu0 %v168
    %5284 = vmatpush.msra.mxu0 %v160
    %5285 = vmatmul.f32.gmra.mxu0 %v3193
    %v5286 = vpop.f32.mrf.mxu0
    %v5287 = vadd.f32 %v5267, %v5286
    %5288 = vdwg.mxu0
    %5289 = vmatpush.msra.mxu0 %v408
    %5290 = vmatpush.msra.mxu0 %v400
    %5291 = vmatpush.msra.mxu0 %v392
    %5292 = vmatpush.msra.mxu0 %v384
    %5293 = vmatpush.msra.mxu0 %v376
    %5294 = vmatpush.msra.mxu0 %v368
    %5295 = vmatpush.msra.mxu0 %v360
    %5296 = vmatpush.msra.mxu0 %v352
    %5297 = vmatpush.msra.mxu0 %v344
    %5298 = vmatpush.msra.mxu0 %v336
    %5299 = vmatpush.msra.mxu0 %v328
    %5300 = vmatpush.msra.mxu0 %v320
    %5301 = vmatpush.msra.mxu0 %v312
    %5302 = vmatpush.msra.mxu0 %v304
    %5303 = vmatpush.msra.mxu0 %v296
    %5304 = vmatpush.msra.mxu0 %v288
    %5305 = vmatmul.f32.gmra.mxu0 %v3194
    %v5306 = vpop.f32.mrf.mxu0
    %v5307 = vadd.f32 %v5287, %v5306
    %5308 = vdwg.mxu0
    %5309 = vmatpush.msra.mxu0 %v536
    %5310 = vmatpush.msra.mxu0 %v528
    %5311 = vmatpush.msra.mxu0 %v520
    %5312 = vmatpush.msra.mxu0 %v512
    %5313 = vmatpush.msra.mxu0 %v504
    %5314 = vmatpush.msra.mxu0 %v496
    %5315 = vmatpush.msra.mxu0 %v488
    %5316 = vmatpush.msra.mxu0 %v480
    %5317 = vmatpush.msra.mxu0 %v472
    %5318 = vmatpush.msra.mxu0 %v464
    %5319 = vmatpush.msra.mxu0 %v456
    %5320 = vmatpush.msra.mxu0 %v448
    %5321 = vmatpush.msra.mxu0 %v440
    %5322 = vmatpush.msra.mxu0 %v432
    %5323 = vmatpush.msra.mxu0 %v424
    %5324 = vmatpush.msra.mxu0 %v416
    %5325 = vmatmul.f32.gmra.mxu0 %v3195
    %v5326 = vpop.f32.mrf.mxu0
    %v5327 = vadd.f32 %v5307, %v5326
    %5328 = vdwg.mxu0
    %5329 = vmatpush.msra.mxu0 %v664
    %5330 = vmatpush.msra.mxu0 %v656
    %5331 = vmatpush.msra.mxu0 %v648
    %5332 = vmatpush.msra.mxu0 %v640
    %5333 = vmatpush.msra.mxu0 %v632
    %5334 = vmatpush.msra.mxu0 %v624
    %5335 = vmatpush.msra.mxu0 %v616
    %5336 = vmatpush.msra.mxu0 %v608
    %5337 = vmatpush.msra.mxu0 %v600
    %5338 = vmatpush.msra.mxu0 %v592
    %5339 = vmatpush.msra.mxu0 %v584
    %5340 = vmatpush.msra.mxu0 %v576
    %5341 = vmatpush.msra.mxu0 %v568
    %5342 = vmatpush.msra.mxu0 %v560
    %5343 = vmatpush.msra.mxu0 %v552
    %5344 = vmatpush.msra.mxu0 %v544
    %5345 = vmatmul.f32.gmra.mxu0 %v3196
    %v5346 = vpop.f32.mrf.mxu0
    %v5347 = vadd.f32 %v5327, %v5346
    %5348 = vdwg.mxu0
    %5349 = vmatpush.msra.mxu0 %v792
    %5350 = vmatpush.msra.mxu0 %v784
    %5351 = vmatpush.msra.mxu0 %v776
    %5352 = vmatpush.msra.mxu0 %v768
    %5353 = vmatpush.msra.mxu0 %v760
    %5354 = vmatpush.msra.mxu0 %v752
    %5355 = vmatpush.msra.mxu0 %v744
    %5356 = vmatpush.msra.mxu0 %v736
    %5357 = vmatpush.msra.mxu0 %v728
    %5358 = vmatpush.msra.mxu0 %v720
    %5359 = vmatpush.msra.mxu0 %v712
    %5360 = vmatpush.msra.mxu0 %v704
    %5361 = vmatpush.msra.mxu0 %v696
    %5362 = vmatpush.msra.mxu0 %v688
    %5363 = vmatpush.msra.mxu0 %v680
    %5364 = vmatpush.msra.mxu0 %v672
    %5365 = vmatmul.f32.gmra.mxu0 %v3197
    %v5366 = vpop.f32.mrf.mxu0
    %v5367 = vadd.f32 %v5347, %v5366
    %5368 = vdwg.mxu0
    %5369 = vmatpush.msra.mxu0 %v920
    %5370 = vmatpush.msra.mxu0 %v912
    %5371 = vmatpush.msra.mxu0 %v904
    %5372 = vmatpush.msra.mxu0 %v896
    %5373 = vmatpush.msra.mxu0 %v888
    %5374 = vmatpush.msra.mxu0 %v880
    %5375 = vmatpush.msra.mxu0 %v872
    %5376 = vmatpush.msra.mxu0 %v864
    %5377 = vmatpush.msra.mxu0 %v856
    %5378 = vmatpush.msra.mxu0 %v848
    %5379 = vmatpush.msra.mxu0 %v840
    %5380 = vmatpush.msra.mxu0 %v832
    %5381 = vmatpush.msra.mxu0 %v824
    %5382 = vmatpush.msra.mxu0 %v816
    %5383 = vmatpush.msra.mxu0 %v808
    %5384 = vmatpush.msra.mxu0 %v800
    %5385 = vmatmul.f32.gmra.mxu0 %v3198
    %v5386 = vpop.f32.mrf.mxu0
    %v5387 = vadd.f32 %v5367, %v5386
    %5388 = vdwg.mxu0
    %5389 = vmatpush.msra.mxu0 %v1048
    %5390 = vmatpush.msra.mxu0 %v1040
    %5391 = vmatpush.msra.mxu0 %v1032
    %5392 = vmatpush.msra.mxu0 %v1024
    %5393 = vmatpush.msra.mxu0 %v1016
    %5394 = vmatpush.msra.mxu0 %v1008
    %5395 = vmatpush.msra.mxu0 %v1000
    %5396 = vmatpush.msra.mxu0 %v992
    %5397 = vmatpush.msra.mxu0 %v984
    %5398 = vmatpush.msra.mxu0 %v976
    %5399 = vmatpush.msra.mxu0 %v968
    %5400 = vmatpush.msra.mxu0 %v960
    %5401 = vmatpush.msra.mxu0 %v952
    %5402 = vmatpush.msra.mxu0 %v944
    %5403 = vmatpush.msra.mxu0 %v936
    %5404 = vmatpush.msra.mxu0 %v928
    %5405 = vmatmul.f32.gmra.mxu0 %v3199
    %v5406 = vpop.f32.mrf.mxu0
    %v5407 = vadd.f32 %v5387, %v5406
    %5408 = vdwg.mxu0
    %5409 = vmatpush.msra.mxu0 %v1176
    %5410 = vmatpush.msra.mxu0 %v1168
    %5411 = vmatpush.msra.mxu0 %v1160
    %5412 = vmatpush.msra.mxu0 %v1152
    %5413 = vmatpush.msra.mxu0 %v1144
    %5414 = vmatpush.msra.mxu0 %v1136
    %5415 = vmatpush.msra.mxu0 %v1128
    %5416 = vmatpush.msra.mxu0 %v1120
    %5417 = vmatpush.msra.mxu0 %v1112
    %5418 = vmatpush.msra.mxu0 %v1104
    %5419 = vmatpush.msra.mxu0 %v1096
    %5420 = vmatpush.msra.mxu0 %v1088
    %5421 = vmatpush.msra.mxu0 %v1080
    %5422 = vmatpush.msra.mxu0 %v1072
    %5423 = vmatpush.msra.mxu0 %v1064
    %5424 = vmatpush.msra.mxu0 %v1056
    %5425 = vmatmul.f32.gmra.mxu0 %v3202
    %v5426 = vpop.f32.mrf.mxu0
    %v5427 = vadd.f32 %v5407, %v5426
    %5428 = vdwg.mxu0
    %5429 = vmatpush.msra.mxu0 %v1304
    %5430 = vmatpush.msra.mxu0 %v1296
    %5431 = vmatpush.msra.mxu0 %v1288
    %5432 = vmatpush.msra.mxu0 %v1280
    %5433 = vmatpush.msra.mxu0 %v1272
    %5434 = vmatpush.msra.mxu0 %v1264
    %5435 = vmatpush.msra.mxu0 %v1256
    %5436 = vmatpush.msra.mxu0 %v1248
    %5437 = vmatpush.msra.mxu0 %v1240
    %5438 = vmatpush.msra.mxu0 %v1232
    %5439 = vmatpush.msra.mxu0 %v1224
    %5440 = vmatpush.msra.mxu0 %v1216
    %5441 = vmatpush.msra.mxu0 %v1208
    %5442 = vmatpush.msra.mxu0 %v1200
    %5443 = vmatpush.msra.mxu0 %v1192
    %5444 = vmatpush.msra.mxu0 %v1184
    %5445 = vmatmul.f32.gmra.mxu0 %v3203
    %v5446 = vpop.f32.mrf.mxu0
    %v5447 = vadd.f32 %v5427, %v5446
    %5448 = vdwg.mxu0
    %5449 = vmatpush.msra.mxu0 %v1432
    %5450 = vmatpush.msra.mxu0 %v1424
    %5451 = vmatpush.msra.mxu0 %v1416
    %5452 = vmatpush.msra.mxu0 %v1408
    %5453 = vmatpush.msra.mxu0 %v1400
    %5454 = vmatpush.msra.mxu0 %v1392
    %5455 = vmatpush.msra.mxu0 %v1384
    %5456 = vmatpush.msra.mxu0 %v1376
    %5457 = vmatpush.msra.mxu0 %v1368
    %5458 = vmatpush.msra.mxu0 %v1360
    %5459 = vmatpush.msra.mxu0 %v1352
    %5460 = vmatpush.msra.mxu0 %v1344
    %5461 = vmatpush.msra.mxu0 %v1336
    %5462 = vmatpush.msra.mxu0 %v1328
    %5463 = vmatpush.msra.mxu0 %v1320
    %5464 = vmatpush.msra.mxu0 %v1312
    %5465 = vmatmul.f32.gmra.mxu0 %v3204
    %v5466 = vpop.f32.mrf.mxu0
    %v5467 = vadd.f32 %v5447, %v5466
    %5468 = vdwg.mxu0
    %5469 = vmatpush.msra.mxu0 %v1560
    %5470 = vmatpush.msra.mxu0 %v1552
    %5471 = vmatpush.msra.mxu0 %v1544
    %5472 = vmatpush.msra.mxu0 %v1536
    %5473 = vmatpush.msra.mxu0 %v1528
    %5474 = vmatpush.msra.mxu0 %v1520
    %5475 = vmatpush.msra.mxu0 %v1512
    %5476 = vmatpush.msra.mxu0 %v1504
    %5477 = vmatpush.msra.mxu0 %v1496
    %5478 = vmatpush.msra.mxu0 %v1488
    %5479 = vmatpush.msra.mxu0 %v1480
    %5480 = vmatpush.msra.mxu0 %v1472
    %5481 = vmatpush.msra.mxu0 %v1464
    %5482 = vmatpush.msra.mxu0 %v1456
    %5483 = vmatpush.msra.mxu0 %v1448
    %5484 = vmatpush.msra.mxu0 %v1440
    %5485 = vmatmul.f32.gmra.mxu0 %v3205
    %v5486 = vpop.f32.mrf.mxu0
    %v5487 = vadd.f32 %v5467, %v5486
    %5488 = vdwg.mxu0
    %5489 = vmatpush.msra.mxu0 %v1688
    %5490 = vmatpush.msra.mxu0 %v1680
    %5491 = vmatpush.msra.mxu0 %v1672
    %5492 = vmatpush.msra.mxu0 %v1664
    %5493 = vmatpush.msra.mxu0 %v1656
    %5494 = vmatpush.msra.mxu0 %v1648
    %5495 = vmatpush.msra.mxu0 %v1640
    %5496 = vmatpush.msra.mxu0 %v1632
    %5497 = vmatpush.msra.mxu0 %v1624
    %5498 = vmatpush.msra.mxu0 %v1616
    %5499 = vmatpush.msra.mxu0 %v1608
    %5500 = vmatpush.msra.mxu0 %v1600
    %5501 = vmatpush.msra.mxu0 %v1592
    %5502 = vmatpush.msra.mxu0 %v1584
    %5503 = vmatpush.msra.mxu0 %v1576
    %5504 = vmatpush.msra.mxu0 %v1568
    %5505 = vmatmul.f32.gmra.mxu0 %v3206
    %v5506 = vpop.f32.mrf.mxu0
    %v5507 = vadd.f32 %v5487, %v5506
    %5508 = vdwg.mxu0
    %5509 = vmatpush.msra.mxu0 %v1816
    %5510 = vmatpush.msra.mxu0 %v1808
    %5511 = vmatpush.msra.mxu0 %v1800
    %5512 = vmatpush.msra.mxu0 %v1792
    %5513 = vmatpush.msra.mxu0 %v1784
    %5514 = vmatpush.msra.mxu0 %v1776
    %5515 = vmatpush.msra.mxu0 %v1768
    %5516 = vmatpush.msra.mxu0 %v1760
    %5517 = vmatpush.msra.mxu0 %v1752
    %5518 = vmatpush.msra.mxu0 %v1744
    %5519 = vmatpush.msra.mxu0 %v1736
    %5520 = vmatpush.msra.mxu0 %v1728
    %5521 = vmatpush.msra.mxu0 %v1720
    %5522 = vmatpush.msra.mxu0 %v1712
    %5523 = vmatpush.msra.mxu0 %v1704
    %5524 = vmatpush.msra.mxu0 %v1696
    %5525 = vmatmul.f32.gmra.mxu0 %v3207
    %v5526 = vpop.f32.mrf.mxu0
    %v5527 = vadd.f32 %v5507, %v5526
    %5528 = vdwg.mxu0
    %5529 = vmatpush.msra.mxu0 %v1944
    %5530 = vmatpush.msra.mxu0 %v1936
    %5531 = vmatpush.msra.mxu0 %v1928
    %5532 = vmatpush.msra.mxu0 %v1920
    %5533 = vmatpush.msra.mxu0 %v1912
    %5534 = vmatpush.msra.mxu0 %v1904
    %5535 = vmatpush.msra.mxu0 %v1896
    %5536 = vmatpush.msra.mxu0 %v1888
    %5537 = vmatpush.msra.mxu0 %v1880
    %5538 = vmatpush.msra.mxu0 %v1872
    %5539 = vmatpush.msra.mxu0 %v1864
    %5540 = vmatpush.msra.mxu0 %v1856
    %5541 = vmatpush.msra.mxu0 %v1848
    %5542 = vmatpush.msra.mxu0 %v1840
    %5543 = vmatpush.msra.mxu0 %v1832
    %5544 = vmatpush.msra.mxu0 %v1824
    %5545 = vmatmul.f32.gmra.mxu0 %v3208
    %v5546 = vpop.f32.mrf.mxu0
    %v5547 = vadd.f32 %v5527, %v5546
    %5548 = vdwg.mxu0
    %5549 = vmatpush.msra.mxu0 %v2072
    %5550 = vmatpush.msra.mxu0 %v2064
    %5551 = vmatpush.msra.mxu0 %v2056
    %5552 = vmatpush.msra.mxu0 %v2048
    %5553 = vmatpush.msra.mxu0 %v2040
    %5554 = vmatpush.msra.mxu0 %v2032
    %5555 = vmatpush.msra.mxu0 %v2024
    %5556 = vmatpush.msra.mxu0 %v2016
    %5557 = vmatpush.msra.mxu0 %v2008
    %5558 = vmatpush.msra.mxu0 %v2000
    %5559 = vmatpush.msra.mxu0 %v1992
    %5560 = vmatpush.msra.mxu0 %v1984
    %5561 = vmatpush.msra.mxu0 %v1976
    %5562 = vmatpush.msra.mxu0 %v1968
    %5563 = vmatpush.msra.mxu0 %v1960
    %5564 = vmatpush.msra.mxu0 %v1952
    %5565 = vmatmul.f32.gmra.mxu0 %v3209
    %v5566 = vpop.f32.mrf.mxu0
    %v5567 = vadd.f32 %v5547, %v5566
    %5568 = vdwg.mxu0
    %5569 = vmatpush.msra.mxu0 %v2200
    %5570 = vmatpush.msra.mxu0 %v2192
    %5571 = vmatpush.msra.mxu0 %v2184
    %5572 = vmatpush.msra.mxu0 %v2176
    %5573 = vmatpush.msra.mxu0 %v2168
    %5574 = vmatpush.msra.mxu0 %v2160
    %5575 = vmatpush.msra.mxu0 %v2152
    %5576 = vmatpush.msra.mxu0 %v2144
    %5577 = vmatpush.msra.mxu0 %v2136
    %5578 = vmatpush.msra.mxu0 %v2128
    %5579 = vmatpush.msra.mxu0 %v2120
    %5580 = vmatpush.msra.mxu0 %v2112
    %5581 = vmatpush.msra.mxu0 %v2104
    %5582 = vmatpush.msra.mxu0 %v2096
    %5583 = vmatpush.msra.mxu0 %v2088
    %5584 = vmatpush.msra.mxu0 %v2080
    %5585 = vmatmul.f32.gmra.mxu0 %v3212
    %v5586 = vpop.f32.mrf.mxu0
    %v5587 = vadd.f32 %v5567, %v5586
    %5588 = vdwg.mxu0
    %5589 = vmatpush.msra.mxu0 %v2328
    %5590 = vmatpush.msra.mxu0 %v2320
    %5591 = vmatpush.msra.mxu0 %v2312
    %5592 = vmatpush.msra.mxu0 %v2304
    %5593 = vmatpush.msra.mxu0 %v2296
    %5594 = vmatpush.msra.mxu0 %v2288
    %5595 = vmatpush.msra.mxu0 %v2280
    %5596 = vmatpush.msra.mxu0 %v2272
    %5597 = vmatpush.msra.mxu0 %v2264
    %5598 = vmatpush.msra.mxu0 %v2256
    %5599 = vmatpush.msra.mxu0 %v2248
    %5600 = vmatpush.msra.mxu0 %v2240
    %5601 = vmatpush.msra.mxu0 %v2232
    %5602 = vmatpush.msra.mxu0 %v2224
    %5603 = vmatpush.msra.mxu0 %v2216
    %5604 = vmatpush.msra.mxu0 %v2208
    %5605 = vmatmul.f32.gmra.mxu0 %v3213
    %v5606 = vpop.f32.mrf.mxu0
    %v5607 = vadd.f32 %v5587, %v5606
    %5608 = vdwg.mxu0
    %5609 = vmatpush.msra.mxu0 %v2456
    %5610 = vmatpush.msra.mxu0 %v2448
    %5611 = vmatpush.msra.mxu0 %v2440
    %5612 = vmatpush.msra.mxu0 %v2432
    %5613 = vmatpush.msra.mxu0 %v2424
    %5614 = vmatpush.msra.mxu0 %v2416
    %5615 = vmatpush.msra.mxu0 %v2408
    %5616 = vmatpush.msra.mxu0 %v2400
    %5617 = vmatpush.msra.mxu0 %v2392
    %5618 = vmatpush.msra.mxu0 %v2384
    %5619 = vmatpush.msra.mxu0 %v2376
    %5620 = vmatpush.msra.mxu0 %v2368
    %5621 = vmatpush.msra.mxu0 %v2360
    %5622 = vmatpush.msra.mxu0 %v2352
    %5623 = vmatpush.msra.mxu0 %v2344
    %5624 = vmatpush.msra.mxu0 %v2336
    %5625 = vmatmul.f32.gmra.mxu0 %v3214
    %v5626 = vpop.f32.mrf.mxu0
    %v5627 = vadd.f32 %v5607, %v5626
    %5628 = vdwg.mxu0
    %5629 = vmatpush.msra.mxu0 %v2584
    %5630 = vmatpush.msra.mxu0 %v2576
    %5631 = vmatpush.msra.mxu0 %v2568
    %5632 = vmatpush.msra.mxu0 %v2560
    %5633 = vmatpush.msra.mxu0 %v2552
    %5634 = vmatpush.msra.mxu0 %v2544
    %5635 = vmatpush.msra.mxu0 %v2536
    %5636 = vmatpush.msra.mxu0 %v2528
    %5637 = vmatpush.msra.mxu0 %v2520
    %5638 = vmatpush.msra.mxu0 %v2512
    %5639 = vmatpush.msra.mxu0 %v2504
    %5640 = vmatpush.msra.mxu0 %v2496
    %5641 = vmatpush.msra.mxu0 %v2488
    %5642 = vmatpush.msra.mxu0 %v2480
    %5643 = vmatpush.msra.mxu0 %v2472
    %5644 = vmatpush.msra.mxu0 %v2464
    %5645 = vmatmul.f32.gmra.mxu0 %v3215
    %v5646 = vpop.f32.mrf.mxu0
    %v5647 = vadd.f32 %v5627, %v5646
    %5648 = vdwg.mxu0
    %5649 = vmatpush.msra.mxu0 %v2712
    %5650 = vmatpush.msra.mxu0 %v2704
    %5651 = vmatpush.msra.mxu0 %v2696
    %5652 = vmatpush.msra.mxu0 %v2688
    %5653 = vmatpush.msra.mxu0 %v2680
    %5654 = vmatpush.msra.mxu0 %v2672
    %5655 = vmatpush.msra.mxu0 %v2664
    %5656 = vmatpush.msra.mxu0 %v2656
    %5657 = vmatpush.msra.mxu0 %v2648
    %5658 = vmatpush.msra.mxu0 %v2640
    %5659 = vmatpush.msra.mxu0 %v2632
    %5660 = vmatpush.msra.mxu0 %v2624
    %5661 = vmatpush.msra.mxu0 %v2616
    %5662 = vmatpush.msra.mxu0 %v2608
    %5663 = vmatpush.msra.mxu0 %v2600
    %5664 = vmatpush.msra.mxu0 %v2592
    %5665 = vmatmul.f32.gmra.mxu0 %v3216
    %v5666 = vpop.f32.mrf.mxu0
    %v5667 = vadd.f32 %v5647, %v5666
    %5668 = vdwg.mxu0
    %5669 = vmatpush.msra.mxu0 %v2840
    %5670 = vmatpush.msra.mxu0 %v2832
    %5671 = vmatpush.msra.mxu0 %v2824
    %5672 = vmatpush.msra.mxu0 %v2816
    %5673 = vmatpush.msra.mxu0 %v2808
    %5674 = vmatpush.msra.mxu0 %v2800
    %5675 = vmatpush.msra.mxu0 %v2792
    %5676 = vmatpush.msra.mxu0 %v2784
    %5677 = vmatpush.msra.mxu0 %v2776
    %5678 = vmatpush.msra.mxu0 %v2768
    %5679 = vmatpush.msra.mxu0 %v2760
    %5680 = vmatpush.msra.mxu0 %v2752
    %5681 = vmatpush.msra.mxu0 %v2744
    %5682 = vmatpush.msra.mxu0 %v2736
    %5683 = vmatpush.msra.mxu0 %v2728
    %5684 = vmatpush.msra.mxu0 %v2720
    %5685 = vmatmul.f32.gmra.mxu0 %v3217
    %v5686 = vpop.f32.mrf.mxu0
    %v5687 = vadd.f32 %v5667, %v5686
    %5688 = vdwg.mxu0
    %5689 = vmatpush.msra.mxu0 %v2968
    %5690 = vmatpush.msra.mxu0 %v2960
    %5691 = vmatpush.msra.mxu0 %v2952
    %5692 = vmatpush.msra.mxu0 %v2944
    %5693 = vmatpush.msra.mxu0 %v2936
    %5694 = vmatpush.msra.mxu0 %v2928
    %5695 = vmatpush.msra.mxu0 %v2920
    %5696 = vmatpush.msra.mxu0 %v2912
    %5697 = vmatpush.msra.mxu0 %v2904
    %5698 = vmatpush.msra.mxu0 %v2896
    %5699 = vmatpush.msra.mxu0 %v2888
    %5700 = vmatpush.msra.mxu0 %v2880
    %5701 = vmatpush.msra.mxu0 %v2872
    %5702 = vmatpush.msra.mxu0 %v2864
    %5703 = vmatpush.msra.mxu0 %v2856
    %5704 = vmatpush.msra.mxu0 %v2848
    %5705 = vmatmul.f32.gmra.mxu0 %v3218
    %v5706 = vpop.f32.mrf.mxu0
    %v5707 = vadd.f32 %v5687, %v5706
    %5708 = vdwg.mxu0
    %5709 = vmatpush.msra.mxu0 %v3096
    %5710 = vmatpush.msra.mxu0 %v3088
    %5711 = vmatpush.msra.mxu0 %v3080
    %5712 = vmatpush.msra.mxu0 %v3072
    %5713 = vmatpush.msra.mxu0 %v3064
    %5714 = vmatpush.msra.mxu0 %v3056
    %5715 = vmatpush.msra.mxu0 %v3048
    %5716 = vmatpush.msra.mxu0 %v3040
    %5717 = vmatpush.msra.mxu0 %v3032
    %5718 = vmatpush.msra.mxu0 %v3024
    %5719 = vmatpush.msra.mxu0 %v3016
    %5720 = vmatpush.msra.mxu0 %v3008
    %5721 = vmatpush.msra.mxu0 %v3000
    %5722 = vmatpush.msra.mxu0 %v2992
    %5723 = vmatpush.msra.mxu0 %v2984
    %5724 = vmatpush.msra.mxu0 %v2976
    %5725 = vmatmul.f32.gmra.mxu0 %v3219
    %v5726 = vpop.f32.mrf.mxu0
    %v5727 = vadd.f32 %v5707, %v5726
    %5728 = vdwg.mxu0
    %5729 = vmatpush.msra.mxu0 0.0
    %5730 = vmatpush.msra.mxu0 0.0
    %5731 = vmatpush.msra.mxu0 0.0
    %5732 = vmatpush.msra.mxu0 0.0
    %5733 = vmatpush.msra.mxu0 0.0
    %5734 = vmatpush.msra.mxu0 0.0
    %5735 = vmatpush.msra.mxu0 0.0
    %5736 = vmatpush.msra.mxu0 0.0
    %5737 = vmatpush.msra.mxu0 %v3160
    %5738 = vmatpush.msra.mxu0 %v3152
    %5739 = vmatpush.msra.mxu0 %v3144
    %5740 = vmatpush.msra.mxu0 %v3136
    %5741 = vmatpush.msra.mxu0 %v3128
    %5742 = vmatpush.msra.mxu0 %v3120
    %5743 = vmatpush.msra.mxu0 %v3112
    %5744 = vmatpush.msra.mxu0 %v3104
    %5745 = vmatmul.f32.gmra.mxu0 %v3247
    %v5746 = vpop.f32.mrf.mxu0
    %v5747 = vadd.f32 %v5727, %v5746
    %5748 = vdwg.mxu0
    %5749 = vmatpush.msra.mxu0 %v153
    %5750 = vmatpush.msra.mxu0 %v145
    %5751 = vmatpush.msra.mxu0 %v137
    %5752 = vmatpush.msra.mxu0 %v129
    %5753 = vmatpush.msra.mxu0 %v121
    %5754 = vmatpush.msra.mxu0 %v113
    %5755 = vmatpush.msra.mxu0 %v105
    %5756 = vmatpush.msra.mxu0 %v97
    %5757 = vmatpush.msra.mxu0 %v89
    %5758 = vmatpush.msra.mxu0 %v81
    %5759 = vmatpush.msra.mxu0 %v73
    %5760 = vmatpush.msra.mxu0 %v65
    %5761 = vmatpush.msra.mxu0 %v57
    %5762 = vmatpush.msra.mxu0 %v49
    %5763 = vmatpush.msra.mxu0 %v41
    %5764 = vmatpush.msra.mxu0 %v33
    %5765 = vmatmul.f32.gmra.mxu0 %v3192
    %v5766 = vpop.f32.mrf.mxu0
    %v5767 = vadd.f32 %v3171, %v5766
    %5768 = vdwg.mxu0
    %5769 = vmatpush.msra.mxu0 %v281
    %5770 = vmatpush.msra.mxu0 %v273
    %5771 = vmatpush.msra.mxu0 %v265
    %5772 = vmatpush.msra.mxu0 %v257
    %5773 = vmatpush.msra.mxu0 %v249
    %5774 = vmatpush.msra.mxu0 %v241
    %5775 = vmatpush.msra.mxu0 %v233
    %5776 = vmatpush.msra.mxu0 %v225
    %5777 = vmatpush.msra.mxu0 %v217
    %5778 = vmatpush.msra.mxu0 %v209
    %5779 = vmatpush.msra.mxu0 %v201
    %5780 = vmatpush.msra.mxu0 %v193
    %5781 = vmatpush.msra.mxu0 %v185
    %5782 = vmatpush.msra.mxu0 %v177
    %5783 = vmatpush.msra.mxu0 %v169
    %5784 = vmatpush.msra.mxu0 %v161
    %5785 = vmatmul.f32.gmra.mxu0 %v3193
    %v5786 = vpop.f32.mrf.mxu0
    %v5787 = vadd.f32 %v5767, %v5786
    %5788 = vdwg.mxu0
    %5789 = vmatpush.msra.mxu0 %v409
    %5790 = vmatpush.msra.mxu0 %v401
    %5791 = vmatpush.msra.mxu0 %v393
    %5792 = vmatpush.msra.mxu0 %v385
    %5793 = vmatpush.msra.mxu0 %v377
    %5794 = vmatpush.msra.mxu0 %v369
    %5795 = vmatpush.msra.mxu0 %v361
    %5796 = vmatpush.msra.mxu0 %v353
    %5797 = vmatpush.msra.mxu0 %v345
    %5798 = vmatpush.msra.mxu0 %v337
    %5799 = vmatpush.msra.mxu0 %v329
    %5800 = vmatpush.msra.mxu0 %v321
    %5801 = vmatpush.msra.mxu0 %v313
    %5802 = vmatpush.msra.mxu0 %v305
    %5803 = vmatpush.msra.mxu0 %v297
    %5804 = vmatpush.msra.mxu0 %v289
    %5805 = vmatmul.f32.gmra.mxu0 %v3194
    %v5806 = vpop.f32.mrf.mxu0
    %v5807 = vadd.f32 %v5787, %v5806
    %5808 = vdwg.mxu0
    %5809 = vmatpush.msra.mxu0 %v537
    %5810 = vmatpush.msra.mxu0 %v529
    %5811 = vmatpush.msra.mxu0 %v521
    %5812 = vmatpush.msra.mxu0 %v513
    %5813 = vmatpush.msra.mxu0 %v505
    %5814 = vmatpush.msra.mxu0 %v497
    %5815 = vmatpush.msra.mxu0 %v489
    %5816 = vmatpush.msra.mxu0 %v481
    %5817 = vmatpush.msra.mxu0 %v473
    %5818 = vmatpush.msra.mxu0 %v465
    %5819 = vmatpush.msra.mxu0 %v457
    %5820 = vmatpush.msra.mxu0 %v449
    %5821 = vmatpush.msra.mxu0 %v441
    %5822 = vmatpush.msra.mxu0 %v433
    %5823 = vmatpush.msra.mxu0 %v425
    %5824 = vmatpush.msra.mxu0 %v417
    %5825 = vmatmul.f32.gmra.mxu0 %v3195
    %v5826 = vpop.f32.mrf.mxu0
    %v5827 = vadd.f32 %v5807, %v5826
    %5828 = vdwg.mxu0
    %5829 = vmatpush.msra.mxu0 %v665
    %5830 = vmatpush.msra.mxu0 %v657
    %5831 = vmatpush.msra.mxu0 %v649
    %5832 = vmatpush.msra.mxu0 %v641
    %5833 = vmatpush.msra.mxu0 %v633
    %5834 = vmatpush.msra.mxu0 %v625
    %5835 = vmatpush.msra.mxu0 %v617
    %5836 = vmatpush.msra.mxu0 %v609
    %5837 = vmatpush.msra.mxu0 %v601
    %5838 = vmatpush.msra.mxu0 %v593
    %5839 = vmatpush.msra.mxu0 %v585
    %5840 = vmatpush.msra.mxu0 %v577
    %5841 = vmatpush.msra.mxu0 %v569
    %5842 = vmatpush.msra.mxu0 %v561
    %5843 = vmatpush.msra.mxu0 %v553
    %5844 = vmatpush.msra.mxu0 %v545
    %5845 = vmatmul.f32.gmra.mxu0 %v3196
    %v5846 = vpop.f32.mrf.mxu0
    %v5847 = vadd.f32 %v5827, %v5846
    %5848 = vdwg.mxu0
    %5849 = vmatpush.msra.mxu0 %v793
    %5850 = vmatpush.msra.mxu0 %v785
    %5851 = vmatpush.msra.mxu0 %v777
    %5852 = vmatpush.msra.mxu0 %v769
    %5853 = vmatpush.msra.mxu0 %v761
    %5854 = vmatpush.msra.mxu0 %v753
    %5855 = vmatpush.msra.mxu0 %v745
    %5856 = vmatpush.msra.mxu0 %v737
    %5857 = vmatpush.msra.mxu0 %v729
    %5858 = vmatpush.msra.mxu0 %v721
    %5859 = vmatpush.msra.mxu0 %v713
    %5860 = vmatpush.msra.mxu0 %v705
    %5861 = vmatpush.msra.mxu0 %v697
    %5862 = vmatpush.msra.mxu0 %v689
    %5863 = vmatpush.msra.mxu0 %v681
    %5864 = vmatpush.msra.mxu0 %v673
    %5865 = vmatmul.f32.gmra.mxu0 %v3197
    %v5866 = vpop.f32.mrf.mxu0
    %v5867 = vadd.f32 %v5847, %v5866
    %5868 = vdwg.mxu0
    %5869 = vmatpush.msra.mxu0 %v921
    %5870 = vmatpush.msra.mxu0 %v913
    %5871 = vmatpush.msra.mxu0 %v905
    %5872 = vmatpush.msra.mxu0 %v897
    %5873 = vmatpush.msra.mxu0 %v889
    %5874 = vmatpush.msra.mxu0 %v881
    %5875 = vmatpush.msra.mxu0 %v873
    %5876 = vmatpush.msra.mxu0 %v865
    %5877 = vmatpush.msra.mxu0 %v857
    %5878 = vmatpush.msra.mxu0 %v849
    %5879 = vmatpush.msra.mxu0 %v841
    %5880 = vmatpush.msra.mxu0 %v833
    %5881 = vmatpush.msra.mxu0 %v825
    %5882 = vmatpush.msra.mxu0 %v817
    %5883 = vmatpush.msra.mxu0 %v809
    %5884 = vmatpush.msra.mxu0 %v801
    %5885 = vmatmul.f32.gmra.mxu0 %v3198
    %v5886 = vpop.f32.mrf.mxu0
    %v5887 = vadd.f32 %v5867, %v5886
    %5888 = vdwg.mxu0
    %5889 = vmatpush.msra.mxu0 %v1049
    %5890 = vmatpush.msra.mxu0 %v1041
    %5891 = vmatpush.msra.mxu0 %v1033
    %5892 = vmatpush.msra.mxu0 %v1025
    %5893 = vmatpush.msra.mxu0 %v1017
    %5894 = vmatpush.msra.mxu0 %v1009
    %5895 = vmatpush.msra.mxu0 %v1001
    %5896 = vmatpush.msra.mxu0 %v993
    %5897 = vmatpush.msra.mxu0 %v985
    %5898 = vmatpush.msra.mxu0 %v977
    %5899 = vmatpush.msra.mxu0 %v969
    %5900 = vmatpush.msra.mxu0 %v961
    %5901 = vmatpush.msra.mxu0 %v953
    %5902 = vmatpush.msra.mxu0 %v945
    %5903 = vmatpush.msra.mxu0 %v937
    %5904 = vmatpush.msra.mxu0 %v929
    %5905 = vmatmul.f32.gmra.mxu0 %v3199
    %v5906 = vpop.f32.mrf.mxu0
    %v5907 = vadd.f32 %v5887, %v5906
    %5908 = vdwg.mxu0
    %5909 = vmatpush.msra.mxu0 %v1177
    %5910 = vmatpush.msra.mxu0 %v1169
    %5911 = vmatpush.msra.mxu0 %v1161
    %5912 = vmatpush.msra.mxu0 %v1153
    %5913 = vmatpush.msra.mxu0 %v1145
    %5914 = vmatpush.msra.mxu0 %v1137
    %5915 = vmatpush.msra.mxu0 %v1129
    %5916 = vmatpush.msra.mxu0 %v1121
    %5917 = vmatpush.msra.mxu0 %v1113
    %5918 = vmatpush.msra.mxu0 %v1105
    %5919 = vmatpush.msra.mxu0 %v1097
    %5920 = vmatpush.msra.mxu0 %v1089
    %5921 = vmatpush.msra.mxu0 %v1081
    %5922 = vmatpush.msra.mxu0 %v1073
    %5923 = vmatpush.msra.mxu0 %v1065
    %5924 = vmatpush.msra.mxu0 %v1057
    %5925 = vmatmul.f32.gmra.mxu0 %v3202
    %v5926 = vpop.f32.mrf.mxu0
    %v5927 = vadd.f32 %v5907, %v5926
    %5928 = vdwg.mxu0
    %5929 = vmatpush.msra.mxu0 %v1305
    %5930 = vmatpush.msra.mxu0 %v1297
    %5931 = vmatpush.msra.mxu0 %v1289
    %5932 = vmatpush.msra.mxu0 %v1281
    %5933 = vmatpush.msra.mxu0 %v1273
    %5934 = vmatpush.msra.mxu0 %v1265
    %5935 = vmatpush.msra.mxu0 %v1257
    %5936 = vmatpush.msra.mxu0 %v1249
    %5937 = vmatpush.msra.mxu0 %v1241
    %5938 = vmatpush.msra.mxu0 %v1233
    %5939 = vmatpush.msra.mxu0 %v1225
    %5940 = vmatpush.msra.mxu0 %v1217
    %5941 = vmatpush.msra.mxu0 %v1209
    %5942 = vmatpush.msra.mxu0 %v1201
    %5943 = vmatpush.msra.mxu0 %v1193
    %5944 = vmatpush.msra.mxu0 %v1185
    %5945 = vmatmul.f32.gmra.mxu0 %v3203
    %v5946 = vpop.f32.mrf.mxu0
    %v5947 = vadd.f32 %v5927, %v5946
    %5948 = vdwg.mxu0
    %5949 = vmatpush.msra.mxu0 %v1433
    %5950 = vmatpush.msra.mxu0 %v1425
    %5951 = vmatpush.msra.mxu0 %v1417
    %5952 = vmatpush.msra.mxu0 %v1409
    %5953 = vmatpush.msra.mxu0 %v1401
    %5954 = vmatpush.msra.mxu0 %v1393
    %5955 = vmatpush.msra.mxu0 %v1385
    %5956 = vmatpush.msra.mxu0 %v1377
    %5957 = vmatpush.msra.mxu0 %v1369
    %5958 = vmatpush.msra.mxu0 %v1361
    %5959 = vmatpush.msra.mxu0 %v1353
    %5960 = vmatpush.msra.mxu0 %v1345
    %5961 = vmatpush.msra.mxu0 %v1337
    %5962 = vmatpush.msra.mxu0 %v1329
    %5963 = vmatpush.msra.mxu0 %v1321
    %5964 = vmatpush.msra.mxu0 %v1313
    %5965 = vmatmul.f32.gmra.mxu0 %v3204
    %v5966 = vpop.f32.mrf.mxu0
    %v5967 = vadd.f32 %v5947, %v5966
    %5968 = vdwg.mxu0
    %5969 = vmatpush.msra.mxu0 %v1561
    %5970 = vmatpush.msra.mxu0 %v1553
    %5971 = vmatpush.msra.mxu0 %v1545
    %5972 = vmatpush.msra.mxu0 %v1537
    %5973 = vmatpush.msra.mxu0 %v1529
    %5974 = vmatpush.msra.mxu0 %v1521
    %5975 = vmatpush.msra.mxu0 %v1513
    %5976 = vmatpush.msra.mxu0 %v1505
    %5977 = vmatpush.msra.mxu0 %v1497
    %5978 = vmatpush.msra.mxu0 %v1489
    %5979 = vmatpush.msra.mxu0 %v1481
    %5980 = vmatpush.msra.mxu0 %v1473
    %5981 = vmatpush.msra.mxu0 %v1465
    %5982 = vmatpush.msra.mxu0 %v1457
    %5983 = vmatpush.msra.mxu0 %v1449
    %5984 = vmatpush.msra.mxu0 %v1441
    %5985 = vmatmul.f32.gmra.mxu0 %v3205
    %v5986 = vpop.f32.mrf.mxu0
    %v5987 = vadd.f32 %v5967, %v5986
    %5988 = vdwg.mxu0
    %5989 = vmatpush.msra.mxu0 %v1689
    %5990 = vmatpush.msra.mxu0 %v1681
    %5991 = vmatpush.msra.mxu0 %v1673
    %5992 = vmatpush.msra.mxu0 %v1665
    %5993 = vmatpush.msra.mxu0 %v1657
    %5994 = vmatpush.msra.mxu0 %v1649
    %5995 = vmatpush.msra.mxu0 %v1641
    %5996 = vmatpush.msra.mxu0 %v1633
    %5997 = vmatpush.msra.mxu0 %v1625
    %5998 = vmatpush.msra.mxu0 %v1617
    %5999 = vmatpush.msra.mxu0 %v1609
    %6000 = vmatpush.msra.mxu0 %v1601
    %6001 = vmatpush.msra.mxu0 %v1593
    %6002 = vmatpush.msra.mxu0 %v1585
    %6003 = vmatpush.msra.mxu0 %v1577
    %6004 = vmatpush.msra.mxu0 %v1569
    %6005 = vmatmul.f32.gmra.mxu0 %v3206
    %v6006 = vpop.f32.mrf.mxu0
    %v6007 = vadd.f32 %v5987, %v6006
    %6008 = vdwg.mxu0
    %6009 = vmatpush.msra.mxu0 %v1817
    %6010 = vmatpush.msra.mxu0 %v1809
    %6011 = vmatpush.msra.mxu0 %v1801
    %6012 = vmatpush.msra.mxu0 %v1793
    %6013 = vmatpush.msra.mxu0 %v1785
    %6014 = vmatpush.msra.mxu0 %v1777
    %6015 = vmatpush.msra.mxu0 %v1769
    %6016 = vmatpush.msra.mxu0 %v1761
    %6017 = vmatpush.msra.mxu0 %v1753
    %6018 = vmatpush.msra.mxu0 %v1745
    %6019 = vmatpush.msra.mxu0 %v1737
    %6020 = vmatpush.msra.mxu0 %v1729
    %6021 = vmatpush.msra.mxu0 %v1721
    %6022 = vmatpush.msra.mxu0 %v1713
    %6023 = vmatpush.msra.mxu0 %v1705
    %6024 = vmatpush.msra.mxu0 %v1697
    %6025 = vmatmul.f32.gmra.mxu0 %v3207
    %v6026 = vpop.f32.mrf.mxu0
    %v6027 = vadd.f32 %v6007, %v6026
    %6028 = vdwg.mxu0
    %6029 = vmatpush.msra.mxu0 %v1945
    %6030 = vmatpush.msra.mxu0 %v1937
    %6031 = vmatpush.msra.mxu0 %v1929
    %6032 = vmatpush.msra.mxu0 %v1921
    %6033 = vmatpush.msra.mxu0 %v1913
    %6034 = vmatpush.msra.mxu0 %v1905
    %6035 = vmatpush.msra.mxu0 %v1897
    %6036 = vmatpush.msra.mxu0 %v1889
    %6037 = vmatpush.msra.mxu0 %v1881
    %6038 = vmatpush.msra.mxu0 %v1873
    %6039 = vmatpush.msra.mxu0 %v1865
    %6040 = vmatpush.msra.mxu0 %v1857
    %6041 = vmatpush.msra.mxu0 %v1849
    %6042 = vmatpush.msra.mxu0 %v1841
    %6043 = vmatpush.msra.mxu0 %v1833
    %6044 = vmatpush.msra.mxu0 %v1825
    %6045 = vmatmul.f32.gmra.mxu0 %v3208
    %v6046 = vpop.f32.mrf.mxu0
    %v6047 = vadd.f32 %v6027, %v6046
    %6048 = vdwg.mxu0
    %6049 = vmatpush.msra.mxu0 %v2073
    %6050 = vmatpush.msra.mxu0 %v2065
    %6051 = vmatpush.msra.mxu0 %v2057
    %6052 = vmatpush.msra.mxu0 %v2049
    %6053 = vmatpush.msra.mxu0 %v2041
    %6054 = vmatpush.msra.mxu0 %v2033
    %6055 = vmatpush.msra.mxu0 %v2025
    %6056 = vmatpush.msra.mxu0 %v2017
    %6057 = vmatpush.msra.mxu0 %v2009
    %6058 = vmatpush.msra.mxu0 %v2001
    %6059 = vmatpush.msra.mxu0 %v1993
    %6060 = vmatpush.msra.mxu0 %v1985
    %6061 = vmatpush.msra.mxu0 %v1977
    %6062 = vmatpush.msra.mxu0 %v1969
    %6063 = vmatpush.msra.mxu0 %v1961
    %6064 = vmatpush.msra.mxu0 %v1953
    %6065 = vmatmul.f32.gmra.mxu0 %v3209
    %v6066 = vpop.f32.mrf.mxu0
    %v6067 = vadd.f32 %v6047, %v6066
    %6068 = vdwg.mxu0
    %6069 = vmatpush.msra.mxu0 %v2201
    %6070 = vmatpush.msra.mxu0 %v2193
    %6071 = vmatpush.msra.mxu0 %v2185
    %6072 = vmatpush.msra.mxu0 %v2177
    %6073 = vmatpush.msra.mxu0 %v2169
    %6074 = vmatpush.msra.mxu0 %v2161
    %6075 = vmatpush.msra.mxu0 %v2153
    %6076 = vmatpush.msra.mxu0 %v2145
    %6077 = vmatpush.msra.mxu0 %v2137
    %6078 = vmatpush.msra.mxu0 %v2129
    %6079 = vmatpush.msra.mxu0 %v2121
    %6080 = vmatpush.msra.mxu0 %v2113
    %6081 = vmatpush.msra.mxu0 %v2105
    %6082 = vmatpush.msra.mxu0 %v2097
    %6083 = vmatpush.msra.mxu0 %v2089
    %6084 = vmatpush.msra.mxu0 %v2081
    %6085 = vmatmul.f32.gmra.mxu0 %v3212
    %v6086 = vpop.f32.mrf.mxu0
    %v6087 = vadd.f32 %v6067, %v6086
    %6088 = vdwg.mxu0
    %6089 = vmatpush.msra.mxu0 %v2329
    %6090 = vmatpush.msra.mxu0 %v2321
    %6091 = vmatpush.msra.mxu0 %v2313
    %6092 = vmatpush.msra.mxu0 %v2305
    %6093 = vmatpush.msra.mxu0 %v2297
    %6094 = vmatpush.msra.mxu0 %v2289
    %6095 = vmatpush.msra.mxu0 %v2281
    %6096 = vmatpush.msra.mxu0 %v2273
    %6097 = vmatpush.msra.mxu0 %v2265
    %6098 = vmatpush.msra.mxu0 %v2257
    %6099 = vmatpush.msra.mxu0 %v2249
    %6100 = vmatpush.msra.mxu0 %v2241
    %6101 = vmatpush.msra.mxu0 %v2233
    %6102 = vmatpush.msra.mxu0 %v2225
    %6103 = vmatpush.msra.mxu0 %v2217
    %6104 = vmatpush.msra.mxu0 %v2209
    %6105 = vmatmul.f32.gmra.mxu0 %v3213
    %v6106 = vpop.f32.mrf.mxu0
    %v6107 = vadd.f32 %v6087, %v6106
    %6108 = vdwg.mxu0
    %6109 = vmatpush.msra.mxu0 %v2457
    %6110 = vmatpush.msra.mxu0 %v2449
    %6111 = vmatpush.msra.mxu0 %v2441
    %6112 = vmatpush.msra.mxu0 %v2433
    %6113 = vmatpush.msra.mxu0 %v2425
    %6114 = vmatpush.msra.mxu0 %v2417
    %6115 = vmatpush.msra.mxu0 %v2409
    %6116 = vmatpush.msra.mxu0 %v2401
    %6117 = vmatpush.msra.mxu0 %v2393
    %6118 = vmatpush.msra.mxu0 %v2385
    %6119 = vmatpush.msra.mxu0 %v2377
    %6120 = vmatpush.msra.mxu0 %v2369
    %6121 = vmatpush.msra.mxu0 %v2361
    %6122 = vmatpush.msra.mxu0 %v2353
    %6123 = vmatpush.msra.mxu0 %v2345
    %6124 = vmatpush.msra.mxu0 %v2337
    %6125 = vmatmul.f32.gmra.mxu0 %v3214
    %v6126 = vpop.f32.mrf.mxu0
    %v6127 = vadd.f32 %v6107, %v6126
    %6128 = vdwg.mxu0
    %6129 = vmatpush.msra.mxu0 %v2585
    %6130 = vmatpush.msra.mxu0 %v2577
    %6131 = vmatpush.msra.mxu0 %v2569
    %6132 = vmatpush.msra.mxu0 %v2561
    %6133 = vmatpush.msra.mxu0 %v2553
    %6134 = vmatpush.msra.mxu0 %v2545
    %6135 = vmatpush.msra.mxu0 %v2537
    %6136 = vmatpush.msra.mxu0 %v2529
    %6137 = vmatpush.msra.mxu0 %v2521
    %6138 = vmatpush.msra.mxu0 %v2513
    %6139 = vmatpush.msra.mxu0 %v2505
    %6140 = vmatpush.msra.mxu0 %v2497
    %6141 = vmatpush.msra.mxu0 %v2489
    %6142 = vmatpush.msra.mxu0 %v2481
    %6143 = vmatpush.msra.mxu0 %v2473
    %6144 = vmatpush.msra.mxu0 %v2465
    %6145 = vmatmul.f32.gmra.mxu0 %v3215
    %v6146 = vpop.f32.mrf.mxu0
    %v6147 = vadd.f32 %v6127, %v6146
    %6148 = vdwg.mxu0
    %6149 = vmatpush.msra.mxu0 %v2713
    %6150 = vmatpush.msra.mxu0 %v2705
    %6151 = vmatpush.msra.mxu0 %v2697
    %6152 = vmatpush.msra.mxu0 %v2689
    %6153 = vmatpush.msra.mxu0 %v2681
    %6154 = vmatpush.msra.mxu0 %v2673
    %6155 = vmatpush.msra.mxu0 %v2665
    %6156 = vmatpush.msra.mxu0 %v2657
    %6157 = vmatpush.msra.mxu0 %v2649
    %6158 = vmatpush.msra.mxu0 %v2641
    %6159 = vmatpush.msra.mxu0 %v2633
    %6160 = vmatpush.msra.mxu0 %v2625
    %6161 = vmatpush.msra.mxu0 %v2617
    %6162 = vmatpush.msra.mxu0 %v2609
    %6163 = vmatpush.msra.mxu0 %v2601
    %6164 = vmatpush.msra.mxu0 %v2593
    %6165 = vmatmul.f32.gmra.mxu0 %v3216
    %v6166 = vpop.f32.mrf.mxu0
    %v6167 = vadd.f32 %v6147, %v6166
    %6168 = vdwg.mxu0
    %6169 = vmatpush.msra.mxu0 %v2841
    %6170 = vmatpush.msra.mxu0 %v2833
    %6171 = vmatpush.msra.mxu0 %v2825
    %6172 = vmatpush.msra.mxu0 %v2817
    %6173 = vmatpush.msra.mxu0 %v2809
    %6174 = vmatpush.msra.mxu0 %v2801
    %6175 = vmatpush.msra.mxu0 %v2793
    %6176 = vmatpush.msra.mxu0 %v2785
    %6177 = vmatpush.msra.mxu0 %v2777
    %6178 = vmatpush.msra.mxu0 %v2769
    %6179 = vmatpush.msra.mxu0 %v2761
    %6180 = vmatpush.msra.mxu0 %v2753
    %6181 = vmatpush.msra.mxu0 %v2745
    %6182 = vmatpush.msra.mxu0 %v2737
    %6183 = vmatpush.msra.mxu0 %v2729
    %6184 = vmatpush.msra.mxu0 %v2721
    %6185 = vmatmul.f32.gmra.mxu0 %v3217
    %v6186 = vpop.f32.mrf.mxu0
    %v6187 = vadd.f32 %v6167, %v6186
    %6188 = vdwg.mxu0
    %6189 = vmatpush.msra.mxu0 %v2969
    %6190 = vmatpush.msra.mxu0 %v2961
    %6191 = vmatpush.msra.mxu0 %v2953
    %6192 = vmatpush.msra.mxu0 %v2945
    %6193 = vmatpush.msra.mxu0 %v2937
    %6194 = vmatpush.msra.mxu0 %v2929
    %6195 = vmatpush.msra.mxu0 %v2921
    %6196 = vmatpush.msra.mxu0 %v2913
    %6197 = vmatpush.msra.mxu0 %v2905
    %6198 = vmatpush.msra.mxu0 %v2897
    %6199 = vmatpush.msra.mxu0 %v2889
    %6200 = vmatpush.msra.mxu0 %v2881
    %6201 = vmatpush.msra.mxu0 %v2873
    %6202 = vmatpush.msra.mxu0 %v2865
    %6203 = vmatpush.msra.mxu0 %v2857
    %6204 = vmatpush.msra.mxu0 %v2849
    %6205 = vmatmul.f32.gmra.mxu0 %v3218
    %v6206 = vpop.f32.mrf.mxu0
    %v6207 = vadd.f32 %v6187, %v6206
    %6208 = vdwg.mxu0
    %6209 = vmatpush.msra.mxu0 %v3097
    %6210 = vmatpush.msra.mxu0 %v3089
    %6211 = vmatpush.msra.mxu0 %v3081
    %6212 = vmatpush.msra.mxu0 %v3073
    %6213 = vmatpush.msra.mxu0 %v3065
    %6214 = vmatpush.msra.mxu0 %v3057
    %6215 = vmatpush.msra.mxu0 %v3049
    %6216 = vmatpush.msra.mxu0 %v3041
    %6217 = vmatpush.msra.mxu0 %v3033
    %6218 = vmatpush.msra.mxu0 %v3025
    %6219 = vmatpush.msra.mxu0 %v3017
    %6220 = vmatpush.msra.mxu0 %v3009
    %6221 = vmatpush.msra.mxu0 %v3001
    %6222 = vmatpush.msra.mxu0 %v2993
    %6223 = vmatpush.msra.mxu0 %v2985
    %6224 = vmatpush.msra.mxu0 %v2977
    %6225 = vmatmul.f32.gmra.mxu0 %v3219
    %v6226 = vpop.f32.mrf.mxu0
    %v6227 = vadd.f32 %v6207, %v6226
    %6228 = vdwg.mxu0
    %6229 = vmatpush.msra.mxu0 0.0
    %6230 = vmatpush.msra.mxu0 0.0
    %6231 = vmatpush.msra.mxu0 0.0
    %6232 = vmatpush.msra.mxu0 0.0
    %6233 = vmatpush.msra.mxu0 0.0
    %6234 = vmatpush.msra.mxu0 0.0
    %6235 = vmatpush.msra.mxu0 0.0
    %6236 = vmatpush.msra.mxu0 0.0
    %6237 = vmatpush.msra.mxu0 %v3161
    %6238 = vmatpush.msra.mxu0 %v3153
    %6239 = vmatpush.msra.mxu0 %v3145
    %6240 = vmatpush.msra.mxu0 %v3137
    %6241 = vmatpush.msra.mxu0 %v3129
    %6242 = vmatpush.msra.mxu0 %v3121
    %6243 = vmatpush.msra.mxu0 %v3113
    %6244 = vmatpush.msra.mxu0 %v3105
    %6245 = vmatmul.f32.gmra.mxu0 %v3247
    %v6246 = vpop.f32.mrf.mxu0
    %v6247 = vadd.f32 %v6227, %v6246
    %6248 = vdwg.mxu0
    %6249 = vmatpush.msra.mxu0 %v154
    %6250 = vmatpush.msra.mxu0 %v146
    %6251 = vmatpush.msra.mxu0 %v138
    %6252 = vmatpush.msra.mxu0 %v130
    %6253 = vmatpush.msra.mxu0 %v122
    %6254 = vmatpush.msra.mxu0 %v114
    %6255 = vmatpush.msra.mxu0 %v106
    %6256 = vmatpush.msra.mxu0 %v98
    %6257 = vmatpush.msra.mxu0 %v90
    %6258 = vmatpush.msra.mxu0 %v82
    %6259 = vmatpush.msra.mxu0 %v74
    %6260 = vmatpush.msra.mxu0 %v66
    %6261 = vmatpush.msra.mxu0 %v58
    %6262 = vmatpush.msra.mxu0 %v50
    %6263 = vmatpush.msra.mxu0 %v42
    %6264 = vmatpush.msra.mxu0 %v34
    %6265 = vmatmul.f32.gmra.mxu0 %v3192
    %v6266 = vpop.f32.mrf.mxu0
    %v6267 = vadd.f32 %v3172, %v6266
    %6268 = vdwg.mxu0
    %6269 = vmatpush.msra.mxu0 %v282
    %6270 = vmatpush.msra.mxu0 %v274
    %6271 = vmatpush.msra.mxu0 %v266
    %6272 = vmatpush.msra.mxu0 %v258
    %6273 = vmatpush.msra.mxu0 %v250
    %6274 = vmatpush.msra.mxu0 %v242
    %6275 = vmatpush.msra.mxu0 %v234
    %6276 = vmatpush.msra.mxu0 %v226
    %6277 = vmatpush.msra.mxu0 %v218
    %6278 = vmatpush.msra.mxu0 %v210
    %6279 = vmatpush.msra.mxu0 %v202
    %6280 = vmatpush.msra.mxu0 %v194
    %6281 = vmatpush.msra.mxu0 %v186
    %6282 = vmatpush.msra.mxu0 %v178
    %6283 = vmatpush.msra.mxu0 %v170
    %6284 = vmatpush.msra.mxu0 %v162
    %6285 = vmatmul.f32.gmra.mxu0 %v3193
    %v6286 = vpop.f32.mrf.mxu0
    %v6287 = vadd.f32 %v6267, %v6286
    %6288 = vdwg.mxu0
    %6289 = vmatpush.msra.mxu0 %v410
    %6290 = vmatpush.msra.mxu0 %v402
    %6291 = vmatpush.msra.mxu0 %v394
    %6292 = vmatpush.msra.mxu0 %v386
    %6293 = vmatpush.msra.mxu0 %v378
    %6294 = vmatpush.msra.mxu0 %v370
    %6295 = vmatpush.msra.mxu0 %v362
    %6296 = vmatpush.msra.mxu0 %v354
    %6297 = vmatpush.msra.mxu0 %v346
    %6298 = vmatpush.msra.mxu0 %v338
    %6299 = vmatpush.msra.mxu0 %v330
    %6300 = vmatpush.msra.mxu0 %v322
    %6301 = vmatpush.msra.mxu0 %v314
    %6302 = vmatpush.msra.mxu0 %v306
    %6303 = vmatpush.msra.mxu0 %v298
    %6304 = vmatpush.msra.mxu0 %v290
    %6305 = vmatmul.f32.gmra.mxu0 %v3194
    %v6306 = vpop.f32.mrf.mxu0
    %v6307 = vadd.f32 %v6287, %v6306
    %6308 = vdwg.mxu0
    %6309 = vmatpush.msra.mxu0 %v538
    %6310 = vmatpush.msra.mxu0 %v530
    %6311 = vmatpush.msra.mxu0 %v522
    %6312 = vmatpush.msra.mxu0 %v514
    %6313 = vmatpush.msra.mxu0 %v506
    %6314 = vmatpush.msra.mxu0 %v498
    %6315 = vmatpush.msra.mxu0 %v490
    %6316 = vmatpush.msra.mxu0 %v482
    %6317 = vmatpush.msra.mxu0 %v474
    %6318 = vmatpush.msra.mxu0 %v466
    %6319 = vmatpush.msra.mxu0 %v458
    %6320 = vmatpush.msra.mxu0 %v450
    %6321 = vmatpush.msra.mxu0 %v442
    %6322 = vmatpush.msra.mxu0 %v434
    %6323 = vmatpush.msra.mxu0 %v426
    %6324 = vmatpush.msra.mxu0 %v418
    %6325 = vmatmul.f32.gmra.mxu0 %v3195
    %v6326 = vpop.f32.mrf.mxu0
    %v6327 = vadd.f32 %v6307, %v6326
    %6328 = vdwg.mxu0
    %6329 = vmatpush.msra.mxu0 %v666
    %6330 = vmatpush.msra.mxu0 %v658
    %6331 = vmatpush.msra.mxu0 %v650
    %6332 = vmatpush.msra.mxu0 %v642
    %6333 = vmatpush.msra.mxu0 %v634
    %6334 = vmatpush.msra.mxu0 %v626
    %6335 = vmatpush.msra.mxu0 %v618
    %6336 = vmatpush.msra.mxu0 %v610
    %6337 = vmatpush.msra.mxu0 %v602
    %6338 = vmatpush.msra.mxu0 %v594
    %6339 = vmatpush.msra.mxu0 %v586
    %6340 = vmatpush.msra.mxu0 %v578
    %6341 = vmatpush.msra.mxu0 %v570
    %6342 = vmatpush.msra.mxu0 %v562
    %6343 = vmatpush.msra.mxu0 %v554
    %6344 = vmatpush.msra.mxu0 %v546
    %6345 = vmatmul.f32.gmra.mxu0 %v3196
    %v6346 = vpop.f32.mrf.mxu0
    %v6347 = vadd.f32 %v6327, %v6346
    %6348 = vdwg.mxu0
    %6349 = vmatpush.msra.mxu0 %v794
    %6350 = vmatpush.msra.mxu0 %v786
    %6351 = vmatpush.msra.mxu0 %v778
    %6352 = vmatpush.msra.mxu0 %v770
    %6353 = vmatpush.msra.mxu0 %v762
    %6354 = vmatpush.msra.mxu0 %v754
    %6355 = vmatpush.msra.mxu0 %v746
    %6356 = vmatpush.msra.mxu0 %v738
    %6357 = vmatpush.msra.mxu0 %v730
    %6358 = vmatpush.msra.mxu0 %v722
    %6359 = vmatpush.msra.mxu0 %v714
    %6360 = vmatpush.msra.mxu0 %v706
    %6361 = vmatpush.msra.mxu0 %v698
    %6362 = vmatpush.msra.mxu0 %v690
    %6363 = vmatpush.msra.mxu0 %v682
    %6364 = vmatpush.msra.mxu0 %v674
    %6365 = vmatmul.f32.gmra.mxu0 %v3197
    %v6366 = vpop.f32.mrf.mxu0
    %v6367 = vadd.f32 %v6347, %v6366
    %6368 = vdwg.mxu0
    %6369 = vmatpush.msra.mxu0 %v922
    %6370 = vmatpush.msra.mxu0 %v914
    %6371 = vmatpush.msra.mxu0 %v906
    %6372 = vmatpush.msra.mxu0 %v898
    %6373 = vmatpush.msra.mxu0 %v890
    %6374 = vmatpush.msra.mxu0 %v882
    %6375 = vmatpush.msra.mxu0 %v874
    %6376 = vmatpush.msra.mxu0 %v866
    %6377 = vmatpush.msra.mxu0 %v858
    %6378 = vmatpush.msra.mxu0 %v850
    %6379 = vmatpush.msra.mxu0 %v842
    %6380 = vmatpush.msra.mxu0 %v834
    %6381 = vmatpush.msra.mxu0 %v826
    %6382 = vmatpush.msra.mxu0 %v818
    %6383 = vmatpush.msra.mxu0 %v810
    %6384 = vmatpush.msra.mxu0 %v802
    %6385 = vmatmul.f32.gmra.mxu0 %v3198
    %v6386 = vpop.f32.mrf.mxu0
    %v6387 = vadd.f32 %v6367, %v6386
    %6388 = vdwg.mxu0
    %6389 = vmatpush.msra.mxu0 %v1050
    %6390 = vmatpush.msra.mxu0 %v1042
    %6391 = vmatpush.msra.mxu0 %v1034
    %6392 = vmatpush.msra.mxu0 %v1026
    %6393 = vmatpush.msra.mxu0 %v1018
    %6394 = vmatpush.msra.mxu0 %v1010
    %6395 = vmatpush.msra.mxu0 %v1002
    %6396 = vmatpush.msra.mxu0 %v994
    %6397 = vmatpush.msra.mxu0 %v986
    %6398 = vmatpush.msra.mxu0 %v978
    %6399 = vmatpush.msra.mxu0 %v970
    %6400 = vmatpush.msra.mxu0 %v962
    %6401 = vmatpush.msra.mxu0 %v954
    %6402 = vmatpush.msra.mxu0 %v946
    %6403 = vmatpush.msra.mxu0 %v938
    %6404 = vmatpush.msra.mxu0 %v930
    %6405 = vmatmul.f32.gmra.mxu0 %v3199
    %v6406 = vpop.f32.mrf.mxu0
    %v6407 = vadd.f32 %v6387, %v6406
    %6408 = vdwg.mxu0
    %6409 = vmatpush.msra.mxu0 %v1178
    %6410 = vmatpush.msra.mxu0 %v1170
    %6411 = vmatpush.msra.mxu0 %v1162
    %6412 = vmatpush.msra.mxu0 %v1154
    %6413 = vmatpush.msra.mxu0 %v1146
    %6414 = vmatpush.msra.mxu0 %v1138
    %6415 = vmatpush.msra.mxu0 %v1130
    %6416 = vmatpush.msra.mxu0 %v1122
    %6417 = vmatpush.msra.mxu0 %v1114
    %6418 = vmatpush.msra.mxu0 %v1106
    %6419 = vmatpush.msra.mxu0 %v1098
    %6420 = vmatpush.msra.mxu0 %v1090
    %6421 = vmatpush.msra.mxu0 %v1082
    %6422 = vmatpush.msra.mxu0 %v1074
    %6423 = vmatpush.msra.mxu0 %v1066
    %6424 = vmatpush.msra.mxu0 %v1058
    %6425 = vmatmul.f32.gmra.mxu0 %v3202
    %v6426 = vpop.f32.mrf.mxu0
    %v6427 = vadd.f32 %v6407, %v6426
    %6428 = vdwg.mxu0
    %6429 = vmatpush.msra.mxu0 %v1306
    %6430 = vmatpush.msra.mxu0 %v1298
    %6431 = vmatpush.msra.mxu0 %v1290
    %6432 = vmatpush.msra.mxu0 %v1282
    %6433 = vmatpush.msra.mxu0 %v1274
    %6434 = vmatpush.msra.mxu0 %v1266
    %6435 = vmatpush.msra.mxu0 %v1258
    %6436 = vmatpush.msra.mxu0 %v1250
    %6437 = vmatpush.msra.mxu0 %v1242
    %6438 = vmatpush.msra.mxu0 %v1234
    %6439 = vmatpush.msra.mxu0 %v1226
    %6440 = vmatpush.msra.mxu0 %v1218
    %6441 = vmatpush.msra.mxu0 %v1210
    %6442 = vmatpush.msra.mxu0 %v1202
    %6443 = vmatpush.msra.mxu0 %v1194
    %6444 = vmatpush.msra.mxu0 %v1186
    %6445 = vmatmul.f32.gmra.mxu0 %v3203
    %v6446 = vpop.f32.mrf.mxu0
    %v6447 = vadd.f32 %v6427, %v6446
    %6448 = vdwg.mxu0
    %6449 = vmatpush.msra.mxu0 %v1434
    %6450 = vmatpush.msra.mxu0 %v1426
    %6451 = vmatpush.msra.mxu0 %v1418
    %6452 = vmatpush.msra.mxu0 %v1410
    %6453 = vmatpush.msra.mxu0 %v1402
    %6454 = vmatpush.msra.mxu0 %v1394
    %6455 = vmatpush.msra.mxu0 %v1386
    %6456 = vmatpush.msra.mxu0 %v1378
    %6457 = vmatpush.msra.mxu0 %v1370
    %6458 = vmatpush.msra.mxu0 %v1362
    %6459 = vmatpush.msra.mxu0 %v1354
    %6460 = vmatpush.msra.mxu0 %v1346
    %6461 = vmatpush.msra.mxu0 %v1338
    %6462 = vmatpush.msra.mxu0 %v1330
    %6463 = vmatpush.msra.mxu0 %v1322
    %6464 = vmatpush.msra.mxu0 %v1314
    %6465 = vmatmul.f32.gmra.mxu0 %v3204
    %v6466 = vpop.f32.mrf.mxu0
    %v6467 = vadd.f32 %v6447, %v6466
    %6468 = vdwg.mxu0
    %6469 = vmatpush.msra.mxu0 %v1562
    %6470 = vmatpush.msra.mxu0 %v1554
    %6471 = vmatpush.msra.mxu0 %v1546
    %6472 = vmatpush.msra.mxu0 %v1538
    %6473 = vmatpush.msra.mxu0 %v1530
    %6474 = vmatpush.msra.mxu0 %v1522
    %6475 = vmatpush.msra.mxu0 %v1514
    %6476 = vmatpush.msra.mxu0 %v1506
    %6477 = vmatpush.msra.mxu0 %v1498
    %6478 = vmatpush.msra.mxu0 %v1490
    %6479 = vmatpush.msra.mxu0 %v1482
    %6480 = vmatpush.msra.mxu0 %v1474
    %6481 = vmatpush.msra.mxu0 %v1466
    %6482 = vmatpush.msra.mxu0 %v1458
    %6483 = vmatpush.msra.mxu0 %v1450
    %6484 = vmatpush.msra.mxu0 %v1442
    %6485 = vmatmul.f32.gmra.mxu0 %v3205
    %v6486 = vpop.f32.mrf.mxu0
    %v6487 = vadd.f32 %v6467, %v6486
    %6488 = vdwg.mxu0
    %6489 = vmatpush.msra.mxu0 %v1690
    %6490 = vmatpush.msra.mxu0 %v1682
    %6491 = vmatpush.msra.mxu0 %v1674
    %6492 = vmatpush.msra.mxu0 %v1666
    %6493 = vmatpush.msra.mxu0 %v1658
    %6494 = vmatpush.msra.mxu0 %v1650
    %6495 = vmatpush.msra.mxu0 %v1642
    %6496 = vmatpush.msra.mxu0 %v1634
    %6497 = vmatpush.msra.mxu0 %v1626
    %6498 = vmatpush.msra.mxu0 %v1618
    %6499 = vmatpush.msra.mxu0 %v1610
    %6500 = vmatpush.msra.mxu0 %v1602
    %6501 = vmatpush.msra.mxu0 %v1594
    %6502 = vmatpush.msra.mxu0 %v1586
    %6503 = vmatpush.msra.mxu0 %v1578
    %6504 = vmatpush.msra.mxu0 %v1570
    %6505 = vmatmul.f32.gmra.mxu0 %v3206
    %v6506 = vpop.f32.mrf.mxu0
    %v6507 = vadd.f32 %v6487, %v6506
    %6508 = vdwg.mxu0
    %6509 = vmatpush.msra.mxu0 %v1818
    %6510 = vmatpush.msra.mxu0 %v1810
    %6511 = vmatpush.msra.mxu0 %v1802
    %6512 = vmatpush.msra.mxu0 %v1794
    %6513 = vmatpush.msra.mxu0 %v1786
    %6514 = vmatpush.msra.mxu0 %v1778
    %6515 = vmatpush.msra.mxu0 %v1770
    %6516 = vmatpush.msra.mxu0 %v1762
    %6517 = vmatpush.msra.mxu0 %v1754
    %6518 = vmatpush.msra.mxu0 %v1746
    %6519 = vmatpush.msra.mxu0 %v1738
    %6520 = vmatpush.msra.mxu0 %v1730
    %6521 = vmatpush.msra.mxu0 %v1722
    %6522 = vmatpush.msra.mxu0 %v1714
    %6523 = vmatpush.msra.mxu0 %v1706
    %6524 = vmatpush.msra.mxu0 %v1698
    %6525 = vmatmul.f32.gmra.mxu0 %v3207
    %v6526 = vpop.f32.mrf.mxu0
    %v6527 = vadd.f32 %v6507, %v6526
    %6528 = vdwg.mxu0
    %6529 = vmatpush.msra.mxu0 %v1946
    %6530 = vmatpush.msra.mxu0 %v1938
    %6531 = vmatpush.msra.mxu0 %v1930
    %6532 = vmatpush.msra.mxu0 %v1922
    %6533 = vmatpush.msra.mxu0 %v1914
    %6534 = vmatpush.msra.mxu0 %v1906
    %6535 = vmatpush.msra.mxu0 %v1898
    %6536 = vmatpush.msra.mxu0 %v1890
    %6537 = vmatpush.msra.mxu0 %v1882
    %6538 = vmatpush.msra.mxu0 %v1874
    %6539 = vmatpush.msra.mxu0 %v1866
    %6540 = vmatpush.msra.mxu0 %v1858
    %6541 = vmatpush.msra.mxu0 %v1850
    %6542 = vmatpush.msra.mxu0 %v1842
    %6543 = vmatpush.msra.mxu0 %v1834
    %6544 = vmatpush.msra.mxu0 %v1826
    %6545 = vmatmul.f32.gmra.mxu0 %v3208
    %v6546 = vpop.f32.mrf.mxu0
    %v6547 = vadd.f32 %v6527, %v6546
    %6548 = vdwg.mxu0
    %6549 = vmatpush.msra.mxu0 %v2074
    %6550 = vmatpush.msra.mxu0 %v2066
    %6551 = vmatpush.msra.mxu0 %v2058
    %6552 = vmatpush.msra.mxu0 %v2050
    %6553 = vmatpush.msra.mxu0 %v2042
    %6554 = vmatpush.msra.mxu0 %v2034
    %6555 = vmatpush.msra.mxu0 %v2026
    %6556 = vmatpush.msra.mxu0 %v2018
    %6557 = vmatpush.msra.mxu0 %v2010
    %6558 = vmatpush.msra.mxu0 %v2002
    %6559 = vmatpush.msra.mxu0 %v1994
    %6560 = vmatpush.msra.mxu0 %v1986
    %6561 = vmatpush.msra.mxu0 %v1978
    %6562 = vmatpush.msra.mxu0 %v1970
    %6563 = vmatpush.msra.mxu0 %v1962
    %6564 = vmatpush.msra.mxu0 %v1954
    %6565 = vmatmul.f32.gmra.mxu0 %v3209
    %v6566 = vpop.f32.mrf.mxu0
    %v6567 = vadd.f32 %v6547, %v6566
    %6568 = vdwg.mxu0
    %6569 = vmatpush.msra.mxu0 %v2202
    %6570 = vmatpush.msra.mxu0 %v2194
    %6571 = vmatpush.msra.mxu0 %v2186
    %6572 = vmatpush.msra.mxu0 %v2178
    %6573 = vmatpush.msra.mxu0 %v2170
    %6574 = vmatpush.msra.mxu0 %v2162
    %6575 = vmatpush.msra.mxu0 %v2154
    %6576 = vmatpush.msra.mxu0 %v2146
    %6577 = vmatpush.msra.mxu0 %v2138
    %6578 = vmatpush.msra.mxu0 %v2130
    %6579 = vmatpush.msra.mxu0 %v2122
    %6580 = vmatpush.msra.mxu0 %v2114
    %6581 = vmatpush.msra.mxu0 %v2106
    %6582 = vmatpush.msra.mxu0 %v2098
    %6583 = vmatpush.msra.mxu0 %v2090
    %6584 = vmatpush.msra.mxu0 %v2082
    %6585 = vmatmul.f32.gmra.mxu0 %v3212
    %v6586 = vpop.f32.mrf.mxu0
    %v6587 = vadd.f32 %v6567, %v6586
    %6588 = vdwg.mxu0
    %6589 = vmatpush.msra.mxu0 %v2330
    %6590 = vmatpush.msra.mxu0 %v2322
    %6591 = vmatpush.msra.mxu0 %v2314
    %6592 = vmatpush.msra.mxu0 %v2306
    %6593 = vmatpush.msra.mxu0 %v2298
    %6594 = vmatpush.msra.mxu0 %v2290
    %6595 = vmatpush.msra.mxu0 %v2282
    %6596 = vmatpush.msra.mxu0 %v2274
    %6597 = vmatpush.msra.mxu0 %v2266
    %6598 = vmatpush.msra.mxu0 %v2258
    %6599 = vmatpush.msra.mxu0 %v2250
    %6600 = vmatpush.msra.mxu0 %v2242
    %6601 = vmatpush.msra.mxu0 %v2234
    %6602 = vmatpush.msra.mxu0 %v2226
    %6603 = vmatpush.msra.mxu0 %v2218
    %6604 = vmatpush.msra.mxu0 %v2210
    %6605 = vmatmul.f32.gmra.mxu0 %v3213
    %v6606 = vpop.f32.mrf.mxu0
    %v6607 = vadd.f32 %v6587, %v6606
    %6608 = vdwg.mxu0
    %6609 = vmatpush.msra.mxu0 %v2458
    %6610 = vmatpush.msra.mxu0 %v2450
    %6611 = vmatpush.msra.mxu0 %v2442
    %6612 = vmatpush.msra.mxu0 %v2434
    %6613 = vmatpush.msra.mxu0 %v2426
    %6614 = vmatpush.msra.mxu0 %v2418
    %6615 = vmatpush.msra.mxu0 %v2410
    %6616 = vmatpush.msra.mxu0 %v2402
    %6617 = vmatpush.msra.mxu0 %v2394
    %6618 = vmatpush.msra.mxu0 %v2386
    %6619 = vmatpush.msra.mxu0 %v2378
    %6620 = vmatpush.msra.mxu0 %v2370
    %6621 = vmatpush.msra.mxu0 %v2362
    %6622 = vmatpush.msra.mxu0 %v2354
    %6623 = vmatpush.msra.mxu0 %v2346
    %6624 = vmatpush.msra.mxu0 %v2338
    %6625 = vmatmul.f32.gmra.mxu0 %v3214
    %v6626 = vpop.f32.mrf.mxu0
    %v6627 = vadd.f32 %v6607, %v6626
    %6628 = vdwg.mxu0
    %6629 = vmatpush.msra.mxu0 %v2586
    %6630 = vmatpush.msra.mxu0 %v2578
    %6631 = vmatpush.msra.mxu0 %v2570
    %6632 = vmatpush.msra.mxu0 %v2562
    %6633 = vmatpush.msra.mxu0 %v2554
    %6634 = vmatpush.msra.mxu0 %v2546
    %6635 = vmatpush.msra.mxu0 %v2538
    %6636 = vmatpush.msra.mxu0 %v2530
    %6637 = vmatpush.msra.mxu0 %v2522
    %6638 = vmatpush.msra.mxu0 %v2514
    %6639 = vmatpush.msra.mxu0 %v2506
    %6640 = vmatpush.msra.mxu0 %v2498
    %6641 = vmatpush.msra.mxu0 %v2490
    %6642 = vmatpush.msra.mxu0 %v2482
    %6643 = vmatpush.msra.mxu0 %v2474
    %6644 = vmatpush.msra.mxu0 %v2466
    %6645 = vmatmul.f32.gmra.mxu0 %v3215
    %v6646 = vpop.f32.mrf.mxu0
    %v6647 = vadd.f32 %v6627, %v6646
    %6648 = vdwg.mxu0
    %6649 = vmatpush.msra.mxu0 %v2714
    %6650 = vmatpush.msra.mxu0 %v2706
    %6651 = vmatpush.msra.mxu0 %v2698
    %6652 = vmatpush.msra.mxu0 %v2690
    %6653 = vmatpush.msra.mxu0 %v2682
    %6654 = vmatpush.msra.mxu0 %v2674
    %6655 = vmatpush.msra.mxu0 %v2666
    %6656 = vmatpush.msra.mxu0 %v2658
    %6657 = vmatpush.msra.mxu0 %v2650
    %6658 = vmatpush.msra.mxu0 %v2642
    %6659 = vmatpush.msra.mxu0 %v2634
    %6660 = vmatpush.msra.mxu0 %v2626
    %6661 = vmatpush.msra.mxu0 %v2618
    %6662 = vmatpush.msra.mxu0 %v2610
    %6663 = vmatpush.msra.mxu0 %v2602
    %6664 = vmatpush.msra.mxu0 %v2594
    %6665 = vmatmul.f32.gmra.mxu0 %v3216
    %v6666 = vpop.f32.mrf.mxu0
    %v6667 = vadd.f32 %v6647, %v6666
    %6668 = vdwg.mxu0
    %6669 = vmatpush.msra.mxu0 %v2842
    %6670 = vmatpush.msra.mxu0 %v2834
    %6671 = vmatpush.msra.mxu0 %v2826
    %6672 = vmatpush.msra.mxu0 %v2818
    %6673 = vmatpush.msra.mxu0 %v2810
    %6674 = vmatpush.msra.mxu0 %v2802
    %6675 = vmatpush.msra.mxu0 %v2794
    %6676 = vmatpush.msra.mxu0 %v2786
    %6677 = vmatpush.msra.mxu0 %v2778
    %6678 = vmatpush.msra.mxu0 %v2770
    %6679 = vmatpush.msra.mxu0 %v2762
    %6680 = vmatpush.msra.mxu0 %v2754
    %6681 = vmatpush.msra.mxu0 %v2746
    %6682 = vmatpush.msra.mxu0 %v2738
    %6683 = vmatpush.msra.mxu0 %v2730
    %6684 = vmatpush.msra.mxu0 %v2722
    %6685 = vmatmul.f32.gmra.mxu0 %v3217
    %v6686 = vpop.f32.mrf.mxu0
    %v6687 = vadd.f32 %v6667, %v6686
    %6688 = vdwg.mxu0
    %6689 = vmatpush.msra.mxu0 %v2970
    %6690 = vmatpush.msra.mxu0 %v2962
    %6691 = vmatpush.msra.mxu0 %v2954
    %6692 = vmatpush.msra.mxu0 %v2946
    %6693 = vmatpush.msra.mxu0 %v2938
    %6694 = vmatpush.msra.mxu0 %v2930
    %6695 = vmatpush.msra.mxu0 %v2922
    %6696 = vmatpush.msra.mxu0 %v2914
    %6697 = vmatpush.msra.mxu0 %v2906
    %6698 = vmatpush.msra.mxu0 %v2898
    %6699 = vmatpush.msra.mxu0 %v2890
    %6700 = vmatpush.msra.mxu0 %v2882
    %6701 = vmatpush.msra.mxu0 %v2874
    %6702 = vmatpush.msra.mxu0 %v2866
    %6703 = vmatpush.msra.mxu0 %v2858
    %6704 = vmatpush.msra.mxu0 %v2850
    %6705 = vmatmul.f32.gmra.mxu0 %v3218
    %v6706 = vpop.f32.mrf.mxu0
    %v6707 = vadd.f32 %v6687, %v6706
    %6708 = vdwg.mxu0
    %6709 = vmatpush.msra.mxu0 %v3098
    %6710 = vmatpush.msra.mxu0 %v3090
    %6711 = vmatpush.msra.mxu0 %v3082
    %6712 = vmatpush.msra.mxu0 %v3074
    %6713 = vmatpush.msra.mxu0 %v3066
    %6714 = vmatpush.msra.mxu0 %v3058
    %6715 = vmatpush.msra.mxu0 %v3050
    %6716 = vmatpush.msra.mxu0 %v3042
    %6717 = vmatpush.msra.mxu0 %v3034
    %6718 = vmatpush.msra.mxu0 %v3026
    %6719 = vmatpush.msra.mxu0 %v3018
    %6720 = vmatpush.msra.mxu0 %v3010
    %6721 = vmatpush.msra.mxu0 %v3002
    %6722 = vmatpush.msra.mxu0 %v2994
    %6723 = vmatpush.msra.mxu0 %v2986
    %6724 = vmatpush.msra.mxu0 %v2978
    %6725 = vmatmul.f32.gmra.mxu0 %v3219
    %v6726 = vpop.f32.mrf.mxu0
    %v6727 = vadd.f32 %v6707, %v6726
    %6728 = vdwg.mxu0
    %6729 = vmatpush.msra.mxu0 0.0
    %6730 = vmatpush.msra.mxu0 0.0
    %6731 = vmatpush.msra.mxu0 0.0
    %6732 = vmatpush.msra.mxu0 0.0
    %6733 = vmatpush.msra.mxu0 0.0
    %6734 = vmatpush.msra.mxu0 0.0
    %6735 = vmatpush.msra.mxu0 0.0
    %6736 = vmatpush.msra.mxu0 0.0
    %6737 = vmatpush.msra.mxu0 %v3162
    %6738 = vmatpush.msra.mxu0 %v3154
    %6739 = vmatpush.msra.mxu0 %v3146
    %6740 = vmatpush.msra.mxu0 %v3138
    %6741 = vmatpush.msra.mxu0 %v3130
    %6742 = vmatpush.msra.mxu0 %v3122
    %6743 = vmatpush.msra.mxu0 %v3114
    %6744 = vmatpush.msra.mxu0 %v3106
    %6745 = vmatmul.f32.gmra.mxu0 %v3247
    %v6746 = vpop.f32.mrf.mxu0
    %v6747 = vadd.f32 %v6727, %v6746
    %6748 = vdwg.mxu0
    %6749 = vmatpush.msra.mxu0 %v155
    %6750 = vmatpush.msra.mxu0 %v147
    %6751 = vmatpush.msra.mxu0 %v139
    %6752 = vmatpush.msra.mxu0 %v131
    %6753 = vmatpush.msra.mxu0 %v123
    %6754 = vmatpush.msra.mxu0 %v115
    %6755 = vmatpush.msra.mxu0 %v107
    %6756 = vmatpush.msra.mxu0 %v99
    %6757 = vmatpush.msra.mxu0 %v91
    %6758 = vmatpush.msra.mxu0 %v83
    %6759 = vmatpush.msra.mxu0 %v75
    %6760 = vmatpush.msra.mxu0 %v67
    %6761 = vmatpush.msra.mxu0 %v59
    %6762 = vmatpush.msra.mxu0 %v51
    %6763 = vmatpush.msra.mxu0 %v43
    %6764 = vmatpush.msra.mxu0 %v35
    %6765 = vmatmul.f32.gmra.mxu0 %v3192
    %v6766 = vpop.f32.mrf.mxu0
    %v6767 = vadd.f32 %v3173, %v6766
    %6768 = vdwg.mxu0
    %6769 = vmatpush.msra.mxu0 %v283
    %6770 = vmatpush.msra.mxu0 %v275
    %6771 = vmatpush.msra.mxu0 %v267
    %6772 = vmatpush.msra.mxu0 %v259
    %6773 = vmatpush.msra.mxu0 %v251
    %6774 = vmatpush.msra.mxu0 %v243
    %6775 = vmatpush.msra.mxu0 %v235
    %6776 = vmatpush.msra.mxu0 %v227
    %6777 = vmatpush.msra.mxu0 %v219
    %6778 = vmatpush.msra.mxu0 %v211
    %6779 = vmatpush.msra.mxu0 %v203
    %6780 = vmatpush.msra.mxu0 %v195
    %6781 = vmatpush.msra.mxu0 %v187
    %6782 = vmatpush.msra.mxu0 %v179
    %6783 = vmatpush.msra.mxu0 %v171
    %6784 = vmatpush.msra.mxu0 %v163
    %6785 = vmatmul.f32.gmra.mxu0 %v3193
    %v6786 = vpop.f32.mrf.mxu0
    %v6787 = vadd.f32 %v6767, %v6786
    %6788 = vdwg.mxu0
    %6789 = vmatpush.msra.mxu0 %v411
    %6790 = vmatpush.msra.mxu0 %v403
    %6791 = vmatpush.msra.mxu0 %v395
    %6792 = vmatpush.msra.mxu0 %v387
    %6793 = vmatpush.msra.mxu0 %v379
    %6794 = vmatpush.msra.mxu0 %v371
    %6795 = vmatpush.msra.mxu0 %v363
    %6796 = vmatpush.msra.mxu0 %v355
    %6797 = vmatpush.msra.mxu0 %v347
    %6798 = vmatpush.msra.mxu0 %v339
    %6799 = vmatpush.msra.mxu0 %v331
    %6800 = vmatpush.msra.mxu0 %v323
    %6801 = vmatpush.msra.mxu0 %v315
    %6802 = vmatpush.msra.mxu0 %v307
    %6803 = vmatpush.msra.mxu0 %v299
    %6804 = vmatpush.msra.mxu0 %v291
    %6805 = vmatmul.f32.gmra.mxu0 %v3194
    %v6806 = vpop.f32.mrf.mxu0
    %v6807 = vadd.f32 %v6787, %v6806
    %6808 = vdwg.mxu0
    %6809 = vmatpush.msra.mxu0 %v539
    %6810 = vmatpush.msra.mxu0 %v531
    %6811 = vmatpush.msra.mxu0 %v523
    %6812 = vmatpush.msra.mxu0 %v515
    %6813 = vmatpush.msra.mxu0 %v507
    %6814 = vmatpush.msra.mxu0 %v499
    %6815 = vmatpush.msra.mxu0 %v491
    %6816 = vmatpush.msra.mxu0 %v483
    %6817 = vmatpush.msra.mxu0 %v475
    %6818 = vmatpush.msra.mxu0 %v467
    %6819 = vmatpush.msra.mxu0 %v459
    %6820 = vmatpush.msra.mxu0 %v451
    %6821 = vmatpush.msra.mxu0 %v443
    %6822 = vmatpush.msra.mxu0 %v435
    %6823 = vmatpush.msra.mxu0 %v427
    %6824 = vmatpush.msra.mxu0 %v419
    %6825 = vmatmul.f32.gmra.mxu0 %v3195
    %v6826 = vpop.f32.mrf.mxu0
    %v6827 = vadd.f32 %v6807, %v6826
    %6828 = vdwg.mxu0
    %6829 = vmatpush.msra.mxu0 %v667
    %6830 = vmatpush.msra.mxu0 %v659
    %6831 = vmatpush.msra.mxu0 %v651
    %6832 = vmatpush.msra.mxu0 %v643
    %6833 = vmatpush.msra.mxu0 %v635
    %6834 = vmatpush.msra.mxu0 %v627
    %6835 = vmatpush.msra.mxu0 %v619
    %6836 = vmatpush.msra.mxu0 %v611
    %6837 = vmatpush.msra.mxu0 %v603
    %6838 = vmatpush.msra.mxu0 %v595
    %6839 = vmatpush.msra.mxu0 %v587
    %6840 = vmatpush.msra.mxu0 %v579
    %6841 = vmatpush.msra.mxu0 %v571
    %6842 = vmatpush.msra.mxu0 %v563
    %6843 = vmatpush.msra.mxu0 %v555
    %6844 = vmatpush.msra.mxu0 %v547
    %6845 = vmatmul.f32.gmra.mxu0 %v3196
    %v6846 = vpop.f32.mrf.mxu0
    %v6847 = vadd.f32 %v6827, %v6846
    %6848 = vdwg.mxu0
    %6849 = vmatpush.msra.mxu0 %v795
    %6850 = vmatpush.msra.mxu0 %v787
    %6851 = vmatpush.msra.mxu0 %v779
    %6852 = vmatpush.msra.mxu0 %v771
    %6853 = vmatpush.msra.mxu0 %v763
    %6854 = vmatpush.msra.mxu0 %v755
    %6855 = vmatpush.msra.mxu0 %v747
    %6856 = vmatpush.msra.mxu0 %v739
    %6857 = vmatpush.msra.mxu0 %v731
    %6858 = vmatpush.msra.mxu0 %v723
    %6859 = vmatpush.msra.mxu0 %v715
    %6860 = vmatpush.msra.mxu0 %v707
    %6861 = vmatpush.msra.mxu0 %v699
    %6862 = vmatpush.msra.mxu0 %v691
    %6863 = vmatpush.msra.mxu0 %v683
    %6864 = vmatpush.msra.mxu0 %v675
    %6865 = vmatmul.f32.gmra.mxu0 %v3197
    %v6866 = vpop.f32.mrf.mxu0
    %v6867 = vadd.f32 %v6847, %v6866
    %6868 = vdwg.mxu0
    %6869 = vmatpush.msra.mxu0 %v923
    %6870 = vmatpush.msra.mxu0 %v915
    %6871 = vmatpush.msra.mxu0 %v907
    %6872 = vmatpush.msra.mxu0 %v899
    %6873 = vmatpush.msra.mxu0 %v891
    %6874 = vmatpush.msra.mxu0 %v883
    %6875 = vmatpush.msra.mxu0 %v875
    %6876 = vmatpush.msra.mxu0 %v867
    %6877 = vmatpush.msra.mxu0 %v859
    %6878 = vmatpush.msra.mxu0 %v851
    %6879 = vmatpush.msra.mxu0 %v843
    %6880 = vmatpush.msra.mxu0 %v835
    %6881 = vmatpush.msra.mxu0 %v827
    %6882 = vmatpush.msra.mxu0 %v819
    %6883 = vmatpush.msra.mxu0 %v811
    %6884 = vmatpush.msra.mxu0 %v803
    %6885 = vmatmul.f32.gmra.mxu0 %v3198
    %v6886 = vpop.f32.mrf.mxu0
    %v6887 = vadd.f32 %v6867, %v6886
    %6888 = vdwg.mxu0
    %6889 = vmatpush.msra.mxu0 %v1051
    %6890 = vmatpush.msra.mxu0 %v1043
    %6891 = vmatpush.msra.mxu0 %v1035
    %6892 = vmatpush.msra.mxu0 %v1027
    %6893 = vmatpush.msra.mxu0 %v1019
    %6894 = vmatpush.msra.mxu0 %v1011
    %6895 = vmatpush.msra.mxu0 %v1003
    %6896 = vmatpush.msra.mxu0 %v995
    %6897 = vmatpush.msra.mxu0 %v987
    %6898 = vmatpush.msra.mxu0 %v979
    %6899 = vmatpush.msra.mxu0 %v971
    %6900 = vmatpush.msra.mxu0 %v963
    %6901 = vmatpush.msra.mxu0 %v955
    %6902 = vmatpush.msra.mxu0 %v947
    %6903 = vmatpush.msra.mxu0 %v939
    %6904 = vmatpush.msra.mxu0 %v931
    %6905 = vmatmul.f32.gmra.mxu0 %v3199
    %v6906 = vpop.f32.mrf.mxu0
    %v6907 = vadd.f32 %v6887, %v6906
    %6908 = vdwg.mxu0
    %6909 = vmatpush.msra.mxu0 %v1179
    %6910 = vmatpush.msra.mxu0 %v1171
    %6911 = vmatpush.msra.mxu0 %v1163
    %6912 = vmatpush.msra.mxu0 %v1155
    %6913 = vmatpush.msra.mxu0 %v1147
    %6914 = vmatpush.msra.mxu0 %v1139
    %6915 = vmatpush.msra.mxu0 %v1131
    %6916 = vmatpush.msra.mxu0 %v1123
    %6917 = vmatpush.msra.mxu0 %v1115
    %6918 = vmatpush.msra.mxu0 %v1107
    %6919 = vmatpush.msra.mxu0 %v1099
    %6920 = vmatpush.msra.mxu0 %v1091
    %6921 = vmatpush.msra.mxu0 %v1083
    %6922 = vmatpush.msra.mxu0 %v1075
    %6923 = vmatpush.msra.mxu0 %v1067
    %6924 = vmatpush.msra.mxu0 %v1059
    %6925 = vmatmul.f32.gmra.mxu0 %v3202
    %v6926 = vpop.f32.mrf.mxu0
    %v6927 = vadd.f32 %v6907, %v6926
    %6928 = vdwg.mxu0
    %6929 = vmatpush.msra.mxu0 %v1307
    %6930 = vmatpush.msra.mxu0 %v1299
    %6931 = vmatpush.msra.mxu0 %v1291
    %6932 = vmatpush.msra.mxu0 %v1283
    %6933 = vmatpush.msra.mxu0 %v1275
    %6934 = vmatpush.msra.mxu0 %v1267
    %6935 = vmatpush.msra.mxu0 %v1259
    %6936 = vmatpush.msra.mxu0 %v1251
    %6937 = vmatpush.msra.mxu0 %v1243
    %6938 = vmatpush.msra.mxu0 %v1235
    %6939 = vmatpush.msra.mxu0 %v1227
    %6940 = vmatpush.msra.mxu0 %v1219
    %6941 = vmatpush.msra.mxu0 %v1211
    %6942 = vmatpush.msra.mxu0 %v1203
    %6943 = vmatpush.msra.mxu0 %v1195
    %6944 = vmatpush.msra.mxu0 %v1187
    %6945 = vmatmul.f32.gmra.mxu0 %v3203
    %v6946 = vpop.f32.mrf.mxu0
    %v6947 = vadd.f32 %v6927, %v6946
    %6948 = vdwg.mxu0
    %6949 = vmatpush.msra.mxu0 %v1435
    %6950 = vmatpush.msra.mxu0 %v1427
    %6951 = vmatpush.msra.mxu0 %v1419
    %6952 = vmatpush.msra.mxu0 %v1411
    %6953 = vmatpush.msra.mxu0 %v1403
    %6954 = vmatpush.msra.mxu0 %v1395
    %6955 = vmatpush.msra.mxu0 %v1387
    %6956 = vmatpush.msra.mxu0 %v1379
    %6957 = vmatpush.msra.mxu0 %v1371
    %6958 = vmatpush.msra.mxu0 %v1363
    %6959 = vmatpush.msra.mxu0 %v1355
    %6960 = vmatpush.msra.mxu0 %v1347
    %6961 = vmatpush.msra.mxu0 %v1339
    %6962 = vmatpush.msra.mxu0 %v1331
    %6963 = vmatpush.msra.mxu0 %v1323
    %6964 = vmatpush.msra.mxu0 %v1315
    %6965 = vmatmul.f32.gmra.mxu0 %v3204
    %v6966 = vpop.f32.mrf.mxu0
    %v6967 = vadd.f32 %v6947, %v6966
    %6968 = vdwg.mxu0
    %6969 = vmatpush.msra.mxu0 %v1563
    %6970 = vmatpush.msra.mxu0 %v1555
    %6971 = vmatpush.msra.mxu0 %v1547
    %6972 = vmatpush.msra.mxu0 %v1539
    %6973 = vmatpush.msra.mxu0 %v1531
    %6974 = vmatpush.msra.mxu0 %v1523
    %6975 = vmatpush.msra.mxu0 %v1515
    %6976 = vmatpush.msra.mxu0 %v1507
    %6977 = vmatpush.msra.mxu0 %v1499
    %6978 = vmatpush.msra.mxu0 %v1491
    %6979 = vmatpush.msra.mxu0 %v1483
    %6980 = vmatpush.msra.mxu0 %v1475
    %6981 = vmatpush.msra.mxu0 %v1467
    %6982 = vmatpush.msra.mxu0 %v1459
    %6983 = vmatpush.msra.mxu0 %v1451
    %6984 = vmatpush.msra.mxu0 %v1443
    %6985 = vmatmul.f32.gmra.mxu0 %v3205
    %v6986 = vpop.f32.mrf.mxu0
    %v6987 = vadd.f32 %v6967, %v6986
    %6988 = vdwg.mxu0
    %6989 = vmatpush.msra.mxu0 %v1691
    %6990 = vmatpush.msra.mxu0 %v1683
    %6991 = vmatpush.msra.mxu0 %v1675
    %6992 = vmatpush.msra.mxu0 %v1667
    %6993 = vmatpush.msra.mxu0 %v1659
    %6994 = vmatpush.msra.mxu0 %v1651
    %6995 = vmatpush.msra.mxu0 %v1643
    %6996 = vmatpush.msra.mxu0 %v1635
    %6997 = vmatpush.msra.mxu0 %v1627
    %6998 = vmatpush.msra.mxu0 %v1619
    %6999 = vmatpush.msra.mxu0 %v1611
    %7000 = vmatpush.msra.mxu0 %v1603
    %7001 = vmatpush.msra.mxu0 %v1595
    %7002 = vmatpush.msra.mxu0 %v1587
    %7003 = vmatpush.msra.mxu0 %v1579
    %7004 = vmatpush.msra.mxu0 %v1571
    %7005 = vmatmul.f32.gmra.mxu0 %v3206
    %v7006 = vpop.f32.mrf.mxu0
    %v7007 = vadd.f32 %v6987, %v7006
    %7008 = vdwg.mxu0
    %7009 = vmatpush.msra.mxu0 %v1819
    %7010 = vmatpush.msra.mxu0 %v1811
    %7011 = vmatpush.msra.mxu0 %v1803
    %7012 = vmatpush.msra.mxu0 %v1795
    %7013 = vmatpush.msra.mxu0 %v1787
    %7014 = vmatpush.msra.mxu0 %v1779
    %7015 = vmatpush.msra.mxu0 %v1771
    %7016 = vmatpush.msra.mxu0 %v1763
    %7017 = vmatpush.msra.mxu0 %v1755
    %7018 = vmatpush.msra.mxu0 %v1747
    %7019 = vmatpush.msra.mxu0 %v1739
    %7020 = vmatpush.msra.mxu0 %v1731
    %7021 = vmatpush.msra.mxu0 %v1723
    %7022 = vmatpush.msra.mxu0 %v1715
    %7023 = vmatpush.msra.mxu0 %v1707
    %7024 = vmatpush.msra.mxu0 %v1699
    %7025 = vmatmul.f32.gmra.mxu0 %v3207
    %v7026 = vpop.f32.mrf.mxu0
    %v7027 = vadd.f32 %v7007, %v7026
    %7028 = vdwg.mxu0
    %7029 = vmatpush.msra.mxu0 %v1947
    %7030 = vmatpush.msra.mxu0 %v1939
    %7031 = vmatpush.msra.mxu0 %v1931
    %7032 = vmatpush.msra.mxu0 %v1923
    %7033 = vmatpush.msra.mxu0 %v1915
    %7034 = vmatpush.msra.mxu0 %v1907
    %7035 = vmatpush.msra.mxu0 %v1899
    %7036 = vmatpush.msra.mxu0 %v1891
    %7037 = vmatpush.msra.mxu0 %v1883
    %7038 = vmatpush.msra.mxu0 %v1875
    %7039 = vmatpush.msra.mxu0 %v1867
    %7040 = vmatpush.msra.mxu0 %v1859
    %7041 = vmatpush.msra.mxu0 %v1851
    %7042 = vmatpush.msra.mxu0 %v1843
    %7043 = vmatpush.msra.mxu0 %v1835
    %7044 = vmatpush.msra.mxu0 %v1827
    %7045 = vmatmul.f32.gmra.mxu0 %v3208
    %v7046 = vpop.f32.mrf.mxu0
    %v7047 = vadd.f32 %v7027, %v7046
    %7048 = vdwg.mxu0
    %7049 = vmatpush.msra.mxu0 %v2075
    %7050 = vmatpush.msra.mxu0 %v2067
    %7051 = vmatpush.msra.mxu0 %v2059
    %7052 = vmatpush.msra.mxu0 %v2051
    %7053 = vmatpush.msra.mxu0 %v2043
    %7054 = vmatpush.msra.mxu0 %v2035
    %7055 = vmatpush.msra.mxu0 %v2027
    %7056 = vmatpush.msra.mxu0 %v2019
    %7057 = vmatpush.msra.mxu0 %v2011
    %7058 = vmatpush.msra.mxu0 %v2003
    %7059 = vmatpush.msra.mxu0 %v1995
    %7060 = vmatpush.msra.mxu0 %v1987
    %7061 = vmatpush.msra.mxu0 %v1979
    %7062 = vmatpush.msra.mxu0 %v1971
    %7063 = vmatpush.msra.mxu0 %v1963
    %7064 = vmatpush.msra.mxu0 %v1955
    %7065 = vmatmul.f32.gmra.mxu0 %v3209
    %v7066 = vpop.f32.mrf.mxu0
    %v7067 = vadd.f32 %v7047, %v7066
    %7068 = vdwg.mxu0
    %7069 = vmatpush.msra.mxu0 %v2203
    %7070 = vmatpush.msra.mxu0 %v2195
    %7071 = vmatpush.msra.mxu0 %v2187
    %7072 = vmatpush.msra.mxu0 %v2179
    %7073 = vmatpush.msra.mxu0 %v2171
    %7074 = vmatpush.msra.mxu0 %v2163
    %7075 = vmatpush.msra.mxu0 %v2155
    %7076 = vmatpush.msra.mxu0 %v2147
    %7077 = vmatpush.msra.mxu0 %v2139
    %7078 = vmatpush.msra.mxu0 %v2131
    %7079 = vmatpush.msra.mxu0 %v2123
    %7080 = vmatpush.msra.mxu0 %v2115
    %7081 = vmatpush.msra.mxu0 %v2107
    %7082 = vmatpush.msra.mxu0 %v2099
    %7083 = vmatpush.msra.mxu0 %v2091
    %7084 = vmatpush.msra.mxu0 %v2083
    %7085 = vmatmul.f32.gmra.mxu0 %v3212
    %v7086 = vpop.f32.mrf.mxu0
    %v7087 = vadd.f32 %v7067, %v7086
    %7088 = vdwg.mxu0
    %7089 = vmatpush.msra.mxu0 %v2331
    %7090 = vmatpush.msra.mxu0 %v2323
    %7091 = vmatpush.msra.mxu0 %v2315
    %7092 = vmatpush.msra.mxu0 %v2307
    %7093 = vmatpush.msra.mxu0 %v2299
    %7094 = vmatpush.msra.mxu0 %v2291
    %7095 = vmatpush.msra.mxu0 %v2283
    %7096 = vmatpush.msra.mxu0 %v2275
    %7097 = vmatpush.msra.mxu0 %v2267
    %7098 = vmatpush.msra.mxu0 %v2259
    %7099 = vmatpush.msra.mxu0 %v2251
    %7100 = vmatpush.msra.mxu0 %v2243
    %7101 = vmatpush.msra.mxu0 %v2235
    %7102 = vmatpush.msra.mxu0 %v2227
    %7103 = vmatpush.msra.mxu0 %v2219
    %7104 = vmatpush.msra.mxu0 %v2211
    %7105 = vmatmul.f32.gmra.mxu0 %v3213
    %v7106 = vpop.f32.mrf.mxu0
    %v7107 = vadd.f32 %v7087, %v7106
    %7108 = vdwg.mxu0
    %7109 = vmatpush.msra.mxu0 %v2459
    %7110 = vmatpush.msra.mxu0 %v2451
    %7111 = vmatpush.msra.mxu0 %v2443
    %7112 = vmatpush.msra.mxu0 %v2435
    %7113 = vmatpush.msra.mxu0 %v2427
    %7114 = vmatpush.msra.mxu0 %v2419
    %7115 = vmatpush.msra.mxu0 %v2411
    %7116 = vmatpush.msra.mxu0 %v2403
    %7117 = vmatpush.msra.mxu0 %v2395
    %7118 = vmatpush.msra.mxu0 %v2387
    %7119 = vmatpush.msra.mxu0 %v2379
    %7120 = vmatpush.msra.mxu0 %v2371
    %7121 = vmatpush.msra.mxu0 %v2363
    %7122 = vmatpush.msra.mxu0 %v2355
    %7123 = vmatpush.msra.mxu0 %v2347
    %7124 = vmatpush.msra.mxu0 %v2339
    %7125 = vmatmul.f32.gmra.mxu0 %v3214
    %v7126 = vpop.f32.mrf.mxu0
    %v7127 = vadd.f32 %v7107, %v7126
    %7128 = vdwg.mxu0
    %7129 = vmatpush.msra.mxu0 %v2587
    %7130 = vmatpush.msra.mxu0 %v2579
    %7131 = vmatpush.msra.mxu0 %v2571
    %7132 = vmatpush.msra.mxu0 %v2563
    %7133 = vmatpush.msra.mxu0 %v2555
    %7134 = vmatpush.msra.mxu0 %v2547
    %7135 = vmatpush.msra.mxu0 %v2539
    %7136 = vmatpush.msra.mxu0 %v2531
    %7137 = vmatpush.msra.mxu0 %v2523
    %7138 = vmatpush.msra.mxu0 %v2515
    %7139 = vmatpush.msra.mxu0 %v2507
    %7140 = vmatpush.msra.mxu0 %v2499
    %7141 = vmatpush.msra.mxu0 %v2491
    %7142 = vmatpush.msra.mxu0 %v2483
    %7143 = vmatpush.msra.mxu0 %v2475
    %7144 = vmatpush.msra.mxu0 %v2467
    %7145 = vmatmul.f32.gmra.mxu0 %v3215
    %v7146 = vpop.f32.mrf.mxu0
    %v7147 = vadd.f32 %v7127, %v7146
    %7148 = vdwg.mxu0
    %7149 = vmatpush.msra.mxu0 %v2715
    %7150 = vmatpush.msra.mxu0 %v2707
    %7151 = vmatpush.msra.mxu0 %v2699
    %7152 = vmatpush.msra.mxu0 %v2691
    %7153 = vmatpush.msra.mxu0 %v2683
    %7154 = vmatpush.msra.mxu0 %v2675
    %7155 = vmatpush.msra.mxu0 %v2667
    %7156 = vmatpush.msra.mxu0 %v2659
    %7157 = vmatpush.msra.mxu0 %v2651
    %7158 = vmatpush.msra.mxu0 %v2643
    %7159 = vmatpush.msra.mxu0 %v2635
    %7160 = vmatpush.msra.mxu0 %v2627
    %7161 = vmatpush.msra.mxu0 %v2619
    %7162 = vmatpush.msra.mxu0 %v2611
    %7163 = vmatpush.msra.mxu0 %v2603
    %7164 = vmatpush.msra.mxu0 %v2595
    %7165 = vmatmul.f32.gmra.mxu0 %v3216
    %v7166 = vpop.f32.mrf.mxu0
    %v7167 = vadd.f32 %v7147, %v7166
    %7168 = vdwg.mxu0
    %7169 = vmatpush.msra.mxu0 %v2843
    %7170 = vmatpush.msra.mxu0 %v2835
    %7171 = vmatpush.msra.mxu0 %v2827
    %7172 = vmatpush.msra.mxu0 %v2819
    %7173 = vmatpush.msra.mxu0 %v2811
    %7174 = vmatpush.msra.mxu0 %v2803
    %7175 = vmatpush.msra.mxu0 %v2795
    %7176 = vmatpush.msra.mxu0 %v2787
    %7177 = vmatpush.msra.mxu0 %v2779
    %7178 = vmatpush.msra.mxu0 %v2771
    %7179 = vmatpush.msra.mxu0 %v2763
    %7180 = vmatpush.msra.mxu0 %v2755
    %7181 = vmatpush.msra.mxu0 %v2747
    %7182 = vmatpush.msra.mxu0 %v2739
    %7183 = vmatpush.msra.mxu0 %v2731
    %7184 = vmatpush.msra.mxu0 %v2723
    %7185 = vmatmul.f32.gmra.mxu0 %v3217
    %v7186 = vpop.f32.mrf.mxu0
    %v7187 = vadd.f32 %v7167, %v7186
    %7188 = vdwg.mxu0
    %7189 = vmatpush.msra.mxu0 %v2971
    %7190 = vmatpush.msra.mxu0 %v2963
    %7191 = vmatpush.msra.mxu0 %v2955
    %7192 = vmatpush.msra.mxu0 %v2947
    %7193 = vmatpush.msra.mxu0 %v2939
    %7194 = vmatpush.msra.mxu0 %v2931
    %7195 = vmatpush.msra.mxu0 %v2923
    %7196 = vmatpush.msra.mxu0 %v2915
    %7197 = vmatpush.msra.mxu0 %v2907
    %7198 = vmatpush.msra.mxu0 %v2899
    %7199 = vmatpush.msra.mxu0 %v2891
    %7200 = vmatpush.msra.mxu0 %v2883
    %7201 = vmatpush.msra.mxu0 %v2875
    %7202 = vmatpush.msra.mxu0 %v2867
    %7203 = vmatpush.msra.mxu0 %v2859
    %7204 = vmatpush.msra.mxu0 %v2851
    %7205 = vmatmul.f32.gmra.mxu0 %v3218
    %v7206 = vpop.f32.mrf.mxu0
    %v7207 = vadd.f32 %v7187, %v7206
    %7208 = vdwg.mxu0
    %7209 = vmatpush.msra.mxu0 %v3099
    %7210 = vmatpush.msra.mxu0 %v3091
    %7211 = vmatpush.msra.mxu0 %v3083
    %7212 = vmatpush.msra.mxu0 %v3075
    %7213 = vmatpush.msra.mxu0 %v3067
    %7214 = vmatpush.msra.mxu0 %v3059
    %7215 = vmatpush.msra.mxu0 %v3051
    %7216 = vmatpush.msra.mxu0 %v3043
    %7217 = vmatpush.msra.mxu0 %v3035
    %7218 = vmatpush.msra.mxu0 %v3027
    %7219 = vmatpush.msra.mxu0 %v3019
    %7220 = vmatpush.msra.mxu0 %v3011
    %7221 = vmatpush.msra.mxu0 %v3003
    %7222 = vmatpush.msra.mxu0 %v2995
    %7223 = vmatpush.msra.mxu0 %v2987
    %7224 = vmatpush.msra.mxu0 %v2979
    %7225 = vmatmul.f32.gmra.mxu0 %v3219
    %v7226 = vpop.f32.mrf.mxu0
    %v7227 = vadd.f32 %v7207, %v7226
    %7228 = vdwg.mxu0
    %7229 = vmatpush.msra.mxu0 0.0
    %7230 = vmatpush.msra.mxu0 0.0
    %7231 = vmatpush.msra.mxu0 0.0
    %7232 = vmatpush.msra.mxu0 0.0
    %7233 = vmatpush.msra.mxu0 0.0
    %7234 = vmatpush.msra.mxu0 0.0
    %7235 = vmatpush.msra.mxu0 0.0
    %7236 = vmatpush.msra.mxu0 0.0
    %7237 = vmatpush.msra.mxu0 %v3163
    %7238 = vmatpush.msra.mxu0 %v3155
    %7239 = vmatpush.msra.mxu0 %v3147
    %7240 = vmatpush.msra.mxu0 %v3139
    %7241 = vmatpush.msra.mxu0 %v3131
    %7242 = vmatpush.msra.mxu0 %v3123
    %7243 = vmatpush.msra.mxu0 %v3115
    %7244 = vmatpush.msra.mxu0 %v3107
    %7245 = vmatmul.f32.gmra.mxu0 %v3247
    %v7246 = vpop.f32.mrf.mxu0
    %v7247 = vadd.f32 %v7227, %v7246
    %7248 = vdwg.mxu0
    %vm7249 = vcmp.gt.f32.partialorder %v3747, 0.0
    %vm7250 = vcmp.gt.f32.partialorder %v4247, 0.0
    %vm7251 = vcmp.gt.f32.partialorder %v4747, 0.0
    %vm7252 = vcmp.gt.f32.partialorder %v5247, 0.0
    %vm7253 = vcmp.gt.f32.partialorder %v5747, 0.0
    %vm7254 = vcmp.gt.f32.partialorder %v6247, 0.0
    %vm7255 = vcmp.gt.f32.partialorder %v6747, 0.0
    %vm7256 = vcmp.gt.f32.partialorder %v7247, 0.0
    %v7257 = vmul.f32 %v3747, 0.01
    %v7258 = vmul.f32 %v4247, 0.01
    %v7259 = vmul.f32 %v4747, 0.01
    %v7260 = vmul.f32 %v5247, 0.01
    %v7261 = vmul.f32 %v5747, 0.01
    %v7262 = vmul.f32 %v6247, 0.01
    %v7263 = vmul.f32 %v6747, 0.01
    %v7264 = vmul.f32 %v7247, 0.01
    %v7265 = vsel %vm7249, %v3747, %v7257
    %v7266 = vsel %vm7250, %v4247, %v7258
    %v7267 = vsel %vm7251, %v4747, %v7259
    %v7268 = vsel %vm7252, %v5247, %v7260
    %v7269 = vsel %vm7253, %v5747, %v7261
    %v7270 = vsel %vm7254, %v6247, %v7262
    %v7271 = vsel %vm7255, %v6747, %v7263
    %v7272 = vsel %vm7256, %v7247, %v7264
    %v7273 = vld [vmem:[%s3] sm:$0xff]
    %v7274 = vld [vmem:[%s3 + $0x8] sm:$0xff]
    %v7275 = vld [vmem:[%s3 + $0x10] sm:$0xff]
    %v7276 = vld [vmem:[%s3 + $0x18] sm:$0xff]
    %v7277 = vld [vmem:[%s3 + $0x20] sm:$0xff]
    %v7278 = vld [vmem:[%s3 + $0x28] sm:$0xff]
    %v7279 = vld [vmem:[%s3 + $0x30] sm:$0xff]
    %v7280 = vld [vmem:[%s3 + $0x38] sm:$0xff]
    %v7281 = vld [vmem:[%s3 + $0x40] sm:$0xff]
    %v7282 = vld [vmem:[%s3 + $0x48] sm:$0xff]
    %v7283 = vld [vmem:[%s3 + $0x50] sm:$0xff]
    %v7284 = vld [vmem:[%s3 + $0x58] sm:$0xff]
    %v7285 = vld [vmem:[%s3 + $0x60] sm:$0xff]
    %v7286 = vld [vmem:[%s3 + $0x68] sm:$0xff]
    %v7287 = vld [vmem:[%s3 + $0x70] sm:$0xff]
    %v7288 = vld [vmem:[%s3 + $0x78] sm:$0xff]
    %v7289 = vld [vmem:[%s3 + $0x80] sm:$0xff]
    %v7290 = vld [vmem:[%s3 + $0x88] sm:$0xff]
    %v7291 = vld [vmem:[%s3 + $0x90] sm:$0xff]
    %v7292 = vld [vmem:[%s3 + $0x98] sm:$0xff]
    %v7293 = vld [vmem:[%s3 + $0xa0] sm:$0xff]
    %v7294 = vld [vmem:[%s3 + $0xa8] sm:$0xff]
    %v7295 = vld [vmem:[%s3 + $0xb0] sm:$0xff]
    %v7296 = vld [vmem:[%s3 + $0xb8] sm:$0xff]
    %v7297 = vld [vmem:[%s3 + $0xc0] sm:$0xff]
    %v7298 = vld [vmem:[%s3 + $0xc8] sm:$0xff]
    %v7299 = vld [vmem:[%s3 + $0xd0] sm:$0xff]
    %v7300 = vld [vmem:[%s3 + $0xd8] sm:$0xff]
    %v7301 = vld [vmem:[%s3 + $0xe0] sm:$0xff]
    %v7302 = vld [vmem:[%s3 + $0xe8] sm:$0xff]
    %v7303 = vld [vmem:[%s3 + $0xf0] sm:$0xff]
    %v7304 = vld [vmem:[%s3 + $0xf8] sm:$0xff]
    %v7305 = vld [vmem:[%s3 + $0x100] sm:$0xff]
    %v7306 = vld [vmem:[%s3 + $0x108] sm:$0xff]
    %v7307 = vld [vmem:[%s3 + $0x110] sm:$0xff]
    %v7308 = vld [vmem:[%s3 + $0x118] sm:$0xff]
    %v7309 = vld [vmem:[%s3 + $0x120] sm:$0xff]
    %v7310 = vld [vmem:[%s3 + $0x128] sm:$0xff]
    %v7311 = vld [vmem:[%s3 + $0x130] sm:$0xff]
    %v7312 = vld [vmem:[%s3 + $0x138] sm:$0xff]
    %v7313 = vld [vmem:[%s3 + $0x140] sm:$0xff]
    %v7314 = vld [vmem:[%s3 + $0x148] sm:$0xff]
    %v7315 = vld [vmem:[%s3 + $0x150] sm:$0xff]
    %v7316 = vld [vmem:[%s3 + $0x158] sm:$0xff]
    %v7317 = vld [vmem:[%s3 + $0x160] sm:$0xff]
    %v7318 = vld [vmem:[%s3 + $0x168] sm:$0xff]
    %v7319 = vld [vmem:[%s3 + $0x170] sm:$0xff]
    %v7320 = vld [vmem:[%s3 + $0x178] sm:$0xff]
    %v7321 = vld [vmem:[%s3 + $0x180] sm:$0xff]
    %v7322 = vld [vmem:[%s3 + $0x188] sm:$0xff]
    %v7323 = vld [vmem:[%s3 + $0x190] sm:$0xff]
    %v7324 = vld [vmem:[%s3 + $0x198] sm:$0xff]
    %v7325 = vld [vmem:[%s3 + $0x1a0] sm:$0xff]
    %v7326 = vld [vmem:[%s3 + $0x1a8] sm:$0xff]
    %v7327 = vld [vmem:[%s3 + $0x1b0] sm:$0xff]
    %v7328 = vld [vmem:[%s3 + $0x1b8] sm:$0xff]
    %v7329 = vld [vmem:[%s3 + $0x1c0] sm:$0xff]
    %v7330 = vld [vmem:[%s3 + $0x1c8] sm:$0xff]
    %v7331 = vld [vmem:[%s3 + $0x1d0] sm:$0xff]
    %v7332 = vld [vmem:[%s3 + $0x1d8] sm:$0xff]
    %v7333 = vld [vmem:[%s3 + $0x1e0] sm:$0xff]
    %v7334 = vld [vmem:[%s3 + $0x1e8] sm:$0xff]
    %v7335 = vld [vmem:[%s3 + $0x1f0] sm:$0xff]
    %v7336 = vld [vmem:[%s3 + $0x1f8] sm:$0xff]
    %v7337 = vld [vmem:[%s3 + $0x200] sm:$0xff]
    %v7338 = vld [vmem:[%s3 + $0x208] sm:$0xff]
    %v7339 = vld [vmem:[%s3 + $0x210] sm:$0xff]
    %v7340 = vld [vmem:[%s3 + $0x218] sm:$0xff]
    %v7341 = vld [vmem:[%s3 + $0x220] sm:$0xff]
    %v7342 = vld [vmem:[%s3 + $0x228] sm:$0xff]
    %v7343 = vld [vmem:[%s3 + $0x230] sm:$0xff]
    %v7344 = vld [vmem:[%s3 + $0x238] sm:$0xff]
    %v7345 = vld [vmem:[%s3 + $0x240] sm:$0xff]
    %v7346 = vld [vmem:[%s3 + $0x248] sm:$0xff]
    %v7347 = vld [vmem:[%s3 + $0x250] sm:$0xff]
    %v7348 = vld [vmem:[%s3 + $0x258] sm:$0xff]
    %v7349 = vld [vmem:[%s3 + $0x260] sm:$0xff]
    %v7350 = vld [vmem:[%s3 + $0x268] sm:$0xff]
    %v7351 = vld [vmem:[%s3 + $0x270] sm:$0xff]
    %v7352 = vld [vmem:[%s3 + $0x278] sm:$0xff]
    %v7353 = vld [vmem:[%s3 + $0x280] sm:$0xff]
    %v7354 = vld [vmem:[%s3 + $0x288] sm:$0xff]
    %v7355 = vld [vmem:[%s3 + $0x290] sm:$0xff]
    %v7356 = vld [vmem:[%s3 + $0x298] sm:$0xff]
    %v7357 = vld [vmem:[%s3 + $0x2a0] sm:$0xff]
    %v7358 = vld [vmem:[%s3 + $0x2a8] sm:$0xff]
    %v7359 = vld [vmem:[%s3 + $0x2b0] sm:$0xff]
    %v7360 = vld [vmem:[%s3 + $0x2b8] sm:$0xff]
    %v7361 = vld [vmem:[%s3 + $0x2c0] sm:$0xff]
    %v7362 = vld [vmem:[%s3 + $0x2c8] sm:$0xff]
    %v7363 = vld [vmem:[%s3 + $0x2d0] sm:$0xff]
    %v7364 = vld [vmem:[%s3 + $0x2d8] sm:$0xff]
    %v7365 = vld [vmem:[%s3 + $0x2e0] sm:$0xff]
    %v7366 = vld [vmem:[%s3 + $0x2e8] sm:$0xff]
    %v7367 = vld [vmem:[%s3 + $0x2f0] sm:$0xff]
    %v7368 = vld [vmem:[%s3 + $0x2f8] sm:$0xff]
    %v7369 = vld [vmem:[%s3 + $0x300] sm:$0xff]
    %v7370 = vld [vmem:[%s3 + $0x308] sm:$0xff]
    %v7371 = vld [vmem:[%s3 + $0x310] sm:$0xff]
    %v7372 = vld [vmem:[%s3 + $0x318] sm:$0xff]
    %v7373 = vld [vmem:[%s3 + $0x320] sm:$0xff]
    %v7374 = vld [vmem:[%s3 + $0x328] sm:$0xff]
    %v7375 = vld [vmem:[%s3 + $0x330] sm:$0xff]
    %v7376 = vld [vmem:[%s3 + $0x338] sm:$0xff]
    %v7377 = vld [vmem:[%s3 + $0x340] sm:$0xff]
    %v7378 = vld [vmem:[%s3 + $0x348] sm:$0xff]
    %v7379 = vld [vmem:[%s3 + $0x350] sm:$0xff]
    %v7380 = vld [vmem:[%s3 + $0x358] sm:$0xff]
    %v7381 = vld [vmem:[%s3 + $0x360] sm:$0xff]
    %v7382 = vld [vmem:[%s3 + $0x368] sm:$0xff]
    %v7383 = vld [vmem:[%s3 + $0x370] sm:$0xff]
    %v7384 = vld [vmem:[%s3 + $0x378] sm:$0xff]
    %v7385 = vld [vmem:[%s3 + $0x380] sm:$0xff]
    %v7386 = vld [vmem:[%s3 + $0x388] sm:$0xff]
    %v7387 = vld [vmem:[%s3 + $0x390] sm:$0xff]
    %v7388 = vld [vmem:[%s3 + $0x398] sm:$0xff]
    %v7389 = vld [vmem:[%s3 + $0x3a0] sm:$0xff]
    %v7390 = vld [vmem:[%s3 + $0x3a8] sm:$0xff]
    %v7391 = vld [vmem:[%s3 + $0x3b0] sm:$0xff]
    %v7392 = vld [vmem:[%s3 + $0x3b8] sm:$0xff]
    %v7393 = vld [vmem:[%s3 + $0x3c0] sm:$0xff]
    %v7394 = vld [vmem:[%s3 + $0x3c8] sm:$0xff]
    %v7395 = vld [vmem:[%s3 + $0x3d0] sm:$0xff]
    %v7396 = vld [vmem:[%s3 + $0x3d8] sm:$0xff]
    %v7397 = vld [vmem:[%s3 + $0x3e0] sm:$0xff]
    %v7398 = vld [vmem:[%s3 + $0x3e8] sm:$0xff]
    %v7399 = vld [vmem:[%s3 + $0x3f0] sm:$0xff]
    %v7400 = vld [vmem:[%s3 + $0x3f8] sm:$0xff]
    %v7401 = vld [vmem:[%s4] sm:$0x1]
    %v7403 = vperm.slane %v7401, 0
    %7405 = vmatpush.msra.mxu0 %v7288
    %7406 = vmatpush.msra.mxu0 %v7287
    %7407 = vmatpush.msra.mxu0 %v7286
    %7408 = vmatpush.msra.mxu0 %v7285
    %7409 = vmatpush.msra.mxu0 %v7284
    %7410 = vmatpush.msra.mxu0 %v7283
    %7411 = vmatpush.msra.mxu0 %v7282
    %7412 = vmatpush.msra.mxu0 %v7281
    %7413 = vmatpush.msra.mxu0 %v7280
    %7414 = vmatpush.msra.mxu0 %v7279
    %7415 = vmatpush.msra.mxu0 %v7278
    %7416 = vmatpush.msra.mxu0 %v7277
    %7417 = vmatpush.msra.mxu0 %v7276
    %7418 = vmatpush.msra.mxu0 %v7275
    %7419 = vmatpush.msra.mxu0 %v7274
    %7420 = vmatpush.msra.mxu0 %v7273
    %7421 = vmatmul.f32.gmra.mxu0 %v7265
    %v7422 = vpop.f32.mrf.mxu0
    %v7423 = vadd.f32 %v7403, %v7422
    %7424 = vdwg.mxu0
    %7425 = vmatpush.msra.mxu0 %v7304
    %7426 = vmatpush.msra.mxu0 %v7303
    %7427 = vmatpush.msra.mxu0 %v7302
    %7428 = vmatpush.msra.mxu0 %v7301
    %7429 = vmatpush.msra.mxu0 %v7300
    %7430 = vmatpush.msra.mxu0 %v7299
    %7431 = vmatpush.msra.mxu0 %v7298
    %7432 = vmatpush.msra.mxu0 %v7297
    %7433 = vmatpush.msra.mxu0 %v7296
    %7434 = vmatpush.msra.mxu0 %v7295
    %7435 = vmatpush.msra.mxu0 %v7294
    %7436 = vmatpush.msra.mxu0 %v7293
    %7437 = vmatpush.msra.mxu0 %v7292
    %7438 = vmatpush.msra.mxu0 %v7291
    %7439 = vmatpush.msra.mxu0 %v7290
    %7440 = vmatpush.msra.mxu0 %v7289
    %7441 = vmatmul.f32.gmra.mxu0 %v7266
    %v7442 = vpop.f32.mrf.mxu0
    %v7443 = vadd.f32 %v7423, %v7442
    %7444 = vdwg.mxu0
    %7445 = vmatpush.msra.mxu0 %v7320
    %7446 = vmatpush.msra.mxu0 %v7319
    %7447 = vmatpush.msra.mxu0 %v7318
    %7448 = vmatpush.msra.mxu0 %v7317
    %7449 = vmatpush.msra.mxu0 %v7316
    %7450 = vmatpush.msra.mxu0 %v7315
    %7451 = vmatpush.msra.mxu0 %v7314
    %7452 = vmatpush.msra.mxu0 %v7313
    %7453 = vmatpush.msra.mxu0 %v7312
    %7454 = vmatpush.msra.mxu0 %v7311
    %7455 = vmatpush.msra.mxu0 %v7310
    %7456 = vmatpush.msra.mxu0 %v7309
    %7457 = vmatpush.msra.mxu0 %v7308
    %7458 = vmatpush.msra.mxu0 %v7307
    %7459 = vmatpush.msra.mxu0 %v7306
    %7460 = vmatpush.msra.mxu0 %v7305
    %7461 = vmatmul.f32.gmra.mxu0 %v7267
    %v7462 = vpop.f32.mrf.mxu0
    %v7463 = vadd.f32 %v7443, %v7462
    %7464 = vdwg.mxu0
    %7465 = vmatpush.msra.mxu0 %v7336
    %7466 = vmatpush.msra.mxu0 %v7335
    %7467 = vmatpush.msra.mxu0 %v7334
    %7468 = vmatpush.msra.mxu0 %v7333
    %7469 = vmatpush.msra.mxu0 %v7332
    %7470 = vmatpush.msra.mxu0 %v7331
    %7471 = vmatpush.msra.mxu0 %v7330
    %7472 = vmatpush.msra.mxu0 %v7329
    %7473 = vmatpush.msra.mxu0 %v7328
    %7474 = vmatpush.msra.mxu0 %v7327
    %7475 = vmatpush.msra.mxu0 %v7326
    %7476 = vmatpush.msra.mxu0 %v7325
    %7477 = vmatpush.msra.mxu0 %v7324
    %7478 = vmatpush.msra.mxu0 %v7323
    %7479 = vmatpush.msra.mxu0 %v7322
    %7480 = vmatpush.msra.mxu0 %v7321
    %7481 = vmatmul.f32.gmra.mxu0 %v7268
    %v7482 = vpop.f32.mrf.mxu0
    %v7483 = vadd.f32 %v7463, %v7482
    %7484 = vdwg.mxu0
    %7485 = vmatpush.msra.mxu0 %v7352
    %7486 = vmatpush.msra.mxu0 %v7351
    %7487 = vmatpush.msra.mxu0 %v7350
    %7488 = vmatpush.msra.mxu0 %v7349
    %7489 = vmatpush.msra.mxu0 %v7348
    %7490 = vmatpush.msra.mxu0 %v7347
    %7491 = vmatpush.msra.mxu0 %v7346
    %7492 = vmatpush.msra.mxu0 %v7345
    %7493 = vmatpush.msra.mxu0 %v7344
    %7494 = vmatpush.msra.mxu0 %v7343
    %7495 = vmatpush.msra.mxu0 %v7342
    %7496 = vmatpush.msra.mxu0 %v7341
    %7497 = vmatpush.msra.mxu0 %v7340
    %7498 = vmatpush.msra.mxu0 %v7339
    %7499 = vmatpush.msra.mxu0 %v7338
    %7500 = vmatpush.msra.mxu0 %v7337
    %7501 = vmatmul.f32.gmra.mxu0 %v7269
    %v7502 = vpop.f32.mrf.mxu0
    %v7503 = vadd.f32 %v7483, %v7502
    %7504 = vdwg.mxu0
    %7505 = vmatpush.msra.mxu0 %v7368
    %7506 = vmatpush.msra.mxu0 %v7367
    %7507 = vmatpush.msra.mxu0 %v7366
    %7508 = vmatpush.msra.mxu0 %v7365
    %7509 = vmatpush.msra.mxu0 %v7364
    %7510 = vmatpush.msra.mxu0 %v7363
    %7511 = vmatpush.msra.mxu0 %v7362
    %7512 = vmatpush.msra.mxu0 %v7361
    %7513 = vmatpush.msra.mxu0 %v7360
    %7514 = vmatpush.msra.mxu0 %v7359
    %7515 = vmatpush.msra.mxu0 %v7358
    %7516 = vmatpush.msra.mxu0 %v7357
    %7517 = vmatpush.msra.mxu0 %v7356
    %7518 = vmatpush.msra.mxu0 %v7355
    %7519 = vmatpush.msra.mxu0 %v7354
    %7520 = vmatpush.msra.mxu0 %v7353
    %7521 = vmatmul.f32.gmra.mxu0 %v7270
    %v7522 = vpop.f32.mrf.mxu0
    %v7523 = vadd.f32 %v7503, %v7522
    %7524 = vdwg.mxu0
    %7525 = vmatpush.msra.mxu0 %v7384
    %7526 = vmatpush.msra.mxu0 %v7383
    %7527 = vmatpush.msra.mxu0 %v7382
    %7528 = vmatpush.msra.mxu0 %v7381
    %7529 = vmatpush.msra.mxu0 %v7380
    %7530 = vmatpush.msra.mxu0 %v7379
    %7531 = vmatpush.msra.mxu0 %v7378
    %7532 = vmatpush.msra.mxu0 %v7377
    %7533 = vmatpush.msra.mxu0 %v7376
    %7534 = vmatpush.msra.mxu0 %v7375
    %7535 = vmatpush.msra.mxu0 %v7374
    %7536 = vmatpush.msra.mxu0 %v7373
    %7537 = vmatpush.msra.mxu0 %v7372
    %7538 = vmatpush.msra.mxu0 %v7371
    %7539 = vmatpush.msra.mxu0 %v7370
    %7540 = vmatpush.msra.mxu0 %v7369
    %7541 = vmatmul.f32.gmra.mxu0 %v7271
    %v7542 = vpop.f32.mrf.mxu0
    %v7543 = vadd.f32 %v7523, %v7542
    %7544 = vdwg.mxu0
    %7545 = vmatpush.msra.mxu0 %v7400
    %7546 = vmatpush.msra.mxu0 %v7399
    %7547 = vmatpush.msra.mxu0 %v7398
    %7548 = vmatpush.msra.mxu0 %v7397
    %7549 = vmatpush.msra.mxu0 %v7396
    %7550 = vmatpush.msra.mxu0 %v7395
    %7551 = vmatpush.msra.mxu0 %v7394
    %7552 = vmatpush.msra.mxu0 %v7393
    %7553 = vmatpush.msra.mxu0 %v7392
    %7554 = vmatpush.msra.mxu0 %v7391
    %7555 = vmatpush.msra.mxu0 %v7390
    %7556 = vmatpush.msra.mxu0 %v7389
    %7557 = vmatpush.msra.mxu0 %v7388
    %7558 = vmatpush.msra.mxu0 %v7387
    %7559 = vmatpush.msra.mxu0 %v7386
    %7560 = vmatpush.msra.mxu0 %v7385
    %7561 = vmatmul.f32.gmra.mxu0 %v7272
    %v7562 = vpop.f32.mrf.mxu0
    %v7563 = vadd.f32 %v7543, %v7562
    %7564 = vdwg.mxu0
    %7566 = vset.pattern.permute.xlu0 4
    %7567 = vperm.xlu0 %7566, %v7563
    %v7568 = vpop.permute.xlu0 %7567
    %v7570 = vadd.f32 %v7568, %v7563
    %vm7571 = vcmask 25600
    %v7572 = vsel %vm7571, %v7563, 0.0
    %7573 = vadd.xlane.f32.xlu0 %v7572
    %v7574 = vpop.xlane.xlu0 %7573
    %v7575 = vrcp.pop 4.0
    %v7576 = vmul.f32 4.0, %v7575
    %v7577 = vsub.f32 1.0, %v7576
    %v7578 = vmul.f32 %v7575, %v7577
    %v7579 = vadd.f32 %v7575, %v7578
    %vm7580 = vweird.f32 %v7575
    %v7581 = vsel %vm7580, %v7575, %v7579
    %v7582 = vmul.f32 %v7574, %v7581
    %v7583 = vsub.f32 %v7570, %v7582
    %7584 = vst.msk [vmem:[#allocation2] sm:$0x3] %vm7571, %v7583
    // Predicated region
    $region22: #{dueling_dqn_forward.7} parent=1 // pred_check
      _
    $region23: #{dueling_dqn_forward.7} parent=1 // pred_check_branch
      %7586 = sbr.rel (0) target = $region25
    $region24: #{dueling_dqn_forward.7} parent=1 // pred_region
      %7588 = vsyncadd [#allocation3], 0
      %s7590 = sshll.u32 [#allocation2], 4
      %s7591 = int_to_ptr.vmem [resolvable:$true] %s7590
      %s7592 = sshll.u32 %s5, 4
      %s7593 = int_to_ptr.hbm [resolvable:$true] %s7592
      %7595 = dma.vmem_to_hbm [thread:$0]  %s7591, 32, %s7593, [#allocation3]
    $region25: #{dueling_dqn_forward.7} parent=1 // pred_fallthru
      _
    // Predicated region
    $region26: #{dueling_dqn_forward.7} parent=1 // pred_check
      _
    $region27: #{dueling_dqn_forward.7} parent=1 // pred_check_branch
      %7597 = sbr.rel (0) target = $region29
    $region28: #{dueling_dqn_forward.7} parent=1 // pred_region
      %7599 = dma.done [#allocation3], 32
    $region29: #{dueling_dqn_forward.7} parent=1 // pred_fallthru
      _
    %7600 = vsyncpa [#allocation3], 1

</llo_original>
